<compile_context>
chip_gen: v6e
topology: v6e:2x2x1
jax: 0.10.0
libtpu: 0.0.40
codegen_flags: <defaults>
</compile_context>

<pallas_src>
import functools
import math

import jax
import jax.numpy as jnp
from jax.experimental import pallas as pl
from jax.experimental.pallas import tpu as pltpu

# ---- stand-ins for the global `args` used by the PyTorch module ----
LATDIM = 32        # args.latdim
HEAD = 4           # args.head
ANCHOR = 8         # args.anchor
GT_LAYER = 2       # args.gt_layer
SCALE_LAYER = 2.0  # args.scale_layer
ACT = "relu"       # args.act
N_NODES = 64       # number of graph nodes


# ----------------------------------------------------------------------------
# Fused all-layer kernel (grid=(), everything VMEM-resident)
# ----------------------------------------------------------------------------
def _gt_kernel(emb_ref,      # VMEM (N, D)        f32  -- initial embeddings
               onehot_ref,   # VMEM (L, A, N)     f32  -- anchor one-hot rows
               a3_ref,       # VMEM (L, H, D, D)  bf16 -- Wq_h @ Wk_h^T / sqrt(dh)
               b3_ref,       # VMEM (L, H, D, D)  bf16 -- Wv_h @ Wo_h-rows
               fc1_ref,      # VMEM (L, D, D)     bf16
               fc2_ref,      # VMEM (L, D, D)     bf16
               vec_ref,      # VMEM (L, 8, D)     f32  -- b1,b2,ln1_g,ln1_b,ln2_g',ln2_b',0,0
               out_ref,      # VMEM (N, D)        f32
               *, num_layers, num_heads):
    H = num_heads
    bf16 = jnp.bfloat16
    f32 = jnp.float32

    def attend(xq, xkv, a3, b3):
        """Multi-head attention with all heads batched along a leading axis.

        xq: (M, D) f32 queries-source; xkv: (K, D) f32 keys/values-source.
        a3/b3: (H, D, D) bf16 folded per-head weights.  Returns (M, D) f32.
        No per-head loop, one softmax, no lane concat, no transposes.
        """
        M = xq.shape[0]
        K = xkv.shape[0]
        D = xq.shape[1]
        xq_b = jnp.broadcast_to(xq.astype(bf16), (H, M, D))
        xk_b = jnp.broadcast_to(xkv.astype(bf16), (H, K, D))
        # t[h] = Xq @ (Wq_h Wk_h^T / sqrt(dh))        -> (H, M, D)
        t = jnp.einsum("hme,hed->hmd", xq_b, a3, preferred_element_type=f32)
        # s[h, m, k] = t[h, m, :] . Xk[k, :] = (Q_h K_h^T)/sqrt(dh)
        s = jnp.einsum("hmd,hkd->hmk", t.astype(bf16), xk_b,
                       preferred_element_type=f32)
        s = s - jnp.max(s, axis=-1, keepdims=True)
        e = jnp.exp(s)
        p = e * pl.reciprocal(jnp.sum(e, axis=-1, keepdims=True), approx=True)
        # u[h] = P_h @ Xk ; w[h] = u[h] @ (Wv_h Wo_h-rows) = P_h V_h Wo_h-rows
        u = jnp.einsum("hmk,hkd->hmd", p.astype(bf16), xk_b,
                       preferred_element_type=f32)
        w = jnp.einsum("hmd,hde->hme", u.astype(bf16), b3,
                       preferred_element_type=f32)
        return jnp.sum(w, axis=0)                    # concat_h(P_h V_h) @ Wo

    def layer_norm(x, g, b):
        mu = jnp.mean(x, axis=-1, keepdims=True)
        xc = x - mu
        var = jnp.mean(xc * xc, axis=-1, keepdims=True)
        return xc * jax.lax.rsqrt(var + 1e-5) * g + b

    def layer_body(l, cur):
        a3 = a3_ref[l]                               # (H, D, D) bf16
        b3 = b3_ref[l]
        fc1 = fc1_ref[l]                             # (D, D) bf16
        fc2 = fc2_ref[l]
        vec = vec_ref[l]                             # (8, D) f32
        fc1_b, fc2_b = vec[0:1], vec[1:2]
        ln1_g, ln1_b = vec[2:3], vec[3:4]
        ln2_g, ln2_b = vec[4:5], vec[5:6]            # 1/scale_layer folded in

        # Anchor gather = one-hot matmul on the MXU (exact row selection, f32).
        anchors = jnp.dot(onehot_ref[l], cur, preferred_element_type=f32)

        # anchors <- MHA(anchors, embeds, embeds) + anchors
        anc2 = attend(anchors, cur, a3, b3) + anchors            # (A, D)

        # embeds <- LN1(MHA(embeds, anchors', anchors') + embeds)
        e1 = layer_norm(attend(cur, anc2, a3, b3) + cur, ln1_g, ln1_b)

        # Two FeedForwardLayers (Linear(D, D) + ReLU); dropout = identity.
        h1 = jnp.maximum(
            jnp.dot(e1.astype(bf16), fc1, preferred_element_type=f32) + fc1_b,
            0.0)
        h2 = jnp.maximum(
            jnp.dot(h1.astype(bf16), fc2, preferred_element_type=f32) + fc2_b,
            0.0)

        # LN2 with 1/scale_layer folded into gamma/beta.
        return layer_norm(h2 + e1, ln2_g, ln2_b)

    out_ref[...] = jax.lax.fori_loop(0, num_layers, layer_body, emb_ref[...],
                                     unroll=True)


def graph_transformer_pallas(embeds, packed, onehot):
    """Run all GT layers in a single pallas_call (no grid)."""
    N, D = embeds.shape
    L, H, _, _ = packed["a3"].shape
    A = onehot.shape[1]

    kernel = functools.partial(_gt_kernel, num_layers=L, num_heads=H)

    # Advisory cost estimate for the XLA scheduler.
    per_layer_flops = (
        2 * A * N * D                                   # one-hot gather matmul
        + 2 * H * (A * D * D + 2 * A * N * D + A * D * D)   # anchors-attend
        + 2 * H * (N * D * D + 2 * N * A * D + N * D * D)   # nodes-attend
        + 4 * N * D * D                                 # two FFN matmuls
        + 16 * N * D)                                   # LN / residual / relu
    cost = pl.CostEstimate(
        flops=int(L * per_layer_flops),
        transcendentals=int(L * H * 2 * A * N),
        bytes_accessed=int(
            embeds.size * 4 * 2 + onehot.size * 4
            + (packed["a3"].size + packed["b3"].size
               + packed["fc1"].size + packed["fc2"].size) * 2
            + packed["vec"].size * 4),
    )

    vmem = pltpu.MemorySpace.VMEM
    return pl.pallas_call(
        kernel,
        out_shape=jax.ShapeDtypeStruct((N, D), jnp.float32),
        in_specs=[pl.BlockSpec(memory_space=vmem) for _ in range(7)],
        out_specs=pl.BlockSpec(memory_space=vmem),
        compiler_params=pltpu.CompilerParams(
            vmem_limit_bytes=16 * 1024 * 1024),   # total residency ~100 KiB
        cost_estimate=cost,
    )(embeds, onehot, packed["a3"], packed["b3"],
      packed["fc1"], packed["fc2"], packed["vec"])


# ----------------------------------------------------------------------------
# Parameter creation / packing
# ----------------------------------------------------------------------------
def init_layer_params(key, D):
    """Raw per-layer params, already transposed to (in, out) layout."""
    ks = jax.random.split(key, 6)
    s = 1.0 / math.sqrt(D)
    in_proj = jax.random.uniform(ks[0], (3 * D, D), jnp.float32, -s, s)
    wq_t, wk_t, wv_t = in_proj[:D], in_proj[D:2 * D], in_proj[2 * D:]
    wo_t = jax.random.uniform(ks[1], (D, D), jnp.float32, -s, s)
    fc1_w_t = jax.random.uniform(ks[2], (D, D), jnp.float32, -s, s)
    fc1_b = jax.random.uniform(ks[3], (1, D), jnp.float32, -s, s)
    fc2_w_t = jax.random.uniform(ks[4], (D, D), jnp.float32, -s, s)
    fc2_b = jax.random.uniform(ks[5], (1, D), jnp.float32, -s, s)
    return dict(
        wq=wq_t.T, wk=wk_t.T, wv=wv_t.T, wo=wo_t.T,
        fc1_w=fc1_w_t.T, fc1_b=fc1_b, fc2_w=fc2_w_t.T, fc2_b=fc2_b,
        ln1_g=jnp.ones((1, D), jnp.float32), ln1_b=jnp.zeros((1, D), jnp.float32),
        ln2_g=jnp.ones((1, D), jnp.float32), ln2_b=jnp.zeros((1, D), jnp.float32),
    )


def pack_params(raw_params):
    """Fold per-head Q/K and V/Wo products, constants, and cast to bf16."""
    D = LATDIM
    H = HEAD
    dh = D // H
    inv_sqrt_dh = 1.0 / math.sqrt(dh)
    inv_scale = 1.0 / SCALE_LAYER
    a3, b3, fc1, fc2, vec = [], [], [], [], []
    for p in raw_params:
        wq, wk, wv, wo = p["wq"], p["wk"], p["wv"], p["wo"]      # (D, D) in->out
        a_h, b_h = [], []
        for h in range(H):
            sl = slice(h * dh, (h + 1) * dh)
            a_h.append((wq[:, sl] @ wk[:, sl].T) * inv_sqrt_dh)  # (D, D)
            b_h.append(wv[:, sl] @ wo[sl, :])                    # (D, D)
        a3.append(jnp.stack(a_h))                                # (H, D, D)
        b3.append(jnp.stack(b_h))
        fc1.append(p["fc1_w"])
        fc2.append(p["fc2_w"])
        vec.append(jnp.concatenate(
            [p["fc1_b"], p["fc2_b"],
             p["ln1_g"], p["ln1_b"],
             p["ln2_g"] * inv_scale, p["ln2_b"] * inv_scale,
             jnp.zeros((2, D), jnp.float32)], axis=0))           # (8, D)
    return dict(
        a3=jnp.stack(a3).astype(jnp.bfloat16),    # (L, H, D, D)
        b3=jnp.stack(b3).astype(jnp.bfloat16),    # (L, H, D, D)
        fc1=jnp.stack(fc1).astype(jnp.bfloat16),  # (L, D, D)
        fc2=jnp.stack(fc2).astype(jnp.bfloat16),  # (L, D, D)
        vec=jnp.stack(vec),                       # (L, 8, D) f32
    )


# ----------------------------------------------------------------------------
# Pure-JAX reference (mirrors the PyTorch forward, eval mode)
# ----------------------------------------------------------------------------
def _layer_norm_ref(x, g, b):
    mu = x.mean(-1, keepdims=True)
    var = ((x - mu) ** 2).mean(-1, keepdims=True)
    return (x - mu) * jax.lax.rsqrt(var + 1e-5) * g + b


def _mha_ref(q_in, kv_in, p, num_heads):
    D = q_in.shape[-1]
    dh = D // num_heads
    q = (q_in @ p["wq"]).reshape(-1, num_heads, dh)
    k = (kv_in @ p["wk"]).reshape(-1, num_heads, dh)
    v = (kv_in @ p["wv"]).reshape(-1, num_heads, dh)
    s = jnp.einsum("qhd,khd->hqk", q, k) / math.sqrt(dh)
    a = jax.nn.softmax(s, axis=-1)
    o = jnp.einsum("hqk,khd->qhd", a, v).reshape(-1, D)
    return o @ p["wo"]


def graph_transformer_ref(embeds, raw_params, anchor_idx):
    out = embeds
    for p, idx in zip(raw_params, anchor_idx):
        anchors = out[idx]
        anc2 = _mha_ref(anchors, out, p, HEAD) + anchors
        e1 = _layer_norm_ref(_mha_ref(out, anc2, p, HEAD) + out,
                             p["ln1_g"], p["ln1_b"])
        h1 = jnp.maximum(e1 @ p["fc1_w"] + p["fc1_b"], 0.0)
        h2 = jnp.maximum(h1 @ p["fc2_w"] + p["fc2_b"], 0.0)
        out = _layer_norm_ref(h2 + e1, p["ln2_g"], p["ln2_b"]) / SCALE_LAYER
    return out


# ----------------------------------------------------------------------------
if __name__ == "__main__":
    key = jax.random.PRNGKey(0)
    k_emb, k_params, k_anchor = jax.random.split(key, 3)

    embeds = jax.random.normal(k_emb, (N_NODES, LATDIM), jnp.float32)
    layer_keys = jax.random.split(k_params, GT_LAYER)
    raw_params = [init_layer_params(k, LATDIM) for k in layer_keys]

    # TODO(synk): torch.randperm is host-side RNG; the anchor-index draw is
    # done here with jax.random (deterministic) and only the gather (as a
    # one-hot matmul) is fused into the kernel.
    anchor_keys = jax.random.split(k_anchor, GT_LAYER)
    anchor_idx = jnp.stack(
        [jax.random.permutation(k, N_NODES)[:ANCHOR] for k in anchor_keys]
    ).astype(jnp.int32)                                 # (GT_LAYER, ANCHOR)
    onehot = jax.nn.one_hot(anchor_idx, N_NODES, dtype=jnp.float32)  # (L, A, N)

    packed = pack_params(raw_params)
    out = graph_transformer_pallas(embeds, packed, onehot)
    out = jax.block_until_ready(out)

    assert out.shape == (N_NODES, LATDIM) and out.dtype == jnp.float32
    assert bool(jnp.all(jnp.isfinite(out)))

    ref = graph_transformer_ref(embeds, raw_params, anchor_idx)
    err = float(jnp.max(jnp.abs(out - ref)))
    assert err < 5e-2, f"mismatch vs pure-JAX reference: max abs err = {err}"

    print("KERNEL_OK")
</pallas_src>

<mosaic_0001>
module attributes {stable_mosaic.version = 11 : i64} {
  func.func @_gt_kernel(%arg0: memref<64x32xf32, #tpu.memory_space<vmem>>, %arg1: memref<2x8x64xf32, #tpu.memory_space<vmem>>, %arg2: memref<2x4x32x32xbf16, #tpu.memory_space<vmem>>, %arg3: memref<2x4x32x32xbf16, #tpu.memory_space<vmem>>, %arg4: memref<2x32x32xbf16, #tpu.memory_space<vmem>>, %arg5: memref<2x32x32xbf16, #tpu.memory_space<vmem>>, %arg6: memref<2x8x32xf32, #tpu.memory_space<vmem>>, %arg7: memref<64x32xf32, #tpu.memory_space<vmem>>) attributes {dimension_semantics = [], scalar_prefetch = 0 : i64, scratch_operands = 0 : i64, tpu.core_type = #tpu.core_type<tc>} {
    %c0 = arith.constant 0 : index
    %c0_0 = arith.constant 0 : index
    %0 = vector.load %arg0[%c0, %c0_0] : memref<64x32xf32, #tpu.memory_space<vmem>>, vector<64x32xf32>
    %c0_i32 = arith.constant 0 : i32
    %1 = arith.index_cast %c0_i32 : i32 to index
    %c0_1 = arith.constant 0 : index
    %c0_2 = arith.constant 0 : index
    %c0_3 = arith.constant 0 : index
    %2 = vector.load %arg2[%1, %c0_1, %c0_2, %c0_3] : memref<2x4x32x32xbf16, #tpu.memory_space<vmem>>, vector<1x4x32x32xbf16>
    %3 = vector.shape_cast %2 : vector<1x4x32x32xbf16> to vector<4x32x32xbf16>
    %4 = arith.index_cast %c0_i32 : i32 to index
    %c0_4 = arith.constant 0 : index
    %c0_5 = arith.constant 0 : index
    %c0_6 = arith.constant 0 : index
    %5 = vector.load %arg3[%4, %c0_4, %c0_5, %c0_6] : memref<2x4x32x32xbf16, #tpu.memory_space<vmem>>, vector<1x4x32x32xbf16>
    %6 = vector.shape_cast %5 : vector<1x4x32x32xbf16> to vector<4x32x32xbf16>
    %7 = arith.index_cast %c0_i32 : i32 to index
    %c0_7 = arith.constant 0 : index
    %c0_8 = arith.constant 0 : index
    %8 = vector.load %arg4[%7, %c0_7, %c0_8] : memref<2x32x32xbf16, #tpu.memory_space<vmem>>, vector<1x32x32xbf16>
    %9 = vector.shape_cast %8 : vector<1x32x32xbf16> to vector<32x32xbf16>
    %10 = arith.index_cast %c0_i32 : i32 to index
    %c0_9 = arith.constant 0 : index
    %c0_10 = arith.constant 0 : index
    %11 = vector.load %arg5[%10, %c0_9, %c0_10] : memref<2x32x32xbf16, #tpu.memory_space<vmem>>, vector<1x32x32xbf16>
    %12 = vector.shape_cast %11 : vector<1x32x32xbf16> to vector<32x32xbf16>
    %13 = arith.index_cast %c0_i32 : i32 to index
    %c0_11 = arith.constant 0 : index
    %c0_12 = arith.constant 0 : index
    %14 = vector.load %arg6[%13, %c0_11, %c0_12] : memref<2x8x32xf32, #tpu.memory_space<vmem>>, vector<1x8x32xf32>
    %15 = vector.shape_cast %14 : vector<1x8x32xf32> to vector<8x32xf32>
    %16 = vector.extract_strided_slice %15 {offsets = [0, 0], sizes = [1, 32], strides = [1, 1]} : vector<8x32xf32> to vector<1x32xf32>
    %17 = vector.extract_strided_slice %15 {offsets = [1, 0], sizes = [1, 32], strides = [1, 1]} : vector<8x32xf32> to vector<1x32xf32>
    %18 = vector.extract_strided_slice %15 {offsets = [2, 0], sizes = [1, 32], strides = [1, 1]} : vector<8x32xf32> to vector<1x32xf32>
    %19 = vector.extract_strided_slice %15 {offsets = [3, 0], sizes = [1, 32], strides = [1, 1]} : vector<8x32xf32> to vector<1x32xf32>
    %20 = vector.extract_strided_slice %15 {offsets = [4, 0], sizes = [1, 32], strides = [1, 1]} : vector<8x32xf32> to vector<1x32xf32>
    %21 = vector.extract_strided_slice %15 {offsets = [5, 0], sizes = [1, 32], strides = [1, 1]} : vector<8x32xf32> to vector<1x32xf32>
    %22 = arith.index_cast %c0_i32 : i32 to index
    %c0_13 = arith.constant 0 : index
    %c0_14 = arith.constant 0 : index
    %23 = vector.load %arg1[%22, %c0_13, %c0_14] : memref<2x8x64xf32, #tpu.memory_space<vmem>>, vector<1x8x64xf32>
    %24 = vector.shape_cast %23 : vector<1x8x64xf32> to vector<8x64xf32>
    %cst = arith.constant dense<0.000000e+00> : vector<8x32xf32>
    %25 = tpu.matmul %24, %0, %cst {dimension_numbers = #tpu.dot_dimension_numbers<[1], [0], [0], [1], [0, 0, 1, 1], [], []>} : vector<8x64xf32>, vector<64x32xf32>, vector<8x32xf32> -> vector<8x32xf32>
    %26 = arith.truncf %25 : vector<8x32xf32> to vector<8x32xbf16>
    %27 = vector.shape_cast %26 : vector<8x32xbf16> to vector<1x8x32xbf16>
    %28 = vector.broadcast %27 : vector<1x8x32xbf16> to vector<4x8x32xbf16>
    %29 = arith.truncf %0 : vector<64x32xf32> to vector<64x32xbf16>
    %30 = vector.shape_cast %29 : vector<64x32xbf16> to vector<1x64x32xbf16>
    %31 = vector.broadcast %30 : vector<1x64x32xbf16> to vector<4x64x32xbf16>
    "tpu.trace_start"() <{level = 10 : i32, message = "hme,hed->hmd"}> : () -> ()
    %cst_15 = arith.constant dense<0.000000e+00> : vector<4x8x32xf32>
    %32 = tpu.matmul %28, %3, %cst_15 {dimension_numbers = #tpu.dot_dimension_numbers<[2], [1], [1], [2], [0, 0, 0, 1, 1, 2], [0], [0]>} : vector<4x8x32xbf16>, vector<4x32x32xbf16>, vector<4x8x32xf32> -> vector<4x8x32xf32>
    "tpu.trace_stop"() : () -> ()
    %33 = arith.truncf %32 : vector<4x8x32xf32> to vector<4x8x32xbf16>
    "tpu.trace_start"() <{level = 10 : i32, message = "hmd,hkd->hmk"}> : () -> ()
    %cst_16 = arith.constant dense<0.000000e+00> : vector<4x8x64xf32>
    %34 = tpu.matmul %33, %31, %cst_16 {dimension_numbers = #tpu.dot_dimension_numbers<[2], [2], [1], [1], [0, 0, 0, 1, 1, 1], [0], [0]>} : vector<4x8x32xbf16>, vector<4x64x32xbf16>, vector<4x8x64xf32> -> vector<4x8x64xf32>
    "tpu.trace_stop"() : () -> ()
    %cst_17 = arith.constant dense<0xFF800000> : vector<4x8xf32>
    %35 = vector.multi_reduction <maximumf>, %34, %cst_17 [2] : vector<4x8x64xf32> to vector<4x8xf32>
    %36 = vector.shape_cast %35 : vector<4x8xf32> to vector<4x8x1xf32>
    %37 = vector.broadcast %36 : vector<4x8x1xf32> to vector<4x8x64xf32>
    %38 = arith.subf %34, %37 : vector<4x8x64xf32>
    %39 = math.exp %38 : vector<4x8x64xf32>
    %cst_18 = arith.constant dense<0.000000e+00> : vector<4x8xf32>
    %40 = vector.multi_reduction <add>, %39, %cst_18 [2] : vector<4x8x64xf32> to vector<4x8xf32>
    %41 = vector.shape_cast %40 : vector<4x8xf32> to vector<4x8x1xf32>
    %42 = tpu.reciprocal %41 {approx = true} : vector<4x8x1xf32> -> vector<4x8x1xf32>
    %43 = vector.broadcast %42 : vector<4x8x1xf32> to vector<4x8x64xf32>
    %44 = arith.mulf %39, %43 : vector<4x8x64xf32>
    %45 = arith.truncf %44 : vector<4x8x64xf32> to vector<4x8x64xbf16>
    "tpu.trace_start"() <{level = 10 : i32, message = "hmk,hkd->hmd"}> : () -> ()
    %cst_19 = arith.constant dense<0.000000e+00> : vector<4x8x32xf32>
    %46 = tpu.matmul %45, %31, %cst_19 {dimension_numbers = #tpu.dot_dimension_numbers<[2], [1], [1], [2], [0, 0, 0, 1, 1, 2], [0], [0]>} : vector<4x8x64xbf16>, vector<4x64x32xbf16>, vector<4x8x32xf32> -> vector<4x8x32xf32>
    "tpu.trace_stop"() : () -> ()
    %47 = arith.truncf %46 : vector<4x8x32xf32> to vector<4x8x32xbf16>
    "tpu.trace_start"() <{level = 10 : i32, message = "hmd,hde->hme"}> : () -> ()
    %cst_20 = arith.constant dense<0.000000e+00> : vector<4x8x32xf32>
    %48 = tpu.matmul %47, %6, %cst_20 {dimension_numbers = #tpu.dot_dimension_numbers<[2], [1], [1], [2], [0, 0, 0, 1, 1, 2], [0], [0]>} : vector<4x8x32xbf16>, vector<4x32x32xbf16>, vector<4x8x32xf32> -> vector<4x8x32xf32>
    "tpu.trace_stop"() : () -> ()
    %cst_21 = arith.constant dense<0.000000e+00> : vector<8x32xf32>
    %49 = vector.multi_reduction <add>, %48, %cst_21 [0] : vector<4x8x32xf32> to vector<8x32xf32>
    %50 = arith.addf %49, %25 : vector<8x32xf32>
    %51 = arith.truncf %0 : vector<64x32xf32> to vector<64x32xbf16>
    %52 = vector.shape_cast %51 : vector<64x32xbf16> to vector<1x64x32xbf16>
    %53 = vector.broadcast %52 : vector<1x64x32xbf16> to vector<4x64x32xbf16>
    %54 = arith.truncf %50 : vector<8x32xf32> to vector<8x32xbf16>
    %55 = vector.shape_cast %54 : vector<8x32xbf16> to vector<1x8x32xbf16>
    %56 = vector.broadcast %55 : vector<1x8x32xbf16> to vector<4x8x32xbf16>
    "tpu.trace_start"() <{level = 10 : i32, message = "hme,hed->hmd"}> : () -> ()
    %cst_22 = arith.constant dense<0.000000e+00> : vector<4x64x32xf32>
    %57 = tpu.matmul %53, %3, %cst_22 {dimension_numbers = #tpu.dot_dimension_numbers<[2], [1], [1], [2], [0, 0, 0, 1, 1, 2], [0], [0]>} : vector<4x64x32xbf16>, vector<4x32x32xbf16>, vector<4x64x32xf32> -> vector<4x64x32xf32>
    "tpu.trace_stop"() : () -> ()
    %58 = arith.truncf %57 : vector<4x64x32xf32> to vector<4x64x32xbf16>
    "tpu.trace_start"() <{level = 10 : i32, message = "hmd,hkd->hmk"}> : () -> ()
    %cst_23 = arith.constant dense<0.000000e+00> : vector<4x64x8xf32>
    %59 = tpu.matmul %58, %56, %cst_23 {dimension_numbers = #tpu.dot_dimension_numbers<[2], [2], [1], [1], [0, 0, 0, 1, 1, 1], [0], [0]>} : vector<4x64x32xbf16>, vector<4x8x32xbf16>, vector<4x64x8xf32> -> vector<4x64x8xf32>
    "tpu.trace_stop"() : () -> ()
    %cst_24 = arith.constant dense<0xFF800000> : vector<4x64xf32>
    %60 = vector.multi_reduction <maximumf>, %59, %cst_24 [2] : vector<4x64x8xf32> to vector<4x64xf32>
    %61 = vector.shape_cast %60 : vector<4x64xf32> to vector<4x64x1xf32>
    %62 = vector.broadcast %61 : vector<4x64x1xf32> to vector<4x64x8xf32>
    %63 = arith.subf %59, %62 : vector<4x64x8xf32>
    %64 = math.exp %63 : vector<4x64x8xf32>
    %cst_25 = arith.constant dense<0.000000e+00> : vector<4x64xf32>
    %65 = vector.multi_reduction <add>, %64, %cst_25 [2] : vector<4x64x8xf32> to vector<4x64xf32>
    %66 = vector.shape_cast %65 : vector<4x64xf32> to vector<4x64x1xf32>
    %67 = tpu.reciprocal %66 {approx = true} : vector<4x64x1xf32> -> vector<4x64x1xf32>
    %68 = vector.broadcast %67 : vector<4x64x1xf32> to vector<4x64x8xf32>
    %69 = arith.mulf %64, %68 : vector<4x64x8xf32>
    %70 = arith.truncf %69 : vector<4x64x8xf32> to vector<4x64x8xbf16>
    "tpu.trace_start"() <{level = 10 : i32, message = "hmk,hkd->hmd"}> : () -> ()
    %cst_26 = arith.constant dense<0.000000e+00> : vector<4x64x32xf32>
    %71 = tpu.matmul %70, %56, %cst_26 {dimension_numbers = #tpu.dot_dimension_numbers<[2], [1], [1], [2], [0, 0, 0, 1, 1, 2], [0], [0]>} : vector<4x64x8xbf16>, vector<4x8x32xbf16>, vector<4x64x32xf32> -> vector<4x64x32xf32>
    "tpu.trace_stop"() : () -> ()
    %72 = arith.truncf %71 : vector<4x64x32xf32> to vector<4x64x32xbf16>
    "tpu.trace_start"() <{level = 10 : i32, message = "hmd,hde->hme"}> : () -> ()
    %cst_27 = arith.constant dense<0.000000e+00> : vector<4x64x32xf32>
    %73 = tpu.matmul %72, %6, %cst_27 {dimension_numbers = #tpu.dot_dimension_numbers<[2], [1], [1], [2], [0, 0, 0, 1, 1, 2], [0], [0]>} : vector<4x64x32xbf16>, vector<4x32x32xbf16>, vector<4x64x32xf32> -> vector<4x64x32xf32>
    "tpu.trace_stop"() : () -> ()
    %cst_28 = arith.constant dense<0.000000e+00> : vector<64x32xf32>
    %74 = vector.multi_reduction <add>, %73, %cst_28 [0] : vector<4x64x32xf32> to vector<64x32xf32>
    %75 = arith.addf %74, %0 : vector<64x32xf32>
    %cst_29 = arith.constant dense<0.000000e+00> : vector<64xf32>
    %76 = vector.multi_reduction <add>, %75, %cst_29 [1] : vector<64x32xf32> to vector<64xf32>
    %77 = vector.shape_cast %76 : vector<64xf32> to vector<64x1xf32>
    %cst_30 = arith.constant 3.200000e+01 : f32
    %78 = vector.broadcast %cst_30 : f32 to vector<64x1xf32>
    %79 = arith.divf %77, %78 : vector<64x1xf32>
    %80 = vector.broadcast %79 : vector<64x1xf32> to vector<64x32xf32>
    %81 = arith.subf %75, %80 : vector<64x32xf32>
    %82 = arith.mulf %81, %81 : vector<64x32xf32>
    %cst_31 = arith.constant dense<0.000000e+00> : vector<64xf32>
    %83 = vector.multi_reduction <add>, %82, %cst_31 [1] : vector<64x32xf32> to vector<64xf32>
    %84 = vector.shape_cast %83 : vector<64xf32> to vector<64x1xf32>
    %cst_32 = arith.constant 3.200000e+01 : f32
    %85 = vector.broadcast %cst_32 : f32 to vector<64x1xf32>
    %86 = arith.divf %84, %85 : vector<64x1xf32>
    %cst_33 = arith.constant 9.99999974E-6 : f32
    %87 = vector.broadcast %cst_33 : f32 to vector<64x1xf32>
    %88 = arith.addf %86, %87 : vector<64x1xf32>
    %89 = math.rsqrt %88 : vector<64x1xf32>
    %90 = vector.broadcast %89 : vector<64x1xf32> to vector<64x32xf32>
    %91 = arith.mulf %81, %90 : vector<64x32xf32>
    %92 = vector.broadcast %18 : vector<1x32xf32> to vector<64x32xf32>
    %93 = arith.mulf %91, %92 : vector<64x32xf32>
    %94 = vector.broadcast %19 : vector<1x32xf32> to vector<64x32xf32>
    %95 = arith.addf %93, %94 : vector<64x32xf32>
    %96 = arith.truncf %95 : vector<64x32xf32> to vector<64x32xbf16>
    %cst_34 = arith.constant dense<0.000000e+00> : vector<64x32xf32>
    %97 = tpu.matmul %96, %9, %cst_34 {dimension_numbers = #tpu.dot_dimension_numbers<[1], [0], [0], [1], [0, 0, 1, 1], [], []>} : vector<64x32xbf16>, vector<32x32xbf16>, vector<64x32xf32> -> vector<64x32xf32>
    %98 = vector.broadcast %16 : vector<1x32xf32> to vector<64x32xf32>
    %99 = arith.addf %97, %98 : vector<64x32xf32>
    %cst_35 = arith.constant 0.000000e+00 : f32
    %100 = vector.broadcast %cst_35 : f32 to vector<64x32xf32>
    %101 = arith.maximumf %99, %100 : vector<64x32xf32>
    %102 = arith.truncf %101 : vector<64x32xf32> to vector<64x32xbf16>
    %cst_36 = arith.constant dense<0.000000e+00> : vector<64x32xf32>
    %103 = tpu.matmul %102, %12, %cst_36 {dimension_numbers = #tpu.dot_dimension_numbers<[1], [0], [0], [1], [0, 0, 1, 1], [], []>} : vector<64x32xbf16>, vector<32x32xbf16>, vector<64x32xf32> -> vector<64x32xf32>
    %104 = vector.broadcast %17 : vector<1x32xf32> to vector<64x32xf32>
    %105 = arith.addf %103, %104 : vector<64x32xf32>
    %cst_37 = arith.constant 0.000000e+00 : f32
    %106 = vector.broadcast %cst_37 : f32 to vector<64x32xf32>
    %107 = arith.maximumf %105, %106 : vector<64x32xf32>
    %108 = arith.addf %107, %95 : vector<64x32xf32>
    %cst_38 = arith.constant dense<0.000000e+00> : vector<64xf32>
    %109 = vector.multi_reduction <add>, %108, %cst_38 [1] : vector<64x32xf32> to vector<64xf32>
    %110 = vector.shape_cast %109 : vector<64xf32> to vector<64x1xf32>
    %cst_39 = arith.constant 3.200000e+01 : f32
    %111 = vector.broadcast %cst_39 : f32 to vector<64x1xf32>
    %112 = arith.divf %110, %111 : vector<64x1xf32>
    %113 = vector.broadcast %112 : vector<64x1xf32> to vector<64x32xf32>
    %114 = arith.subf %108, %113 : vector<64x32xf32>
    %115 = arith.mulf %114, %114 : vector<64x32xf32>
    %cst_40 = arith.constant dense<0.000000e+00> : vector<64xf32>
    %116 = vector.multi_reduction <add>, %115, %cst_40 [1] : vector<64x32xf32> to vector<64xf32>
    %117 = vector.shape_cast %116 : vector<64xf32> to vector<64x1xf32>
    %cst_41 = arith.constant 3.200000e+01 : f32
    %118 = vector.broadcast %cst_41 : f32 to vector<64x1xf32>
    %119 = arith.divf %117, %118 : vector<64x1xf32>
    %cst_42 = arith.constant 9.99999974E-6 : f32
    %120 = vector.broadcast %cst_42 : f32 to vector<64x1xf32>
    %121 = arith.addf %119, %120 : vector<64x1xf32>
    %122 = math.rsqrt %121 : vector<64x1xf32>
    %123 = vector.broadcast %122 : vector<64x1xf32> to vector<64x32xf32>
    %124 = arith.mulf %114, %123 : vector<64x32xf32>
    %125 = vector.broadcast %20 : vector<1x32xf32> to vector<64x32xf32>
    %126 = arith.mulf %124, %125 : vector<64x32xf32>
    %127 = vector.broadcast %21 : vector<1x32xf32> to vector<64x32xf32>
    %128 = arith.addf %126, %127 : vector<64x32xf32>
    %c1_i32 = arith.constant 1 : i32
    %129 = arith.index_cast %c1_i32 : i32 to index
    %c0_43 = arith.constant 0 : index
    %c0_44 = arith.constant 0 : index
    %c0_45 = arith.constant 0 : index
    %130 = vector.load %arg2[%129, %c0_43, %c0_44, %c0_45] : memref<2x4x32x32xbf16, #tpu.memory_space<vmem>>, vector<1x4x32x32xbf16>
    %131 = vector.shape_cast %130 : vector<1x4x32x32xbf16> to vector<4x32x32xbf16>
    %132 = arith.index_cast %c1_i32 : i32 to index
    %c0_46 = arith.constant 0 : index
    %c0_47 = arith.constant 0 : index
    %c0_48 = arith.constant 0 : index
    %133 = vector.load %arg3[%132, %c0_46, %c0_47, %c0_48] : memref<2x4x32x32xbf16, #tpu.memory_space<vmem>>, vector<1x4x32x32xbf16>
    %134 = vector.shape_cast %133 : vector<1x4x32x32xbf16> to vector<4x32x32xbf16>
    %135 = arith.index_cast %c1_i32 : i32 to index
    %c0_49 = arith.constant 0 : index
    %c0_50 = arith.constant 0 : index
    %136 = vector.load %arg4[%135, %c0_49, %c0_50] : memref<2x32x32xbf16, #tpu.memory_space<vmem>>, vector<1x32x32xbf16>
    %137 = vector.shape_cast %136 : vector<1x32x32xbf16> to vector<32x32xbf16>
    %138 = arith.index_cast %c1_i32 : i32 to index
    %c0_51 = arith.constant 0 : index
    %c0_52 = arith.constant 0 : index
    %139 = vector.load %arg5[%138, %c0_51, %c0_52] : memref<2x32x32xbf16, #tpu.memory_space<vmem>>, vector<1x32x32xbf16>
    %140 = vector.shape_cast %139 : vector<1x32x32xbf16> to vector<32x32xbf16>
    %141 = arith.index_cast %c1_i32 : i32 to index
    %c0_53 = arith.constant 0 : index
    %c0_54 = arith.constant 0 : index
    %142 = vector.load %arg6[%141, %c0_53, %c0_54] : memref<2x8x32xf32, #tpu.memory_space<vmem>>, vector<1x8x32xf32>
    %143 = vector.shape_cast %142 : vector<1x8x32xf32> to vector<8x32xf32>
    %144 = vector.extract_strided_slice %143 {offsets = [0, 0], sizes = [1, 32], strides = [1, 1]} : vector<8x32xf32> to vector<1x32xf32>
    %145 = vector.extract_strided_slice %143 {offsets = [1, 0], sizes = [1, 32], strides = [1, 1]} : vector<8x32xf32> to vector<1x32xf32>
    %146 = vector.extract_strided_slice %143 {offsets = [2, 0], sizes = [1, 32], strides = [1, 1]} : vector<8x32xf32> to vector<1x32xf32>
    %147 = vector.extract_strided_slice %143 {offsets = [3, 0], sizes = [1, 32], strides = [1, 1]} : vector<8x32xf32> to vector<1x32xf32>
    %148 = vector.extract_strided_slice %143 {offsets = [4, 0], sizes = [1, 32], strides = [1, 1]} : vector<8x32xf32> to vector<1x32xf32>
    %149 = vector.extract_strided_slice %143 {offsets = [5, 0], sizes = [1, 32], strides = [1, 1]} : vector<8x32xf32> to vector<1x32xf32>
    %150 = arith.index_cast %c1_i32 : i32 to index
    %c0_55 = arith.constant 0 : index
    %c0_56 = arith.constant 0 : index
    %151 = vector.load %arg1[%150, %c0_55, %c0_56] : memref<2x8x64xf32, #tpu.memory_space<vmem>>, vector<1x8x64xf32>
    %152 = vector.shape_cast %151 : vector<1x8x64xf32> to vector<8x64xf32>
    %cst_57 = arith.constant dense<0.000000e+00> : vector<8x32xf32>
    %153 = tpu.matmul %152, %128, %cst_57 {dimension_numbers = #tpu.dot_dimension_numbers<[1], [0], [0], [1], [0, 0, 1, 1], [], []>} : vector<8x64xf32>, vector<64x32xf32>, vector<8x32xf32> -> vector<8x32xf32>
    %154 = arith.truncf %153 : vector<8x32xf32> to vector<8x32xbf16>
    %155 = vector.shape_cast %154 : vector<8x32xbf16> to vector<1x8x32xbf16>
    %156 = vector.broadcast %155 : vector<1x8x32xbf16> to vector<4x8x32xbf16>
    %157 = arith.truncf %128 : vector<64x32xf32> to vector<64x32xbf16>
    %158 = vector.shape_cast %157 : vector<64x32xbf16> to vector<1x64x32xbf16>
    %159 = vector.broadcast %158 : vector<1x64x32xbf16> to vector<4x64x32xbf16>
    "tpu.trace_start"() <{level = 10 : i32, message = "hme,hed->hmd"}> : () -> ()
    %cst_58 = arith.constant dense<0.000000e+00> : vector<4x8x32xf32>
    %160 = tpu.matmul %156, %131, %cst_58 {dimension_numbers = #tpu.dot_dimension_numbers<[2], [1], [1], [2], [0, 0, 0, 1, 1, 2], [0], [0]>} : vector<4x8x32xbf16>, vector<4x32x32xbf16>, vector<4x8x32xf32> -> vector<4x8x32xf32>
    "tpu.trace_stop"() : () -> ()
    %161 = arith.truncf %160 : vector<4x8x32xf32> to vector<4x8x32xbf16>
    "tpu.trace_start"() <{level = 10 : i32, message = "hmd,hkd->hmk"}> : () -> ()
    %cst_59 = arith.constant dense<0.000000e+00> : vector<4x8x64xf32>
    %162 = tpu.matmul %161, %159, %cst_59 {dimension_numbers = #tpu.dot_dimension_numbers<[2], [2], [1], [1], [0, 0, 0, 1, 1, 1], [0], [0]>} : vector<4x8x32xbf16>, vector<4x64x32xbf16>, vector<4x8x64xf32> -> vector<4x8x64xf32>
    "tpu.trace_stop"() : () -> ()
    %cst_60 = arith.constant dense<0xFF800000> : vector<4x8xf32>
    %163 = vector.multi_reduction <maximumf>, %162, %cst_60 [2] : vector<4x8x64xf32> to vector<4x8xf32>
    %164 = vector.shape_cast %163 : vector<4x8xf32> to vector<4x8x1xf32>
    %165 = vector.broadcast %164 : vector<4x8x1xf32> to vector<4x8x64xf32>
    %166 = arith.subf %162, %165 : vector<4x8x64xf32>
    %167 = math.exp %166 : vector<4x8x64xf32>
    %cst_61 = arith.constant dense<0.000000e+00> : vector<4x8xf32>
    %168 = vector.multi_reduction <add>, %167, %cst_61 [2] : vector<4x8x64xf32> to vector<4x8xf32>
    %169 = vector.shape_cast %168 : vector<4x8xf32> to vector<4x8x1xf32>
    %170 = tpu.reciprocal %169 {approx = true} : vector<4x8x1xf32> -> vector<4x8x1xf32>
    %171 = vector.broadcast %170 : vector<4x8x1xf32> to vector<4x8x64xf32>
    %172 = arith.mulf %167, %171 : vector<4x8x64xf32>
    %173 = arith.truncf %172 : vector<4x8x64xf32> to vector<4x8x64xbf16>
    "tpu.trace_start"() <{level = 10 : i32, message = "hmk,hkd->hmd"}> : () -> ()
    %cst_62 = arith.constant dense<0.000000e+00> : vector<4x8x32xf32>
    %174 = tpu.matmul %173, %159, %cst_62 {dimension_numbers = #tpu.dot_dimension_numbers<[2], [1], [1], [2], [0, 0, 0, 1, 1, 2], [0], [0]>} : vector<4x8x64xbf16>, vector<4x64x32xbf16>, vector<4x8x32xf32> -> vector<4x8x32xf32>
    "tpu.trace_stop"() : () -> ()
    %175 = arith.truncf %174 : vector<4x8x32xf32> to vector<4x8x32xbf16>
    "tpu.trace_start"() <{level = 10 : i32, message = "hmd,hde->hme"}> : () -> ()
    %cst_63 = arith.constant dense<0.000000e+00> : vector<4x8x32xf32>
    %176 = tpu.matmul %175, %134, %cst_63 {dimension_numbers = #tpu.dot_dimension_numbers<[2], [1], [1], [2], [0, 0, 0, 1, 1, 2], [0], [0]>} : vector<4x8x32xbf16>, vector<4x32x32xbf16>, vector<4x8x32xf32> -> vector<4x8x32xf32>
    "tpu.trace_stop"() : () -> ()
    %cst_64 = arith.constant dense<0.000000e+00> : vector<8x32xf32>
    %177 = vector.multi_reduction <add>, %176, %cst_64 [0] : vector<4x8x32xf32> to vector<8x32xf32>
    %178 = arith.addf %177, %153 : vector<8x32xf32>
    %179 = arith.truncf %128 : vector<64x32xf32> to vector<64x32xbf16>
    %180 = vector.shape_cast %179 : vector<64x32xbf16> to vector<1x64x32xbf16>
    %181 = vector.broadcast %180 : vector<1x64x32xbf16> to vector<4x64x32xbf16>
    %182 = arith.truncf %178 : vector<8x32xf32> to vector<8x32xbf16>
    %183 = vector.shape_cast %182 : vector<8x32xbf16> to vector<1x8x32xbf16>
    %184 = vector.broadcast %183 : vector<1x8x32xbf16> to vector<4x8x32xbf16>
    "tpu.trace_start"() <{level = 10 : i32, message = "hme,hed->hmd"}> : () -> ()
    %cst_65 = arith.constant dense<0.000000e+00> : vector<4x64x32xf32>
    %185 = tpu.matmul %181, %131, %cst_65 {dimension_numbers = #tpu.dot_dimension_numbers<[2], [1], [1], [2], [0, 0, 0, 1, 1, 2], [0], [0]>} : vector<4x64x32xbf16>, vector<4x32x32xbf16>, vector<4x64x32xf32> -> vector<4x64x32xf32>
    "tpu.trace_stop"() : () -> ()
    %186 = arith.truncf %185 : vector<4x64x32xf32> to vector<4x64x32xbf16>
    "tpu.trace_start"() <{level = 10 : i32, message = "hmd,hkd->hmk"}> : () -> ()
    %cst_66 = arith.constant dense<0.000000e+00> : vector<4x64x8xf32>
    %187 = tpu.matmul %186, %184, %cst_66 {dimension_numbers = #tpu.dot_dimension_numbers<[2], [2], [1], [1], [0, 0, 0, 1, 1, 1], [0], [0]>} : vector<4x64x32xbf16>, vector<4x8x32xbf16>, vector<4x64x8xf32> -> vector<4x64x8xf32>
    "tpu.trace_stop"() : () -> ()
    %cst_67 = arith.constant dense<0xFF800000> : vector<4x64xf32>
    %188 = vector.multi_reduction <maximumf>, %187, %cst_67 [2] : vector<4x64x8xf32> to vector<4x64xf32>
    %189 = vector.shape_cast %188 : vector<4x64xf32> to vector<4x64x1xf32>
    %190 = vector.broadcast %189 : vector<4x64x1xf32> to vector<4x64x8xf32>
    %191 = arith.subf %187, %190 : vector<4x64x8xf32>
    %192 = math.exp %191 : vector<4x64x8xf32>
    %cst_68 = arith.constant dense<0.000000e+00> : vector<4x64xf32>
    %193 = vector.multi_reduction <add>, %192, %cst_68 [2] : vector<4x64x8xf32> to vector<4x64xf32>
    %194 = vector.shape_cast %193 : vector<4x64xf32> to vector<4x64x1xf32>
    %195 = tpu.reciprocal %194 {approx = true} : vector<4x64x1xf32> -> vector<4x64x1xf32>
    %196 = vector.broadcast %195 : vector<4x64x1xf32> to vector<4x64x8xf32>
    %197 = arith.mulf %192, %196 : vector<4x64x8xf32>
    %198 = arith.truncf %197 : vector<4x64x8xf32> to vector<4x64x8xbf16>
    "tpu.trace_start"() <{level = 10 : i32, message = "hmk,hkd->hmd"}> : () -> ()
    %cst_69 = arith.constant dense<0.000000e+00> : vector<4x64x32xf32>
    %199 = tpu.matmul %198, %184, %cst_69 {dimension_numbers = #tpu.dot_dimension_numbers<[2], [1], [1], [2], [0, 0, 0, 1, 1, 2], [0], [0]>} : vector<4x64x8xbf16>, vector<4x8x32xbf16>, vector<4x64x32xf32> -> vector<4x64x32xf32>
    "tpu.trace_stop"() : () -> ()
    %200 = arith.truncf %199 : vector<4x64x32xf32> to vector<4x64x32xbf16>
    "tpu.trace_start"() <{level = 10 : i32, message = "hmd,hde->hme"}> : () -> ()
    %cst_70 = arith.constant dense<0.000000e+00> : vector<4x64x32xf32>
    %201 = tpu.matmul %200, %134, %cst_70 {dimension_numbers = #tpu.dot_dimension_numbers<[2], [1], [1], [2], [0, 0, 0, 1, 1, 2], [0], [0]>} : vector<4x64x32xbf16>, vector<4x32x32xbf16>, vector<4x64x32xf32> -> vector<4x64x32xf32>
    "tpu.trace_stop"() : () -> ()
    %cst_71 = arith.constant dense<0.000000e+00> : vector<64x32xf32>
    %202 = vector.multi_reduction <add>, %201, %cst_71 [0] : vector<4x64x32xf32> to vector<64x32xf32>
    %203 = arith.addf %202, %128 : vector<64x32xf32>
    %cst_72 = arith.constant dense<0.000000e+00> : vector<64xf32>
    %204 = vector.multi_reduction <add>, %203, %cst_72 [1] : vector<64x32xf32> to vector<64xf32>
    %205 = vector.shape_cast %204 : vector<64xf32> to vector<64x1xf32>
    %cst_73 = arith.constant 3.200000e+01 : f32
    %206 = vector.broadcast %cst_73 : f32 to vector<64x1xf32>
    %207 = arith.divf %205, %206 : vector<64x1xf32>
    %208 = vector.broadcast %207 : vector<64x1xf32> to vector<64x32xf32>
    %209 = arith.subf %203, %208 : vector<64x32xf32>
    %210 = arith.mulf %209, %209 : vector<64x32xf32>
    %cst_74 = arith.constant dense<0.000000e+00> : vector<64xf32>
    %211 = vector.multi_reduction <add>, %210, %cst_74 [1] : vector<64x32xf32> to vector<64xf32>
    %212 = vector.shape_cast %211 : vector<64xf32> to vector<64x1xf32>
    %cst_75 = arith.constant 3.200000e+01 : f32
    %213 = vector.broadcast %cst_75 : f32 to vector<64x1xf32>
    %214 = arith.divf %212, %213 : vector<64x1xf32>
    %cst_76 = arith.constant 9.99999974E-6 : f32
    %215 = vector.broadcast %cst_76 : f32 to vector<64x1xf32>
    %216 = arith.addf %214, %215 : vector<64x1xf32>
    %217 = math.rsqrt %216 : vector<64x1xf32>
    %218 = vector.broadcast %217 : vector<64x1xf32> to vector<64x32xf32>
    %219 = arith.mulf %209, %218 : vector<64x32xf32>
    %220 = vector.broadcast %146 : vector<1x32xf32> to vector<64x32xf32>
    %221 = arith.mulf %219, %220 : vector<64x32xf32>
    %222 = vector.broadcast %147 : vector<1x32xf32> to vector<64x32xf32>
    %223 = arith.addf %221, %222 : vector<64x32xf32>
    %224 = arith.truncf %223 : vector<64x32xf32> to vector<64x32xbf16>
    %cst_77 = arith.constant dense<0.000000e+00> : vector<64x32xf32>
    %225 = tpu.matmul %224, %137, %cst_77 {dimension_numbers = #tpu.dot_dimension_numbers<[1], [0], [0], [1], [0, 0, 1, 1], [], []>} : vector<64x32xbf16>, vector<32x32xbf16>, vector<64x32xf32> -> vector<64x32xf32>
    %226 = vector.broadcast %144 : vector<1x32xf32> to vector<64x32xf32>
    %227 = arith.addf %225, %226 : vector<64x32xf32>
    %cst_78 = arith.constant 0.000000e+00 : f32
    %228 = vector.broadcast %cst_78 : f32 to vector<64x32xf32>
    %229 = arith.maximumf %227, %228 : vector<64x32xf32>
    %230 = arith.truncf %229 : vector<64x32xf32> to vector<64x32xbf16>
    %cst_79 = arith.constant dense<0.000000e+00> : vector<64x32xf32>
    %231 = tpu.matmul %230, %140, %cst_79 {dimension_numbers = #tpu.dot_dimension_numbers<[1], [0], [0], [1], [0, 0, 1, 1], [], []>} : vector<64x32xbf16>, vector<32x32xbf16>, vector<64x32xf32> -> vector<64x32xf32>
    %232 = vector.broadcast %145 : vector<1x32xf32> to vector<64x32xf32>
    %233 = arith.addf %231, %232 : vector<64x32xf32>
    %cst_80 = arith.constant 0.000000e+00 : f32
    %234 = vector.broadcast %cst_80 : f32 to vector<64x32xf32>
    %235 = arith.maximumf %233, %234 : vector<64x32xf32>
    %236 = arith.addf %235, %223 : vector<64x32xf32>
    %cst_81 = arith.constant dense<0.000000e+00> : vector<64xf32>
    %237 = vector.multi_reduction <add>, %236, %cst_81 [1] : vector<64x32xf32> to vector<64xf32>
    %238 = vector.shape_cast %237 : vector<64xf32> to vector<64x1xf32>
    %cst_82 = arith.constant 3.200000e+01 : f32
    %239 = vector.broadcast %cst_82 : f32 to vector<64x1xf32>
    %240 = arith.divf %238, %239 : vector<64x1xf32>
    %241 = vector.broadcast %240 : vector<64x1xf32> to vector<64x32xf32>
    %242 = arith.subf %236, %241 : vector<64x32xf32>
    %243 = arith.mulf %242, %242 : vector<64x32xf32>
    %cst_83 = arith.constant dense<0.000000e+00> : vector<64xf32>
    %244 = vector.multi_reduction <add>, %243, %cst_83 [1] : vector<64x32xf32> to vector<64xf32>
    %245 = vector.shape_cast %244 : vector<64xf32> to vector<64x1xf32>
    %cst_84 = arith.constant 3.200000e+01 : f32
    %246 = vector.broadcast %cst_84 : f32 to vector<64x1xf32>
    %247 = arith.divf %245, %246 : vector<64x1xf32>
    %cst_85 = arith.constant 9.99999974E-6 : f32
    %248 = vector.broadcast %cst_85 : f32 to vector<64x1xf32>
    %249 = arith.addf %247, %248 : vector<64x1xf32>
    %250 = math.rsqrt %249 : vector<64x1xf32>
    %251 = vector.broadcast %250 : vector<64x1xf32> to vector<64x32xf32>
    %252 = arith.mulf %242, %251 : vector<64x32xf32>
    %253 = vector.broadcast %148 : vector<1x32xf32> to vector<64x32xf32>
    %254 = arith.mulf %252, %253 : vector<64x32xf32>
    %255 = vector.broadcast %149 : vector<1x32xf32> to vector<64x32xf32>
    %256 = arith.addf %254, %255 : vector<64x32xf32>
    %c2_i32 = arith.constant 2 : i32
    %c0_86 = arith.constant 0 : index
    %c0_87 = arith.constant 0 : index
    %257 = vector.load %arg7[%c0_86, %c0_87] : memref<64x32xf32, #tpu.memory_space<vmem>>, vector<64x32xf32>
    tpu.vector_store %arg7[%c0_86, %c0_87], %256 {strides = array<i32>} : memref<64x32xf32, #tpu.memory_space<vmem>>, vector<64x32xf32>,
    return
  }
}

</mosaic_0001>

<llo_original>
// kernel: tpu_custom_call.1
$region0: #{tpu_custom_call.1}
  #allocation0 [shape = 'u32[]', space=smem, size = 0x4, offset = 0x4, fixed_abs, tag = 'smem constant byte address 0x4 - core index']
  #allocation1 [shape = 'u32[144,128]{1,0:T(1,128)}', space=vmem, size = 0x12000, scoped, tag = 'internal scratch']
  %s0 = inlined_call_operand.vmem [shape: f32[64,32], index: 0, kind: input, shape index: {}]
  %s1 = inlined_call_operand.vmem [shape: f32[2,8,64], index: 1, kind: input, shape index: {}]
  %s2 = inlined_call_operand.hbm [shape: bf16[2,4,32,32], index: 2, kind: input, shape index: {}]
  %s3 = inlined_call_operand.hbm [shape: bf16[2,4,32,32], index: 3, kind: input, shape index: {}]
  %s4 = inlined_call_operand.vmem [shape: bf16[2,32,32], index: 4, kind: input, shape index: {}]
  %s5 = inlined_call_operand.vmem [shape: bf16[2,32,32], index: 5, kind: input, shape index: {}]
  %s6 = inlined_call_operand.vmem [shape: f32[2,8,32], index: 6, kind: input, shape index: {}]
  %s7 = inlined_call_operand.vmem [shape: f32[64,32], index: 7, kind: output, shape index: {}]
  %s8 = sld [smem:[#allocation0]]
  $region46: #{tpu_custom_call.1} parent=0
    _
  %s10 = ssub.s32 1, %s8
  %s11 = scalar_select 0, %s10, %s8
  $region1: #{tpu_custom_call.1} parent=0
    #allocation2 [shape = 'u8[65536]{0}', space=vmem, size = 0x10000, scoped, tag = 'input window, operand 2, single buffered']
    #allocation3 [shape = 's32[1]{0}', space=sflag, size = 0x4, scoped, tag = 'scoped memory for tpu_custom_call.1']
    #allocation4 [shape = 'u8[65536]{0}', space=vmem, size = 0x10000, scoped, tag = 'input window, operand 3, single buffered']
    #allocation5 [shape = 's32[1]{0}', space=sflag, size = 0x4, scoped, tag = 'scoped memory for tpu_custom_call.1']
    %12 = vsyncpa [#allocation3], 0
    %13 = vsyncpa [#allocation5], 0
    // Predicated region
    $region2: #{tpu_custom_call.1} parent=1 // pred_check
      _
    $region3: #{tpu_custom_call.1} parent=1 // pred_check_branch
      %15 = sbr.rel (0) target = $region5
    $region4: #{tpu_custom_call.1} parent=1 // pred_region
      _
    $region5: #{tpu_custom_call.1} parent=1 // pred_fallthru
      _
    // Predicated region
    $region6: #{tpu_custom_call.1} parent=1 // pred_check
      _
    $region7: #{tpu_custom_call.1} parent=1 // pred_check_branch
      %17 = sbr.rel (0) target = $region9
    $region8: #{tpu_custom_call.1} parent=1 // pred_region
      _
    $region9: #{tpu_custom_call.1} parent=1 // pred_fallthru
      _
    // Predicated region
    $region10: #{tpu_custom_call.1} parent=1 // pred_check
      _
    $region11: #{tpu_custom_call.1} parent=1 // pred_check_branch
      %19 = sbr.rel (0) target = $region13
    $region12: #{tpu_custom_call.1} parent=1 // pred_region
      %s21 = ssub.s32 2048, 2048
      %22 = vsyncadd [#allocation3], %s21
      %s23 = sshll.u32 [#allocation2], 4
      %s24 = int_to_ptr.vmem [resolvable:$true] %s23
      %29 = dma.hbm_to_vmem [thread:$0]  %s2, 2048, %s24, [#allocation3], 64, 64, 4
    $region13: #{tpu_custom_call.1} parent=1 // pred_fallthru
      _
    // Predicated region
    $region14: #{tpu_custom_call.1} parent=1 // pred_check
      _
    $region15: #{tpu_custom_call.1} parent=1 // pred_check_branch
      %31 = sbr.rel (0) target = $region17
    $region16: #{tpu_custom_call.1} parent=1 // pred_region
      %s33 = ssub.s32 2048, 2048
      %34 = vsyncadd [#allocation5], %s33
      %s35 = sshll.u32 [#allocation4], 4
      %s36 = int_to_ptr.vmem [resolvable:$true] %s35
      %41 = dma.hbm_to_vmem [thread:$0]  %s3, 2048, %s36, [#allocation5], 64, 64, 4
    $region17: #{tpu_custom_call.1} parent=1 // pred_fallthru
      _
    // Predicated region
    $region18: #{tpu_custom_call.1} parent=1 // pred_check
      _
    $region19: #{tpu_custom_call.1} parent=1 // pred_check_branch
      %43 = sbr.rel (0) target = $region21
    $region20: #{tpu_custom_call.1} parent=1 // pred_region
      _
    $region21: #{tpu_custom_call.1} parent=1 // pred_fallthru
      _
    // Predicated region
    $region22: #{tpu_custom_call.1} parent=1 // pred_check
      _
    $region23: #{tpu_custom_call.1} parent=1 // pred_check_branch
      %45 = sbr.rel (0) target = $region25
    $region24: #{tpu_custom_call.1} parent=1 // pred_region
      _
    $region25: #{tpu_custom_call.1} parent=1 // pred_fallthru
      _
    // Predicated region
    $region26: #{tpu_custom_call.1} parent=1 // pred_check
      _
    $region27: #{tpu_custom_call.1} parent=1 // pred_check_branch
      %47 = sbr.rel (0) target = $region29
    $region28: #{tpu_custom_call.1} parent=1 // pred_region
      _
    $region29: #{tpu_custom_call.1} parent=1 // pred_fallthru
      _
    // Predicated region
    $region30: #{tpu_custom_call.1} parent=1 // pred_check
      _
    $region31: #{tpu_custom_call.1} parent=1 // pred_check_branch
      %49 = sbr.rel (0) target = $region33
    $region32: #{tpu_custom_call.1} parent=1 // pred_region
      %50 = dma.done [#allocation3], 2048
    $region33: #{tpu_custom_call.1} parent=1 // pred_fallthru
      _
    // Predicated region
    $region34: #{tpu_custom_call.1} parent=1 // pred_check
      _
    $region35: #{tpu_custom_call.1} parent=1 // pred_check_branch
      %52 = sbr.rel (0) target = $region37
    $region36: #{tpu_custom_call.1} parent=1 // pred_region
      %53 = dma.done [#allocation5], 2048
    $region37: #{tpu_custom_call.1} parent=1 // pred_fallthru
      _
    %v55 = vld [vmem:[%s0] sm:$0xff]
    %v56 = vld [vmem:[%s0 + $0x8] sm:$0xff]
    %v57 = vld [vmem:[%s0 + $0x10] sm:$0xff]
    %v58 = vld [vmem:[%s0 + $0x18] sm:$0xff]
    %v59 = vld [vmem:[%s0 + $0x20] sm:$0xff]
    %v60 = vld [vmem:[%s0 + $0x28] sm:$0xff]
    %v61 = vld [vmem:[%s0 + $0x30] sm:$0xff]
    %v62 = vld [vmem:[%s0 + $0x38] sm:$0xff]
    %v63 = vld [vmem:[#allocation2] sm:$0xf]
    %v64 = vld [vmem:[#allocation2 + $0x4] sm:$0xf]
    %v65 = vld [vmem:[#allocation2 + $0x8] sm:$0xf]
    %v66 = vld [vmem:[#allocation2 + $0xc] sm:$0xf]
    %v67 = vld [vmem:[#allocation2 + $0x10] sm:$0xf]
    %v68 = vld [vmem:[#allocation2 + $0x14] sm:$0xf]
    %v69 = vld [vmem:[#allocation2 + $0x18] sm:$0xf]
    %v70 = vld [vmem:[#allocation2 + $0x1c] sm:$0xf]
    %v71 = vld [vmem:[#allocation2 + $0x20] sm:$0xf]
    %v72 = vld [vmem:[#allocation2 + $0x24] sm:$0xf]
    %v73 = vld [vmem:[#allocation2 + $0x28] sm:$0xf]
    %v74 = vld [vmem:[#allocation2 + $0x2c] sm:$0xf]
    %v75 = vld [vmem:[#allocation2 + $0x30] sm:$0xf]
    %v76 = vld [vmem:[#allocation2 + $0x34] sm:$0xf]
    %v77 = vld [vmem:[#allocation2 + $0x38] sm:$0xf]
    %v78 = vld [vmem:[#allocation2 + $0x3c] sm:$0xf]
    %v79 = vld [vmem:[#allocation4] sm:$0xf]
    %v80 = vld [vmem:[#allocation4 + $0x4] sm:$0xf]
    %v81 = vld [vmem:[#allocation4 + $0x8] sm:$0xf]
    %v82 = vld [vmem:[#allocation4 + $0xc] sm:$0xf]
    %v83 = vld [vmem:[#allocation4 + $0x10] sm:$0xf]
    %v84 = vld [vmem:[#allocation4 + $0x14] sm:$0xf]
    %v85 = vld [vmem:[#allocation4 + $0x18] sm:$0xf]
    %v86 = vld [vmem:[#allocation4 + $0x1c] sm:$0xf]
    %v87 = vld [vmem:[#allocation4 + $0x20] sm:$0xf]
    %v88 = vld [vmem:[#allocation4 + $0x24] sm:$0xf]
    %v89 = vld [vmem:[#allocation4 + $0x28] sm:$0xf]
    %v90 = vld [vmem:[#allocation4 + $0x2c] sm:$0xf]
    %v91 = vld [vmem:[#allocation4 + $0x30] sm:$0xf]
    %v92 = vld [vmem:[#allocation4 + $0x34] sm:$0xf]
    %v93 = vld [vmem:[#allocation4 + $0x38] sm:$0xf]
    %v94 = vld [vmem:[#allocation4 + $0x3c] sm:$0xf]
    %v95 = vld [vmem:[%s4] sm:$0xf]
    %v96 = vld [vmem:[%s4 + $0x4] sm:$0xf]
    %v97 = vld [vmem:[%s4 + $0x8] sm:$0xf]
    %v98 = vld [vmem:[%s4 + $0xc] sm:$0xf]
    %v99 = vld [vmem:[%s5] sm:$0xf]
    %v100 = vld [vmem:[%s5 + $0x4] sm:$0xf]
    %v101 = vld [vmem:[%s5 + $0x8] sm:$0xf]
    %v102 = vld [vmem:[%s5 + $0xc] sm:$0xf]
    %v103 = vld [vmem:[%s6] sm:$0xff]
    %v104 = vld [vmem:[%s1] sm:$0xff]
    %vm105 = vcmask 523264
    %v107 = vsel %vm105, %v104, 0
    %109 = vmatprep.subr.mxu0 0.0
    %110 = vmatpush1.msra.mxu0 0.0
    %111 = vmatprep.subr.mxu0 0.0
    %112 = vmatpush1.msra.mxu0 0.0
    %113 = vmatprep.subr.mxu0 0.0
    %114 = vmatpush1.msra.mxu0 0.0
    %115 = vmatprep.subr.mxu0 0.0
    %116 = vmatpush1.msra.mxu0 0.0
    %117 = vmatprep.subr.mxu0 0.0
    %118 = vmatpush1.msra.mxu0 0.0
    %119 = vmatprep.subr.mxu0 0.0
    %120 = vmatpush1.msra.mxu0 0.0
    %121 = vmatprep.subr.mxu0 0.0
    %122 = vmatpush1.msra.mxu0 0.0
    %123 = vmatprep.subr.mxu0 0.0
    %124 = vmatpush1.msra.mxu0 0.0
    %125 = vmatprep.subr.mxu0 0.0
    %126 = vmatpush1.msra.mxu0 %v62
    %127 = vmatprep.subr.mxu0 0.0
    %128 = vmatpush1.msra.mxu0 %v61
    %129 = vmatprep.subr.mxu0 0.0
    %130 = vmatpush1.msra.mxu0 %v60
    %131 = vmatprep.subr.mxu0 0.0
    %132 = vmatpush1.msra.mxu0 %v59
    %133 = vmatprep.subr.mxu0 0.0
    %134 = vmatpush1.msra.mxu0 %v58
    %135 = vmatprep.subr.mxu0 0.0
    %136 = vmatpush1.msra.mxu0 %v57
    %137 = vmatprep.subr.mxu0 0.0
    %138 = vmatpush1.msra.mxu0 %v56
    %139 = vmatprep.subr.mxu0 0.0
    %140 = vmatpush1.msra.mxu0 %v55
    %141 = vmatprep.subr.mxu0 0.0
    %142 = vmatpush2.msra.mxu0 0.0
    %143 = vmatprep.subr.mxu0 0.0
    %144 = vmatpush2.msra.mxu0 0.0
    %145 = vmatprep.subr.mxu0 0.0
    %146 = vmatpush2.msra.mxu0 0.0
    %147 = vmatprep.subr.mxu0 0.0
    %148 = vmatpush2.msra.mxu0 0.0
    %149 = vmatprep.subr.mxu0 0.0
    %150 = vmatpush2.msra.mxu0 0.0
    %151 = vmatprep.subr.mxu0 0.0
    %152 = vmatpush2.msra.mxu0 0.0
    %153 = vmatprep.subr.mxu0 0.0
    %154 = vmatpush2.msra.mxu0 0.0
    %155 = vmatprep.subr.mxu0 0.0
    %156 = vmatpush2.msra.mxu0 0.0
    %157 = vmatprep.subr.mxu0 0.0
    %158 = vmatpush2.msra.mxu0 0.0
    %159 = vmatprep.subr.mxu0 0.0
    %160 = vmatpush2.msra.mxu0 0.0
    %161 = vmatprep.subr.mxu0 0.0
    %162 = vmatpush2.msra.mxu0 0.0
    %163 = vmatprep.subr.mxu0 0.0
    %164 = vmatpush2.msra.mxu0 0.0
    %165 = vmatprep.subr.mxu0 0.0
    %166 = vmatpush2.msra.mxu0 0.0
    %167 = vmatprep.subr.mxu0 0.0
    %168 = vmatpush2.msra.mxu0 0.0
    %169 = vmatprep.subr.mxu0 0.0
    %170 = vmatpush2.msra.mxu0 0.0
    %171 = vmatprep.subr.mxu0 0.0
    %172 = vmatpush2.msra.mxu0 0.0
    %173 = vmatprep.mubr.f32.mxu0 0.0
    %174 = vmatmul.mubr.f32.gmra.mxu0 %v107
    %v175 = vpop.f32.mrf.mxu0
    %v176 = vadd.f32 0.0, %v175
    %v177 = vpop.f32.mrf.mxu0
    %178 = vdwg.mxu0
    %v179 = vpack.c.bf16 %v176, %v176
    %v180 = vpack.c.bf16 %v56, %v55
    %v181 = vpack.c.bf16 %v58, %v57
    %v182 = vpack.c.bf16 %v60, %v59
    %v183 = vpack.c.bf16 %v62, %v61
    %v188 = vunpack.c.l.b16 %v63
    %v189 = vunpack.c.l.b16 %v64
    %v190 = vunpack.c.l.b16 %v65
    %v191 = vunpack.c.l.b16 %v66
    %v192 = vpack.c.b16 %v189, %v188
    %v193 = vpack.c.b16 %v191, %v190
    %vm196 = vcmask 261120
    %v198 = vsel %vm196, %v179, 0
    %200 = vmatprep.subr.bf16.mxu0 0
    %201 = vmatpush1.bf16.msra.mxu0 0
    %202 = vmatprep.subr.bf16.mxu0 0
    %203 = vmatpush1.bf16.msra.mxu0 0
    %204 = vmatprep.subr.bf16.mxu0 0
    %205 = vmatpush1.bf16.msra.mxu0 0
    %206 = vmatprep.subr.bf16.mxu0 0
    %207 = vmatpush1.bf16.msra.mxu0 0
    %208 = vmatprep.subr.bf16.mxu0 0
    %209 = vmatpush1.bf16.msra.mxu0 0
    %210 = vmatprep.subr.bf16.mxu0 0
    %211 = vmatpush1.bf16.msra.mxu0 0
    %212 = vmatprep.subr.bf16.mxu0 0
    %213 = vmatpush1.bf16.msra.mxu0 %v193
    %214 = vmatprep.subr.bf16.mxu0 0
    %215 = vmatpush1.bf16.msra.mxu0 %v192
    %216 = vmatprep.subr.bf16.mxu0 0
    %217 = vmatpush2.bf16.msra.mxu0 0
    %218 = vmatprep.subr.bf16.mxu0 0
    %219 = vmatpush2.bf16.msra.mxu0 0
    %220 = vmatprep.subr.bf16.mxu0 0
    %221 = vmatpush2.bf16.msra.mxu0 0
    %222 = vmatprep.subr.bf16.mxu0 0
    %223 = vmatpush2.bf16.msra.mxu0 0
    %224 = vmatprep.subr.bf16.mxu0 0
    %225 = vmatpush2.bf16.msra.mxu0 0
    %226 = vmatprep.subr.bf16.mxu0 0
    %227 = vmatpush2.bf16.msra.mxu0 0
    %228 = vmatprep.subr.bf16.mxu0 0
    %229 = vmatpush2.bf16.msra.mxu0 0
    %230 = vmatprep.subr.bf16.mxu0 0
    %231 = vmatpush2.bf16.msra.mxu0 0
    %232 = vmatprep.mubr.bf16.mxu0 0
    %233 = vmatmul.mubr.bf16.gmra.mxu0 %v198
    %v234 = vpop.f32.mrf.mxu0
    %v235 = vadd.f32 0.0, %v234
    %v236 = vpop.f32.mrf.mxu0
    %v237 = vpop.f32.mrf.mxu0
    %v238 = vpop.f32.mrf.mxu0
    %239 = vdwg.mxu0
    %v244 = vunpack.c.l.b16 %v67
    %v245 = vunpack.c.l.b16 %v68
    %v246 = vunpack.c.l.b16 %v69
    %v247 = vunpack.c.l.b16 %v70
    %v248 = vpack.c.b16 %v245, %v244
    %v249 = vpack.c.b16 %v247, %v246
    %252 = vmatprep.subr.bf16.mxu0 0
    %253 = vmatpush1.bf16.msra.mxu0 0
    %254 = vmatprep.subr.bf16.mxu0 0
    %255 = vmatpush1.bf16.msra.mxu0 0
    %256 = vmatprep.subr.bf16.mxu0 0
    %257 = vmatpush1.bf16.msra.mxu0 0
    %258 = vmatprep.subr.bf16.mxu0 0
    %259 = vmatpush1.bf16.msra.mxu0 0
    %260 = vmatprep.subr.bf16.mxu0 0
    %261 = vmatpush1.bf16.msra.mxu0 0
    %262 = vmatprep.subr.bf16.mxu0 0
    %263 = vmatpush1.bf16.msra.mxu0 0
    %264 = vmatprep.subr.bf16.mxu0 0
    %265 = vmatpush1.bf16.msra.mxu0 %v249
    %266 = vmatprep.subr.bf16.mxu0 0
    %267 = vmatpush1.bf16.msra.mxu0 %v248
    %268 = vmatprep.subr.bf16.mxu0 0
    %269 = vmatpush2.bf16.msra.mxu0 0
    %270 = vmatprep.subr.bf16.mxu0 0
    %271 = vmatpush2.bf16.msra.mxu0 0
    %272 = vmatprep.subr.bf16.mxu0 0
    %273 = vmatpush2.bf16.msra.mxu0 0
    %274 = vmatprep.subr.bf16.mxu0 0
    %275 = vmatpush2.bf16.msra.mxu0 0
    %276 = vmatprep.subr.bf16.mxu0 0
    %277 = vmatpush2.bf16.msra.mxu0 0
    %278 = vmatprep.subr.bf16.mxu0 0
    %279 = vmatpush2.bf16.msra.mxu0 0
    %280 = vmatprep.subr.bf16.mxu0 0
    %281 = vmatpush2.bf16.msra.mxu0 0
    %282 = vmatprep.subr.bf16.mxu0 0
    %283 = vmatpush2.bf16.msra.mxu0 0
    %284 = vmatprep.mubr.bf16.mxu0 0
    %285 = vmatmul.mubr.bf16.gmra.mxu0 %v198
    %v286 = vpop.f32.mrf.mxu0
    %v287 = vadd.f32 0.0, %v286
    %v288 = vpop.f32.mrf.mxu0
    %v289 = vpop.f32.mrf.mxu0
    %v290 = vpop.f32.mrf.mxu0
    %291 = vdwg.mxu0
    %v296 = vunpack.c.l.b16 %v71
    %v297 = vunpack.c.l.b16 %v72
    %v298 = vunpack.c.l.b16 %v73
    %v299 = vunpack.c.l.b16 %v74
    %v300 = vpack.c.b16 %v297, %v296
    %v301 = vpack.c.b16 %v299, %v298
    %304 = vmatprep.subr.bf16.mxu0 0
    %305 = vmatpush1.bf16.msra.mxu0 0
    %306 = vmatprep.subr.bf16.mxu0 0
    %307 = vmatpush1.bf16.msra.mxu0 0
    %308 = vmatprep.subr.bf16.mxu0 0
    %309 = vmatpush1.bf16.msra.mxu0 0
    %310 = vmatprep.subr.bf16.mxu0 0
    %311 = vmatpush1.bf16.msra.mxu0 0
    %312 = vmatprep.subr.bf16.mxu0 0
    %313 = vmatpush1.bf16.msra.mxu0 0
    %314 = vmatprep.subr.bf16.mxu0 0
    %315 = vmatpush1.bf16.msra.mxu0 0
    %316 = vmatprep.subr.bf16.mxu0 0
    %317 = vmatpush1.bf16.msra.mxu0 %v301
    %318 = vmatprep.subr.bf16.mxu0 0
    %319 = vmatpush1.bf16.msra.mxu0 %v300
    %320 = vmatprep.subr.bf16.mxu0 0
    %321 = vmatpush2.bf16.msra.mxu0 0
    %322 = vmatprep.subr.bf16.mxu0 0
    %323 = vmatpush2.bf16.msra.mxu0 0
    %324 = vmatprep.subr.bf16.mxu0 0
    %325 = vmatpush2.bf16.msra.mxu0 0
    %326 = vmatprep.subr.bf16.mxu0 0
    %327 = vmatpush2.bf16.msra.mxu0 0
    %328 = vmatprep.subr.bf16.mxu0 0
    %329 = vmatpush2.bf16.msra.mxu0 0
    %330 = vmatprep.subr.bf16.mxu0 0
    %331 = vmatpush2.bf16.msra.mxu0 0
    %332 = vmatprep.subr.bf16.mxu0 0
    %333 = vmatpush2.bf16.msra.mxu0 0
    %334 = vmatprep.subr.bf16.mxu0 0
    %335 = vmatpush2.bf16.msra.mxu0 0
    %336 = vmatprep.mubr.bf16.mxu0 0
    %337 = vmatmul.mubr.bf16.gmra.mxu0 %v198
    %v338 = vpop.f32.mrf.mxu0
    %v339 = vadd.f32 0.0, %v338
    %v340 = vpop.f32.mrf.mxu0
    %v341 = vpop.f32.mrf.mxu0
    %v342 = vpop.f32.mrf.mxu0
    %343 = vdwg.mxu0
    %v348 = vunpack.c.l.b16 %v75
    %v349 = vunpack.c.l.b16 %v76
    %v350 = vunpack.c.l.b16 %v77
    %v351 = vunpack.c.l.b16 %v78
    %v352 = vpack.c.b16 %v349, %v348
    %v353 = vpack.c.b16 %v351, %v350
    %356 = vmatprep.subr.bf16.mxu0 0
    %357 = vmatpush1.bf16.msra.mxu0 0
    %358 = vmatprep.subr.bf16.mxu0 0
    %359 = vmatpush1.bf16.msra.mxu0 0
    %360 = vmatprep.subr.bf16.mxu0 0
    %361 = vmatpush1.bf16.msra.mxu0 0
    %362 = vmatprep.subr.bf16.mxu0 0
    %363 = vmatpush1.bf16.msra.mxu0 0
    %364 = vmatprep.subr.bf16.mxu0 0
    %365 = vmatpush1.bf16.msra.mxu0 0
    %366 = vmatprep.subr.bf16.mxu0 0
    %367 = vmatpush1.bf16.msra.mxu0 0
    %368 = vmatprep.subr.bf16.mxu0 0
    %369 = vmatpush1.bf16.msra.mxu0 %v353
    %370 = vmatprep.subr.bf16.mxu0 0
    %371 = vmatpush1.bf16.msra.mxu0 %v352
    %372 = vmatprep.subr.bf16.mxu0 0
    %373 = vmatpush2.bf16.msra.mxu0 0
    %374 = vmatprep.subr.bf16.mxu0 0
    %375 = vmatpush2.bf16.msra.mxu0 0
    %376 = vmatprep.subr.bf16.mxu0 0
    %377 = vmatpush2.bf16.msra.mxu0 0
    %378 = vmatprep.subr.bf16.mxu0 0
    %379 = vmatpush2.bf16.msra.mxu0 0
    %380 = vmatprep.subr.bf16.mxu0 0
    %381 = vmatpush2.bf16.msra.mxu0 0
    %382 = vmatprep.subr.bf16.mxu0 0
    %383 = vmatpush2.bf16.msra.mxu0 0
    %384 = vmatprep.subr.bf16.mxu0 0
    %385 = vmatpush2.bf16.msra.mxu0 0
    %386 = vmatprep.subr.bf16.mxu0 0
    %387 = vmatpush2.bf16.msra.mxu0 0
    %388 = vmatprep.mubr.bf16.mxu0 0
    %389 = vmatmul.mubr.bf16.gmra.mxu0 %v198
    %v390 = vpop.f32.mrf.mxu0
    %v391 = vadd.f32 0.0, %v390
    %v392 = vpop.f32.mrf.mxu0
    %v393 = vpop.f32.mrf.mxu0
    %v394 = vpop.f32.mrf.mxu0
    %395 = vdwg.mxu0
    %v396 = vpack.c.bf16 %v235, %v235
    %v397 = vpack.c.bf16 %v287, %v287
    %v398 = vpack.c.bf16 %v339, %v339
    %v399 = vpack.c.bf16 %v391, %v391
    %v401 = vsel %vm196, %v396, 0
    %v404 = vsel %vm196, %v180, 0
    %v407 = vsel %vm196, %v181, 0
    %v410 = vsel %vm196, %v182, 0
    %v413 = vsel %vm196, %v183, 0
    %415 = vmatprep.subr.bf16.mxu0 0
    %416 = vmatpush1.bf16.xpose.msra.mxu0 0
    %417 = vmatprep.subr.bf16.mxu0 0
    %418 = vmatpush1.bf16.xpose.msra.mxu0 0
    %419 = vmatprep.subr.bf16.mxu0 0
    %420 = vmatpush1.bf16.xpose.msra.mxu0 0
    %421 = vmatprep.subr.bf16.mxu0 0
    %422 = vmatpush1.bf16.xpose.msra.mxu0 0
    %423 = vmatprep.subr.bf16.mxu0 0
    %424 = vmatpush1.bf16.xpose.msra.mxu0 %v413
    %425 = vmatprep.subr.bf16.mxu0 0
    %426 = vmatpush1.bf16.xpose.msra.mxu0 %v410
    %427 = vmatprep.subr.bf16.mxu0 0
    %428 = vmatpush1.bf16.xpose.msra.mxu0 %v407
    %429 = vmatprep.subr.bf16.mxu0 0
    %430 = vmatpush1.bf16.xpose.msra.mxu0 %v404
    %431 = vmatprep.subr.bf16.mxu0 0
    %432 = vmatpush2.bf16.xpose.msra.mxu0 0
    %433 = vmatprep.subr.bf16.mxu0 0
    %434 = vmatpush2.bf16.xpose.msra.mxu0 0
    %435 = vmatprep.subr.bf16.mxu0 0
    %436 = vmatpush2.bf16.xpose.msra.mxu0 0
    %437 = vmatprep.subr.bf16.mxu0 0
    %438 = vmatpush2.bf16.xpose.msra.mxu0 0
    %439 = vmatprep.subr.bf16.mxu0 0
    %440 = vmatpush2.bf16.xpose.msra.mxu0 0
    %441 = vmatprep.subr.bf16.mxu0 0
    %442 = vmatpush2.bf16.xpose.msra.mxu0 0
    %443 = vmatprep.subr.bf16.mxu0 0
    %444 = vmatpush2.bf16.xpose.msra.mxu0 0
    %445 = vmatprep.subr.bf16.mxu0 0
    %446 = vmatpush2.bf16.xpose.msra.mxu0 0
    %447 = vmatprep.mubr.bf16.mxu0 0
    %448 = vmatmul.mubr.bf16.gmra.mxu0 %v401
    %v449 = vpop.f32.mrf.mxu0
    %v450 = vadd.f32 0.0, %v449
    %v451 = vpop.f32.mrf.mxu0
    %v452 = vpop.f32.mrf.mxu0
    %v453 = vpop.f32.mrf.mxu0
    %454 = vdwg.mxu0
    %v456 = vsel %vm196, %v397, 0
    %458 = vmatprep.subr.bf16.mxu0 0
    %459 = vmatpush1.bf16.xpose.msra.mxu0 0
    %460 = vmatprep.subr.bf16.mxu0 0
    %461 = vmatpush1.bf16.xpose.msra.mxu0 0
    %462 = vmatprep.subr.bf16.mxu0 0
    %463 = vmatpush1.bf16.xpose.msra.mxu0 0
    %464 = vmatprep.subr.bf16.mxu0 0
    %465 = vmatpush1.bf16.xpose.msra.mxu0 0
    %466 = vmatprep.subr.bf16.mxu0 0
    %467 = vmatpush1.bf16.xpose.msra.mxu0 %v413
    %468 = vmatprep.subr.bf16.mxu0 0
    %469 = vmatpush1.bf16.xpose.msra.mxu0 %v410
    %470 = vmatprep.subr.bf16.mxu0 0
    %471 = vmatpush1.bf16.xpose.msra.mxu0 %v407
    %472 = vmatprep.subr.bf16.mxu0 0
    %473 = vmatpush1.bf16.xpose.msra.mxu0 %v404
    %474 = vmatprep.subr.bf16.mxu0 0
    %475 = vmatpush2.bf16.xpose.msra.mxu0 0
    %476 = vmatprep.subr.bf16.mxu0 0
    %477 = vmatpush2.bf16.xpose.msra.mxu0 0
    %478 = vmatprep.subr.bf16.mxu0 0
    %479 = vmatpush2.bf16.xpose.msra.mxu0 0
    %480 = vmatprep.subr.bf16.mxu0 0
    %481 = vmatpush2.bf16.xpose.msra.mxu0 0
    %482 = vmatprep.subr.bf16.mxu0 0
    %483 = vmatpush2.bf16.xpose.msra.mxu0 0
    %484 = vmatprep.subr.bf16.mxu0 0
    %485 = vmatpush2.bf16.xpose.msra.mxu0 0
    %486 = vmatprep.subr.bf16.mxu0 0
    %487 = vmatpush2.bf16.xpose.msra.mxu0 0
    %488 = vmatprep.subr.bf16.mxu0 0
    %489 = vmatpush2.bf16.xpose.msra.mxu0 0
    %490 = vmatprep.mubr.bf16.mxu0 0
    %491 = vmatmul.mubr.bf16.gmra.mxu0 %v456
    %v492 = vpop.f32.mrf.mxu0
    %v493 = vadd.f32 0.0, %v492
    %v494 = vpop.f32.mrf.mxu0
    %v495 = vpop.f32.mrf.mxu0
    %v496 = vpop.f32.mrf.mxu0
    %497 = vdwg.mxu0
    %v499 = vsel %vm196, %v398, 0
    %501 = vmatprep.subr.bf16.mxu0 0
    %502 = vmatpush1.bf16.xpose.msra.mxu0 0
    %503 = vmatprep.subr.bf16.mxu0 0
    %504 = vmatpush1.bf16.xpose.msra.mxu0 0
    %505 = vmatprep.subr.bf16.mxu0 0
    %506 = vmatpush1.bf16.xpose.msra.mxu0 0
    %507 = vmatprep.subr.bf16.mxu0 0
    %508 = vmatpush1.bf16.xpose.msra.mxu0 0
    %509 = vmatprep.subr.bf16.mxu0 0
    %510 = vmatpush1.bf16.xpose.msra.mxu0 %v413
    %511 = vmatprep.subr.bf16.mxu0 0
    %512 = vmatpush1.bf16.xpose.msra.mxu0 %v410
    %513 = vmatprep.subr.bf16.mxu0 0
    %514 = vmatpush1.bf16.xpose.msra.mxu0 %v407
    %515 = vmatprep.subr.bf16.mxu0 0
    %516 = vmatpush1.bf16.xpose.msra.mxu0 %v404
    %517 = vmatprep.subr.bf16.mxu0 0
    %518 = vmatpush2.bf16.xpose.msra.mxu0 0
    %519 = vmatprep.subr.bf16.mxu0 0
    %520 = vmatpush2.bf16.xpose.msra.mxu0 0
    %521 = vmatprep.subr.bf16.mxu0 0
    %522 = vmatpush2.bf16.xpose.msra.mxu0 0
    %523 = vmatprep.subr.bf16.mxu0 0
    %524 = vmatpush2.bf16.xpose.msra.mxu0 0
    %525 = vmatprep.subr.bf16.mxu0 0
    %526 = vmatpush2.bf16.xpose.msra.mxu0 0
    %527 = vmatprep.subr.bf16.mxu0 0
    %528 = vmatpush2.bf16.xpose.msra.mxu0 0
    %529 = vmatprep.subr.bf16.mxu0 0
    %530 = vmatpush2.bf16.xpose.msra.mxu0 0
    %531 = vmatprep.subr.bf16.mxu0 0
    %532 = vmatpush2.bf16.xpose.msra.mxu0 0
    %533 = vmatprep.mubr.bf16.mxu0 0
    %534 = vmatmul.mubr.bf16.gmra.mxu0 %v499
    %v535 = vpop.f32.mrf.mxu0
    %v536 = vadd.f32 0.0, %v535
    %v537 = vpop.f32.mrf.mxu0
    %v538 = vpop.f32.mrf.mxu0
    %v539 = vpop.f32.mrf.mxu0
    %540 = vdwg.mxu0
    %v542 = vsel %vm196, %v399, 0
    %544 = vmatprep.subr.bf16.mxu0 0
    %545 = vmatpush1.bf16.xpose.msra.mxu0 0
    %546 = vmatprep.subr.bf16.mxu0 0
    %547 = vmatpush1.bf16.xpose.msra.mxu0 0
    %548 = vmatprep.subr.bf16.mxu0 0
    %549 = vmatpush1.bf16.xpose.msra.mxu0 0
    %550 = vmatprep.subr.bf16.mxu0 0
    %551 = vmatpush1.bf16.xpose.msra.mxu0 0
    %552 = vmatprep.subr.bf16.mxu0 0
    %553 = vmatpush1.bf16.xpose.msra.mxu0 %v413
    %554 = vmatprep.subr.bf16.mxu0 0
    %555 = vmatpush1.bf16.xpose.msra.mxu0 %v410
    %556 = vmatprep.subr.bf16.mxu0 0
    %557 = vmatpush1.bf16.xpose.msra.mxu0 %v407
    %558 = vmatprep.subr.bf16.mxu0 0
    %559 = vmatpush1.bf16.xpose.msra.mxu0 %v404
    %560 = vmatprep.subr.bf16.mxu0 0
    %561 = vmatpush2.bf16.xpose.msra.mxu0 0
    %562 = vmatprep.subr.bf16.mxu0 0
    %563 = vmatpush2.bf16.xpose.msra.mxu0 0
    %564 = vmatprep.subr.bf16.mxu0 0
    %565 = vmatpush2.bf16.xpose.msra.mxu0 0
    %566 = vmatprep.subr.bf16.mxu0 0
    %567 = vmatpush2.bf16.xpose.msra.mxu0 0
    %568 = vmatprep.subr.bf16.mxu0 0
    %569 = vmatpush2.bf16.xpose.msra.mxu0 0
    %570 = vmatprep.subr.bf16.mxu0 0
    %571 = vmatpush2.bf16.xpose.msra.mxu0 0
    %572 = vmatprep.subr.bf16.mxu0 0
    %573 = vmatpush2.bf16.xpose.msra.mxu0 0
    %574 = vmatprep.subr.bf16.mxu0 0
    %575 = vmatpush2.bf16.xpose.msra.mxu0 0
    %576 = vmatprep.mubr.bf16.mxu0 0
    %577 = vmatmul.mubr.bf16.gmra.mxu0 %v542
    %v578 = vpop.f32.mrf.mxu0
    %v579 = vadd.f32 0.0, %v578
    %v580 = vpop.f32.mrf.mxu0
    %v581 = vpop.f32.mrf.mxu0
    %v582 = vpop.f32.mrf.mxu0
    %583 = vdwg.mxu0
    %v584 = vsel %vm105, %v450, -inf
    %585 = vmax.xlane.f32.xlu0 %v584
    %v586 = vpop.xlane.xlu0 %585
    %v587 = vsel %vm105, %v493, -inf
    %588 = vmax.xlane.f32.xlu0 %v587
    %v589 = vpop.xlane.xlu0 %588
    %v590 = vsel %vm105, %v536, -inf
    %591 = vmax.xlane.f32.xlu0 %v590
    %v592 = vpop.xlane.xlu0 %591
    %v593 = vsel %vm105, %v579, -inf
    %594 = vmax.xlane.f32.xlu0 %v593
    %v595 = vpop.xlane.xlu0 %594
    %v596 = vsub.f32 %v450, %v586
    %v597 = vsub.f32 %v493, %v589
    %v598 = vsub.f32 %v536, %v592
    %v599 = vsub.f32 %v579, %v595
    %v600 = vmul.f32 %v596, 1.442695
    %v601 = vpow.pop %v600
    %v602 = vmul.f32 %v597, 1.442695
    %v603 = vpow.pop %v602
    %v604 = vmul.f32 %v598, 1.442695
    %v605 = vpow.pop %v604
    %v606 = vmul.f32 %v599, 1.442695
    %v607 = vpow.pop %v606
    %v608 = vsel %vm105, %v601, 0.0
    %609 = vadd.xlane.f32.xlu0 %v608
    %v610 = vpop.xlane.xlu0 %609
    %v611 = vsel %vm105, %v603, 0.0
    %612 = vadd.xlane.f32.xlu0 %v611
    %v613 = vpop.xlane.xlu0 %612
    %v614 = vsel %vm105, %v605, 0.0
    %615 = vadd.xlane.f32.xlu0 %v614
    %v616 = vpop.xlane.xlu0 %615
    %v617 = vsel %vm105, %v607, 0.0
    %618 = vadd.xlane.f32.xlu0 %v617
    %v619 = vpop.xlane.xlu0 %618
    %v620 = vrcp.pop %v610
    %v621 = vrcp.pop %v613
    %v622 = vrcp.pop %v616
    %v623 = vrcp.pop %v619
    %v624 = vmul.f32 %v601, %v620
    %v625 = vmul.f32 %v603, %v621
    %v626 = vmul.f32 %v605, %v622
    %v627 = vmul.f32 %v607, %v623
    %v628 = vpack.c.bf16 %v624, %v624
    %v629 = vpack.c.bf16 %v625, %v625
    %v630 = vpack.c.bf16 %v626, %v626
    %v631 = vpack.c.bf16 %v627, %v627
    %v633 = vsel %vm105, %v628, 0
    %635 = vmatprep.subr.bf16.mxu0 0
    %636 = vmatpush1.bf16.msra.mxu0 0
    %637 = vmatprep.subr.bf16.mxu0 0
    %638 = vmatpush1.bf16.msra.mxu0 0
    %639 = vmatprep.subr.bf16.mxu0 0
    %640 = vmatpush1.bf16.msra.mxu0 0
    %641 = vmatprep.subr.bf16.mxu0 0
    %642 = vmatpush1.bf16.msra.mxu0 0
    %643 = vmatprep.subr.bf16.mxu0 0
    %644 = vmatpush1.bf16.msra.mxu0 %v183
    %645 = vmatprep.subr.bf16.mxu0 0
    %646 = vmatpush1.bf16.msra.mxu0 %v182
    %647 = vmatprep.subr.bf16.mxu0 0
    %648 = vmatpush1.bf16.msra.mxu0 %v181
    %649 = vmatprep.subr.bf16.mxu0 0
    %650 = vmatpush1.bf16.msra.mxu0 %v180
    %651 = vmatprep.subr.bf16.mxu0 0
    %652 = vmatpush2.bf16.msra.mxu0 0
    %653 = vmatprep.subr.bf16.mxu0 0
    %654 = vmatpush2.bf16.msra.mxu0 0
    %655 = vmatprep.subr.bf16.mxu0 0
    %656 = vmatpush2.bf16.msra.mxu0 0
    %657 = vmatprep.subr.bf16.mxu0 0
    %658 = vmatpush2.bf16.msra.mxu0 0
    %659 = vmatprep.subr.bf16.mxu0 0
    %660 = vmatpush2.bf16.msra.mxu0 0
    %661 = vmatprep.subr.bf16.mxu0 0
    %662 = vmatpush2.bf16.msra.mxu0 0
    %663 = vmatprep.subr.bf16.mxu0 0
    %664 = vmatpush2.bf16.msra.mxu0 0
    %665 = vmatprep.subr.bf16.mxu0 0
    %666 = vmatpush2.bf16.msra.mxu0 0
    %667 = vmatprep.mubr.bf16.mxu0 0
    %668 = vmatmul.mubr.bf16.gmra.mxu0 %v633
    %v669 = vpop.f32.mrf.mxu0
    %v670 = vadd.f32 0.0, %v669
    %v671 = vpop.f32.mrf.mxu0
    %v672 = vpop.f32.mrf.mxu0
    %v673 = vpop.f32.mrf.mxu0
    %674 = vdwg.mxu0
    %v676 = vsel %vm105, %v629, 0
    %678 = vmatprep.subr.bf16.mxu0 0
    %679 = vmatpush1.bf16.msra.mxu0 0
    %680 = vmatprep.subr.bf16.mxu0 0
    %681 = vmatpush1.bf16.msra.mxu0 0
    %682 = vmatprep.subr.bf16.mxu0 0
    %683 = vmatpush1.bf16.msra.mxu0 0
    %684 = vmatprep.subr.bf16.mxu0 0
    %685 = vmatpush1.bf16.msra.mxu0 0
    %686 = vmatprep.subr.bf16.mxu0 0
    %687 = vmatpush1.bf16.msra.mxu0 %v183
    %688 = vmatprep.subr.bf16.mxu0 0
    %689 = vmatpush1.bf16.msra.mxu0 %v182
    %690 = vmatprep.subr.bf16.mxu0 0
    %691 = vmatpush1.bf16.msra.mxu0 %v181
    %692 = vmatprep.subr.bf16.mxu0 0
    %693 = vmatpush1.bf16.msra.mxu0 %v180
    %694 = vmatprep.subr.bf16.mxu0 0
    %695 = vmatpush2.bf16.msra.mxu0 0
    %696 = vmatprep.subr.bf16.mxu0 0
    %697 = vmatpush2.bf16.msra.mxu0 0
    %698 = vmatprep.subr.bf16.mxu0 0
    %699 = vmatpush2.bf16.msra.mxu0 0
    %700 = vmatprep.subr.bf16.mxu0 0
    %701 = vmatpush2.bf16.msra.mxu0 0
    %702 = vmatprep.subr.bf16.mxu0 0
    %703 = vmatpush2.bf16.msra.mxu0 0
    %704 = vmatprep.subr.bf16.mxu0 0
    %705 = vmatpush2.bf16.msra.mxu0 0
    %706 = vmatprep.subr.bf16.mxu0 0
    %707 = vmatpush2.bf16.msra.mxu0 0
    %708 = vmatprep.subr.bf16.mxu0 0
    %709 = vmatpush2.bf16.msra.mxu0 0
    %710 = vmatprep.mubr.bf16.mxu0 0
    %711 = vmatmul.mubr.bf16.gmra.mxu0 %v676
    %v712 = vpop.f32.mrf.mxu0
    %v713 = vadd.f32 0.0, %v712
    %v714 = vpop.f32.mrf.mxu0
    %v715 = vpop.f32.mrf.mxu0
    %v716 = vpop.f32.mrf.mxu0
    %717 = vdwg.mxu0
    %v719 = vsel %vm105, %v630, 0
    %721 = vmatprep.subr.bf16.mxu0 0
    %722 = vmatpush1.bf16.msra.mxu0 0
    %723 = vmatprep.subr.bf16.mxu0 0
    %724 = vmatpush1.bf16.msra.mxu0 0
    %725 = vmatprep.subr.bf16.mxu0 0
    %726 = vmatpush1.bf16.msra.mxu0 0
    %727 = vmatprep.subr.bf16.mxu0 0
    %728 = vmatpush1.bf16.msra.mxu0 0
    %729 = vmatprep.subr.bf16.mxu0 0
    %730 = vmatpush1.bf16.msra.mxu0 %v183
    %731 = vmatprep.subr.bf16.mxu0 0
    %732 = vmatpush1.bf16.msra.mxu0 %v182
    %733 = vmatprep.subr.bf16.mxu0 0
    %734 = vmatpush1.bf16.msra.mxu0 %v181
    %735 = vmatprep.subr.bf16.mxu0 0
    %736 = vmatpush1.bf16.msra.mxu0 %v180
    %737 = vmatprep.subr.bf16.mxu0 0
    %738 = vmatpush2.bf16.msra.mxu0 0
    %739 = vmatprep.subr.bf16.mxu0 0
    %740 = vmatpush2.bf16.msra.mxu0 0
    %741 = vmatprep.subr.bf16.mxu0 0
    %742 = vmatpush2.bf16.msra.mxu0 0
    %743 = vmatprep.subr.bf16.mxu0 0
    %744 = vmatpush2.bf16.msra.mxu0 0
    %745 = vmatprep.subr.bf16.mxu0 0
    %746 = vmatpush2.bf16.msra.mxu0 0
    %747 = vmatprep.subr.bf16.mxu0 0
    %748 = vmatpush2.bf16.msra.mxu0 0
    %749 = vmatprep.subr.bf16.mxu0 0
    %750 = vmatpush2.bf16.msra.mxu0 0
    %751 = vmatprep.subr.bf16.mxu0 0
    %752 = vmatpush2.bf16.msra.mxu0 0
    %753 = vmatprep.mubr.bf16.mxu0 0
    %754 = vmatmul.mubr.bf16.gmra.mxu0 %v719
    %v755 = vpop.f32.mrf.mxu0
    %v756 = vadd.f32 0.0, %v755
    %v757 = vpop.f32.mrf.mxu0
    %v758 = vpop.f32.mrf.mxu0
    %v759 = vpop.f32.mrf.mxu0
    %760 = vdwg.mxu0
    %v762 = vsel %vm105, %v631, 0
    %764 = vmatprep.subr.bf16.mxu0 0
    %765 = vmatpush1.bf16.msra.mxu0 0
    %766 = vmatprep.subr.bf16.mxu0 0
    %767 = vmatpush1.bf16.msra.mxu0 0
    %768 = vmatprep.subr.bf16.mxu0 0
    %769 = vmatpush1.bf16.msra.mxu0 0
    %770 = vmatprep.subr.bf16.mxu0 0
    %771 = vmatpush1.bf16.msra.mxu0 0
    %772 = vmatprep.subr.bf16.mxu0 0
    %773 = vmatpush1.bf16.msra.mxu0 %v183
    %774 = vmatprep.subr.bf16.mxu0 0
    %775 = vmatpush1.bf16.msra.mxu0 %v182
    %776 = vmatprep.subr.bf16.mxu0 0
    %777 = vmatpush1.bf16.msra.mxu0 %v181
    %778 = vmatprep.subr.bf16.mxu0 0
    %779 = vmatpush1.bf16.msra.mxu0 %v180
    %780 = vmatprep.subr.bf16.mxu0 0
    %781 = vmatpush2.bf16.msra.mxu0 0
    %782 = vmatprep.subr.bf16.mxu0 0
    %783 = vmatpush2.bf16.msra.mxu0 0
    %784 = vmatprep.subr.bf16.mxu0 0
    %785 = vmatpush2.bf16.msra.mxu0 0
    %786 = vmatprep.subr.bf16.mxu0 0
    %787 = vmatpush2.bf16.msra.mxu0 0
    %788 = vmatprep.subr.bf16.mxu0 0
    %789 = vmatpush2.bf16.msra.mxu0 0
    %790 = vmatprep.subr.bf16.mxu0 0
    %791 = vmatpush2.bf16.msra.mxu0 0
    %792 = vmatprep.subr.bf16.mxu0 0
    %793 = vmatpush2.bf16.msra.mxu0 0
    %794 = vmatprep.subr.bf16.mxu0 0
    %795 = vmatpush2.bf16.msra.mxu0 0
    %796 = vmatprep.mubr.bf16.mxu0 0
    %797 = vmatmul.mubr.bf16.gmra.mxu0 %v762
    %v798 = vpop.f32.mrf.mxu0
    %v799 = vadd.f32 0.0, %v798
    %v800 = vpop.f32.mrf.mxu0
    %v801 = vpop.f32.mrf.mxu0
    %v802 = vpop.f32.mrf.mxu0
    %803 = vdwg.mxu0
    %v804 = vpack.c.bf16 %v670, %v670
    %v805 = vpack.c.bf16 %v713, %v713
    %v806 = vpack.c.bf16 %v756, %v756
    %v807 = vpack.c.bf16 %v799, %v799
    %v812 = vunpack.c.l.b16 %v79
    %v813 = vunpack.c.l.b16 %v80
    %v814 = vunpack.c.l.b16 %v81
    %v815 = vunpack.c.l.b16 %v82
    %v816 = vpack.c.b16 %v813, %v812
    %v817 = vpack.c.b16 %v815, %v814
    %v821 = vsel %vm196, %v804, 0
    %823 = vmatprep.subr.bf16.mxu0 0
    %824 = vmatpush1.bf16.msra.mxu0 0
    %825 = vmatprep.subr.bf16.mxu0 0
    %826 = vmatpush1.bf16.msra.mxu0 0
    %827 = vmatprep.subr.bf16.mxu0 0
    %828 = vmatpush1.bf16.msra.mxu0 0
    %829 = vmatprep.subr.bf16.mxu0 0
    %830 = vmatpush1.bf16.msra.mxu0 0
    %831 = vmatprep.subr.bf16.mxu0 0
    %832 = vmatpush1.bf16.msra.mxu0 0
    %833 = vmatprep.subr.bf16.mxu0 0
    %834 = vmatpush1.bf16.msra.mxu0 0
    %835 = vmatprep.subr.bf16.mxu0 0
    %836 = vmatpush1.bf16.msra.mxu0 %v817
    %837 = vmatprep.subr.bf16.mxu0 0
    %838 = vmatpush1.bf16.msra.mxu0 %v816
    %839 = vmatprep.subr.bf16.mxu0 0
    %840 = vmatpush2.bf16.msra.mxu0 0
    %841 = vmatprep.subr.bf16.mxu0 0
    %842 = vmatpush2.bf16.msra.mxu0 0
    %843 = vmatprep.subr.bf16.mxu0 0
    %844 = vmatpush2.bf16.msra.mxu0 0
    %845 = vmatprep.subr.bf16.mxu0 0
    %846 = vmatpush2.bf16.msra.mxu0 0
    %847 = vmatprep.subr.bf16.mxu0 0
    %848 = vmatpush2.bf16.msra.mxu0 0
    %849 = vmatprep.subr.bf16.mxu0 0
    %850 = vmatpush2.bf16.msra.mxu0 0
    %851 = vmatprep.subr.bf16.mxu0 0
    %852 = vmatpush2.bf16.msra.mxu0 0
    %853 = vmatprep.subr.bf16.mxu0 0
    %854 = vmatpush2.bf16.msra.mxu0 0
    %855 = vmatprep.mubr.bf16.mxu0 0
    %856 = vmatmul.mubr.bf16.gmra.mxu0 %v821
    %v857 = vpop.f32.mrf.mxu0
    %v858 = vadd.f32 0.0, %v857
    %v859 = vpop.f32.mrf.mxu0
    %v860 = vpop.f32.mrf.mxu0
    %v861 = vpop.f32.mrf.mxu0
    %862 = vdwg.mxu0
    %v867 = vunpack.c.l.b16 %v83
    %v868 = vunpack.c.l.b16 %v84
    %v869 = vunpack.c.l.b16 %v85
    %v870 = vunpack.c.l.b16 %v86
    %v871 = vpack.c.b16 %v868, %v867
    %v872 = vpack.c.b16 %v870, %v869
    %v876 = vsel %vm196, %v805, 0
    %878 = vmatprep.subr.bf16.mxu0 0
    %879 = vmatpush1.bf16.msra.mxu0 0
    %880 = vmatprep.subr.bf16.mxu0 0
    %881 = vmatpush1.bf16.msra.mxu0 0
    %882 = vmatprep.subr.bf16.mxu0 0
    %883 = vmatpush1.bf16.msra.mxu0 0
    %884 = vmatprep.subr.bf16.mxu0 0
    %885 = vmatpush1.bf16.msra.mxu0 0
    %886 = vmatprep.subr.bf16.mxu0 0
    %887 = vmatpush1.bf16.msra.mxu0 0
    %888 = vmatprep.subr.bf16.mxu0 0
    %889 = vmatpush1.bf16.msra.mxu0 0
    %890 = vmatprep.subr.bf16.mxu0 0
    %891 = vmatpush1.bf16.msra.mxu0 %v872
    %892 = vmatprep.subr.bf16.mxu0 0
    %893 = vmatpush1.bf16.msra.mxu0 %v871
    %894 = vmatprep.subr.bf16.mxu0 0
    %895 = vmatpush2.bf16.msra.mxu0 0
    %896 = vmatprep.subr.bf16.mxu0 0
    %897 = vmatpush2.bf16.msra.mxu0 0
    %898 = vmatprep.subr.bf16.mxu0 0
    %899 = vmatpush2.bf16.msra.mxu0 0
    %900 = vmatprep.subr.bf16.mxu0 0
    %901 = vmatpush2.bf16.msra.mxu0 0
    %902 = vmatprep.subr.bf16.mxu0 0
    %903 = vmatpush2.bf16.msra.mxu0 0
    %904 = vmatprep.subr.bf16.mxu0 0
    %905 = vmatpush2.bf16.msra.mxu0 0
    %906 = vmatprep.subr.bf16.mxu0 0
    %907 = vmatpush2.bf16.msra.mxu0 0
    %908 = vmatprep.subr.bf16.mxu0 0
    %909 = vmatpush2.bf16.msra.mxu0 0
    %910 = vmatprep.mubr.bf16.mxu0 0
    %911 = vmatmul.mubr.bf16.gmra.mxu0 %v876
    %v912 = vpop.f32.mrf.mxu0
    %v913 = vadd.f32 0.0, %v912
    %v914 = vpop.f32.mrf.mxu0
    %v915 = vpop.f32.mrf.mxu0
    %v916 = vpop.f32.mrf.mxu0
    %917 = vdwg.mxu0
    %v922 = vunpack.c.l.b16 %v87
    %v923 = vunpack.c.l.b16 %v88
    %v924 = vunpack.c.l.b16 %v89
    %v925 = vunpack.c.l.b16 %v90
    %v926 = vpack.c.b16 %v923, %v922
    %v927 = vpack.c.b16 %v925, %v924
    %v931 = vsel %vm196, %v806, 0
    %933 = vmatprep.subr.bf16.mxu0 0
    %934 = vmatpush1.bf16.msra.mxu0 0
    %935 = vmatprep.subr.bf16.mxu0 0
    %936 = vmatpush1.bf16.msra.mxu0 0
    %937 = vmatprep.subr.bf16.mxu0 0
    %938 = vmatpush1.bf16.msra.mxu0 0
    %939 = vmatprep.subr.bf16.mxu0 0
    %940 = vmatpush1.bf16.msra.mxu0 0
    %941 = vmatprep.subr.bf16.mxu0 0
    %942 = vmatpush1.bf16.msra.mxu0 0
    %943 = vmatprep.subr.bf16.mxu0 0
    %944 = vmatpush1.bf16.msra.mxu0 0
    %945 = vmatprep.subr.bf16.mxu0 0
    %946 = vmatpush1.bf16.msra.mxu0 %v927
    %947 = vmatprep.subr.bf16.mxu0 0
    %948 = vmatpush1.bf16.msra.mxu0 %v926
    %949 = vmatprep.subr.bf16.mxu0 0
    %950 = vmatpush2.bf16.msra.mxu0 0
    %951 = vmatprep.subr.bf16.mxu0 0
    %952 = vmatpush2.bf16.msra.mxu0 0
    %953 = vmatprep.subr.bf16.mxu0 0
    %954 = vmatpush2.bf16.msra.mxu0 0
    %955 = vmatprep.subr.bf16.mxu0 0
    %956 = vmatpush2.bf16.msra.mxu0 0
    %957 = vmatprep.subr.bf16.mxu0 0
    %958 = vmatpush2.bf16.msra.mxu0 0
    %959 = vmatprep.subr.bf16.mxu0 0
    %960 = vmatpush2.bf16.msra.mxu0 0
    %961 = vmatprep.subr.bf16.mxu0 0
    %962 = vmatpush2.bf16.msra.mxu0 0
    %963 = vmatprep.subr.bf16.mxu0 0
    %964 = vmatpush2.bf16.msra.mxu0 0
    %965 = vmatprep.mubr.bf16.mxu0 0
    %966 = vmatmul.mubr.bf16.gmra.mxu0 %v931
    %v967 = vpop.f32.mrf.mxu0
    %v968 = vadd.f32 0.0, %v967
    %v969 = vpop.f32.mrf.mxu0
    %v970 = vpop.f32.mrf.mxu0
    %v971 = vpop.f32.mrf.mxu0
    %972 = vdwg.mxu0
    %v977 = vunpack.c.l.b16 %v91
    %v978 = vunpack.c.l.b16 %v92
    %v979 = vunpack.c.l.b16 %v93
    %v980 = vunpack.c.l.b16 %v94
    %v981 = vpack.c.b16 %v978, %v977
    %v982 = vpack.c.b16 %v980, %v979
    %v986 = vsel %vm196, %v807, 0
    %988 = vmatprep.subr.bf16.mxu0 0
    %989 = vmatpush1.bf16.msra.mxu0 0
    %990 = vmatprep.subr.bf16.mxu0 0
    %991 = vmatpush1.bf16.msra.mxu0 0
    %992 = vmatprep.subr.bf16.mxu0 0
    %993 = vmatpush1.bf16.msra.mxu0 0
    %994 = vmatprep.subr.bf16.mxu0 0
    %995 = vmatpush1.bf16.msra.mxu0 0
    %996 = vmatprep.subr.bf16.mxu0 0
    %997 = vmatpush1.bf16.msra.mxu0 0
    %998 = vmatprep.subr.bf16.mxu0 0
    %999 = vmatpush1.bf16.msra.mxu0 0
    %1000 = vmatprep.subr.bf16.mxu0 0
    %1001 = vmatpush1.bf16.msra.mxu0 %v982
    %1002 = vmatprep.subr.bf16.mxu0 0
    %1003 = vmatpush1.bf16.msra.mxu0 %v981
    %1004 = vmatprep.subr.bf16.mxu0 0
    %1005 = vmatpush2.bf16.msra.mxu0 0
    %1006 = vmatprep.subr.bf16.mxu0 0
    %1007 = vmatpush2.bf16.msra.mxu0 0
    %1008 = vmatprep.subr.bf16.mxu0 0
    %1009 = vmatpush2.bf16.msra.mxu0 0
    %1010 = vmatprep.subr.bf16.mxu0 0
    %1011 = vmatpush2.bf16.msra.mxu0 0
    %1012 = vmatprep.subr.bf16.mxu0 0
    %1013 = vmatpush2.bf16.msra.mxu0 0
    %1014 = vmatprep.subr.bf16.mxu0 0
    %1015 = vmatpush2.bf16.msra.mxu0 0
    %1016 = vmatprep.subr.bf16.mxu0 0
    %1017 = vmatpush2.bf16.msra.mxu0 0
    %1018 = vmatprep.subr.bf16.mxu0 0
    %1019 = vmatpush2.bf16.msra.mxu0 0
    %1020 = vmatprep.mubr.bf16.mxu0 0
    %1021 = vmatmul.mubr.bf16.gmra.mxu0 %v986
    %v1022 = vpop.f32.mrf.mxu0
    %v1023 = vadd.f32 0.0, %v1022
    %v1024 = vpop.f32.mrf.mxu0
    %v1025 = vpop.f32.mrf.mxu0
    %v1026 = vpop.f32.mrf.mxu0
    %1027 = vdwg.mxu0
    %v1028 = vsel %vm196, %v858, 0.0
    %v1029 = vsel %vm196, %v913, 0.0
    %v1030 = vadd.f32 %v1028, %v1029
    %v1031 = vsel %vm196, %v968, 0.0
    %v1032 = vadd.f32 %v1030, %v1031
    %v1033 = vsel %vm196, %v1023, 0.0
    %v1034 = vadd.f32 %v1032, %v1033
    %v1035 = vadd.f32 %v1034, %v176
    %v1036 = vpack.c.bf16 %v1035, %v1035
    %1037 = vmatprep.subr.bf16.mxu0 0
    %1038 = vmatpush1.bf16.msra.mxu0 0
    %1039 = vmatprep.subr.bf16.mxu0 0
    %1040 = vmatpush1.bf16.msra.mxu0 0
    %1041 = vmatprep.subr.bf16.mxu0 0
    %1042 = vmatpush1.bf16.msra.mxu0 0
    %1043 = vmatprep.subr.bf16.mxu0 0
    %1044 = vmatpush1.bf16.msra.mxu0 0
    %1045 = vmatprep.subr.bf16.mxu0 0
    %1046 = vmatpush1.bf16.msra.mxu0 0
    %1047 = vmatprep.subr.bf16.mxu0 0
    %1048 = vmatpush1.bf16.msra.mxu0 0
    %1049 = vmatprep.subr.bf16.mxu0 0
    %1050 = vmatpush1.bf16.msra.mxu0 %v193
    %1051 = vmatprep.subr.bf16.mxu0 0
    %1052 = vmatpush1.bf16.msra.mxu0 %v192
    %1053 = vmatprep.subr.bf16.mxu0 0
    %1054 = vmatpush2.bf16.msra.mxu0 0
    %1055 = vmatprep.subr.bf16.mxu0 0
    %1056 = vmatpush2.bf16.msra.mxu0 0
    %1057 = vmatprep.subr.bf16.mxu0 0
    %1058 = vmatpush2.bf16.msra.mxu0 0
    %1059 = vmatprep.subr.bf16.mxu0 0
    %1060 = vmatpush2.bf16.msra.mxu0 0
    %1061 = vmatprep.subr.bf16.mxu0 0
    %1062 = vmatpush2.bf16.msra.mxu0 0
    %1063 = vmatprep.subr.bf16.mxu0 0
    %1064 = vmatpush2.bf16.msra.mxu0 0
    %1065 = vmatprep.subr.bf16.mxu0 0
    %1066 = vmatpush2.bf16.msra.mxu0 0
    %1067 = vmatprep.subr.bf16.mxu0 0
    %1068 = vmatpush2.bf16.msra.mxu0 0
    %1069 = vmatprep.mubr.bf16.mxu0 0
    %1070 = vmatmul.mubr.bf16.gmra.mxu0 %v404
    %v1071 = vpop.f32.mrf.mxu0
    %v1072 = vadd.f32 0.0, %v1071
    %v1073 = vpop.f32.mrf.mxu0
    %v1074 = vpop.f32.mrf.mxu0
    %v1075 = vadd.f32 0.0, %v1074
    %v1076 = vpop.f32.mrf.mxu0
    %1077 = vmatprep.mubr.bf16.mxu0 0
    %1078 = vmatmul.mubr.bf16.gmra.mxu0 %v407
    %v1079 = vpop.f32.mrf.mxu0
    %v1080 = vadd.f32 0.0, %v1079
    %v1081 = vpop.f32.mrf.mxu0
    %v1082 = vpop.f32.mrf.mxu0
    %v1083 = vadd.f32 0.0, %v1082
    %v1084 = vpop.f32.mrf.mxu0
    %1085 = vmatprep.mubr.bf16.mxu0 0
    %1086 = vmatmul.mubr.bf16.gmra.mxu0 %v410
    %v1087 = vpop.f32.mrf.mxu0
    %v1088 = vadd.f32 0.0, %v1087
    %v1089 = vpop.f32.mrf.mxu0
    %v1090 = vpop.f32.mrf.mxu0
    %v1091 = vadd.f32 0.0, %v1090
    %v1092 = vpop.f32.mrf.mxu0
    %1093 = vmatprep.mubr.bf16.mxu0 0
    %1094 = vmatmul.mubr.bf16.gmra.mxu0 %v413
    %v1095 = vpop.f32.mrf.mxu0
    %v1096 = vadd.f32 0.0, %v1095
    %v1097 = vpop.f32.mrf.mxu0
    %v1098 = vpop.f32.mrf.mxu0
    %v1099 = vadd.f32 0.0, %v1098
    %v1100 = vpop.f32.mrf.mxu0
    %1101 = vdwg.mxu0
    %1102 = vmatprep.subr.bf16.mxu0 0
    %1103 = vmatpush1.bf16.msra.mxu0 0
    %1104 = vmatprep.subr.bf16.mxu0 0
    %1105 = vmatpush1.bf16.msra.mxu0 0
    %1106 = vmatprep.subr.bf16.mxu0 0
    %1107 = vmatpush1.bf16.msra.mxu0 0
    %1108 = vmatprep.subr.bf16.mxu0 0
    %1109 = vmatpush1.bf16.msra.mxu0 0
    %1110 = vmatprep.subr.bf16.mxu0 0
    %1111 = vmatpush1.bf16.msra.mxu0 0
    %1112 = vmatprep.subr.bf16.mxu0 0
    %1113 = vmatpush1.bf16.msra.mxu0 0
    %1114 = vmatprep.subr.bf16.mxu0 0
    %1115 = vmatpush1.bf16.msra.mxu0 %v249
    %1116 = vmatprep.subr.bf16.mxu0 0
    %1117 = vmatpush1.bf16.msra.mxu0 %v248
    %1118 = vmatprep.subr.bf16.mxu0 0
    %1119 = vmatpush2.bf16.msra.mxu0 0
    %1120 = vmatprep.subr.bf16.mxu0 0
    %1121 = vmatpush2.bf16.msra.mxu0 0
    %1122 = vmatprep.subr.bf16.mxu0 0
    %1123 = vmatpush2.bf16.msra.mxu0 0
    %1124 = vmatprep.subr.bf16.mxu0 0
    %1125 = vmatpush2.bf16.msra.mxu0 0
    %1126 = vmatprep.subr.bf16.mxu0 0
    %1127 = vmatpush2.bf16.msra.mxu0 0
    %1128 = vmatprep.subr.bf16.mxu0 0
    %1129 = vmatpush2.bf16.msra.mxu0 0
    %1130 = vmatprep.subr.bf16.mxu0 0
    %1131 = vmatpush2.bf16.msra.mxu0 0
    %1132 = vmatprep.subr.bf16.mxu0 0
    %1133 = vmatpush2.bf16.msra.mxu0 0
    %1134 = vmatprep.mubr.bf16.mxu0 0
    %1135 = vmatmul.mubr.bf16.gmra.mxu0 %v404
    %v1136 = vpop.f32.mrf.mxu0
    %v1137 = vadd.f32 0.0, %v1136
    %v1138 = vpop.f32.mrf.mxu0
    %v1139 = vpop.f32.mrf.mxu0
    %v1140 = vadd.f32 0.0, %v1139
    %v1141 = vpop.f32.mrf.mxu0
    %1142 = vmatprep.mubr.bf16.mxu0 0
    %1143 = vmatmul.mubr.bf16.gmra.mxu0 %v407
    %v1144 = vpop.f32.mrf.mxu0
    %v1145 = vadd.f32 0.0, %v1144
    %v1146 = vpop.f32.mrf.mxu0
    %v1147 = vpop.f32.mrf.mxu0
    %v1148 = vadd.f32 0.0, %v1147
    %v1149 = vpop.f32.mrf.mxu0
    %1150 = vmatprep.mubr.bf16.mxu0 0
    %1151 = vmatmul.mubr.bf16.gmra.mxu0 %v410
    %v1152 = vpop.f32.mrf.mxu0
    %v1153 = vadd.f32 0.0, %v1152
    %v1154 = vpop.f32.mrf.mxu0
    %v1155 = vpop.f32.mrf.mxu0
    %v1156 = vadd.f32 0.0, %v1155
    %v1157 = vpop.f32.mrf.mxu0
    %1158 = vmatprep.mubr.bf16.mxu0 0
    %1159 = vmatmul.mubr.bf16.gmra.mxu0 %v413
    %v1160 = vpop.f32.mrf.mxu0
    %v1161 = vadd.f32 0.0, %v1160
    %v1162 = vpop.f32.mrf.mxu0
    %v1163 = vpop.f32.mrf.mxu0
    %v1164 = vadd.f32 0.0, %v1163
    %v1165 = vpop.f32.mrf.mxu0
    %1166 = vdwg.mxu0
    %1167 = vmatprep.subr.bf16.mxu0 0
    %1168 = vmatpush1.bf16.msra.mxu0 0
    %1169 = vmatprep.subr.bf16.mxu0 0
    %1170 = vmatpush1.bf16.msra.mxu0 0
    %1171 = vmatprep.subr.bf16.mxu0 0
    %1172 = vmatpush1.bf16.msra.mxu0 0
    %1173 = vmatprep.subr.bf16.mxu0 0
    %1174 = vmatpush1.bf16.msra.mxu0 0
    %1175 = vmatprep.subr.bf16.mxu0 0
    %1176 = vmatpush1.bf16.msra.mxu0 0
    %1177 = vmatprep.subr.bf16.mxu0 0
    %1178 = vmatpush1.bf16.msra.mxu0 0
    %1179 = vmatprep.subr.bf16.mxu0 0
    %1180 = vmatpush1.bf16.msra.mxu0 %v301
    %1181 = vmatprep.subr.bf16.mxu0 0
    %1182 = vmatpush1.bf16.msra.mxu0 %v300
    %1183 = vmatprep.subr.bf16.mxu0 0
    %1184 = vmatpush2.bf16.msra.mxu0 0
    %1185 = vmatprep.subr.bf16.mxu0 0
    %1186 = vmatpush2.bf16.msra.mxu0 0
    %1187 = vmatprep.subr.bf16.mxu0 0
    %1188 = vmatpush2.bf16.msra.mxu0 0
    %1189 = vmatprep.subr.bf16.mxu0 0
    %1190 = vmatpush2.bf16.msra.mxu0 0
    %1191 = vmatprep.subr.bf16.mxu0 0
    %1192 = vmatpush2.bf16.msra.mxu0 0
    %1193 = vmatprep.subr.bf16.mxu0 0
    %1194 = vmatpush2.bf16.msra.mxu0 0
    %1195 = vmatprep.subr.bf16.mxu0 0
    %1196 = vmatpush2.bf16.msra.mxu0 0
    %1197 = vmatprep.subr.bf16.mxu0 0
    %1198 = vmatpush2.bf16.msra.mxu0 0
    %1199 = vmatprep.mubr.bf16.mxu0 0
    %1200 = vmatmul.mubr.bf16.gmra.mxu0 %v404
    %v1201 = vpop.f32.mrf.mxu0
    %v1202 = vadd.f32 0.0, %v1201
    %v1203 = vpop.f32.mrf.mxu0
    %v1204 = vpop.f32.mrf.mxu0
    %v1205 = vadd.f32 0.0, %v1204
    %v1206 = vpop.f32.mrf.mxu0
    %1207 = vmatprep.mubr.bf16.mxu0 0
    %1208 = vmatmul.mubr.bf16.gmra.mxu0 %v407
    %v1209 = vpop.f32.mrf.mxu0
    %v1210 = vadd.f32 0.0, %v1209
    %v1211 = vpop.f32.mrf.mxu0
    %v1212 = vpop.f32.mrf.mxu0
    %v1213 = vadd.f32 0.0, %v1212
    %v1214 = vpop.f32.mrf.mxu0
    %1215 = vmatprep.mubr.bf16.mxu0 0
    %1216 = vmatmul.mubr.bf16.gmra.mxu0 %v410
    %v1217 = vpop.f32.mrf.mxu0
    %v1218 = vadd.f32 0.0, %v1217
    %v1219 = vpop.f32.mrf.mxu0
    %v1220 = vpop.f32.mrf.mxu0
    %v1221 = vadd.f32 0.0, %v1220
    %v1222 = vpop.f32.mrf.mxu0
    %1223 = vmatprep.mubr.bf16.mxu0 0
    %1224 = vmatmul.mubr.bf16.gmra.mxu0 %v413
    %v1225 = vpop.f32.mrf.mxu0
    %v1226 = vadd.f32 0.0, %v1225
    %v1227 = vpop.f32.mrf.mxu0
    %v1228 = vpop.f32.mrf.mxu0
    %v1229 = vadd.f32 0.0, %v1228
    %v1230 = vpop.f32.mrf.mxu0
    %1231 = vdwg.mxu0
    %1232 = vmatprep.subr.bf16.mxu0 0
    %1233 = vmatpush1.bf16.msra.mxu0 0
    %1234 = vmatprep.subr.bf16.mxu0 0
    %1235 = vmatpush1.bf16.msra.mxu0 0
    %1236 = vmatprep.subr.bf16.mxu0 0
    %1237 = vmatpush1.bf16.msra.mxu0 0
    %1238 = vmatprep.subr.bf16.mxu0 0
    %1239 = vmatpush1.bf16.msra.mxu0 0
    %1240 = vmatprep.subr.bf16.mxu0 0
    %1241 = vmatpush1.bf16.msra.mxu0 0
    %1242 = vmatprep.subr.bf16.mxu0 0
    %1243 = vmatpush1.bf16.msra.mxu0 0
    %1244 = vmatprep.subr.bf16.mxu0 0
    %1245 = vmatpush1.bf16.msra.mxu0 %v353
    %1246 = vmatprep.subr.bf16.mxu0 0
    %1247 = vmatpush1.bf16.msra.mxu0 %v352
    %1248 = vmatprep.subr.bf16.mxu0 0
    %1249 = vmatpush2.bf16.msra.mxu0 0
    %1250 = vmatprep.subr.bf16.mxu0 0
    %1251 = vmatpush2.bf16.msra.mxu0 0
    %1252 = vmatprep.subr.bf16.mxu0 0
    %1253 = vmatpush2.bf16.msra.mxu0 0
    %1254 = vmatprep.subr.bf16.mxu0 0
    %1255 = vmatpush2.bf16.msra.mxu0 0
    %1256 = vmatprep.subr.bf16.mxu0 0
    %1257 = vmatpush2.bf16.msra.mxu0 0
    %1258 = vmatprep.subr.bf16.mxu0 0
    %1259 = vmatpush2.bf16.msra.mxu0 0
    %1260 = vmatprep.subr.bf16.mxu0 0
    %1261 = vmatpush2.bf16.msra.mxu0 0
    %1262 = vmatprep.subr.bf16.mxu0 0
    %1263 = vmatpush2.bf16.msra.mxu0 0
    %1264 = vmatprep.mubr.bf16.mxu0 0
    %1265 = vmatmul.mubr.bf16.gmra.mxu0 %v404
    %v1266 = vpop.f32.mrf.mxu0
    %v1267 = vadd.f32 0.0, %v1266
    %v1268 = vpop.f32.mrf.mxu0
    %v1269 = vpop.f32.mrf.mxu0
    %v1270 = vadd.f32 0.0, %v1269
    %v1271 = vpop.f32.mrf.mxu0
    %1272 = vmatprep.mubr.bf16.mxu0 0
    %1273 = vmatmul.mubr.bf16.gmra.mxu0 %v407
    %v1274 = vpop.f32.mrf.mxu0
    %v1275 = vadd.f32 0.0, %v1274
    %v1276 = vpop.f32.mrf.mxu0
    %v1277 = vpop.f32.mrf.mxu0
    %v1278 = vadd.f32 0.0, %v1277
    %v1279 = vpop.f32.mrf.mxu0
    %1280 = vmatprep.mubr.bf16.mxu0 0
    %1281 = vmatmul.mubr.bf16.gmra.mxu0 %v410
    %v1282 = vpop.f32.mrf.mxu0
    %v1283 = vadd.f32 0.0, %v1282
    %v1284 = vpop.f32.mrf.mxu0
    %v1285 = vpop.f32.mrf.mxu0
    %v1286 = vadd.f32 0.0, %v1285
    %v1287 = vpop.f32.mrf.mxu0
    %1288 = vmatprep.mubr.bf16.mxu0 0
    %1289 = vmatmul.mubr.bf16.gmra.mxu0 %v413
    %v1290 = vpop.f32.mrf.mxu0
    %v1291 = vadd.f32 0.0, %v1290
    %v1292 = vpop.f32.mrf.mxu0
    %v1293 = vpop.f32.mrf.mxu0
    %v1294 = vadd.f32 0.0, %v1293
    %v1295 = vpop.f32.mrf.mxu0
    %1296 = vdwg.mxu0
    %v1297 = vpack.c.bf16 %v1075, %v1072
    %v1298 = vpack.c.bf16 %v1083, %v1080
    %v1299 = vpack.c.bf16 %v1091, %v1088
    %v1300 = vpack.c.bf16 %v1099, %v1096
    %v1301 = vpack.c.bf16 %v1140, %v1137
    %v1302 = vpack.c.bf16 %v1148, %v1145
    %v1303 = vpack.c.bf16 %v1156, %v1153
    %v1304 = vpack.c.bf16 %v1164, %v1161
    %v1305 = vpack.c.bf16 %v1205, %v1202
    %v1306 = vpack.c.bf16 %v1213, %v1210
    %v1307 = vpack.c.bf16 %v1221, %v1218
    %v1308 = vpack.c.bf16 %v1229, %v1226
    %v1309 = vpack.c.bf16 %v1270, %v1267
    %v1310 = vpack.c.bf16 %v1278, %v1275
    %v1311 = vpack.c.bf16 %v1286, %v1283
    %v1312 = vpack.c.bf16 %v1294, %v1291
    %v1314 = vsel %vm196, %v1297, 0
    %v1317 = vsel %vm196, %v1298, 0
    %v1320 = vsel %vm196, %v1299, 0
    %v1323 = vsel %vm196, %v1300, 0
    %v1326 = vsel %vm196, %v1036, 0
    %1328 = vmatprep.subr.bf16.mxu0 0
    %1329 = vmatpush1.bf16.xpose.msra.mxu0 0
    %1330 = vmatprep.subr.bf16.mxu0 0
    %1331 = vmatpush1.bf16.xpose.msra.mxu0 0
    %1332 = vmatprep.subr.bf16.mxu0 0
    %1333 = vmatpush1.bf16.xpose.msra.mxu0 0
    %1334 = vmatprep.subr.bf16.mxu0 0
    %1335 = vmatpush1.bf16.xpose.msra.mxu0 0
    %1336 = vmatprep.subr.bf16.mxu0 0
    %1337 = vmatpush1.bf16.xpose.msra.mxu0 0
    %1338 = vmatprep.subr.bf16.mxu0 0
    %1339 = vmatpush1.bf16.xpose.msra.mxu0 0
    %1340 = vmatprep.subr.bf16.mxu0 0
    %1341 = vmatpush1.bf16.xpose.msra.mxu0 0
    %1342 = vmatprep.subr.bf16.mxu0 0
    %1343 = vmatpush1.bf16.xpose.msra.mxu0 %v1326
    %1344 = vmatprep.subr.bf16.mxu0 0
    %1345 = vmatpush2.bf16.xpose.msra.mxu0 0
    %1346 = vmatprep.subr.bf16.mxu0 0
    %1347 = vmatpush2.bf16.xpose.msra.mxu0 0
    %1348 = vmatprep.subr.bf16.mxu0 0
    %1349 = vmatpush2.bf16.xpose.msra.mxu0 0
    %1350 = vmatprep.subr.bf16.mxu0 0
    %1351 = vmatpush2.bf16.xpose.msra.mxu0 0
    %1352 = vmatprep.subr.bf16.mxu0 0
    %1353 = vmatpush2.bf16.xpose.msra.mxu0 0
    %1354 = vmatprep.subr.bf16.mxu0 0
    %1355 = vmatpush2.bf16.xpose.msra.mxu0 0
    %1356 = vmatprep.subr.bf16.mxu0 0
    %1357 = vmatpush2.bf16.xpose.msra.mxu0 0
    %1358 = vmatprep.subr.bf16.mxu0 0
    %1359 = vmatpush2.bf16.xpose.msra.mxu0 0
    %1360 = vmatprep.mubr.bf16.mxu0 0
    %1361 = vmatmul.mubr.bf16.gmra.mxu0 %v1314
    %v1362 = vpop.f32.mrf.mxu0
    %v1363 = vadd.f32 0.0, %v1362
    %v1364 = vpop.f32.mrf.mxu0
    %v1365 = vpop.f32.mrf.mxu0
    %v1366 = vadd.f32 0.0, %v1365
    %v1367 = vpop.f32.mrf.mxu0
    %1368 = vmatprep.mubr.bf16.mxu0 0
    %1369 = vmatmul.mubr.bf16.gmra.mxu0 %v1317
    %v1370 = vpop.f32.mrf.mxu0
    %v1371 = vadd.f32 0.0, %v1370
    %v1372 = vpop.f32.mrf.mxu0
    %v1373 = vpop.f32.mrf.mxu0
    %v1374 = vadd.f32 0.0, %v1373
    %v1375 = vpop.f32.mrf.mxu0
    %1376 = vmatprep.mubr.bf16.mxu0 0
    %1377 = vmatmul.mubr.bf16.gmra.mxu0 %v1320
    %v1378 = vpop.f32.mrf.mxu0
    %v1379 = vadd.f32 0.0, %v1378
    %v1380 = vpop.f32.mrf.mxu0
    %v1381 = vpop.f32.mrf.mxu0
    %v1382 = vadd.f32 0.0, %v1381
    %v1383 = vpop.f32.mrf.mxu0
    %1384 = vmatprep.mubr.bf16.mxu0 0
    %1385 = vmatmul.mubr.bf16.gmra.mxu0 %v1323
    %v1386 = vpop.f32.mrf.mxu0
    %v1387 = vadd.f32 0.0, %v1386
    %v1388 = vpop.f32.mrf.mxu0
    %v1389 = vpop.f32.mrf.mxu0
    %v1390 = vadd.f32 0.0, %v1389
    %v1391 = vpop.f32.mrf.mxu0
    %1392 = vdwg.mxu0
    %v1394 = vsel %vm196, %v1301, 0
    %v1397 = vsel %vm196, %v1302, 0
    %v1400 = vsel %vm196, %v1303, 0
    %v1403 = vsel %vm196, %v1304, 0
    %1405 = vmatprep.subr.bf16.mxu0 0
    %1406 = vmatpush1.bf16.xpose.msra.mxu0 0
    %1407 = vmatprep.subr.bf16.mxu0 0
    %1408 = vmatpush1.bf16.xpose.msra.mxu0 0
    %1409 = vmatprep.subr.bf16.mxu0 0
    %1410 = vmatpush1.bf16.xpose.msra.mxu0 0
    %1411 = vmatprep.subr.bf16.mxu0 0
    %1412 = vmatpush1.bf16.xpose.msra.mxu0 0
    %1413 = vmatprep.subr.bf16.mxu0 0
    %1414 = vmatpush1.bf16.xpose.msra.mxu0 0
    %1415 = vmatprep.subr.bf16.mxu0 0
    %1416 = vmatpush1.bf16.xpose.msra.mxu0 0
    %1417 = vmatprep.subr.bf16.mxu0 0
    %1418 = vmatpush1.bf16.xpose.msra.mxu0 0
    %1419 = vmatprep.subr.bf16.mxu0 0
    %1420 = vmatpush1.bf16.xpose.msra.mxu0 %v1326
    %1421 = vmatprep.subr.bf16.mxu0 0
    %1422 = vmatpush2.bf16.xpose.msra.mxu0 0
    %1423 = vmatprep.subr.bf16.mxu0 0
    %1424 = vmatpush2.bf16.xpose.msra.mxu0 0
    %1425 = vmatprep.subr.bf16.mxu0 0
    %1426 = vmatpush2.bf16.xpose.msra.mxu0 0
    %1427 = vmatprep.subr.bf16.mxu0 0
    %1428 = vmatpush2.bf16.xpose.msra.mxu0 0
    %1429 = vmatprep.subr.bf16.mxu0 0
    %1430 = vmatpush2.bf16.xpose.msra.mxu0 0
    %1431 = vmatprep.subr.bf16.mxu0 0
    %1432 = vmatpush2.bf16.xpose.msra.mxu0 0
    %1433 = vmatprep.subr.bf16.mxu0 0
    %1434 = vmatpush2.bf16.xpose.msra.mxu0 0
    %1435 = vmatprep.subr.bf16.mxu0 0
    %1436 = vmatpush2.bf16.xpose.msra.mxu0 0
    %1437 = vmatprep.mubr.bf16.mxu0 0
    %1438 = vmatmul.mubr.bf16.gmra.mxu0 %v1394
    %v1439 = vpop.f32.mrf.mxu0
    %v1440 = vadd.f32 0.0, %v1439
    %v1441 = vpop.f32.mrf.mxu0
    %v1442 = vpop.f32.mrf.mxu0
    %v1443 = vadd.f32 0.0, %v1442
    %v1444 = vpop.f32.mrf.mxu0
    %1445 = vmatprep.mubr.bf16.mxu0 0
    %1446 = vmatmul.mubr.bf16.gmra.mxu0 %v1397
    %v1447 = vpop.f32.mrf.mxu0
    %v1448 = vadd.f32 0.0, %v1447
    %v1449 = vpop.f32.mrf.mxu0
    %v1450 = vpop.f32.mrf.mxu0
    %v1451 = vadd.f32 0.0, %v1450
    %v1452 = vpop.f32.mrf.mxu0
    %1453 = vmatprep.mubr.bf16.mxu0 0
    %1454 = vmatmul.mubr.bf16.gmra.mxu0 %v1400
    %v1455 = vpop.f32.mrf.mxu0
    %v1456 = vadd.f32 0.0, %v1455
    %v1457 = vpop.f32.mrf.mxu0
    %v1458 = vpop.f32.mrf.mxu0
    %v1459 = vadd.f32 0.0, %v1458
    %v1460 = vpop.f32.mrf.mxu0
    %1461 = vmatprep.mubr.bf16.mxu0 0
    %1462 = vmatmul.mubr.bf16.gmra.mxu0 %v1403
    %v1463 = vpop.f32.mrf.mxu0
    %v1464 = vadd.f32 0.0, %v1463
    %v1465 = vpop.f32.mrf.mxu0
    %v1466 = vpop.f32.mrf.mxu0
    %v1467 = vadd.f32 0.0, %v1466
    %v1468 = vpop.f32.mrf.mxu0
    %1469 = vdwg.mxu0
    %v1471 = vsel %vm196, %v1305, 0
    %v1474 = vsel %vm196, %v1306, 0
    %v1477 = vsel %vm196, %v1307, 0
    %v1480 = vsel %vm196, %v1308, 0
    %1482 = vmatprep.subr.bf16.mxu0 0
    %1483 = vmatpush1.bf16.xpose.msra.mxu0 0
    %1484 = vmatprep.subr.bf16.mxu0 0
    %1485 = vmatpush1.bf16.xpose.msra.mxu0 0
    %1486 = vmatprep.subr.bf16.mxu0 0
    %1487 = vmatpush1.bf16.xpose.msra.mxu0 0
    %1488 = vmatprep.subr.bf16.mxu0 0
    %1489 = vmatpush1.bf16.xpose.msra.mxu0 0
    %1490 = vmatprep.subr.bf16.mxu0 0
    %1491 = vmatpush1.bf16.xpose.msra.mxu0 0
    %1492 = vmatprep.subr.bf16.mxu0 0
    %1493 = vmatpush1.bf16.xpose.msra.mxu0 0
    %1494 = vmatprep.subr.bf16.mxu0 0
    %1495 = vmatpush1.bf16.xpose.msra.mxu0 0
    %1496 = vmatprep.subr.bf16.mxu0 0
    %1497 = vmatpush1.bf16.xpose.msra.mxu0 %v1326
    %1498 = vmatprep.subr.bf16.mxu0 0
    %1499 = vmatpush2.bf16.xpose.msra.mxu0 0
    %1500 = vmatprep.subr.bf16.mxu0 0
    %1501 = vmatpush2.bf16.xpose.msra.mxu0 0
    %1502 = vmatprep.subr.bf16.mxu0 0
    %1503 = vmatpush2.bf16.xpose.msra.mxu0 0
    %1504 = vmatprep.subr.bf16.mxu0 0
    %1505 = vmatpush2.bf16.xpose.msra.mxu0 0
    %1506 = vmatprep.subr.bf16.mxu0 0
    %1507 = vmatpush2.bf16.xpose.msra.mxu0 0
    %1508 = vmatprep.subr.bf16.mxu0 0
    %1509 = vmatpush2.bf16.xpose.msra.mxu0 0
    %1510 = vmatprep.subr.bf16.mxu0 0
    %1511 = vmatpush2.bf16.xpose.msra.mxu0 0
    %1512 = vmatprep.subr.bf16.mxu0 0
    %1513 = vmatpush2.bf16.xpose.msra.mxu0 0
    %1514 = vmatprep.mubr.bf16.mxu0 0
    %1515 = vmatmul.mubr.bf16.gmra.mxu0 %v1471
    %v1516 = vpop.f32.mrf.mxu0
    %v1517 = vadd.f32 0.0, %v1516
    %v1518 = vpop.f32.mrf.mxu0
    %v1519 = vpop.f32.mrf.mxu0
    %v1520 = vadd.f32 0.0, %v1519
    %v1521 = vpop.f32.mrf.mxu0
    %1522 = vmatprep.mubr.bf16.mxu0 0
    %1523 = vmatmul.mubr.bf16.gmra.mxu0 %v1474
    %v1524 = vpop.f32.mrf.mxu0
    %v1525 = vadd.f32 0.0, %v1524
    %v1526 = vpop.f32.mrf.mxu0
    %v1527 = vpop.f32.mrf.mxu0
    %v1528 = vadd.f32 0.0, %v1527
    %v1529 = vpop.f32.mrf.mxu0
    %1530 = vmatprep.mubr.bf16.mxu0 0
    %1531 = vmatmul.mubr.bf16.gmra.mxu0 %v1477
    %v1532 = vpop.f32.mrf.mxu0
    %v1533 = vadd.f32 0.0, %v1532
    %v1534 = vpop.f32.mrf.mxu0
    %v1535 = vpop.f32.mrf.mxu0
    %v1536 = vadd.f32 0.0, %v1535
    %v1537 = vpop.f32.mrf.mxu0
    %1538 = vmatprep.mubr.bf16.mxu0 0
    %1539 = vmatmul.mubr.bf16.gmra.mxu0 %v1480
    %v1540 = vpop.f32.mrf.mxu0
    %v1541 = vadd.f32 0.0, %v1540
    %v1542 = vpop.f32.mrf.mxu0
    %v1543 = vpop.f32.mrf.mxu0
    %v1544 = vadd.f32 0.0, %v1543
    %v1545 = vpop.f32.mrf.mxu0
    %1546 = vdwg.mxu0
    %v1548 = vsel %vm196, %v1309, 0
    %v1551 = vsel %vm196, %v1310, 0
    %v1554 = vsel %vm196, %v1311, 0
    %v1557 = vsel %vm196, %v1312, 0
    %1559 = vmatprep.subr.bf16.mxu0 0
    %1560 = vmatpush1.bf16.xpose.msra.mxu0 0
    %1561 = vmatprep.subr.bf16.mxu0 0
    %1562 = vmatpush1.bf16.xpose.msra.mxu0 0
    %1563 = vmatprep.subr.bf16.mxu0 0
    %1564 = vmatpush1.bf16.xpose.msra.mxu0 0
    %1565 = vmatprep.subr.bf16.mxu0 0
    %1566 = vmatpush1.bf16.xpose.msra.mxu0 0
    %1567 = vmatprep.subr.bf16.mxu0 0
    %1568 = vmatpush1.bf16.xpose.msra.mxu0 0
    %1569 = vmatprep.subr.bf16.mxu0 0
    %1570 = vmatpush1.bf16.xpose.msra.mxu0 0
    %1571 = vmatprep.subr.bf16.mxu0 0
    %1572 = vmatpush1.bf16.xpose.msra.mxu0 0
    %1573 = vmatprep.subr.bf16.mxu0 0
    %1574 = vmatpush1.bf16.xpose.msra.mxu0 %v1326
    %1575 = vmatprep.subr.bf16.mxu0 0
    %1576 = vmatpush2.bf16.xpose.msra.mxu0 0
    %1577 = vmatprep.subr.bf16.mxu0 0
    %1578 = vmatpush2.bf16.xpose.msra.mxu0 0
    %1579 = vmatprep.subr.bf16.mxu0 0
    %1580 = vmatpush2.bf16.xpose.msra.mxu0 0
    %1581 = vmatprep.subr.bf16.mxu0 0
    %1582 = vmatpush2.bf16.xpose.msra.mxu0 0
    %1583 = vmatprep.subr.bf16.mxu0 0
    %1584 = vmatpush2.bf16.xpose.msra.mxu0 0
    %1585 = vmatprep.subr.bf16.mxu0 0
    %1586 = vmatpush2.bf16.xpose.msra.mxu0 0
    %1587 = vmatprep.subr.bf16.mxu0 0
    %1588 = vmatpush2.bf16.xpose.msra.mxu0 0
    %1589 = vmatprep.subr.bf16.mxu0 0
    %1590 = vmatpush2.bf16.xpose.msra.mxu0 0
    %1591 = vmatprep.mubr.bf16.mxu0 0
    %1592 = vmatmul.mubr.bf16.gmra.mxu0 %v1548
    %v1593 = vpop.f32.mrf.mxu0
    %v1594 = vadd.f32 0.0, %v1593
    %v1595 = vpop.f32.mrf.mxu0
    %v1596 = vpop.f32.mrf.mxu0
    %v1597 = vadd.f32 0.0, %v1596
    %v1598 = vpop.f32.mrf.mxu0
    %1599 = vmatprep.mubr.bf16.mxu0 0
    %1600 = vmatmul.mubr.bf16.gmra.mxu0 %v1551
    %v1601 = vpop.f32.mrf.mxu0
    %v1602 = vadd.f32 0.0, %v1601
    %v1603 = vpop.f32.mrf.mxu0
    %v1604 = vpop.f32.mrf.mxu0
    %v1605 = vadd.f32 0.0, %v1604
    %v1606 = vpop.f32.mrf.mxu0
    %1607 = vmatprep.mubr.bf16.mxu0 0
    %1608 = vmatmul.mubr.bf16.gmra.mxu0 %v1554
    %v1609 = vpop.f32.mrf.mxu0
    %v1610 = vadd.f32 0.0, %v1609
    %v1611 = vpop.f32.mrf.mxu0
    %v1612 = vpop.f32.mrf.mxu0
    %v1613 = vadd.f32 0.0, %v1612
    %v1614 = vpop.f32.mrf.mxu0
    %1615 = vmatprep.mubr.bf16.mxu0 0
    %1616 = vmatmul.mubr.bf16.gmra.mxu0 %v1557
    %v1617 = vpop.f32.mrf.mxu0
    %v1618 = vadd.f32 0.0, %v1617
    %v1619 = vpop.f32.mrf.mxu0
    %v1620 = vpop.f32.mrf.mxu0
    %v1621 = vadd.f32 0.0, %v1620
    %v1622 = vpop.f32.mrf.mxu0
    %1623 = vdwg.mxu0
    %vm1624 = vcmask 64512
    %v1625 = vsel %vm1624, %v1363, -inf
    %1626 = vmax.xlane.f32.xlu0 %v1625
    %v1627 = vpop.xlane.xlu0 %1626
    %v1628 = vsel %vm1624, %v1366, -inf
    %1629 = vmax.xlane.f32.xlu0 %v1628
    %v1630 = vpop.xlane.xlu0 %1629
    %v1631 = vsel %vm1624, %v1371, -inf
    %1632 = vmax.xlane.f32.xlu0 %v1631
    %v1633 = vpop.xlane.xlu0 %1632
    %v1634 = vsel %vm1624, %v1374, -inf
    %1635 = vmax.xlane.f32.xlu0 %v1634
    %v1636 = vpop.xlane.xlu0 %1635
    %v1637 = vsel %vm1624, %v1379, -inf
    %1638 = vmax.xlane.f32.xlu0 %v1637
    %v1639 = vpop.xlane.xlu0 %1638
    %v1640 = vsel %vm1624, %v1382, -inf
    %1641 = vmax.xlane.f32.xlu0 %v1640
    %v1642 = vpop.xlane.xlu0 %1641
    %v1643 = vsel %vm1624, %v1387, -inf
    %1644 = vmax.xlane.f32.xlu0 %v1643
    %v1645 = vpop.xlane.xlu0 %1644
    %v1646 = vsel %vm1624, %v1390, -inf
    %1647 = vmax.xlane.f32.xlu0 %v1646
    %v1648 = vpop.xlane.xlu0 %1647
    %v1649 = vsel %vm1624, %v1440, -inf
    %1650 = vmax.xlane.f32.xlu0 %v1649
    %v1651 = vpop.xlane.xlu0 %1650
    %v1652 = vsel %vm1624, %v1443, -inf
    %1653 = vmax.xlane.f32.xlu0 %v1652
    %v1654 = vpop.xlane.xlu0 %1653
    %v1655 = vsel %vm1624, %v1448, -inf
    %1656 = vmax.xlane.f32.xlu0 %v1655
    %v1657 = vpop.xlane.xlu0 %1656
    %v1658 = vsel %vm1624, %v1451, -inf
    %1659 = vmax.xlane.f32.xlu0 %v1658
    %v1660 = vpop.xlane.xlu0 %1659
    %v1661 = vsel %vm1624, %v1456, -inf
    %1662 = vmax.xlane.f32.xlu0 %v1661
    %v1663 = vpop.xlane.xlu0 %1662
    %v1664 = vsel %vm1624, %v1459, -inf
    %1665 = vmax.xlane.f32.xlu0 %v1664
    %v1666 = vpop.xlane.xlu0 %1665
    %v1667 = vsel %vm1624, %v1464, -inf
    %1668 = vmax.xlane.f32.xlu0 %v1667
    %v1669 = vpop.xlane.xlu0 %1668
    %v1670 = vsel %vm1624, %v1467, -inf
    %1671 = vmax.xlane.f32.xlu0 %v1670
    %v1672 = vpop.xlane.xlu0 %1671
    %v1673 = vsel %vm1624, %v1517, -inf
    %1674 = vmax.xlane.f32.xlu0 %v1673
    %v1675 = vpop.xlane.xlu0 %1674
    %v1676 = vsel %vm1624, %v1520, -inf
    %1677 = vmax.xlane.f32.xlu0 %v1676
    %v1678 = vpop.xlane.xlu0 %1677
    %v1679 = vsel %vm1624, %v1525, -inf
    %1680 = vmax.xlane.f32.xlu0 %v1679
    %v1681 = vpop.xlane.xlu0 %1680
    %v1682 = vsel %vm1624, %v1528, -inf
    %1683 = vmax.xlane.f32.xlu0 %v1682
    %v1684 = vpop.xlane.xlu0 %1683
    %v1685 = vsel %vm1624, %v1533, -inf
    %1686 = vmax.xlane.f32.xlu0 %v1685
    %v1687 = vpop.xlane.xlu0 %1686
    %v1688 = vsel %vm1624, %v1536, -inf
    %1689 = vmax.xlane.f32.xlu0 %v1688
    %v1690 = vpop.xlane.xlu0 %1689
    %v1691 = vsel %vm1624, %v1541, -inf
    %1692 = vmax.xlane.f32.xlu0 %v1691
    %v1693 = vpop.xlane.xlu0 %1692
    %v1694 = vsel %vm1624, %v1544, -inf
    %1695 = vmax.xlane.f32.xlu0 %v1694
    %v1696 = vpop.xlane.xlu0 %1695
    %v1697 = vsel %vm1624, %v1594, -inf
    %1698 = vmax.xlane.f32.xlu0 %v1697
    %v1699 = vpop.xlane.xlu0 %1698
    %v1700 = vsel %vm1624, %v1597, -inf
    %1701 = vmax.xlane.f32.xlu0 %v1700
    %v1702 = vpop.xlane.xlu0 %1701
    %v1703 = vsel %vm1624, %v1602, -inf
    %1704 = vmax.xlane.f32.xlu0 %v1703
    %v1705 = vpop.xlane.xlu0 %1704
    %v1706 = vsel %vm1624, %v1605, -inf
    %1707 = vmax.xlane.f32.xlu0 %v1706
    %v1708 = vpop.xlane.xlu0 %1707
    %v1709 = vsel %vm1624, %v1610, -inf
    %1710 = vmax.xlane.f32.xlu0 %v1709
    %v1711 = vpop.xlane.xlu0 %1710
    %v1712 = vsel %vm1624, %v1613, -inf
    %1713 = vmax.xlane.f32.xlu0 %v1712
    %v1714 = vpop.xlane.xlu0 %1713
    %v1715 = vsel %vm1624, %v1618, -inf
    %1716 = vmax.xlane.f32.xlu0 %v1715
    %v1717 = vpop.xlane.xlu0 %1716
    %v1718 = vsel %vm1624, %v1621, -inf
    %1719 = vmax.xlane.f32.xlu0 %v1718
    %v1720 = vpop.xlane.xlu0 %1719
    %v1721 = vsub.f32 %v1363, %v1627
    %v1722 = vsub.f32 %v1366, %v1630
    %v1723 = vsub.f32 %v1371, %v1633
    %v1724 = vsub.f32 %v1374, %v1636
    %v1725 = vsub.f32 %v1379, %v1639
    %v1726 = vsub.f32 %v1382, %v1642
    %v1727 = vsub.f32 %v1387, %v1645
    %v1728 = vsub.f32 %v1390, %v1648
    %v1729 = vsub.f32 %v1440, %v1651
    %v1730 = vsub.f32 %v1443, %v1654
    %v1731 = vsub.f32 %v1448, %v1657
    %v1732 = vsub.f32 %v1451, %v1660
    %v1733 = vsub.f32 %v1456, %v1663
    %v1734 = vsub.f32 %v1459, %v1666
    %v1735 = vsub.f32 %v1464, %v1669
    %v1736 = vsub.f32 %v1467, %v1672
    %v1737 = vsub.f32 %v1517, %v1675
    %v1738 = vsub.f32 %v1520, %v1678
    %v1739 = vsub.f32 %v1525, %v1681
    %v1740 = vsub.f32 %v1528, %v1684
    %v1741 = vsub.f32 %v1533, %v1687
    %v1742 = vsub.f32 %v1536, %v1690
    %v1743 = vsub.f32 %v1541, %v1693
    %v1744 = vsub.f32 %v1544, %v1696
    %v1745 = vsub.f32 %v1594, %v1699
    %v1746 = vsub.f32 %v1597, %v1702
    %v1747 = vsub.f32 %v1602, %v1705
    %v1748 = vsub.f32 %v1605, %v1708
    %v1749 = vsub.f32 %v1610, %v1711
    %v1750 = vsub.f32 %v1613, %v1714
    %v1751 = vsub.f32 %v1618, %v1717
    %v1752 = vsub.f32 %v1621, %v1720
    %v1753 = vmul.f32 %v1721, 1.442695
    %v1754 = vpow.pop %v1753
    %v1755 = vmul.f32 %v1722, 1.442695
    %v1756 = vpow.pop %v1755
    %v1757 = vmul.f32 %v1723, 1.442695
    %v1758 = vpow.pop %v1757
    %v1759 = vmul.f32 %v1724, 1.442695
    %v1760 = vpow.pop %v1759
    %v1761 = vmul.f32 %v1725, 1.442695
    %v1762 = vpow.pop %v1761
    %v1763 = vmul.f32 %v1726, 1.442695
    %v1764 = vpow.pop %v1763
    %v1765 = vmul.f32 %v1727, 1.442695
    %v1766 = vpow.pop %v1765
    %v1767 = vmul.f32 %v1728, 1.442695
    %v1768 = vpow.pop %v1767
    %v1769 = vmul.f32 %v1729, 1.442695
    %v1770 = vpow.pop %v1769
    %v1771 = vmul.f32 %v1730, 1.442695
    %v1772 = vpow.pop %v1771
    %v1773 = vmul.f32 %v1731, 1.442695
    %v1774 = vpow.pop %v1773
    %v1775 = vmul.f32 %v1732, 1.442695
    %v1776 = vpow.pop %v1775
    %v1777 = vmul.f32 %v1733, 1.442695
    %v1778 = vpow.pop %v1777
    %v1779 = vmul.f32 %v1734, 1.442695
    %v1780 = vpow.pop %v1779
    %v1781 = vmul.f32 %v1735, 1.442695
    %v1782 = vpow.pop %v1781
    %v1783 = vmul.f32 %v1736, 1.442695
    %v1784 = vpow.pop %v1783
    %v1785 = vmul.f32 %v1737, 1.442695
    %v1786 = vpow.pop %v1785
    %v1787 = vmul.f32 %v1738, 1.442695
    %v1788 = vpow.pop %v1787
    %v1789 = vmul.f32 %v1739, 1.442695
    %v1790 = vpow.pop %v1789
    %v1791 = vmul.f32 %v1740, 1.442695
    %v1792 = vpow.pop %v1791
    %v1793 = vmul.f32 %v1741, 1.442695
    %v1794 = vpow.pop %v1793
    %v1795 = vmul.f32 %v1742, 1.442695
    %v1796 = vpow.pop %v1795
    %v1797 = vmul.f32 %v1743, 1.442695
    %v1798 = vpow.pop %v1797
    %v1799 = vmul.f32 %v1744, 1.442695
    %v1800 = vpow.pop %v1799
    %v1801 = vmul.f32 %v1745, 1.442695
    %v1802 = vpow.pop %v1801
    %v1803 = vmul.f32 %v1746, 1.442695
    %v1804 = vpow.pop %v1803
    %v1805 = vmul.f32 %v1747, 1.442695
    %v1806 = vpow.pop %v1805
    %v1807 = vmul.f32 %v1748, 1.442695
    %v1808 = vpow.pop %v1807
    %v1809 = vmul.f32 %v1749, 1.442695
    %v1810 = vpow.pop %v1809
    %v1811 = vmul.f32 %v1750, 1.442695
    %v1812 = vpow.pop %v1811
    %v1813 = vmul.f32 %v1751, 1.442695
    %v1814 = vpow.pop %v1813
    %v1815 = vmul.f32 %v1752, 1.442695
    %v1816 = vpow.pop %v1815
    %v1817 = vsel %vm1624, %v1754, 0.0
    %1818 = vadd.xlane.f32.xlu0 %v1817
    %v1819 = vpop.xlane.xlu0 %1818
    %v1820 = vsel %vm1624, %v1756, 0.0
    %1821 = vadd.xlane.f32.xlu0 %v1820
    %v1822 = vpop.xlane.xlu0 %1821
    %v1823 = vsel %vm1624, %v1758, 0.0
    %1824 = vadd.xlane.f32.xlu0 %v1823
    %v1825 = vpop.xlane.xlu0 %1824
    %v1826 = vsel %vm1624, %v1760, 0.0
    %1827 = vadd.xlane.f32.xlu0 %v1826
    %v1828 = vpop.xlane.xlu0 %1827
    %v1829 = vsel %vm1624, %v1762, 0.0
    %1830 = vadd.xlane.f32.xlu0 %v1829
    %v1831 = vpop.xlane.xlu0 %1830
    %v1832 = vsel %vm1624, %v1764, 0.0
    %1833 = vadd.xlane.f32.xlu0 %v1832
    %v1834 = vpop.xlane.xlu0 %1833
    %v1835 = vsel %vm1624, %v1766, 0.0
    %1836 = vadd.xlane.f32.xlu0 %v1835
    %v1837 = vpop.xlane.xlu0 %1836
    %v1838 = vsel %vm1624, %v1768, 0.0
    %1839 = vadd.xlane.f32.xlu0 %v1838
    %v1840 = vpop.xlane.xlu0 %1839
    %v1841 = vsel %vm1624, %v1770, 0.0
    %1842 = vadd.xlane.f32.xlu0 %v1841
    %v1843 = vpop.xlane.xlu0 %1842
    %v1844 = vsel %vm1624, %v1772, 0.0
    %1845 = vadd.xlane.f32.xlu0 %v1844
    %v1846 = vpop.xlane.xlu0 %1845
    %v1847 = vsel %vm1624, %v1774, 0.0
    %1848 = vadd.xlane.f32.xlu0 %v1847
    %v1849 = vpop.xlane.xlu0 %1848
    %v1850 = vsel %vm1624, %v1776, 0.0
    %1851 = vadd.xlane.f32.xlu0 %v1850
    %v1852 = vpop.xlane.xlu0 %1851
    %v1853 = vsel %vm1624, %v1778, 0.0
    %1854 = vadd.xlane.f32.xlu0 %v1853
    %v1855 = vpop.xlane.xlu0 %1854
    %v1856 = vsel %vm1624, %v1780, 0.0
    %1857 = vadd.xlane.f32.xlu0 %v1856
    %v1858 = vpop.xlane.xlu0 %1857
    %v1859 = vsel %vm1624, %v1782, 0.0
    %1860 = vadd.xlane.f32.xlu0 %v1859
    %v1861 = vpop.xlane.xlu0 %1860
    %v1862 = vsel %vm1624, %v1784, 0.0
    %1863 = vadd.xlane.f32.xlu0 %v1862
    %v1864 = vpop.xlane.xlu0 %1863
    %v1865 = vsel %vm1624, %v1786, 0.0
    %1866 = vadd.xlane.f32.xlu0 %v1865
    %v1867 = vpop.xlane.xlu0 %1866
    %v1868 = vsel %vm1624, %v1788, 0.0
    %1869 = vadd.xlane.f32.xlu0 %v1868
    %v1870 = vpop.xlane.xlu0 %1869
    %v1871 = vsel %vm1624, %v1790, 0.0
    %1872 = vadd.xlane.f32.xlu0 %v1871
    %v1873 = vpop.xlane.xlu0 %1872
    %v1874 = vsel %vm1624, %v1792, 0.0
    %1875 = vadd.xlane.f32.xlu0 %v1874
    %v1876 = vpop.xlane.xlu0 %1875
    %v1877 = vsel %vm1624, %v1794, 0.0
    %1878 = vadd.xlane.f32.xlu0 %v1877
    %v1879 = vpop.xlane.xlu0 %1878
    %v1880 = vsel %vm1624, %v1796, 0.0
    %1881 = vadd.xlane.f32.xlu0 %v1880
    %v1882 = vpop.xlane.xlu0 %1881
    %v1883 = vsel %vm1624, %v1798, 0.0
    %1884 = vadd.xlane.f32.xlu0 %v1883
    %v1885 = vpop.xlane.xlu0 %1884
    %v1886 = vsel %vm1624, %v1800, 0.0
    %1887 = vadd.xlane.f32.xlu0 %v1886
    %v1888 = vpop.xlane.xlu0 %1887
    %v1889 = vsel %vm1624, %v1802, 0.0
    %1890 = vadd.xlane.f32.xlu0 %v1889
    %v1891 = vpop.xlane.xlu0 %1890
    %v1892 = vsel %vm1624, %v1804, 0.0
    %1893 = vadd.xlane.f32.xlu0 %v1892
    %v1894 = vpop.xlane.xlu0 %1893
    %v1895 = vsel %vm1624, %v1806, 0.0
    %1896 = vadd.xlane.f32.xlu0 %v1895
    %v1897 = vpop.xlane.xlu0 %1896
    %v1898 = vsel %vm1624, %v1808, 0.0
    %1899 = vadd.xlane.f32.xlu0 %v1898
    %v1900 = vpop.xlane.xlu0 %1899
    %v1901 = vsel %vm1624, %v1810, 0.0
    %1902 = vadd.xlane.f32.xlu0 %v1901
    %v1903 = vpop.xlane.xlu0 %1902
    %v1904 = vsel %vm1624, %v1812, 0.0
    %1905 = vadd.xlane.f32.xlu0 %v1904
    %v1906 = vpop.xlane.xlu0 %1905
    %v1907 = vsel %vm1624, %v1814, 0.0
    %1908 = vadd.xlane.f32.xlu0 %v1907
    %v1909 = vpop.xlane.xlu0 %1908
    %v1910 = vsel %vm1624, %v1816, 0.0
    %1911 = vadd.xlane.f32.xlu0 %v1910
    %v1912 = vpop.xlane.xlu0 %1911
    %v1913 = vrcp.pop %v1819
    %v1914 = vrcp.pop %v1822
    %v1915 = vrcp.pop %v1825
    %v1916 = vrcp.pop %v1828
    %v1917 = vrcp.pop %v1831
    %v1918 = vrcp.pop %v1834
    %v1919 = vrcp.pop %v1837
    %v1920 = vrcp.pop %v1840
    %v1921 = vrcp.pop %v1843
    %v1922 = vrcp.pop %v1846
    %v1923 = vrcp.pop %v1849
    %v1924 = vrcp.pop %v1852
    %v1925 = vrcp.pop %v1855
    %v1926 = vrcp.pop %v1858
    %v1927 = vrcp.pop %v1861
    %v1928 = vrcp.pop %v1864
    %v1929 = vrcp.pop %v1867
    %v1930 = vrcp.pop %v1870
    %v1931 = vrcp.pop %v1873
    %v1932 = vrcp.pop %v1876
    %v1933 = vrcp.pop %v1879
    %v1934 = vrcp.pop %v1882
    %v1935 = vrcp.pop %v1885
    %v1936 = vrcp.pop %v1888
    %v1937 = vrcp.pop %v1891
    %v1938 = vrcp.pop %v1894
    %v1939 = vrcp.pop %v1897
    %v1940 = vrcp.pop %v1900
    %v1941 = vrcp.pop %v1903
    %v1942 = vrcp.pop %v1906
    %v1943 = vrcp.pop %v1909
    %v1944 = vrcp.pop %v1912
    %v1945 = vmul.f32 %v1754, %v1913
    %v1946 = vmul.f32 %v1756, %v1914
    %v1947 = vmul.f32 %v1758, %v1915
    %v1948 = vmul.f32 %v1760, %v1916
    %v1949 = vmul.f32 %v1762, %v1917
    %v1950 = vmul.f32 %v1764, %v1918
    %v1951 = vmul.f32 %v1766, %v1919
    %v1952 = vmul.f32 %v1768, %v1920
    %v1953 = vmul.f32 %v1770, %v1921
    %v1954 = vmul.f32 %v1772, %v1922
    %v1955 = vmul.f32 %v1774, %v1923
    %v1956 = vmul.f32 %v1776, %v1924
    %v1957 = vmul.f32 %v1778, %v1925
    %v1958 = vmul.f32 %v1780, %v1926
    %v1959 = vmul.f32 %v1782, %v1927
    %v1960 = vmul.f32 %v1784, %v1928
    %v1961 = vmul.f32 %v1786, %v1929
    %v1962 = vmul.f32 %v1788, %v1930
    %v1963 = vmul.f32 %v1790, %v1931
    %v1964 = vmul.f32 %v1792, %v1932
    %v1965 = vmul.f32 %v1794, %v1933
    %v1966 = vmul.f32 %v1796, %v1934
    %v1967 = vmul.f32 %v1798, %v1935
    %v1968 = vmul.f32 %v1800, %v1936
    %v1969 = vmul.f32 %v1802, %v1937
    %v1970 = vmul.f32 %v1804, %v1938
    %v1971 = vmul.f32 %v1806, %v1939
    %v1972 = vmul.f32 %v1808, %v1940
    %v1973 = vmul.f32 %v1810, %v1941
    %v1974 = vmul.f32 %v1812, %v1942
    %v1975 = vmul.f32 %v1814, %v1943
    %v1976 = vmul.f32 %v1816, %v1944
    %v1977 = vpack.c.bf16 %v1946, %v1945
    %v1978 = vpack.c.bf16 %v1948, %v1947
    %v1979 = vpack.c.bf16 %v1950, %v1949
    %v1980 = vpack.c.bf16 %v1952, %v1951
    %v1981 = vpack.c.bf16 %v1954, %v1953
    %v1982 = vpack.c.bf16 %v1956, %v1955
    %v1983 = vpack.c.bf16 %v1958, %v1957
    %v1984 = vpack.c.bf16 %v1960, %v1959
    %v1985 = vpack.c.bf16 %v1962, %v1961
    %v1986 = vpack.c.bf16 %v1964, %v1963
    %v1987 = vpack.c.bf16 %v1966, %v1965
    %v1988 = vpack.c.bf16 %v1968, %v1967
    %v1989 = vpack.c.bf16 %v1970, %v1969
    %v1990 = vpack.c.bf16 %v1972, %v1971
    %v1991 = vpack.c.bf16 %v1974, %v1973
    %v1992 = vpack.c.bf16 %v1976, %v1975
    %v1994 = vsel %vm1624, %v1977, 0
    %v1997 = vsel %vm1624, %v1978, 0
    %v2000 = vsel %vm1624, %v1979, 0
    %v2003 = vsel %vm1624, %v1980, 0
    %vm2005 = vcmask 1043456
    %v2006 = vsel %vm2005, %v1036, 0
    %2008 = vmatprep.subr.bf16.mxu0 0
    %2009 = vmatpush1.bf16.msra.mxu0 0
    %2010 = vmatprep.subr.bf16.mxu0 0
    %2011 = vmatpush1.bf16.msra.mxu0 0
    %2012 = vmatprep.subr.bf16.mxu0 0
    %2013 = vmatpush1.bf16.msra.mxu0 0
    %2014 = vmatprep.subr.bf16.mxu0 0
    %2015 = vmatpush1.bf16.msra.mxu0 0
    %2016 = vmatprep.subr.bf16.mxu0 0
    %2017 = vmatpush1.bf16.msra.mxu0 0
    %2018 = vmatprep.subr.bf16.mxu0 0
    %2019 = vmatpush1.bf16.msra.mxu0 0
    %2020 = vmatprep.subr.bf16.mxu0 0
    %2021 = vmatpush1.bf16.msra.mxu0 0
    %2022 = vmatprep.subr.bf16.mxu0 0
    %2023 = vmatpush1.bf16.msra.mxu0 %v2006
    %2024 = vmatprep.subr.bf16.mxu0 0
    %2025 = vmatpush2.bf16.msra.mxu0 0
    %2026 = vmatprep.subr.bf16.mxu0 0
    %2027 = vmatpush2.bf16.msra.mxu0 0
    %2028 = vmatprep.subr.bf16.mxu0 0
    %2029 = vmatpush2.bf16.msra.mxu0 0
    %2030 = vmatprep.subr.bf16.mxu0 0
    %2031 = vmatpush2.bf16.msra.mxu0 0
    %2032 = vmatprep.subr.bf16.mxu0 0
    %2033 = vmatpush2.bf16.msra.mxu0 0
    %2034 = vmatprep.subr.bf16.mxu0 0
    %2035 = vmatpush2.bf16.msra.mxu0 0
    %2036 = vmatprep.subr.bf16.mxu0 0
    %2037 = vmatpush2.bf16.msra.mxu0 0
    %2038 = vmatprep.subr.bf16.mxu0 0
    %2039 = vmatpush2.bf16.msra.mxu0 0
    %2040 = vmatprep.mubr.bf16.mxu0 0
    %2041 = vmatmul.mubr.bf16.gmra.mxu0 %v1994
    %v2042 = vpop.f32.mrf.mxu0
    %v2043 = vadd.f32 0.0, %v2042
    %v2044 = vpop.f32.mrf.mxu0
    %v2045 = vpop.f32.mrf.mxu0
    %v2046 = vadd.f32 0.0, %v2045
    %v2047 = vpop.f32.mrf.mxu0
    %2048 = vmatprep.mubr.bf16.mxu0 0
    %2049 = vmatmul.mubr.bf16.gmra.mxu0 %v1997
    %v2050 = vpop.f32.mrf.mxu0
    %v2051 = vadd.f32 0.0, %v2050
    %v2052 = vpop.f32.mrf.mxu0
    %v2053 = vpop.f32.mrf.mxu0
    %v2054 = vadd.f32 0.0, %v2053
    %v2055 = vpop.f32.mrf.mxu0
    %2056 = vmatprep.mubr.bf16.mxu0 0
    %2057 = vmatmul.mubr.bf16.gmra.mxu0 %v2000
    %v2058 = vpop.f32.mrf.mxu0
    %v2059 = vadd.f32 0.0, %v2058
    %v2060 = vpop.f32.mrf.mxu0
    %v2061 = vpop.f32.mrf.mxu0
    %v2062 = vadd.f32 0.0, %v2061
    %v2063 = vpop.f32.mrf.mxu0
    %2064 = vmatprep.mubr.bf16.mxu0 0
    %2065 = vmatmul.mubr.bf16.gmra.mxu0 %v2003
    %v2066 = vpop.f32.mrf.mxu0
    %v2067 = vadd.f32 0.0, %v2066
    %v2068 = vpop.f32.mrf.mxu0
    %v2069 = vpop.f32.mrf.mxu0
    %v2070 = vadd.f32 0.0, %v2069
    %v2071 = vpop.f32.mrf.mxu0
    %2072 = vdwg.mxu0
    %v2074 = vsel %vm1624, %v1981, 0
    %v2077 = vsel %vm1624, %v1982, 0
    %v2080 = vsel %vm1624, %v1983, 0
    %v2083 = vsel %vm1624, %v1984, 0
    %2085 = vmatprep.subr.bf16.mxu0 0
    %2086 = vmatpush1.bf16.msra.mxu0 0
    %2087 = vmatprep.subr.bf16.mxu0 0
    %2088 = vmatpush1.bf16.msra.mxu0 0
    %2089 = vmatprep.subr.bf16.mxu0 0
    %2090 = vmatpush1.bf16.msra.mxu0 0
    %2091 = vmatprep.subr.bf16.mxu0 0
    %2092 = vmatpush1.bf16.msra.mxu0 0
    %2093 = vmatprep.subr.bf16.mxu0 0
    %2094 = vmatpush1.bf16.msra.mxu0 0
    %2095 = vmatprep.subr.bf16.mxu0 0
    %2096 = vmatpush1.bf16.msra.mxu0 0
    %2097 = vmatprep.subr.bf16.mxu0 0
    %2098 = vmatpush1.bf16.msra.mxu0 0
    %2099 = vmatprep.subr.bf16.mxu0 0
    %2100 = vmatpush1.bf16.msra.mxu0 %v2006
    %2101 = vmatprep.subr.bf16.mxu0 0
    %2102 = vmatpush2.bf16.msra.mxu0 0
    %2103 = vmatprep.subr.bf16.mxu0 0
    %2104 = vmatpush2.bf16.msra.mxu0 0
    %2105 = vmatprep.subr.bf16.mxu0 0
    %2106 = vmatpush2.bf16.msra.mxu0 0
    %2107 = vmatprep.subr.bf16.mxu0 0
    %2108 = vmatpush2.bf16.msra.mxu0 0
    %2109 = vmatprep.subr.bf16.mxu0 0
    %2110 = vmatpush2.bf16.msra.mxu0 0
    %2111 = vmatprep.subr.bf16.mxu0 0
    %2112 = vmatpush2.bf16.msra.mxu0 0
    %2113 = vmatprep.subr.bf16.mxu0 0
    %2114 = vmatpush2.bf16.msra.mxu0 0
    %2115 = vmatprep.subr.bf16.mxu0 0
    %2116 = vmatpush2.bf16.msra.mxu0 0
    %2117 = vmatprep.mubr.bf16.mxu0 0
    %2118 = vmatmul.mubr.bf16.gmra.mxu0 %v2074
    %v2119 = vpop.f32.mrf.mxu0
    %v2120 = vadd.f32 0.0, %v2119
    %v2121 = vpop.f32.mrf.mxu0
    %v2122 = vpop.f32.mrf.mxu0
    %v2123 = vadd.f32 0.0, %v2122
    %v2124 = vpop.f32.mrf.mxu0
    %2125 = vmatprep.mubr.bf16.mxu0 0
    %2126 = vmatmul.mubr.bf16.gmra.mxu0 %v2077
    %v2127 = vpop.f32.mrf.mxu0
    %v2128 = vadd.f32 0.0, %v2127
    %v2129 = vpop.f32.mrf.mxu0
    %v2130 = vpop.f32.mrf.mxu0
    %v2131 = vadd.f32 0.0, %v2130
    %v2132 = vpop.f32.mrf.mxu0
    %2133 = vmatprep.mubr.bf16.mxu0 0
    %2134 = vmatmul.mubr.bf16.gmra.mxu0 %v2080
    %v2135 = vpop.f32.mrf.mxu0
    %v2136 = vadd.f32 0.0, %v2135
    %v2137 = vpop.f32.mrf.mxu0
    %v2138 = vpop.f32.mrf.mxu0
    %v2139 = vadd.f32 0.0, %v2138
    %v2140 = vpop.f32.mrf.mxu0
    %2141 = vmatprep.mubr.bf16.mxu0 0
    %2142 = vmatmul.mubr.bf16.gmra.mxu0 %v2083
    %v2143 = vpop.f32.mrf.mxu0
    %v2144 = vadd.f32 0.0, %v2143
    %v2145 = vpop.f32.mrf.mxu0
    %v2146 = vpop.f32.mrf.mxu0
    %v2147 = vadd.f32 0.0, %v2146
    %v2148 = vpop.f32.mrf.mxu0
    %2149 = vdwg.mxu0
    %v2151 = vsel %vm1624, %v1985, 0
    %v2154 = vsel %vm1624, %v1986, 0
    %v2157 = vsel %vm1624, %v1987, 0
    %v2160 = vsel %vm1624, %v1988, 0
    %2162 = vmatprep.subr.bf16.mxu0 0
    %2163 = vmatpush1.bf16.msra.mxu0 0
    %2164 = vmatprep.subr.bf16.mxu0 0
    %2165 = vmatpush1.bf16.msra.mxu0 0
    %2166 = vmatprep.subr.bf16.mxu0 0
    %2167 = vmatpush1.bf16.msra.mxu0 0
    %2168 = vmatprep.subr.bf16.mxu0 0
    %2169 = vmatpush1.bf16.msra.mxu0 0
    %2170 = vmatprep.subr.bf16.mxu0 0
    %2171 = vmatpush1.bf16.msra.mxu0 0
    %2172 = vmatprep.subr.bf16.mxu0 0
    %2173 = vmatpush1.bf16.msra.mxu0 0
    %2174 = vmatprep.subr.bf16.mxu0 0
    %2175 = vmatpush1.bf16.msra.mxu0 0
    %2176 = vmatprep.subr.bf16.mxu0 0
    %2177 = vmatpush1.bf16.msra.mxu0 %v2006
    %2178 = vmatprep.subr.bf16.mxu0 0
    %2179 = vmatpush2.bf16.msra.mxu0 0
    %2180 = vmatprep.subr.bf16.mxu0 0
    %2181 = vmatpush2.bf16.msra.mxu0 0
    %2182 = vmatprep.subr.bf16.mxu0 0
    %2183 = vmatpush2.bf16.msra.mxu0 0
    %2184 = vmatprep.subr.bf16.mxu0 0
    %2185 = vmatpush2.bf16.msra.mxu0 0
    %2186 = vmatprep.subr.bf16.mxu0 0
    %2187 = vmatpush2.bf16.msra.mxu0 0
    %2188 = vmatprep.subr.bf16.mxu0 0
    %2189 = vmatpush2.bf16.msra.mxu0 0
    %2190 = vmatprep.subr.bf16.mxu0 0
    %2191 = vmatpush2.bf16.msra.mxu0 0
    %2192 = vmatprep.subr.bf16.mxu0 0
    %2193 = vmatpush2.bf16.msra.mxu0 0
    %2194 = vmatprep.mubr.bf16.mxu0 0
    %2195 = vmatmul.mubr.bf16.gmra.mxu0 %v2151
    %v2196 = vpop.f32.mrf.mxu0
    %v2197 = vadd.f32 0.0, %v2196
    %v2198 = vpop.f32.mrf.mxu0
    %v2199 = vpop.f32.mrf.mxu0
    %v2200 = vadd.f32 0.0, %v2199
    %v2201 = vpop.f32.mrf.mxu0
    %2202 = vmatprep.mubr.bf16.mxu0 0
    %2203 = vmatmul.mubr.bf16.gmra.mxu0 %v2154
    %v2204 = vpop.f32.mrf.mxu0
    %v2205 = vadd.f32 0.0, %v2204
    %v2206 = vpop.f32.mrf.mxu0
    %v2207 = vpop.f32.mrf.mxu0
    %v2208 = vadd.f32 0.0, %v2207
    %v2209 = vpop.f32.mrf.mxu0
    %2210 = vmatprep.mubr.bf16.mxu0 0
    %2211 = vmatmul.mubr.bf16.gmra.mxu0 %v2157
    %v2212 = vpop.f32.mrf.mxu0
    %v2213 = vadd.f32 0.0, %v2212
    %v2214 = vpop.f32.mrf.mxu0
    %v2215 = vpop.f32.mrf.mxu0
    %v2216 = vadd.f32 0.0, %v2215
    %v2217 = vpop.f32.mrf.mxu0
    %2218 = vmatprep.mubr.bf16.mxu0 0
    %2219 = vmatmul.mubr.bf16.gmra.mxu0 %v2160
    %v2220 = vpop.f32.mrf.mxu0
    %v2221 = vadd.f32 0.0, %v2220
    %v2222 = vpop.f32.mrf.mxu0
    %v2223 = vpop.f32.mrf.mxu0
    %v2224 = vadd.f32 0.0, %v2223
    %v2225 = vpop.f32.mrf.mxu0
    %2226 = vdwg.mxu0
    %v2228 = vsel %vm1624, %v1989, 0
    %v2231 = vsel %vm1624, %v1990, 0
    %v2234 = vsel %vm1624, %v1991, 0
    %v2237 = vsel %vm1624, %v1992, 0
    %2239 = vmatprep.subr.bf16.mxu0 0
    %2240 = vmatpush1.bf16.msra.mxu0 0
    %2241 = vmatprep.subr.bf16.mxu0 0
    %2242 = vmatpush1.bf16.msra.mxu0 0
    %2243 = vmatprep.subr.bf16.mxu0 0
    %2244 = vmatpush1.bf16.msra.mxu0 0
    %2245 = vmatprep.subr.bf16.mxu0 0
    %2246 = vmatpush1.bf16.msra.mxu0 0
    %2247 = vmatprep.subr.bf16.mxu0 0
    %2248 = vmatpush1.bf16.msra.mxu0 0
    %2249 = vmatprep.subr.bf16.mxu0 0
    %2250 = vmatpush1.bf16.msra.mxu0 0
    %2251 = vmatprep.subr.bf16.mxu0 0
    %2252 = vmatpush1.bf16.msra.mxu0 0
    %2253 = vmatprep.subr.bf16.mxu0 0
    %2254 = vmatpush1.bf16.msra.mxu0 %v2006
    %2255 = vmatprep.subr.bf16.mxu0 0
    %2256 = vmatpush2.bf16.msra.mxu0 0
    %2257 = vmatprep.subr.bf16.mxu0 0
    %2258 = vmatpush2.bf16.msra.mxu0 0
    %2259 = vmatprep.subr.bf16.mxu0 0
    %2260 = vmatpush2.bf16.msra.mxu0 0
    %2261 = vmatprep.subr.bf16.mxu0 0
    %2262 = vmatpush2.bf16.msra.mxu0 0
    %2263 = vmatprep.subr.bf16.mxu0 0
    %2264 = vmatpush2.bf16.msra.mxu0 0
    %2265 = vmatprep.subr.bf16.mxu0 0
    %2266 = vmatpush2.bf16.msra.mxu0 0
    %2267 = vmatprep.subr.bf16.mxu0 0
    %2268 = vmatpush2.bf16.msra.mxu0 0
    %2269 = vmatprep.subr.bf16.mxu0 0
    %2270 = vmatpush2.bf16.msra.mxu0 0
    %2271 = vmatprep.mubr.bf16.mxu0 0
    %2272 = vmatmul.mubr.bf16.gmra.mxu0 %v2228
    %v2273 = vpop.f32.mrf.mxu0
    %v2274 = vadd.f32 0.0, %v2273
    %v2275 = vpop.f32.mrf.mxu0
    %v2276 = vpop.f32.mrf.mxu0
    %v2277 = vadd.f32 0.0, %v2276
    %v2278 = vpop.f32.mrf.mxu0
    %2279 = vmatprep.mubr.bf16.mxu0 0
    %2280 = vmatmul.mubr.bf16.gmra.mxu0 %v2231
    %v2281 = vpop.f32.mrf.mxu0
    %v2282 = vadd.f32 0.0, %v2281
    %v2283 = vpop.f32.mrf.mxu0
    %v2284 = vpop.f32.mrf.mxu0
    %v2285 = vadd.f32 0.0, %v2284
    %v2286 = vpop.f32.mrf.mxu0
    %2287 = vmatprep.mubr.bf16.mxu0 0
    %2288 = vmatmul.mubr.bf16.gmra.mxu0 %v2234
    %v2289 = vpop.f32.mrf.mxu0
    %v2290 = vadd.f32 0.0, %v2289
    %v2291 = vpop.f32.mrf.mxu0
    %v2292 = vpop.f32.mrf.mxu0
    %v2293 = vadd.f32 0.0, %v2292
    %v2294 = vpop.f32.mrf.mxu0
    %2295 = vmatprep.mubr.bf16.mxu0 0
    %2296 = vmatmul.mubr.bf16.gmra.mxu0 %v2237
    %v2297 = vpop.f32.mrf.mxu0
    %v2298 = vadd.f32 0.0, %v2297
    %v2299 = vpop.f32.mrf.mxu0
    %v2300 = vpop.f32.mrf.mxu0
    %v2301 = vadd.f32 0.0, %v2300
    %v2302 = vpop.f32.mrf.mxu0
    %2303 = vdwg.mxu0
    %v2304 = vpack.c.bf16 %v2046, %v2043
    %v2305 = vpack.c.bf16 %v2054, %v2051
    %v2306 = vpack.c.bf16 %v2062, %v2059
    %v2307 = vpack.c.bf16 %v2070, %v2067
    %v2308 = vpack.c.bf16 %v2123, %v2120
    %v2309 = vpack.c.bf16 %v2131, %v2128
    %v2310 = vpack.c.bf16 %v2139, %v2136
    %v2311 = vpack.c.bf16 %v2147, %v2144
    %v2312 = vpack.c.bf16 %v2200, %v2197
    %v2313 = vpack.c.bf16 %v2208, %v2205
    %v2314 = vpack.c.bf16 %v2216, %v2213
    %v2315 = vpack.c.bf16 %v2224, %v2221
    %v2316 = vpack.c.bf16 %v2277, %v2274
    %v2317 = vpack.c.bf16 %v2285, %v2282
    %v2318 = vpack.c.bf16 %v2293, %v2290
    %v2319 = vpack.c.bf16 %v2301, %v2298
    %v2321 = vsel %vm196, %v2304, 0
    %v2324 = vsel %vm196, %v2305, 0
    %v2327 = vsel %vm196, %v2306, 0
    %v2330 = vsel %vm196, %v2307, 0
    %2332 = vmatprep.subr.bf16.mxu0 0
    %2333 = vmatpush1.bf16.msra.mxu0 0
    %2334 = vmatprep.subr.bf16.mxu0 0
    %2335 = vmatpush1.bf16.msra.mxu0 0
    %2336 = vmatprep.subr.bf16.mxu0 0
    %2337 = vmatpush1.bf16.msra.mxu0 0
    %2338 = vmatprep.subr.bf16.mxu0 0
    %2339 = vmatpush1.bf16.msra.mxu0 0
    %2340 = vmatprep.subr.bf16.mxu0 0
    %2341 = vmatpush1.bf16.msra.mxu0 0
    %2342 = vmatprep.subr.bf16.mxu0 0
    %2343 = vmatpush1.bf16.msra.mxu0 0
    %2344 = vmatprep.subr.bf16.mxu0 0
    %2345 = vmatpush1.bf16.msra.mxu0 %v817
    %2346 = vmatprep.subr.bf16.mxu0 0
    %2347 = vmatpush1.bf16.msra.mxu0 %v816
    %2348 = vmatprep.subr.bf16.mxu0 0
    %2349 = vmatpush2.bf16.msra.mxu0 0
    %2350 = vmatprep.subr.bf16.mxu0 0
    %2351 = vmatpush2.bf16.msra.mxu0 0
    %2352 = vmatprep.subr.bf16.mxu0 0
    %2353 = vmatpush2.bf16.msra.mxu0 0
    %2354 = vmatprep.subr.bf16.mxu0 0
    %2355 = vmatpush2.bf16.msra.mxu0 0
    %2356 = vmatprep.subr.bf16.mxu0 0
    %2357 = vmatpush2.bf16.msra.mxu0 0
    %2358 = vmatprep.subr.bf16.mxu0 0
    %2359 = vmatpush2.bf16.msra.mxu0 0
    %2360 = vmatprep.subr.bf16.mxu0 0
    %2361 = vmatpush2.bf16.msra.mxu0 0
    %2362 = vmatprep.subr.bf16.mxu0 0
    %2363 = vmatpush2.bf16.msra.mxu0 0
    %2364 = vmatprep.mubr.bf16.mxu0 0
    %2365 = vmatmul.mubr.bf16.gmra.mxu0 %v2321
    %v2366 = vpop.f32.mrf.mxu0
    %v2367 = vadd.f32 0.0, %v2366
    %v2368 = vpop.f32.mrf.mxu0
    %v2369 = vpop.f32.mrf.mxu0
    %v2370 = vadd.f32 0.0, %v2369
    %v2371 = vpop.f32.mrf.mxu0
    %2372 = vmatprep.mubr.bf16.mxu0 0
    %2373 = vmatmul.mubr.bf16.gmra.mxu0 %v2324
    %v2374 = vpop.f32.mrf.mxu0
    %v2375 = vadd.f32 0.0, %v2374
    %v2376 = vpop.f32.mrf.mxu0
    %v2377 = vpop.f32.mrf.mxu0
    %v2378 = vadd.f32 0.0, %v2377
    %v2379 = vpop.f32.mrf.mxu0
    %2380 = vmatprep.mubr.bf16.mxu0 0
    %2381 = vmatmul.mubr.bf16.gmra.mxu0 %v2327
    %v2382 = vpop.f32.mrf.mxu0
    %v2383 = vadd.f32 0.0, %v2382
    %v2384 = vpop.f32.mrf.mxu0
    %v2385 = vpop.f32.mrf.mxu0
    %v2386 = vadd.f32 0.0, %v2385
    %v2387 = vpop.f32.mrf.mxu0
    %2388 = vmatprep.mubr.bf16.mxu0 0
    %2389 = vmatmul.mubr.bf16.gmra.mxu0 %v2330
    %v2390 = vpop.f32.mrf.mxu0
    %v2391 = vadd.f32 0.0, %v2390
    %v2392 = vpop.f32.mrf.mxu0
    %v2393 = vpop.f32.mrf.mxu0
    %v2394 = vadd.f32 0.0, %v2393
    %v2395 = vpop.f32.mrf.mxu0
    %2396 = vdwg.mxu0
    %v2398 = vsel %vm196, %v2308, 0
    %v2401 = vsel %vm196, %v2309, 0
    %v2404 = vsel %vm196, %v2310, 0
    %v2407 = vsel %vm196, %v2311, 0
    %2409 = vmatprep.subr.bf16.mxu0 0
    %2410 = vmatpush1.bf16.msra.mxu0 0
    %2411 = vmatprep.subr.bf16.mxu0 0
    %2412 = vmatpush1.bf16.msra.mxu0 0
    %2413 = vmatprep.subr.bf16.mxu0 0
    %2414 = vmatpush1.bf16.msra.mxu0 0
    %2415 = vmatprep.subr.bf16.mxu0 0
    %2416 = vmatpush1.bf16.msra.mxu0 0
    %2417 = vmatprep.subr.bf16.mxu0 0
    %2418 = vmatpush1.bf16.msra.mxu0 0
    %2419 = vmatprep.subr.bf16.mxu0 0
    %2420 = vmatpush1.bf16.msra.mxu0 0
    %2421 = vmatprep.subr.bf16.mxu0 0
    %2422 = vmatpush1.bf16.msra.mxu0 %v872
    %2423 = vmatprep.subr.bf16.mxu0 0
    %2424 = vmatpush1.bf16.msra.mxu0 %v871
    %2425 = vmatprep.subr.bf16.mxu0 0
    %2426 = vmatpush2.bf16.msra.mxu0 0
    %2427 = vmatprep.subr.bf16.mxu0 0
    %2428 = vmatpush2.bf16.msra.mxu0 0
    %2429 = vmatprep.subr.bf16.mxu0 0
    %2430 = vmatpush2.bf16.msra.mxu0 0
    %2431 = vmatprep.subr.bf16.mxu0 0
    %2432 = vmatpush2.bf16.msra.mxu0 0
    %2433 = vmatprep.subr.bf16.mxu0 0
    %2434 = vmatpush2.bf16.msra.mxu0 0
    %2435 = vmatprep.subr.bf16.mxu0 0
    %2436 = vmatpush2.bf16.msra.mxu0 0
    %2437 = vmatprep.subr.bf16.mxu0 0
    %2438 = vmatpush2.bf16.msra.mxu0 0
    %2439 = vmatprep.subr.bf16.mxu0 0
    %2440 = vmatpush2.bf16.msra.mxu0 0
    %2441 = vmatprep.mubr.bf16.mxu0 0
    %2442 = vmatmul.mubr.bf16.gmra.mxu0 %v2398
    %v2443 = vpop.f32.mrf.mxu0
    %v2444 = vadd.f32 0.0, %v2443
    %v2445 = vpop.f32.mrf.mxu0
    %v2446 = vpop.f32.mrf.mxu0
    %v2447 = vadd.f32 0.0, %v2446
    %v2448 = vpop.f32.mrf.mxu0
    %2449 = vmatprep.mubr.bf16.mxu0 0
    %2450 = vmatmul.mubr.bf16.gmra.mxu0 %v2401
    %v2451 = vpop.f32.mrf.mxu0
    %v2452 = vadd.f32 0.0, %v2451
    %v2453 = vpop.f32.mrf.mxu0
    %v2454 = vpop.f32.mrf.mxu0
    %v2455 = vadd.f32 0.0, %v2454
    %v2456 = vpop.f32.mrf.mxu0
    %2457 = vmatprep.mubr.bf16.mxu0 0
    %2458 = vmatmul.mubr.bf16.gmra.mxu0 %v2404
    %v2459 = vpop.f32.mrf.mxu0
    %v2460 = vadd.f32 0.0, %v2459
    %v2461 = vpop.f32.mrf.mxu0
    %v2462 = vpop.f32.mrf.mxu0
    %v2463 = vadd.f32 0.0, %v2462
    %v2464 = vpop.f32.mrf.mxu0
    %2465 = vmatprep.mubr.bf16.mxu0 0
    %2466 = vmatmul.mubr.bf16.gmra.mxu0 %v2407
    %v2467 = vpop.f32.mrf.mxu0
    %v2468 = vadd.f32 0.0, %v2467
    %v2469 = vpop.f32.mrf.mxu0
    %v2470 = vpop.f32.mrf.mxu0
    %v2471 = vadd.f32 0.0, %v2470
    %v2472 = vpop.f32.mrf.mxu0
    %2473 = vdwg.mxu0
    %v2475 = vsel %vm196, %v2312, 0
    %v2478 = vsel %vm196, %v2313, 0
    %v2481 = vsel %vm196, %v2314, 0
    %v2484 = vsel %vm196, %v2315, 0
    %2486 = vmatprep.subr.bf16.mxu0 0
    %2487 = vmatpush1.bf16.msra.mxu0 0
    %2488 = vmatprep.subr.bf16.mxu0 0
    %2489 = vmatpush1.bf16.msra.mxu0 0
    %2490 = vmatprep.subr.bf16.mxu0 0
    %2491 = vmatpush1.bf16.msra.mxu0 0
    %2492 = vmatprep.subr.bf16.mxu0 0
    %2493 = vmatpush1.bf16.msra.mxu0 0
    %2494 = vmatprep.subr.bf16.mxu0 0
    %2495 = vmatpush1.bf16.msra.mxu0 0
    %2496 = vmatprep.subr.bf16.mxu0 0
    %2497 = vmatpush1.bf16.msra.mxu0 0
    %2498 = vmatprep.subr.bf16.mxu0 0
    %2499 = vmatpush1.bf16.msra.mxu0 %v927
    %2500 = vmatprep.subr.bf16.mxu0 0
    %2501 = vmatpush1.bf16.msra.mxu0 %v926
    %2502 = vmatprep.subr.bf16.mxu0 0
    %2503 = vmatpush2.bf16.msra.mxu0 0
    %2504 = vmatprep.subr.bf16.mxu0 0
    %2505 = vmatpush2.bf16.msra.mxu0 0
    %2506 = vmatprep.subr.bf16.mxu0 0
    %2507 = vmatpush2.bf16.msra.mxu0 0
    %2508 = vmatprep.subr.bf16.mxu0 0
    %2509 = vmatpush2.bf16.msra.mxu0 0
    %2510 = vmatprep.subr.bf16.mxu0 0
    %2511 = vmatpush2.bf16.msra.mxu0 0
    %2512 = vmatprep.subr.bf16.mxu0 0
    %2513 = vmatpush2.bf16.msra.mxu0 0
    %2514 = vmatprep.subr.bf16.mxu0 0
    %2515 = vmatpush2.bf16.msra.mxu0 0
    %2516 = vmatprep.subr.bf16.mxu0 0
    %2517 = vmatpush2.bf16.msra.mxu0 0
    %2518 = vmatprep.mubr.bf16.mxu0 0
    %2519 = vmatmul.mubr.bf16.gmra.mxu0 %v2475
    %v2520 = vpop.f32.mrf.mxu0
    %v2521 = vadd.f32 0.0, %v2520
    %v2522 = vpop.f32.mrf.mxu0
    %v2523 = vpop.f32.mrf.mxu0
    %v2524 = vadd.f32 0.0, %v2523
    %v2525 = vpop.f32.mrf.mxu0
    %2526 = vmatprep.mubr.bf16.mxu0 0
    %2527 = vmatmul.mubr.bf16.gmra.mxu0 %v2478
    %v2528 = vpop.f32.mrf.mxu0
    %v2529 = vadd.f32 0.0, %v2528
    %v2530 = vpop.f32.mrf.mxu0
    %v2531 = vpop.f32.mrf.mxu0
    %v2532 = vadd.f32 0.0, %v2531
    %v2533 = vpop.f32.mrf.mxu0
    %2534 = vmatprep.mubr.bf16.mxu0 0
    %2535 = vmatmul.mubr.bf16.gmra.mxu0 %v2481
    %v2536 = vpop.f32.mrf.mxu0
    %v2537 = vadd.f32 0.0, %v2536
    %v2538 = vpop.f32.mrf.mxu0
    %v2539 = vpop.f32.mrf.mxu0
    %v2540 = vadd.f32 0.0, %v2539
    %v2541 = vpop.f32.mrf.mxu0
    %2542 = vmatprep.mubr.bf16.mxu0 0
    %2543 = vmatmul.mubr.bf16.gmra.mxu0 %v2484
    %v2544 = vpop.f32.mrf.mxu0
    %v2545 = vadd.f32 0.0, %v2544
    %v2546 = vpop.f32.mrf.mxu0
    %v2547 = vpop.f32.mrf.mxu0
    %v2548 = vadd.f32 0.0, %v2547
    %v2549 = vpop.f32.mrf.mxu0
    %2550 = vdwg.mxu0
    %v2552 = vsel %vm196, %v2316, 0
    %v2555 = vsel %vm196, %v2317, 0
    %v2558 = vsel %vm196, %v2318, 0
    %v2561 = vsel %vm196, %v2319, 0
    %2563 = vmatprep.subr.bf16.mxu0 0
    %2564 = vmatpush1.bf16.msra.mxu0 0
    %2565 = vmatprep.subr.bf16.mxu0 0
    %2566 = vmatpush1.bf16.msra.mxu0 0
    %2567 = vmatprep.subr.bf16.mxu0 0
    %2568 = vmatpush1.bf16.msra.mxu0 0
    %2569 = vmatprep.subr.bf16.mxu0 0
    %2570 = vmatpush1.bf16.msra.mxu0 0
    %2571 = vmatprep.subr.bf16.mxu0 0
    %2572 = vmatpush1.bf16.msra.mxu0 0
    %2573 = vmatprep.subr.bf16.mxu0 0
    %2574 = vmatpush1.bf16.msra.mxu0 0
    %2575 = vmatprep.subr.bf16.mxu0 0
    %2576 = vmatpush1.bf16.msra.mxu0 %v982
    %2577 = vmatprep.subr.bf16.mxu0 0
    %2578 = vmatpush1.bf16.msra.mxu0 %v981
    %2579 = vmatprep.subr.bf16.mxu0 0
    %2580 = vmatpush2.bf16.msra.mxu0 0
    %2581 = vmatprep.subr.bf16.mxu0 0
    %2582 = vmatpush2.bf16.msra.mxu0 0
    %2583 = vmatprep.subr.bf16.mxu0 0
    %2584 = vmatpush2.bf16.msra.mxu0 0
    %2585 = vmatprep.subr.bf16.mxu0 0
    %2586 = vmatpush2.bf16.msra.mxu0 0
    %2587 = vmatprep.subr.bf16.mxu0 0
    %2588 = vmatpush2.bf16.msra.mxu0 0
    %2589 = vmatprep.subr.bf16.mxu0 0
    %2590 = vmatpush2.bf16.msra.mxu0 0
    %2591 = vmatprep.subr.bf16.mxu0 0
    %2592 = vmatpush2.bf16.msra.mxu0 0
    %2593 = vmatprep.subr.bf16.mxu0 0
    %2594 = vmatpush2.bf16.msra.mxu0 0
    %2595 = vmatprep.mubr.bf16.mxu0 0
    %2596 = vmatmul.mubr.bf16.gmra.mxu0 %v2552
    %v2597 = vpop.f32.mrf.mxu0
    %v2598 = vadd.f32 0.0, %v2597
    %v2599 = vpop.f32.mrf.mxu0
    %v2600 = vpop.f32.mrf.mxu0
    %v2601 = vadd.f32 0.0, %v2600
    %v2602 = vpop.f32.mrf.mxu0
    %2603 = vmatprep.mubr.bf16.mxu0 0
    %2604 = vmatmul.mubr.bf16.gmra.mxu0 %v2555
    %v2605 = vpop.f32.mrf.mxu0
    %v2606 = vadd.f32 0.0, %v2605
    %v2607 = vpop.f32.mrf.mxu0
    %v2608 = vpop.f32.mrf.mxu0
    %v2609 = vadd.f32 0.0, %v2608
    %v2610 = vpop.f32.mrf.mxu0
    %2611 = vmatprep.mubr.bf16.mxu0 0
    %2612 = vmatmul.mubr.bf16.gmra.mxu0 %v2558
    %v2613 = vpop.f32.mrf.mxu0
    %v2614 = vadd.f32 0.0, %v2613
    %v2615 = vpop.f32.mrf.mxu0
    %v2616 = vpop.f32.mrf.mxu0
    %v2617 = vadd.f32 0.0, %v2616
    %v2618 = vpop.f32.mrf.mxu0
    %2619 = vmatprep.mubr.bf16.mxu0 0
    %2620 = vmatmul.mubr.bf16.gmra.mxu0 %v2561
    %v2621 = vpop.f32.mrf.mxu0
    %v2622 = vadd.f32 0.0, %v2621
    %v2623 = vpop.f32.mrf.mxu0
    %v2624 = vpop.f32.mrf.mxu0
    %v2625 = vadd.f32 0.0, %v2624
    %v2626 = vpop.f32.mrf.mxu0
    %2627 = vdwg.mxu0
    %v2628 = vsel %vm196, %v2367, 0.0
    %v2629 = vsel %vm196, %v2444, 0.0
    %v2630 = vadd.f32 %v2628, %v2629
    %v2631 = vsel %vm196, %v2521, 0.0
    %v2632 = vadd.f32 %v2630, %v2631
    %v2633 = vsel %vm196, %v2598, 0.0
    %v2634 = vadd.f32 %v2632, %v2633
    %v2635 = vsel %vm196, %v2370, 0.0
    %v2636 = vsel %vm196, %v2447, 0.0
    %v2637 = vadd.f32 %v2635, %v2636
    %v2638 = vsel %vm196, %v2524, 0.0
    %v2639 = vadd.f32 %v2637, %v2638
    %v2640 = vsel %vm196, %v2601, 0.0
    %v2641 = vadd.f32 %v2639, %v2640
    %v2642 = vsel %vm196, %v2375, 0.0
    %v2643 = vsel %vm196, %v2452, 0.0
    %v2644 = vadd.f32 %v2642, %v2643
    %v2645 = vsel %vm196, %v2529, 0.0
    %v2646 = vadd.f32 %v2644, %v2645
    %v2647 = vsel %vm196, %v2606, 0.0
    %v2648 = vadd.f32 %v2646, %v2647
    %v2649 = vsel %vm196, %v2378, 0.0
    %v2650 = vsel %vm196, %v2455, 0.0
    %v2651 = vadd.f32 %v2649, %v2650
    %v2652 = vsel %vm196, %v2532, 0.0
    %v2653 = vadd.f32 %v2651, %v2652
    %v2654 = vsel %vm196, %v2609, 0.0
    %v2655 = vadd.f32 %v2653, %v2654
    %v2656 = vsel %vm196, %v2383, 0.0
    %v2657 = vsel %vm196, %v2460, 0.0
    %v2658 = vadd.f32 %v2656, %v2657
    %v2659 = vsel %vm196, %v2537, 0.0
    %v2660 = vadd.f32 %v2658, %v2659
    %v2661 = vsel %vm196, %v2614, 0.0
    %v2662 = vadd.f32 %v2660, %v2661
    %v2663 = vsel %vm196, %v2386, 0.0
    %v2664 = vsel %vm196, %v2463, 0.0
    %v2665 = vadd.f32 %v2663, %v2664
    %v2666 = vsel %vm196, %v2540, 0.0
    %v2667 = vadd.f32 %v2665, %v2666
    %v2668 = vsel %vm196, %v2617, 0.0
    %v2669 = vadd.f32 %v2667, %v2668
    %v2670 = vsel %vm196, %v2391, 0.0
    %v2671 = vsel %vm196, %v2468, 0.0
    %v2672 = vadd.f32 %v2670, %v2671
    %v2673 = vsel %vm196, %v2545, 0.0
    %v2674 = vadd.f32 %v2672, %v2673
    %v2675 = vsel %vm196, %v2622, 0.0
    %v2676 = vadd.f32 %v2674, %v2675
    %v2677 = vsel %vm196, %v2394, 0.0
    %v2678 = vsel %vm196, %v2471, 0.0
    %v2679 = vadd.f32 %v2677, %v2678
    %v2680 = vsel %vm196, %v2548, 0.0
    %v2681 = vadd.f32 %v2679, %v2680
    %v2682 = vsel %vm196, %v2625, 0.0
    %v2683 = vadd.f32 %v2681, %v2682
    %v2684 = vadd.f32 %v2634, %v55
    %v2685 = vadd.f32 %v2641, %v56
    %v2686 = vadd.f32 %v2648, %v57
    %v2687 = vadd.f32 %v2655, %v58
    %v2688 = vadd.f32 %v2662, %v59
    %v2689 = vadd.f32 %v2669, %v60
    %v2690 = vadd.f32 %v2676, %v61
    %v2691 = vadd.f32 %v2683, %v62
    %v2692 = vsel %vm196, %v2684, 0.0
    %2693 = vadd.xlane.f32.xlu0 %v2692
    %v2694 = vpop.xlane.xlu0 %2693
    %v2695 = vsel %vm196, %v2685, 0.0
    %2696 = vadd.xlane.f32.xlu0 %v2695
    %v2697 = vpop.xlane.xlu0 %2696
    %v2698 = vsel %vm196, %v2686, 0.0
    %2699 = vadd.xlane.f32.xlu0 %v2698
    %v2700 = vpop.xlane.xlu0 %2699
    %v2701 = vsel %vm196, %v2687, 0.0
    %2702 = vadd.xlane.f32.xlu0 %v2701
    %v2703 = vpop.xlane.xlu0 %2702
    %v2704 = vsel %vm196, %v2688, 0.0
    %2705 = vadd.xlane.f32.xlu0 %v2704
    %v2706 = vpop.xlane.xlu0 %2705
    %v2707 = vsel %vm196, %v2689, 0.0
    %2708 = vadd.xlane.f32.xlu0 %v2707
    %v2709 = vpop.xlane.xlu0 %2708
    %v2710 = vsel %vm196, %v2690, 0.0
    %2711 = vadd.xlane.f32.xlu0 %v2710
    %v2712 = vpop.xlane.xlu0 %2711
    %v2713 = vsel %vm196, %v2691, 0.0
    %2714 = vadd.xlane.f32.xlu0 %v2713
    %v2715 = vpop.xlane.xlu0 %2714
    %v2716 = vrcp.pop 32.0
    %v2717 = vmul.f32 %v2694, %v2716
    %v2718 = vmul.f32 %v2697, %v2716
    %v2719 = vmul.f32 %v2700, %v2716
    %v2720 = vmul.f32 %v2703, %v2716
    %v2721 = vmul.f32 %v2706, %v2716
    %v2722 = vmul.f32 %v2709, %v2716
    %v2723 = vmul.f32 %v2712, %v2716
    %v2724 = vmul.f32 %v2715, %v2716
    %v2725 = vsub.f32 %v2684, %v2717
    %v2726 = vsub.f32 %v2685, %v2718
    %v2727 = vsub.f32 %v2686, %v2719
    %v2728 = vsub.f32 %v2687, %v2720
    %v2729 = vsub.f32 %v2688, %v2721
    %v2730 = vsub.f32 %v2689, %v2722
    %v2731 = vsub.f32 %v2690, %v2723
    %v2732 = vsub.f32 %v2691, %v2724
    %v2733 = vmul.f32 %v2725, %v2725
    %v2734 = vmul.f32 %v2726, %v2726
    %v2735 = vmul.f32 %v2727, %v2727
    %v2736 = vmul.f32 %v2728, %v2728
    %v2737 = vmul.f32 %v2729, %v2729
    %v2738 = vmul.f32 %v2730, %v2730
    %v2739 = vmul.f32 %v2731, %v2731
    %v2740 = vmul.f32 %v2732, %v2732
    %v2741 = vsel %vm196, %v2733, 0.0
    %2742 = vadd.xlane.f32.xlu0 %v2741
    %v2743 = vpop.xlane.xlu0 %2742
    %v2744 = vsel %vm196, %v2734, 0.0
    %2745 = vadd.xlane.f32.xlu0 %v2744
    %v2746 = vpop.xlane.xlu0 %2745
    %v2747 = vsel %vm196, %v2735, 0.0
    %2748 = vadd.xlane.f32.xlu0 %v2747
    %v2749 = vpop.xlane.xlu0 %2748
    %v2750 = vsel %vm196, %v2736, 0.0
    %2751 = vadd.xlane.f32.xlu0 %v2750
    %v2752 = vpop.xlane.xlu0 %2751
    %v2753 = vsel %vm196, %v2737, 0.0
    %2754 = vadd.xlane.f32.xlu0 %v2753
    %v2755 = vpop.xlane.xlu0 %2754
    %v2756 = vsel %vm196, %v2738, 0.0
    %2757 = vadd.xlane.f32.xlu0 %v2756
    %v2758 = vpop.xlane.xlu0 %2757
    %v2759 = vsel %vm196, %v2739, 0.0
    %2760 = vadd.xlane.f32.xlu0 %v2759
    %v2761 = vpop.xlane.xlu0 %2760
    %v2762 = vsel %vm196, %v2740, 0.0
    %2763 = vadd.xlane.f32.xlu0 %v2762
    %v2764 = vpop.xlane.xlu0 %2763
    %v2765 = vmul.f32 %v2743, %v2716
    %v2766 = vmul.f32 %v2746, %v2716
    %v2767 = vmul.f32 %v2749, %v2716
    %v2768 = vmul.f32 %v2752, %v2716
    %v2769 = vmul.f32 %v2755, %v2716
    %v2770 = vmul.f32 %v2758, %v2716
    %v2771 = vmul.f32 %v2761, %v2716
    %v2772 = vmul.f32 %v2764, %v2716
    %v2773 = vadd.f32 %v2765, 1e-05
    %v2774 = vadd.f32 %v2766, 1e-05
    %v2775 = vadd.f32 %v2767, 1e-05
    %v2776 = vadd.f32 %v2768, 1e-05
    %v2777 = vadd.f32 %v2769, 1e-05
    %v2778 = vadd.f32 %v2770, 1e-05
    %v2779 = vadd.f32 %v2771, 1e-05
    %v2780 = vadd.f32 %v2772, 1e-05
    %v2781 = vrsqrt.pop %v2773
    %v2782 = vrsqrt.pop %v2774
    %v2783 = vrsqrt.pop %v2775
    %v2784 = vrsqrt.pop %v2776
    %v2785 = vrsqrt.pop %v2777
    %v2786 = vrsqrt.pop %v2778
    %v2787 = vrsqrt.pop %v2779
    %v2788 = vrsqrt.pop %v2780
    %v2789 = vmul.f32 %v2725, %v2781
    %v2790 = vmul.f32 %v2726, %v2782
    %v2791 = vmul.f32 %v2727, %v2783
    %v2792 = vmul.f32 %v2728, %v2784
    %v2793 = vmul.f32 %v2729, %v2785
    %v2794 = vmul.f32 %v2730, %v2786
    %v2795 = vmul.f32 %v2731, %v2787
    %v2796 = vmul.f32 %v2732, %v2788
    %v2797 = vlaneseq
    %v2798 = vshrl.u32 %v2797, 7
    %v2799 = vsub.s32 2, %v2798
    %v2800 = vrot.slane %v103, %v2799
    %v2801 = vmul.f32 %v2789, %v2800
    %v2802 = vmul.f32 %v2790, %v2800
    %v2803 = vmul.f32 %v2791, %v2800
    %v2804 = vmul.f32 %v2792, %v2800
    %v2805 = vmul.f32 %v2793, %v2800
    %v2806 = vmul.f32 %v2794, %v2800
    %v2807 = vmul.f32 %v2795, %v2800
    %v2808 = vmul.f32 %v2796, %v2800
    %v2809 = vlaneseq
    %v2810 = vshrl.u32 %v2809, 7
    %v2811 = vsub.s32 3, %v2810
    %v2812 = vrot.slane %v103, %v2811
    %v2813 = vadd.f32 %v2801, %v2812
    %v2814 = vadd.f32 %v2802, %v2812
    %v2815 = vadd.f32 %v2803, %v2812
    %v2816 = vadd.f32 %v2804, %v2812
    %v2817 = vadd.f32 %v2805, %v2812
    %v2818 = vadd.f32 %v2806, %v2812
    %v2819 = vadd.f32 %v2807, %v2812
    %v2820 = vadd.f32 %v2808, %v2812
    %v2821 = vpack.c.bf16 %v2814, %v2813
    %v2822 = vpack.c.bf16 %v2816, %v2815
    %v2823 = vpack.c.bf16 %v2818, %v2817
    %v2824 = vpack.c.bf16 %v2820, %v2819
    %v2825 = vlaneseq
    %v2826 = vshrl.u32 %v2825, 7
    %v2827 = vsub.s32 0, %v2826
    %v2828 = vrot.slane %v103, %v2827
    %v2833 = vunpack.c.l.b16 %v95
    %v2834 = vunpack.c.l.b16 %v96
    %v2835 = vunpack.c.l.b16 %v97
    %v2836 = vunpack.c.l.b16 %v98
    %v2837 = vpack.c.b16 %v2834, %v2833
    %v2838 = vpack.c.b16 %v2836, %v2835
    %v2842 = vsel %vm196, %v2821, 0
    %v2845 = vsel %vm196, %v2822, 0
    %v2848 = vsel %vm196, %v2823, 0
    %v2851 = vsel %vm196, %v2824, 0
    %2853 = vmatprep.subr.bf16.mxu0 0
    %2854 = vmatpush1.bf16.msra.mxu0 0
    %2855 = vmatprep.subr.bf16.mxu0 0
    %2856 = vmatpush1.bf16.msra.mxu0 0
    %2857 = vmatprep.subr.bf16.mxu0 0
    %2858 = vmatpush1.bf16.msra.mxu0 0
    %2859 = vmatprep.subr.bf16.mxu0 0
    %2860 = vmatpush1.bf16.msra.mxu0 0
    %2861 = vmatprep.subr.bf16.mxu0 0
    %2862 = vmatpush1.bf16.msra.mxu0 0
    %2863 = vmatprep.subr.bf16.mxu0 0
    %2864 = vmatpush1.bf16.msra.mxu0 0
    %2865 = vmatprep.subr.bf16.mxu0 0
    %2866 = vmatpush1.bf16.msra.mxu0 %v2838
    %2867 = vmatprep.subr.bf16.mxu0 0
    %2868 = vmatpush1.bf16.msra.mxu0 %v2837
    %2869 = vmatprep.subr.bf16.mxu0 0
    %2870 = vmatpush2.bf16.msra.mxu0 0
    %2871 = vmatprep.subr.bf16.mxu0 0
    %2872 = vmatpush2.bf16.msra.mxu0 0
    %2873 = vmatprep.subr.bf16.mxu0 0
    %2874 = vmatpush2.bf16.msra.mxu0 0
    %2875 = vmatprep.subr.bf16.mxu0 0
    %2876 = vmatpush2.bf16.msra.mxu0 0
    %2877 = vmatprep.subr.bf16.mxu0 0
    %2878 = vmatpush2.bf16.msra.mxu0 0
    %2879 = vmatprep.subr.bf16.mxu0 0
    %2880 = vmatpush2.bf16.msra.mxu0 0
    %2881 = vmatprep.subr.bf16.mxu0 0
    %2882 = vmatpush2.bf16.msra.mxu0 0
    %2883 = vmatprep.subr.bf16.mxu0 0
    %2884 = vmatpush2.bf16.msra.mxu0 0
    %2885 = vmatprep.mubr.bf16.mxu0 0
    %2886 = vmatmul.mubr.bf16.gmra.mxu0 %v2842
    %v2887 = vpop.f32.mrf.mxu0
    %v2888 = vadd.f32 %v2828, %v2887
    %v2889 = vpop.f32.mrf.mxu0
    %v2890 = vpop.f32.mrf.mxu0
    %v2891 = vadd.f32 %v2828, %v2890
    %v2892 = vpop.f32.mrf.mxu0
    %2893 = vmatprep.mubr.bf16.mxu0 0
    %2894 = vmatmul.mubr.bf16.gmra.mxu0 %v2845
    %v2895 = vpop.f32.mrf.mxu0
    %v2896 = vadd.f32 %v2828, %v2895
    %v2897 = vpop.f32.mrf.mxu0
    %v2898 = vpop.f32.mrf.mxu0
    %v2899 = vadd.f32 %v2828, %v2898
    %v2900 = vpop.f32.mrf.mxu0
    %2901 = vmatprep.mubr.bf16.mxu0 0
    %2902 = vmatmul.mubr.bf16.gmra.mxu0 %v2848
    %v2903 = vpop.f32.mrf.mxu0
    %v2904 = vadd.f32 %v2828, %v2903
    %v2905 = vpop.f32.mrf.mxu0
    %v2906 = vpop.f32.mrf.mxu0
    %v2907 = vadd.f32 %v2828, %v2906
    %v2908 = vpop.f32.mrf.mxu0
    %2909 = vmatprep.mubr.bf16.mxu0 0
    %2910 = vmatmul.mubr.bf16.gmra.mxu0 %v2851
    %v2911 = vpop.f32.mrf.mxu0
    %v2912 = vadd.f32 %v2828, %v2911
    %v2913 = vpop.f32.mrf.mxu0
    %v2914 = vpop.f32.mrf.mxu0
    %v2915 = vadd.f32 %v2828, %v2914
    %v2916 = vpop.f32.mrf.mxu0
    %2917 = vdwg.mxu0
    %v2918 = vmax.f32 %v2888, 0.0
    %v2919 = vmax.f32 %v2891, 0.0
    %v2920 = vmax.f32 %v2896, 0.0
    %v2921 = vmax.f32 %v2899, 0.0
    %v2922 = vmax.f32 %v2904, 0.0
    %v2923 = vmax.f32 %v2907, 0.0
    %v2924 = vmax.f32 %v2912, 0.0
    %v2925 = vmax.f32 %v2915, 0.0
    %v2926 = vpack.c.bf16 %v2919, %v2918
    %v2927 = vpack.c.bf16 %v2921, %v2920
    %v2928 = vpack.c.bf16 %v2923, %v2922
    %v2929 = vpack.c.bf16 %v2925, %v2924
    %v2930 = vlaneseq
    %v2931 = vshrl.u32 %v2930, 7
    %v2932 = vsub.s32 1, %v2931
    %v2933 = vrot.slane %v103, %v2932
    %v2938 = vunpack.c.l.b16 %v99
    %v2939 = vunpack.c.l.b16 %v100
    %v2940 = vunpack.c.l.b16 %v101
    %v2941 = vunpack.c.l.b16 %v102
    %v2942 = vpack.c.b16 %v2939, %v2938
    %v2943 = vpack.c.b16 %v2941, %v2940
    %v2947 = vsel %vm196, %v2926, 0
    %v2950 = vsel %vm196, %v2927, 0
    %v2953 = vsel %vm196, %v2928, 0
    %v2956 = vsel %vm196, %v2929, 0
    %2958 = vmatprep.subr.bf16.mxu0 0
    %2959 = vmatpush1.bf16.msra.mxu0 0
    %2960 = vmatprep.subr.bf16.mxu0 0
    %2961 = vmatpush1.bf16.msra.mxu0 0
    %2962 = vmatprep.subr.bf16.mxu0 0
    %2963 = vmatpush1.bf16.msra.mxu0 0
    %2964 = vmatprep.subr.bf16.mxu0 0
    %2965 = vmatpush1.bf16.msra.mxu0 0
    %2966 = vmatprep.subr.bf16.mxu0 0
    %2967 = vmatpush1.bf16.msra.mxu0 0
    %2968 = vmatprep.subr.bf16.mxu0 0
    %2969 = vmatpush1.bf16.msra.mxu0 0
    %2970 = vmatprep.subr.bf16.mxu0 0
    %2971 = vmatpush1.bf16.msra.mxu0 %v2943
    %2972 = vmatprep.subr.bf16.mxu0 0
    %2973 = vmatpush1.bf16.msra.mxu0 %v2942
    %2974 = vmatprep.subr.bf16.mxu0 0
    %2975 = vmatpush2.bf16.msra.mxu0 0
    %2976 = vmatprep.subr.bf16.mxu0 0
    %2977 = vmatpush2.bf16.msra.mxu0 0
    %2978 = vmatprep.subr.bf16.mxu0 0
    %2979 = vmatpush2.bf16.msra.mxu0 0
    %2980 = vmatprep.subr.bf16.mxu0 0
    %2981 = vmatpush2.bf16.msra.mxu0 0
    %2982 = vmatprep.subr.bf16.mxu0 0
    %2983 = vmatpush2.bf16.msra.mxu0 0
    %2984 = vmatprep.subr.bf16.mxu0 0
    %2985 = vmatpush2.bf16.msra.mxu0 0
    %2986 = vmatprep.subr.bf16.mxu0 0
    %2987 = vmatpush2.bf16.msra.mxu0 0
    %2988 = vmatprep.subr.bf16.mxu0 0
    %2989 = vmatpush2.bf16.msra.mxu0 0
    %2990 = vmatprep.mubr.bf16.mxu0 0
    %2991 = vmatmul.mubr.bf16.gmra.mxu0 %v2947
    %v2992 = vpop.f32.mrf.mxu0
    %v2993 = vadd.f32 %v2933, %v2992
    %v2994 = vpop.f32.mrf.mxu0
    %v2995 = vpop.f32.mrf.mxu0
    %v2996 = vadd.f32 %v2933, %v2995
    %v2997 = vpop.f32.mrf.mxu0
    %2998 = vmatprep.mubr.bf16.mxu0 0
    %2999 = vmatmul.mubr.bf16.gmra.mxu0 %v2950
    %v3000 = vpop.f32.mrf.mxu0
    %v3001 = vadd.f32 %v2933, %v3000
    %v3002 = vpop.f32.mrf.mxu0
    %v3003 = vpop.f32.mrf.mxu0
    %v3004 = vadd.f32 %v2933, %v3003
    %v3005 = vpop.f32.mrf.mxu0
    %3006 = vmatprep.mubr.bf16.mxu0 0
    %3007 = vmatmul.mubr.bf16.gmra.mxu0 %v2953
    %v3008 = vpop.f32.mrf.mxu0
    %v3009 = vadd.f32 %v2933, %v3008
    %v3010 = vpop.f32.mrf.mxu0
    %v3011 = vpop.f32.mrf.mxu0
    %v3012 = vadd.f32 %v2933, %v3011
    %v3013 = vpop.f32.mrf.mxu0
    %3014 = vmatprep.mubr.bf16.mxu0 0
    %3015 = vmatmul.mubr.bf16.gmra.mxu0 %v2956
    %v3016 = vpop.f32.mrf.mxu0
    %v3017 = vadd.f32 %v2933, %v3016
    %v3018 = vpop.f32.mrf.mxu0
    %v3019 = vpop.f32.mrf.mxu0
    %v3020 = vadd.f32 %v2933, %v3019
    %v3021 = vpop.f32.mrf.mxu0
    %3022 = vdwg.mxu0
    %v3023 = vmax.f32 %v2993, 0.0
    %v3024 = vmax.f32 %v2996, 0.0
    %v3025 = vmax.f32 %v3001, 0.0
    %v3026 = vmax.f32 %v3004, 0.0
    %v3027 = vmax.f32 %v3009, 0.0
    %v3028 = vmax.f32 %v3012, 0.0
    %v3029 = vmax.f32 %v3017, 0.0
    %v3030 = vmax.f32 %v3020, 0.0
    %v3031 = vadd.f32 %v3023, %v2813
    %v3032 = vadd.f32 %v3024, %v2814
    %v3033 = vadd.f32 %v3025, %v2815
    %v3034 = vadd.f32 %v3026, %v2816
    %v3035 = vadd.f32 %v3027, %v2817
    %v3036 = vadd.f32 %v3028, %v2818
    %v3037 = vadd.f32 %v3029, %v2819
    %v3038 = vadd.f32 %v3030, %v2820
    %v3039 = vsel %vm196, %v3031, 0.0
    %3040 = vadd.xlane.f32.xlu0 %v3039
    %v3041 = vpop.xlane.xlu0 %3040
    %v3042 = vsel %vm196, %v3032, 0.0
    %3043 = vadd.xlane.f32.xlu0 %v3042
    %v3044 = vpop.xlane.xlu0 %3043
    %v3045 = vsel %vm196, %v3033, 0.0
    %3046 = vadd.xlane.f32.xlu0 %v3045
    %v3047 = vpop.xlane.xlu0 %3046
    %v3048 = vsel %vm196, %v3034, 0.0
    %3049 = vadd.xlane.f32.xlu0 %v3048
    %v3050 = vpop.xlane.xlu0 %3049
    %v3051 = vsel %vm196, %v3035, 0.0
    %3052 = vadd.xlane.f32.xlu0 %v3051
    %v3053 = vpop.xlane.xlu0 %3052
    %v3054 = vsel %vm196, %v3036, 0.0
    %3055 = vadd.xlane.f32.xlu0 %v3054
    %v3056 = vpop.xlane.xlu0 %3055
    %v3057 = vsel %vm196, %v3037, 0.0
    %3058 = vadd.xlane.f32.xlu0 %v3057
    %v3059 = vpop.xlane.xlu0 %3058
    %v3060 = vsel %vm196, %v3038, 0.0
    %3061 = vadd.xlane.f32.xlu0 %v3060
    %v3062 = vpop.xlane.xlu0 %3061
    %v3063 = vmul.f32 %v3041, %v2716
    %v3064 = vmul.f32 %v3044, %v2716
    %v3065 = vmul.f32 %v3047, %v2716
    %v3066 = vmul.f32 %v3050, %v2716
    %v3067 = vmul.f32 %v3053, %v2716
    %v3068 = vmul.f32 %v3056, %v2716
    %v3069 = vmul.f32 %v3059, %v2716
    %v3070 = vmul.f32 %v3062, %v2716
    %v3071 = vsub.f32 %v3031, %v3063
    %v3072 = vsub.f32 %v3032, %v3064
    %v3073 = vsub.f32 %v3033, %v3065
    %v3074 = vsub.f32 %v3034, %v3066
    %v3075 = vsub.f32 %v3035, %v3067
    %v3076 = vsub.f32 %v3036, %v3068
    %v3077 = vsub.f32 %v3037, %v3069
    %v3078 = vsub.f32 %v3038, %v3070
    %v3079 = vmul.f32 %v3071, %v3071
    %v3080 = vmul.f32 %v3072, %v3072
    %v3081 = vmul.f32 %v3073, %v3073
    %v3082 = vmul.f32 %v3074, %v3074
    %v3083 = vmul.f32 %v3075, %v3075
    %v3084 = vmul.f32 %v3076, %v3076
    %v3085 = vmul.f32 %v3077, %v3077
    %v3086 = vmul.f32 %v3078, %v3078
    %v3087 = vsel %vm196, %v3079, 0.0
    %3088 = vadd.xlane.f32.xlu0 %v3087
    %v3089 = vpop.xlane.xlu0 %3088
    %v3090 = vsel %vm196, %v3080, 0.0
    %3091 = vadd.xlane.f32.xlu0 %v3090
    %v3092 = vpop.xlane.xlu0 %3091
    %v3093 = vsel %vm196, %v3081, 0.0
    %3094 = vadd.xlane.f32.xlu0 %v3093
    %v3095 = vpop.xlane.xlu0 %3094
    %v3096 = vsel %vm196, %v3082, 0.0
    %3097 = vadd.xlane.f32.xlu0 %v3096
    %v3098 = vpop.xlane.xlu0 %3097
    %v3099 = vsel %vm196, %v3083, 0.0
    %3100 = vadd.xlane.f32.xlu0 %v3099
    %v3101 = vpop.xlane.xlu0 %3100
    %v3102 = vsel %vm196, %v3084, 0.0
    %3103 = vadd.xlane.f32.xlu0 %v3102
    %v3104 = vpop.xlane.xlu0 %3103
    %v3105 = vsel %vm196, %v3085, 0.0
    %3106 = vadd.xlane.f32.xlu0 %v3105
    %v3107 = vpop.xlane.xlu0 %3106
    %v3108 = vsel %vm196, %v3086, 0.0
    %3109 = vadd.xlane.f32.xlu0 %v3108
    %v3110 = vpop.xlane.xlu0 %3109
    %v3111 = vmul.f32 %v3089, %v2716
    %v3112 = vmul.f32 %v3092, %v2716
    %v3113 = vmul.f32 %v3095, %v2716
    %v3114 = vmul.f32 %v3098, %v2716
    %v3115 = vmul.f32 %v3101, %v2716
    %v3116 = vmul.f32 %v3104, %v2716
    %v3117 = vmul.f32 %v3107, %v2716
    %v3118 = vmul.f32 %v3110, %v2716
    %v3119 = vadd.f32 %v3111, 1e-05
    %v3120 = vadd.f32 %v3112, 1e-05
    %v3121 = vadd.f32 %v3113, 1e-05
    %v3122 = vadd.f32 %v3114, 1e-05
    %v3123 = vadd.f32 %v3115, 1e-05
    %v3124 = vadd.f32 %v3116, 1e-05
    %v3125 = vadd.f32 %v3117, 1e-05
    %v3126 = vadd.f32 %v3118, 1e-05
    %v3127 = vrsqrt.pop %v3119
    %v3128 = vrsqrt.pop %v3120
    %v3129 = vrsqrt.pop %v3121
    %v3130 = vrsqrt.pop %v3122
    %v3131 = vrsqrt.pop %v3123
    %v3132 = vrsqrt.pop %v3124
    %v3133 = vrsqrt.pop %v3125
    %v3134 = vrsqrt.pop %v3126
    %v3135 = vmul.f32 %v3071, %v3127
    %v3136 = vmul.f32 %v3072, %v3128
    %v3137 = vmul.f32 %v3073, %v3129
    %v3138 = vmul.f32 %v3074, %v3130
    %v3139 = vmul.f32 %v3075, %v3131
    %v3140 = vmul.f32 %v3076, %v3132
    %v3141 = vmul.f32 %v3077, %v3133
    %v3142 = vmul.f32 %v3078, %v3134
    %v3143 = vlaneseq
    %v3144 = vshrl.u32 %v3143, 7
    %v3145 = vsub.s32 4, %v3144
    %v3146 = vrot.slane %v103, %v3145
    %v3147 = vmul.f32 %v3135, %v3146
    %v3148 = vmul.f32 %v3136, %v3146
    %v3149 = vmul.f32 %v3137, %v3146
    %v3150 = vmul.f32 %v3138, %v3146
    %v3151 = vmul.f32 %v3139, %v3146
    %v3152 = vmul.f32 %v3140, %v3146
    %v3153 = vmul.f32 %v3141, %v3146
    %v3154 = vmul.f32 %v3142, %v3146
    %v3155 = vlaneseq
    %v3156 = vshrl.u32 %v3155, 7
    %v3157 = vsub.s32 5, %v3156
    %v3158 = vrot.slane %v103, %v3157
    %v3159 = vadd.f32 %v3147, %v3158
    %v3160 = vadd.f32 %v3148, %v3158
    %v3161 = vadd.f32 %v3149, %v3158
    %v3162 = vadd.f32 %v3150, %v3158
    %v3163 = vadd.f32 %v3151, %v3158
    %v3164 = vadd.f32 %v3152, %v3158
    %v3165 = vadd.f32 %v3153, %v3158
    %v3166 = vadd.f32 %v3154, %v3158
    %s3167 = scalar_lea.vmem [#allocation2], 64
    %v3168 = vld [vmem:[%s3167] sm:$0xf]
    %v3169 = vld [vmem:[%s3167 + $0x4] sm:$0xf]
    %v3170 = vld [vmem:[%s3167 + $0x8] sm:$0xf]
    %v3171 = vld [vmem:[%s3167 + $0xc] sm:$0xf]
    %v3172 = vld [vmem:[%s3167 + $0x10] sm:$0xf]
    %v3173 = vld [vmem:[%s3167 + $0x14] sm:$0xf]
    %v3174 = vld [vmem:[%s3167 + $0x18] sm:$0xf]
    %v3175 = vld [vmem:[%s3167 + $0x1c] sm:$0xf]
    %v3176 = vld [vmem:[%s3167 + $0x20] sm:$0xf]
    %v3177 = vld [vmem:[%s3167 + $0x24] sm:$0xf]
    %v3178 = vld [vmem:[%s3167 + $0x28] sm:$0xf]
    %v3179 = vld [vmem:[%s3167 + $0x2c] sm:$0xf]
    %v3180 = vld [vmem:[%s3167 + $0x30] sm:$0xf]
    %v3181 = vld [vmem:[%s3167 + $0x34] sm:$0xf]
    %v3182 = vld [vmem:[%s3167 + $0x38] sm:$0xf]
    %v3183 = vld [vmem:[%s3167 + $0x3c] sm:$0xf]
    %s3184 = scalar_lea.vmem [#allocation4], 64
    %v3185 = vld [vmem:[%s3184] sm:$0xf]
    %v3186 = vld [vmem:[%s3184 + $0x4] sm:$0xf]
    %v3187 = vld [vmem:[%s3184 + $0x8] sm:$0xf]
    %v3188 = vld [vmem:[%s3184 + $0xc] sm:$0xf]
    %v3189 = vld [vmem:[%s3184 + $0x10] sm:$0xf]
    %v3190 = vld [vmem:[%s3184 + $0x14] sm:$0xf]
    %v3191 = vld [vmem:[%s3184 + $0x18] sm:$0xf]
    %v3192 = vld [vmem:[%s3184 + $0x1c] sm:$0xf]
    %v3193 = vld [vmem:[%s3184 + $0x20] sm:$0xf]
    %v3194 = vld [vmem:[%s3184 + $0x24] sm:$0xf]
    %v3195 = vld [vmem:[%s3184 + $0x28] sm:$0xf]
    %v3196 = vld [vmem:[%s3184 + $0x2c] sm:$0xf]
    %v3197 = vld [vmem:[%s3184 + $0x30] sm:$0xf]
    %v3198 = vld [vmem:[%s3184 + $0x34] sm:$0xf]
    %v3199 = vld [vmem:[%s3184 + $0x38] sm:$0xf]
    %v3200 = vld [vmem:[%s3184 + $0x3c] sm:$0xf]
    %s3201 = scalar_lea.vmem %s4, 16
    %v3202 = vld [vmem:[%s3201] sm:$0xf]
    %v3203 = vld [vmem:[%s3201 + $0x4] sm:$0xf]
    %v3204 = vld [vmem:[%s3201 + $0x8] sm:$0xf]
    %v3205 = vld [vmem:[%s3201 + $0xc] sm:$0xf]
    %s3206 = scalar_lea.vmem %s5, 16
    %v3207 = vld [vmem:[%s3206] sm:$0xf]
    %v3208 = vld [vmem:[%s3206 + $0x4] sm:$0xf]
    %v3209 = vld [vmem:[%s3206 + $0x8] sm:$0xf]
    %v3210 = vld [vmem:[%s3206 + $0xc] sm:$0xf]
    %s3211 = scalar_lea.vmem %s6, 8
    %v3212 = vld [vmem:[%s3211] sm:$0xff]
    %s3213 = scalar_lea.vmem %s1, 8
    %v3214 = vld [vmem:[%s3213] sm:$0xff]
    %v3216 = vsel %vm105, %v3214, 0
    %3218 = vmatprep.subr.mxu0 0.0
    %3219 = vmatpush1.msra.mxu0 0.0
    %3220 = vmatprep.subr.mxu0 0.0
    %3221 = vmatpush1.msra.mxu0 0.0
    %3222 = vmatprep.subr.mxu0 0.0
    %3223 = vmatpush1.msra.mxu0 0.0
    %3224 = vmatprep.subr.mxu0 0.0
    %3225 = vmatpush1.msra.mxu0 0.0
    %3226 = vmatprep.subr.mxu0 0.0
    %3227 = vmatpush1.msra.mxu0 0.0
    %3228 = vmatprep.subr.mxu0 0.0
    %3229 = vmatpush1.msra.mxu0 0.0
    %3230 = vmatprep.subr.mxu0 0.0
    %3231 = vmatpush1.msra.mxu0 0.0
    %3232 = vmatprep.subr.mxu0 0.0
    %3233 = vmatpush1.msra.mxu0 0.0
    %3234 = vmatprep.subr.mxu0 0.0
    %3235 = vmatpush1.msra.mxu0 %v3166
    %3236 = vmatprep.subr.mxu0 0.0
    %3237 = vmatpush1.msra.mxu0 %v3165
    %3238 = vmatprep.subr.mxu0 0.0
    %3239 = vmatpush1.msra.mxu0 %v3164
    %3240 = vmatprep.subr.mxu0 0.0
    %3241 = vmatpush1.msra.mxu0 %v3163
    %3242 = vmatprep.subr.mxu0 0.0
    %3243 = vmatpush1.msra.mxu0 %v3162
    %3244 = vmatprep.subr.mxu0 0.0
    %3245 = vmatpush1.msra.mxu0 %v3161
    %3246 = vmatprep.subr.mxu0 0.0
    %3247 = vmatpush1.msra.mxu0 %v3160
    %3248 = vmatprep.subr.mxu0 0.0
    %3249 = vmatpush1.msra.mxu0 %v3159
    %3250 = vmatprep.subr.mxu0 0.0
    %3251 = vmatpush2.msra.mxu0 0.0
    %3252 = vmatprep.subr.mxu0 0.0
    %3253 = vmatpush2.msra.mxu0 0.0
    %3254 = vmatprep.subr.mxu0 0.0
    %3255 = vmatpush2.msra.mxu0 0.0
    %3256 = vmatprep.subr.mxu0 0.0
    %3257 = vmatpush2.msra.mxu0 0.0
    %3258 = vmatprep.subr.mxu0 0.0
    %3259 = vmatpush2.msra.mxu0 0.0
    %3260 = vmatprep.subr.mxu0 0.0
    %3261 = vmatpush2.msra.mxu0 0.0
    %3262 = vmatprep.subr.mxu0 0.0
    %3263 = vmatpush2.msra.mxu0 0.0
    %3264 = vmatprep.subr.mxu0 0.0
    %3265 = vmatpush2.msra.mxu0 0.0
    %3266 = vmatprep.subr.mxu0 0.0
    %3267 = vmatpush2.msra.mxu0 0.0
    %3268 = vmatprep.subr.mxu0 0.0
    %3269 = vmatpush2.msra.mxu0 0.0
    %3270 = vmatprep.subr.mxu0 0.0
    %3271 = vmatpush2.msra.mxu0 0.0
    %3272 = vmatprep.subr.mxu0 0.0
    %3273 = vmatpush2.msra.mxu0 0.0
    %3274 = vmatprep.subr.mxu0 0.0
    %3275 = vmatpush2.msra.mxu0 0.0
    %3276 = vmatprep.subr.mxu0 0.0
    %3277 = vmatpush2.msra.mxu0 0.0
    %3278 = vmatprep.subr.mxu0 0.0
    %3279 = vmatpush2.msra.mxu0 0.0
    %3280 = vmatprep.subr.mxu0 0.0
    %3281 = vmatpush2.msra.mxu0 0.0
    %3282 = vmatprep.mubr.f32.mxu0 0.0
    %3283 = vmatmul.mubr.f32.gmra.mxu0 %v3216
    %v3284 = vpop.f32.mrf.mxu0
    %v3285 = vadd.f32 0.0, %v3284
    %v3286 = vpop.f32.mrf.mxu0
    %3287 = vdwg.mxu0
    %v3288 = vpack.c.bf16 %v3285, %v3285
    %v3289 = vpack.c.bf16 %v3160, %v3159
    %v3290 = vpack.c.bf16 %v3162, %v3161
    %v3291 = vpack.c.bf16 %v3164, %v3163
    %v3292 = vpack.c.bf16 %v3166, %v3165
    %v3297 = vunpack.c.l.b16 %v3168
    %v3298 = vunpack.c.l.b16 %v3169
    %v3299 = vunpack.c.l.b16 %v3170
    %v3300 = vunpack.c.l.b16 %v3171
    %v3301 = vpack.c.b16 %v3298, %v3297
    %v3302 = vpack.c.b16 %v3300, %v3299
    %v3306 = vsel %vm196, %v3288, 0
    %3308 = vmatprep.subr.bf16.mxu0 0
    %3309 = vmatpush1.bf16.msra.mxu0 0
    %3310 = vmatprep.subr.bf16.mxu0 0
    %3311 = vmatpush1.bf16.msra.mxu0 0
    %3312 = vmatprep.subr.bf16.mxu0 0
    %3313 = vmatpush1.bf16.msra.mxu0 0
    %3314 = vmatprep.subr.bf16.mxu0 0
    %3315 = vmatpush1.bf16.msra.mxu0 0
    %3316 = vmatprep.subr.bf16.mxu0 0
    %3317 = vmatpush1.bf16.msra.mxu0 0
    %3318 = vmatprep.subr.bf16.mxu0 0
    %3319 = vmatpush1.bf16.msra.mxu0 0
    %3320 = vmatprep.subr.bf16.mxu0 0
    %3321 = vmatpush1.bf16.msra.mxu0 %v3302
    %3322 = vmatprep.subr.bf16.mxu0 0
    %3323 = vmatpush1.bf16.msra.mxu0 %v3301
    %3324 = vmatprep.subr.bf16.mxu0 0
    %3325 = vmatpush2.bf16.msra.mxu0 0
    %3326 = vmatprep.subr.bf16.mxu0 0
    %3327 = vmatpush2.bf16.msra.mxu0 0
    %3328 = vmatprep.subr.bf16.mxu0 0
    %3329 = vmatpush2.bf16.msra.mxu0 0
    %3330 = vmatprep.subr.bf16.mxu0 0
    %3331 = vmatpush2.bf16.msra.mxu0 0
    %3332 = vmatprep.subr.bf16.mxu0 0
    %3333 = vmatpush2.bf16.msra.mxu0 0
    %3334 = vmatprep.subr.bf16.mxu0 0
    %3335 = vmatpush2.bf16.msra.mxu0 0
    %3336 = vmatprep.subr.bf16.mxu0 0
    %3337 = vmatpush2.bf16.msra.mxu0 0
    %3338 = vmatprep.subr.bf16.mxu0 0
    %3339 = vmatpush2.bf16.msra.mxu0 0
    %3340 = vmatprep.mubr.bf16.mxu0 0
    %3341 = vmatmul.mubr.bf16.gmra.mxu0 %v3306
    %v3342 = vpop.f32.mrf.mxu0
    %v3343 = vadd.f32 0.0, %v3342
    %v3344 = vpop.f32.mrf.mxu0
    %v3345 = vpop.f32.mrf.mxu0
    %v3346 = vpop.f32.mrf.mxu0
    %3347 = vdwg.mxu0
    %v3352 = vunpack.c.l.b16 %v3172
    %v3353 = vunpack.c.l.b16 %v3173
    %v3354 = vunpack.c.l.b16 %v3174
    %v3355 = vunpack.c.l.b16 %v3175
    %v3356 = vpack.c.b16 %v3353, %v3352
    %v3357 = vpack.c.b16 %v3355, %v3354
    %3360 = vmatprep.subr.bf16.mxu0 0
    %3361 = vmatpush1.bf16.msra.mxu0 0
    %3362 = vmatprep.subr.bf16.mxu0 0
    %3363 = vmatpush1.bf16.msra.mxu0 0
    %3364 = vmatprep.subr.bf16.mxu0 0
    %3365 = vmatpush1.bf16.msra.mxu0 0
    %3366 = vmatprep.subr.bf16.mxu0 0
    %3367 = vmatpush1.bf16.msra.mxu0 0
    %3368 = vmatprep.subr.bf16.mxu0 0
    %3369 = vmatpush1.bf16.msra.mxu0 0
    %3370 = vmatprep.subr.bf16.mxu0 0
    %3371 = vmatpush1.bf16.msra.mxu0 0
    %3372 = vmatprep.subr.bf16.mxu0 0
    %3373 = vmatpush1.bf16.msra.mxu0 %v3357
    %3374 = vmatprep.subr.bf16.mxu0 0
    %3375 = vmatpush1.bf16.msra.mxu0 %v3356
    %3376 = vmatprep.subr.bf16.mxu0 0
    %3377 = vmatpush2.bf16.msra.mxu0 0
    %3378 = vmatprep.subr.bf16.mxu0 0
    %3379 = vmatpush2.bf16.msra.mxu0 0
    %3380 = vmatprep.subr.bf16.mxu0 0
    %3381 = vmatpush2.bf16.msra.mxu0 0
    %3382 = vmatprep.subr.bf16.mxu0 0
    %3383 = vmatpush2.bf16.msra.mxu0 0
    %3384 = vmatprep.subr.bf16.mxu0 0
    %3385 = vmatpush2.bf16.msra.mxu0 0
    %3386 = vmatprep.subr.bf16.mxu0 0
    %3387 = vmatpush2.bf16.msra.mxu0 0
    %3388 = vmatprep.subr.bf16.mxu0 0
    %3389 = vmatpush2.bf16.msra.mxu0 0
    %3390 = vmatprep.subr.bf16.mxu0 0
    %3391 = vmatpush2.bf16.msra.mxu0 0
    %3392 = vmatprep.mubr.bf16.mxu0 0
    %3393 = vmatmul.mubr.bf16.gmra.mxu0 %v3306
    %v3394 = vpop.f32.mrf.mxu0
    %v3395 = vadd.f32 0.0, %v3394
    %v3396 = vpop.f32.mrf.mxu0
    %v3397 = vpop.f32.mrf.mxu0
    %v3398 = vpop.f32.mrf.mxu0
    %3399 = vdwg.mxu0
    %v3404 = vunpack.c.l.b16 %v3176
    %v3405 = vunpack.c.l.b16 %v3177
    %v3406 = vunpack.c.l.b16 %v3178
    %v3407 = vunpack.c.l.b16 %v3179
    %v3408 = vpack.c.b16 %v3405, %v3404
    %v3409 = vpack.c.b16 %v3407, %v3406
    %3412 = vmatprep.subr.bf16.mxu0 0
    %3413 = vmatpush1.bf16.msra.mxu0 0
    %3414 = vmatprep.subr.bf16.mxu0 0
    %3415 = vmatpush1.bf16.msra.mxu0 0
    %3416 = vmatprep.subr.bf16.mxu0 0
    %3417 = vmatpush1.bf16.msra.mxu0 0
    %3418 = vmatprep.subr.bf16.mxu0 0
    %3419 = vmatpush1.bf16.msra.mxu0 0
    %3420 = vmatprep.subr.bf16.mxu0 0
    %3421 = vmatpush1.bf16.msra.mxu0 0
    %3422 = vmatprep.subr.bf16.mxu0 0
    %3423 = vmatpush1.bf16.msra.mxu0 0
    %3424 = vmatprep.subr.bf16.mxu0 0
    %3425 = vmatpush1.bf16.msra.mxu0 %v3409
    %3426 = vmatprep.subr.bf16.mxu0 0
    %3427 = vmatpush1.bf16.msra.mxu0 %v3408
    %3428 = vmatprep.subr.bf16.mxu0 0
    %3429 = vmatpush2.bf16.msra.mxu0 0
    %3430 = vmatprep.subr.bf16.mxu0 0
    %3431 = vmatpush2.bf16.msra.mxu0 0
    %3432 = vmatprep.subr.bf16.mxu0 0
    %3433 = vmatpush2.bf16.msra.mxu0 0
    %3434 = vmatprep.subr.bf16.mxu0 0
    %3435 = vmatpush2.bf16.msra.mxu0 0
    %3436 = vmatprep.subr.bf16.mxu0 0
    %3437 = vmatpush2.bf16.msra.mxu0 0
    %3438 = vmatprep.subr.bf16.mxu0 0
    %3439 = vmatpush2.bf16.msra.mxu0 0
    %3440 = vmatprep.subr.bf16.mxu0 0
    %3441 = vmatpush2.bf16.msra.mxu0 0
    %3442 = vmatprep.subr.bf16.mxu0 0
    %3443 = vmatpush2.bf16.msra.mxu0 0
    %3444 = vmatprep.mubr.bf16.mxu0 0
    %3445 = vmatmul.mubr.bf16.gmra.mxu0 %v3306
    %v3446 = vpop.f32.mrf.mxu0
    %v3447 = vadd.f32 0.0, %v3446
    %v3448 = vpop.f32.mrf.mxu0
    %v3449 = vpop.f32.mrf.mxu0
    %v3450 = vpop.f32.mrf.mxu0
    %3451 = vdwg.mxu0
    %v3456 = vunpack.c.l.b16 %v3180
    %v3457 = vunpack.c.l.b16 %v3181
    %v3458 = vunpack.c.l.b16 %v3182
    %v3459 = vunpack.c.l.b16 %v3183
    %v3460 = vpack.c.b16 %v3457, %v3456
    %v3461 = vpack.c.b16 %v3459, %v3458
    %3464 = vmatprep.subr.bf16.mxu0 0
    %3465 = vmatpush1.bf16.msra.mxu0 0
    %3466 = vmatprep.subr.bf16.mxu0 0
    %3467 = vmatpush1.bf16.msra.mxu0 0
    %3468 = vmatprep.subr.bf16.mxu0 0
    %3469 = vmatpush1.bf16.msra.mxu0 0
    %3470 = vmatprep.subr.bf16.mxu0 0
    %3471 = vmatpush1.bf16.msra.mxu0 0
    %3472 = vmatprep.subr.bf16.mxu0 0
    %3473 = vmatpush1.bf16.msra.mxu0 0
    %3474 = vmatprep.subr.bf16.mxu0 0
    %3475 = vmatpush1.bf16.msra.mxu0 0
    %3476 = vmatprep.subr.bf16.mxu0 0
    %3477 = vmatpush1.bf16.msra.mxu0 %v3461
    %3478 = vmatprep.subr.bf16.mxu0 0
    %3479 = vmatpush1.bf16.msra.mxu0 %v3460
    %3480 = vmatprep.subr.bf16.mxu0 0
    %3481 = vmatpush2.bf16.msra.mxu0 0
    %3482 = vmatprep.subr.bf16.mxu0 0
    %3483 = vmatpush2.bf16.msra.mxu0 0
    %3484 = vmatprep.subr.bf16.mxu0 0
    %3485 = vmatpush2.bf16.msra.mxu0 0
    %3486 = vmatprep.subr.bf16.mxu0 0
    %3487 = vmatpush2.bf16.msra.mxu0 0
    %3488 = vmatprep.subr.bf16.mxu0 0
    %3489 = vmatpush2.bf16.msra.mxu0 0
    %3490 = vmatprep.subr.bf16.mxu0 0
    %3491 = vmatpush2.bf16.msra.mxu0 0
    %3492 = vmatprep.subr.bf16.mxu0 0
    %3493 = vmatpush2.bf16.msra.mxu0 0
    %3494 = vmatprep.subr.bf16.mxu0 0
    %3495 = vmatpush2.bf16.msra.mxu0 0
    %3496 = vmatprep.mubr.bf16.mxu0 0
    %3497 = vmatmul.mubr.bf16.gmra.mxu0 %v3306
    %v3498 = vpop.f32.mrf.mxu0
    %v3499 = vadd.f32 0.0, %v3498
    %v3500 = vpop.f32.mrf.mxu0
    %v3501 = vpop.f32.mrf.mxu0
    %v3502 = vpop.f32.mrf.mxu0
    %3503 = vdwg.mxu0
    %v3504 = vpack.c.bf16 %v3343, %v3343
    %v3505 = vpack.c.bf16 %v3395, %v3395
    %v3506 = vpack.c.bf16 %v3447, %v3447
    %v3507 = vpack.c.bf16 %v3499, %v3499
    %v3509 = vsel %vm196, %v3504, 0
    %v3512 = vsel %vm196, %v3289, 0
    %v3515 = vsel %vm196, %v3290, 0
    %v3518 = vsel %vm196, %v3291, 0
    %v3521 = vsel %vm196, %v3292, 0
    %3523 = vmatprep.subr.bf16.mxu0 0
    %3524 = vmatpush1.bf16.xpose.msra.mxu0 0
    %3525 = vmatprep.subr.bf16.mxu0 0
    %3526 = vmatpush1.bf16.xpose.msra.mxu0 0
    %3527 = vmatprep.subr.bf16.mxu0 0
    %3528 = vmatpush1.bf16.xpose.msra.mxu0 0
    %3529 = vmatprep.subr.bf16.mxu0 0
    %3530 = vmatpush1.bf16.xpose.msra.mxu0 0
    %3531 = vmatprep.subr.bf16.mxu0 0
    %3532 = vmatpush1.bf16.xpose.msra.mxu0 %v3521
    %3533 = vmatprep.subr.bf16.mxu0 0
    %3534 = vmatpush1.bf16.xpose.msra.mxu0 %v3518
    %3535 = vmatprep.subr.bf16.mxu0 0
    %3536 = vmatpush1.bf16.xpose.msra.mxu0 %v3515
    %3537 = vmatprep.subr.bf16.mxu0 0
    %3538 = vmatpush1.bf16.xpose.msra.mxu0 %v3512
    %3539 = vmatprep.subr.bf16.mxu0 0
    %3540 = vmatpush2.bf16.xpose.msra.mxu0 0
    %3541 = vmatprep.subr.bf16.mxu0 0
    %3542 = vmatpush2.bf16.xpose.msra.mxu0 0
    %3543 = vmatprep.subr.bf16.mxu0 0
    %3544 = vmatpush2.bf16.xpose.msra.mxu0 0
    %3545 = vmatprep.subr.bf16.mxu0 0
    %3546 = vmatpush2.bf16.xpose.msra.mxu0 0
    %3547 = vmatprep.subr.bf16.mxu0 0
    %3548 = vmatpush2.bf16.xpose.msra.mxu0 0
    %3549 = vmatprep.subr.bf16.mxu0 0
    %3550 = vmatpush2.bf16.xpose.msra.mxu0 0
    %3551 = vmatprep.subr.bf16.mxu0 0
    %3552 = vmatpush2.bf16.xpose.msra.mxu0 0
    %3553 = vmatprep.subr.bf16.mxu0 0
    %3554 = vmatpush2.bf16.xpose.msra.mxu0 0
    %3555 = vmatprep.mubr.bf16.mxu0 0
    %3556 = vmatmul.mubr.bf16.gmra.mxu0 %v3509
    %v3557 = vpop.f32.mrf.mxu0
    %v3558 = vadd.f32 0.0, %v3557
    %v3559 = vpop.f32.mrf.mxu0
    %v3560 = vpop.f32.mrf.mxu0
    %v3561 = vpop.f32.mrf.mxu0
    %3562 = vdwg.mxu0
    %v3564 = vsel %vm196, %v3505, 0
    %3566 = vmatprep.subr.bf16.mxu0 0
    %3567 = vmatpush1.bf16.xpose.msra.mxu0 0
    %3568 = vmatprep.subr.bf16.mxu0 0
    %3569 = vmatpush1.bf16.xpose.msra.mxu0 0
    %3570 = vmatprep.subr.bf16.mxu0 0
    %3571 = vmatpush1.bf16.xpose.msra.mxu0 0
    %3572 = vmatprep.subr.bf16.mxu0 0
    %3573 = vmatpush1.bf16.xpose.msra.mxu0 0
    %3574 = vmatprep.subr.bf16.mxu0 0
    %3575 = vmatpush1.bf16.xpose.msra.mxu0 %v3521
    %3576 = vmatprep.subr.bf16.mxu0 0
    %3577 = vmatpush1.bf16.xpose.msra.mxu0 %v3518
    %3578 = vmatprep.subr.bf16.mxu0 0
    %3579 = vmatpush1.bf16.xpose.msra.mxu0 %v3515
    %3580 = vmatprep.subr.bf16.mxu0 0
    %3581 = vmatpush1.bf16.xpose.msra.mxu0 %v3512
    %3582 = vmatprep.subr.bf16.mxu0 0
    %3583 = vmatpush2.bf16.xpose.msra.mxu0 0
    %3584 = vmatprep.subr.bf16.mxu0 0
    %3585 = vmatpush2.bf16.xpose.msra.mxu0 0
    %3586 = vmatprep.subr.bf16.mxu0 0
    %3587 = vmatpush2.bf16.xpose.msra.mxu0 0
    %3588 = vmatprep.subr.bf16.mxu0 0
    %3589 = vmatpush2.bf16.xpose.msra.mxu0 0
    %3590 = vmatprep.subr.bf16.mxu0 0
    %3591 = vmatpush2.bf16.xpose.msra.mxu0 0
    %3592 = vmatprep.subr.bf16.mxu0 0
    %3593 = vmatpush2.bf16.xpose.msra.mxu0 0
    %3594 = vmatprep.subr.bf16.mxu0 0
    %3595 = vmatpush2.bf16.xpose.msra.mxu0 0
    %3596 = vmatprep.subr.bf16.mxu0 0
    %3597 = vmatpush2.bf16.xpose.msra.mxu0 0
    %3598 = vmatprep.mubr.bf16.mxu0 0
    %3599 = vmatmul.mubr.bf16.gmra.mxu0 %v3564
    %v3600 = vpop.f32.mrf.mxu0
    %v3601 = vadd.f32 0.0, %v3600
    %v3602 = vpop.f32.mrf.mxu0
    %v3603 = vpop.f32.mrf.mxu0
    %v3604 = vpop.f32.mrf.mxu0
    %3605 = vdwg.mxu0
    %v3607 = vsel %vm196, %v3506, 0
    %3609 = vmatprep.subr.bf16.mxu0 0
    %3610 = vmatpush1.bf16.xpose.msra.mxu0 0
    %3611 = vmatprep.subr.bf16.mxu0 0
    %3612 = vmatpush1.bf16.xpose.msra.mxu0 0
    %3613 = vmatprep.subr.bf16.mxu0 0
    %3614 = vmatpush1.bf16.xpose.msra.mxu0 0
    %3615 = vmatprep.subr.bf16.mxu0 0
    %3616 = vmatpush1.bf16.xpose.msra.mxu0 0
    %3617 = vmatprep.subr.bf16.mxu0 0
    %3618 = vmatpush1.bf16.xpose.msra.mxu0 %v3521
    %3619 = vmatprep.subr.bf16.mxu0 0
    %3620 = vmatpush1.bf16.xpose.msra.mxu0 %v3518
    %3621 = vmatprep.subr.bf16.mxu0 0
    %3622 = vmatpush1.bf16.xpose.msra.mxu0 %v3515
    %3623 = vmatprep.subr.bf16.mxu0 0
    %3624 = vmatpush1.bf16.xpose.msra.mxu0 %v3512
    %3625 = vmatprep.subr.bf16.mxu0 0
    %3626 = vmatpush2.bf16.xpose.msra.mxu0 0
    %3627 = vmatprep.subr.bf16.mxu0 0
    %3628 = vmatpush2.bf16.xpose.msra.mxu0 0
    %3629 = vmatprep.subr.bf16.mxu0 0
    %3630 = vmatpush2.bf16.xpose.msra.mxu0 0
    %3631 = vmatprep.subr.bf16.mxu0 0
    %3632 = vmatpush2.bf16.xpose.msra.mxu0 0
    %3633 = vmatprep.subr.bf16.mxu0 0
    %3634 = vmatpush2.bf16.xpose.msra.mxu0 0
    %3635 = vmatprep.subr.bf16.mxu0 0
    %3636 = vmatpush2.bf16.xpose.msra.mxu0 0
    %3637 = vmatprep.subr.bf16.mxu0 0
    %3638 = vmatpush2.bf16.xpose.msra.mxu0 0
    %3639 = vmatprep.subr.bf16.mxu0 0
    %3640 = vmatpush2.bf16.xpose.msra.mxu0 0
    %3641 = vmatprep.mubr.bf16.mxu0 0
    %3642 = vmatmul.mubr.bf16.gmra.mxu0 %v3607
    %v3643 = vpop.f32.mrf.mxu0
    %v3644 = vadd.f32 0.0, %v3643
    %v3645 = vpop.f32.mrf.mxu0
    %v3646 = vpop.f32.mrf.mxu0
    %v3647 = vpop.f32.mrf.mxu0
    %3648 = vdwg.mxu0
    %v3650 = vsel %vm196, %v3507, 0
    %3652 = vmatprep.subr.bf16.mxu0 0
    %3653 = vmatpush1.bf16.xpose.msra.mxu0 0
    %3654 = vmatprep.subr.bf16.mxu0 0
    %3655 = vmatpush1.bf16.xpose.msra.mxu0 0
    %3656 = vmatprep.subr.bf16.mxu0 0
    %3657 = vmatpush1.bf16.xpose.msra.mxu0 0
    %3658 = vmatprep.subr.bf16.mxu0 0
    %3659 = vmatpush1.bf16.xpose.msra.mxu0 0
    %3660 = vmatprep.subr.bf16.mxu0 0
    %3661 = vmatpush1.bf16.xpose.msra.mxu0 %v3521
    %3662 = vmatprep.subr.bf16.mxu0 0
    %3663 = vmatpush1.bf16.xpose.msra.mxu0 %v3518
    %3664 = vmatprep.subr.bf16.mxu0 0
    %3665 = vmatpush1.bf16.xpose.msra.mxu0 %v3515
    %3666 = vmatprep.subr.bf16.mxu0 0
    %3667 = vmatpush1.bf16.xpose.msra.mxu0 %v3512
    %3668 = vmatprep.subr.bf16.mxu0 0
    %3669 = vmatpush2.bf16.xpose.msra.mxu0 0
    %3670 = vmatprep.subr.bf16.mxu0 0
    %3671 = vmatpush2.bf16.xpose.msra.mxu0 0
    %3672 = vmatprep.subr.bf16.mxu0 0
    %3673 = vmatpush2.bf16.xpose.msra.mxu0 0
    %3674 = vmatprep.subr.bf16.mxu0 0
    %3675 = vmatpush2.bf16.xpose.msra.mxu0 0
    %3676 = vmatprep.subr.bf16.mxu0 0
    %3677 = vmatpush2.bf16.xpose.msra.mxu0 0
    %3678 = vmatprep.subr.bf16.mxu0 0
    %3679 = vmatpush2.bf16.xpose.msra.mxu0 0
    %3680 = vmatprep.subr.bf16.mxu0 0
    %3681 = vmatpush2.bf16.xpose.msra.mxu0 0
    %3682 = vmatprep.subr.bf16.mxu0 0
    %3683 = vmatpush2.bf16.xpose.msra.mxu0 0
    %3684 = vmatprep.mubr.bf16.mxu0 0
    %3685 = vmatmul.mubr.bf16.gmra.mxu0 %v3650
    %v3686 = vpop.f32.mrf.mxu0
    %v3687 = vadd.f32 0.0, %v3686
    %v3688 = vpop.f32.mrf.mxu0
    %v3689 = vpop.f32.mrf.mxu0
    %v3690 = vpop.f32.mrf.mxu0
    %3691 = vdwg.mxu0
    %v3692 = vsel %vm105, %v3558, -inf
    %3693 = vmax.xlane.f32.xlu0 %v3692
    %v3694 = vpop.xlane.xlu0 %3693
    %v3695 = vsel %vm105, %v3601, -inf
    %3696 = vmax.xlane.f32.xlu0 %v3695
    %v3697 = vpop.xlane.xlu0 %3696
    %v3698 = vsel %vm105, %v3644, -inf
    %3699 = vmax.xlane.f32.xlu0 %v3698
    %v3700 = vpop.xlane.xlu0 %3699
    %v3701 = vsel %vm105, %v3687, -inf
    %3702 = vmax.xlane.f32.xlu0 %v3701
    %v3703 = vpop.xlane.xlu0 %3702
    %v3704 = vsub.f32 %v3558, %v3694
    %v3705 = vsub.f32 %v3601, %v3697
    %v3706 = vsub.f32 %v3644, %v3700
    %v3707 = vsub.f32 %v3687, %v3703
    %v3708 = vmul.f32 %v3704, 1.442695
    %v3709 = vpow.pop %v3708
    %v3710 = vmul.f32 %v3705, 1.442695
    %v3711 = vpow.pop %v3710
    %v3712 = vmul.f32 %v3706, 1.442695
    %v3713 = vpow.pop %v3712
    %v3714 = vmul.f32 %v3707, 1.442695
    %v3715 = vpow.pop %v3714
    %v3716 = vsel %vm105, %v3709, 0.0
    %3717 = vadd.xlane.f32.xlu0 %v3716
    %v3718 = vpop.xlane.xlu0 %3717
    %v3719 = vsel %vm105, %v3711, 0.0
    %3720 = vadd.xlane.f32.xlu0 %v3719
    %v3721 = vpop.xlane.xlu0 %3720
    %v3722 = vsel %vm105, %v3713, 0.0
    %3723 = vadd.xlane.f32.xlu0 %v3722
    %v3724 = vpop.xlane.xlu0 %3723
    %v3725 = vsel %vm105, %v3715, 0.0
    %3726 = vadd.xlane.f32.xlu0 %v3725
    %v3727 = vpop.xlane.xlu0 %3726
    %v3728 = vrcp.pop %v3718
    %v3729 = vrcp.pop %v3721
    %v3730 = vrcp.pop %v3724
    %v3731 = vrcp.pop %v3727
    %v3732 = vmul.f32 %v3709, %v3728
    %v3733 = vmul.f32 %v3711, %v3729
    %v3734 = vmul.f32 %v3713, %v3730
    %v3735 = vmul.f32 %v3715, %v3731
    %v3736 = vpack.c.bf16 %v3732, %v3732
    %v3737 = vpack.c.bf16 %v3733, %v3733
    %v3738 = vpack.c.bf16 %v3734, %v3734
    %v3739 = vpack.c.bf16 %v3735, %v3735
    %v3741 = vsel %vm105, %v3736, 0
    %3743 = vmatprep.subr.bf16.mxu0 0
    %3744 = vmatpush1.bf16.msra.mxu0 0
    %3745 = vmatprep.subr.bf16.mxu0 0
    %3746 = vmatpush1.bf16.msra.mxu0 0
    %3747 = vmatprep.subr.bf16.mxu0 0
    %3748 = vmatpush1.bf16.msra.mxu0 0
    %3749 = vmatprep.subr.bf16.mxu0 0
    %3750 = vmatpush1.bf16.msra.mxu0 0
    %3751 = vmatprep.subr.bf16.mxu0 0
    %3752 = vmatpush1.bf16.msra.mxu0 %v3292
    %3753 = vmatprep.subr.bf16.mxu0 0
    %3754 = vmatpush1.bf16.msra.mxu0 %v3291
    %3755 = vmatprep.subr.bf16.mxu0 0
    %3756 = vmatpush1.bf16.msra.mxu0 %v3290
    %3757 = vmatprep.subr.bf16.mxu0 0
    %3758 = vmatpush1.bf16.msra.mxu0 %v3289
    %3759 = vmatprep.subr.bf16.mxu0 0
    %3760 = vmatpush2.bf16.msra.mxu0 0
    %3761 = vmatprep.subr.bf16.mxu0 0
    %3762 = vmatpush2.bf16.msra.mxu0 0
    %3763 = vmatprep.subr.bf16.mxu0 0
    %3764 = vmatpush2.bf16.msra.mxu0 0
    %3765 = vmatprep.subr.bf16.mxu0 0
    %3766 = vmatpush2.bf16.msra.mxu0 0
    %3767 = vmatprep.subr.bf16.mxu0 0
    %3768 = vmatpush2.bf16.msra.mxu0 0
    %3769 = vmatprep.subr.bf16.mxu0 0
    %3770 = vmatpush2.bf16.msra.mxu0 0
    %3771 = vmatprep.subr.bf16.mxu0 0
    %3772 = vmatpush2.bf16.msra.mxu0 0
    %3773 = vmatprep.subr.bf16.mxu0 0
    %3774 = vmatpush2.bf16.msra.mxu0 0
    %3775 = vmatprep.mubr.bf16.mxu0 0
    %3776 = vmatmul.mubr.bf16.gmra.mxu0 %v3741
    %v3777 = vpop.f32.mrf.mxu0
    %v3778 = vadd.f32 0.0, %v3777
    %v3779 = vpop.f32.mrf.mxu0
    %v3780 = vpop.f32.mrf.mxu0
    %v3781 = vpop.f32.mrf.mxu0
    %3782 = vdwg.mxu0
    %v3784 = vsel %vm105, %v3737, 0
    %3786 = vmatprep.subr.bf16.mxu0 0
    %3787 = vmatpush1.bf16.msra.mxu0 0
    %3788 = vmatprep.subr.bf16.mxu0 0
    %3789 = vmatpush1.bf16.msra.mxu0 0
    %3790 = vmatprep.subr.bf16.mxu0 0
    %3791 = vmatpush1.bf16.msra.mxu0 0
    %3792 = vmatprep.subr.bf16.mxu0 0
    %3793 = vmatpush1.bf16.msra.mxu0 0
    %3794 = vmatprep.subr.bf16.mxu0 0
    %3795 = vmatpush1.bf16.msra.mxu0 %v3292
    %3796 = vmatprep.subr.bf16.mxu0 0
    %3797 = vmatpush1.bf16.msra.mxu0 %v3291
    %3798 = vmatprep.subr.bf16.mxu0 0
    %3799 = vmatpush1.bf16.msra.mxu0 %v3290
    %3800 = vmatprep.subr.bf16.mxu0 0
    %3801 = vmatpush1.bf16.msra.mxu0 %v3289
    %3802 = vmatprep.subr.bf16.mxu0 0
    %3803 = vmatpush2.bf16.msra.mxu0 0
    %3804 = vmatprep.subr.bf16.mxu0 0
    %3805 = vmatpush2.bf16.msra.mxu0 0
    %3806 = vmatprep.subr.bf16.mxu0 0
    %3807 = vmatpush2.bf16.msra.mxu0 0
    %3808 = vmatprep.subr.bf16.mxu0 0
    %3809 = vmatpush2.bf16.msra.mxu0 0
    %3810 = vmatprep.subr.bf16.mxu0 0
    %3811 = vmatpush2.bf16.msra.mxu0 0
    %3812 = vmatprep.subr.bf16.mxu0 0
    %3813 = vmatpush2.bf16.msra.mxu0 0
    %3814 = vmatprep.subr.bf16.mxu0 0
    %3815 = vmatpush2.bf16.msra.mxu0 0
    %3816 = vmatprep.subr.bf16.mxu0 0
    %3817 = vmatpush2.bf16.msra.mxu0 0
    %3818 = vmatprep.mubr.bf16.mxu0 0
    %3819 = vmatmul.mubr.bf16.gmra.mxu0 %v3784
    %v3820 = vpop.f32.mrf.mxu0
    %v3821 = vadd.f32 0.0, %v3820
    %v3822 = vpop.f32.mrf.mxu0
    %v3823 = vpop.f32.mrf.mxu0
    %v3824 = vpop.f32.mrf.mxu0
    %3825 = vdwg.mxu0
    %v3827 = vsel %vm105, %v3738, 0
    %3829 = vmatprep.subr.bf16.mxu0 0
    %3830 = vmatpush1.bf16.msra.mxu0 0
    %3831 = vmatprep.subr.bf16.mxu0 0
    %3832 = vmatpush1.bf16.msra.mxu0 0
    %3833 = vmatprep.subr.bf16.mxu0 0
    %3834 = vmatpush1.bf16.msra.mxu0 0
    %3835 = vmatprep.subr.bf16.mxu0 0
    %3836 = vmatpush1.bf16.msra.mxu0 0
    %3837 = vmatprep.subr.bf16.mxu0 0
    %3838 = vmatpush1.bf16.msra.mxu0 %v3292
    %3839 = vmatprep.subr.bf16.mxu0 0
    %3840 = vmatpush1.bf16.msra.mxu0 %v3291
    %3841 = vmatprep.subr.bf16.mxu0 0
    %3842 = vmatpush1.bf16.msra.mxu0 %v3290
    %3843 = vmatprep.subr.bf16.mxu0 0
    %3844 = vmatpush1.bf16.msra.mxu0 %v3289
    %3845 = vmatprep.subr.bf16.mxu0 0
    %3846 = vmatpush2.bf16.msra.mxu0 0
    %3847 = vmatprep.subr.bf16.mxu0 0
    %3848 = vmatpush2.bf16.msra.mxu0 0
    %3849 = vmatprep.subr.bf16.mxu0 0
    %3850 = vmatpush2.bf16.msra.mxu0 0
    %3851 = vmatprep.subr.bf16.mxu0 0
    %3852 = vmatpush2.bf16.msra.mxu0 0
    %3853 = vmatprep.subr.bf16.mxu0 0
    %3854 = vmatpush2.bf16.msra.mxu0 0
    %3855 = vmatprep.subr.bf16.mxu0 0
    %3856 = vmatpush2.bf16.msra.mxu0 0
    %3857 = vmatprep.subr.bf16.mxu0 0
    %3858 = vmatpush2.bf16.msra.mxu0 0
    %3859 = vmatprep.subr.bf16.mxu0 0
    %3860 = vmatpush2.bf16.msra.mxu0 0
    %3861 = vmatprep.mubr.bf16.mxu0 0
    %3862 = vmatmul.mubr.bf16.gmra.mxu0 %v3827
    %v3863 = vpop.f32.mrf.mxu0
    %v3864 = vadd.f32 0.0, %v3863
    %v3865 = vpop.f32.mrf.mxu0
    %v3866 = vpop.f32.mrf.mxu0
    %v3867 = vpop.f32.mrf.mxu0
    %3868 = vdwg.mxu0
    %v3870 = vsel %vm105, %v3739, 0
    %3872 = vmatprep.subr.bf16.mxu0 0
    %3873 = vmatpush1.bf16.msra.mxu0 0
    %3874 = vmatprep.subr.bf16.mxu0 0
    %3875 = vmatpush1.bf16.msra.mxu0 0
    %3876 = vmatprep.subr.bf16.mxu0 0
    %3877 = vmatpush1.bf16.msra.mxu0 0
    %3878 = vmatprep.subr.bf16.mxu0 0
    %3879 = vmatpush1.bf16.msra.mxu0 0
    %3880 = vmatprep.subr.bf16.mxu0 0
    %3881 = vmatpush1.bf16.msra.mxu0 %v3292
    %3882 = vmatprep.subr.bf16.mxu0 0
    %3883 = vmatpush1.bf16.msra.mxu0 %v3291
    %3884 = vmatprep.subr.bf16.mxu0 0
    %3885 = vmatpush1.bf16.msra.mxu0 %v3290
    %3886 = vmatprep.subr.bf16.mxu0 0
    %3887 = vmatpush1.bf16.msra.mxu0 %v3289
    %3888 = vmatprep.subr.bf16.mxu0 0
    %3889 = vmatpush2.bf16.msra.mxu0 0
    %3890 = vmatprep.subr.bf16.mxu0 0
    %3891 = vmatpush2.bf16.msra.mxu0 0
    %3892 = vmatprep.subr.bf16.mxu0 0
    %3893 = vmatpush2.bf16.msra.mxu0 0
    %3894 = vmatprep.subr.bf16.mxu0 0
    %3895 = vmatpush2.bf16.msra.mxu0 0
    %3896 = vmatprep.subr.bf16.mxu0 0
    %3897 = vmatpush2.bf16.msra.mxu0 0
    %3898 = vmatprep.subr.bf16.mxu0 0
    %3899 = vmatpush2.bf16.msra.mxu0 0
    %3900 = vmatprep.subr.bf16.mxu0 0
    %3901 = vmatpush2.bf16.msra.mxu0 0
    %3902 = vmatprep.subr.bf16.mxu0 0
    %3903 = vmatpush2.bf16.msra.mxu0 0
    %3904 = vmatprep.mubr.bf16.mxu0 0
    %3905 = vmatmul.mubr.bf16.gmra.mxu0 %v3870
    %v3906 = vpop.f32.mrf.mxu0
    %v3907 = vadd.f32 0.0, %v3906
    %v3908 = vpop.f32.mrf.mxu0
    %v3909 = vpop.f32.mrf.mxu0
    %v3910 = vpop.f32.mrf.mxu0
    %3911 = vdwg.mxu0
    %v3912 = vpack.c.bf16 %v3778, %v3778
    %v3913 = vpack.c.bf16 %v3821, %v3821
    %v3914 = vpack.c.bf16 %v3864, %v3864
    %v3915 = vpack.c.bf16 %v3907, %v3907
    %v3920 = vunpack.c.l.b16 %v3185
    %v3921 = vunpack.c.l.b16 %v3186
    %v3922 = vunpack.c.l.b16 %v3187
    %v3923 = vunpack.c.l.b16 %v3188
    %v3924 = vpack.c.b16 %v3921, %v3920
    %v3925 = vpack.c.b16 %v3923, %v3922
    %v3929 = vsel %vm196, %v3912, 0
    %3931 = vmatprep.subr.bf16.mxu0 0
    %3932 = vmatpush1.bf16.msra.mxu0 0
    %3933 = vmatprep.subr.bf16.mxu0 0
    %3934 = vmatpush1.bf16.msra.mxu0 0
    %3935 = vmatprep.subr.bf16.mxu0 0
    %3936 = vmatpush1.bf16.msra.mxu0 0
    %3937 = vmatprep.subr.bf16.mxu0 0
    %3938 = vmatpush1.bf16.msra.mxu0 0
    %3939 = vmatprep.subr.bf16.mxu0 0
    %3940 = vmatpush1.bf16.msra.mxu0 0
    %3941 = vmatprep.subr.bf16.mxu0 0
    %3942 = vmatpush1.bf16.msra.mxu0 0
    %3943 = vmatprep.subr.bf16.mxu0 0
    %3944 = vmatpush1.bf16.msra.mxu0 %v3925
    %3945 = vmatprep.subr.bf16.mxu0 0
    %3946 = vmatpush1.bf16.msra.mxu0 %v3924
    %3947 = vmatprep.subr.bf16.mxu0 0
    %3948 = vmatpush2.bf16.msra.mxu0 0
    %3949 = vmatprep.subr.bf16.mxu0 0
    %3950 = vmatpush2.bf16.msra.mxu0 0
    %3951 = vmatprep.subr.bf16.mxu0 0
    %3952 = vmatpush2.bf16.msra.mxu0 0
    %3953 = vmatprep.subr.bf16.mxu0 0
    %3954 = vmatpush2.bf16.msra.mxu0 0
    %3955 = vmatprep.subr.bf16.mxu0 0
    %3956 = vmatpush2.bf16.msra.mxu0 0
    %3957 = vmatprep.subr.bf16.mxu0 0
    %3958 = vmatpush2.bf16.msra.mxu0 0
    %3959 = vmatprep.subr.bf16.mxu0 0
    %3960 = vmatpush2.bf16.msra.mxu0 0
    %3961 = vmatprep.subr.bf16.mxu0 0
    %3962 = vmatpush2.bf16.msra.mxu0 0
    %3963 = vmatprep.mubr.bf16.mxu0 0
    %3964 = vmatmul.mubr.bf16.gmra.mxu0 %v3929
    %v3965 = vpop.f32.mrf.mxu0
    %v3966 = vadd.f32 0.0, %v3965
    %v3967 = vpop.f32.mrf.mxu0
    %v3968 = vpop.f32.mrf.mxu0
    %v3969 = vpop.f32.mrf.mxu0
    %3970 = vdwg.mxu0
    %v3975 = vunpack.c.l.b16 %v3189
    %v3976 = vunpack.c.l.b16 %v3190
    %v3977 = vunpack.c.l.b16 %v3191
    %v3978 = vunpack.c.l.b16 %v3192
    %v3979 = vpack.c.b16 %v3976, %v3975
    %v3980 = vpack.c.b16 %v3978, %v3977
    %v3984 = vsel %vm196, %v3913, 0
    %3986 = vmatprep.subr.bf16.mxu0 0
    %3987 = vmatpush1.bf16.msra.mxu0 0
    %3988 = vmatprep.subr.bf16.mxu0 0
    %3989 = vmatpush1.bf16.msra.mxu0 0
    %3990 = vmatprep.subr.bf16.mxu0 0
    %3991 = vmatpush1.bf16.msra.mxu0 0
    %3992 = vmatprep.subr.bf16.mxu0 0
    %3993 = vmatpush1.bf16.msra.mxu0 0
    %3994 = vmatprep.subr.bf16.mxu0 0
    %3995 = vmatpush1.bf16.msra.mxu0 0
    %3996 = vmatprep.subr.bf16.mxu0 0
    %3997 = vmatpush1.bf16.msra.mxu0 0
    %3998 = vmatprep.subr.bf16.mxu0 0
    %3999 = vmatpush1.bf16.msra.mxu0 %v3980
    %4000 = vmatprep.subr.bf16.mxu0 0
    %4001 = vmatpush1.bf16.msra.mxu0 %v3979
    %4002 = vmatprep.subr.bf16.mxu0 0
    %4003 = vmatpush2.bf16.msra.mxu0 0
    %4004 = vmatprep.subr.bf16.mxu0 0
    %4005 = vmatpush2.bf16.msra.mxu0 0
    %4006 = vmatprep.subr.bf16.mxu0 0
    %4007 = vmatpush2.bf16.msra.mxu0 0
    %4008 = vmatprep.subr.bf16.mxu0 0
    %4009 = vmatpush2.bf16.msra.mxu0 0
    %4010 = vmatprep.subr.bf16.mxu0 0
    %4011 = vmatpush2.bf16.msra.mxu0 0
    %4012 = vmatprep.subr.bf16.mxu0 0
    %4013 = vmatpush2.bf16.msra.mxu0 0
    %4014 = vmatprep.subr.bf16.mxu0 0
    %4015 = vmatpush2.bf16.msra.mxu0 0
    %4016 = vmatprep.subr.bf16.mxu0 0
    %4017 = vmatpush2.bf16.msra.mxu0 0
    %4018 = vmatprep.mubr.bf16.mxu0 0
    %4019 = vmatmul.mubr.bf16.gmra.mxu0 %v3984
    %v4020 = vpop.f32.mrf.mxu0
    %v4021 = vadd.f32 0.0, %v4020
    %v4022 = vpop.f32.mrf.mxu0
    %v4023 = vpop.f32.mrf.mxu0
    %v4024 = vpop.f32.mrf.mxu0
    %4025 = vdwg.mxu0
    %v4030 = vunpack.c.l.b16 %v3193
    %v4031 = vunpack.c.l.b16 %v3194
    %v4032 = vunpack.c.l.b16 %v3195
    %v4033 = vunpack.c.l.b16 %v3196
    %v4034 = vpack.c.b16 %v4031, %v4030
    %v4035 = vpack.c.b16 %v4033, %v4032
    %v4039 = vsel %vm196, %v3914, 0
    %4041 = vmatprep.subr.bf16.mxu0 0
    %4042 = vmatpush1.bf16.msra.mxu0 0
    %4043 = vmatprep.subr.bf16.mxu0 0
    %4044 = vmatpush1.bf16.msra.mxu0 0
    %4045 = vmatprep.subr.bf16.mxu0 0
    %4046 = vmatpush1.bf16.msra.mxu0 0
    %4047 = vmatprep.subr.bf16.mxu0 0
    %4048 = vmatpush1.bf16.msra.mxu0 0
    %4049 = vmatprep.subr.bf16.mxu0 0
    %4050 = vmatpush1.bf16.msra.mxu0 0
    %4051 = vmatprep.subr.bf16.mxu0 0
    %4052 = vmatpush1.bf16.msra.mxu0 0
    %4053 = vmatprep.subr.bf16.mxu0 0
    %4054 = vmatpush1.bf16.msra.mxu0 %v4035
    %4055 = vmatprep.subr.bf16.mxu0 0
    %4056 = vmatpush1.bf16.msra.mxu0 %v4034
    %4057 = vmatprep.subr.bf16.mxu0 0
    %4058 = vmatpush2.bf16.msra.mxu0 0
    %4059 = vmatprep.subr.bf16.mxu0 0
    %4060 = vmatpush2.bf16.msra.mxu0 0
    %4061 = vmatprep.subr.bf16.mxu0 0
    %4062 = vmatpush2.bf16.msra.mxu0 0
    %4063 = vmatprep.subr.bf16.mxu0 0
    %4064 = vmatpush2.bf16.msra.mxu0 0
    %4065 = vmatprep.subr.bf16.mxu0 0
    %4066 = vmatpush2.bf16.msra.mxu0 0
    %4067 = vmatprep.subr.bf16.mxu0 0
    %4068 = vmatpush2.bf16.msra.mxu0 0
    %4069 = vmatprep.subr.bf16.mxu0 0
    %4070 = vmatpush2.bf16.msra.mxu0 0
    %4071 = vmatprep.subr.bf16.mxu0 0
    %4072 = vmatpush2.bf16.msra.mxu0 0
    %4073 = vmatprep.mubr.bf16.mxu0 0
    %4074 = vmatmul.mubr.bf16.gmra.mxu0 %v4039
    %v4075 = vpop.f32.mrf.mxu0
    %v4076 = vadd.f32 0.0, %v4075
    %v4077 = vpop.f32.mrf.mxu0
    %v4078 = vpop.f32.mrf.mxu0
    %v4079 = vpop.f32.mrf.mxu0
    %4080 = vdwg.mxu0
    %v4085 = vunpack.c.l.b16 %v3197
    %v4086 = vunpack.c.l.b16 %v3198
    %v4087 = vunpack.c.l.b16 %v3199
    %v4088 = vunpack.c.l.b16 %v3200
    %v4089 = vpack.c.b16 %v4086, %v4085
    %v4090 = vpack.c.b16 %v4088, %v4087
    %v4094 = vsel %vm196, %v3915, 0
    %4096 = vmatprep.subr.bf16.mxu0 0
    %4097 = vmatpush1.bf16.msra.mxu0 0
    %4098 = vmatprep.subr.bf16.mxu0 0
    %4099 = vmatpush1.bf16.msra.mxu0 0
    %4100 = vmatprep.subr.bf16.mxu0 0
    %4101 = vmatpush1.bf16.msra.mxu0 0
    %4102 = vmatprep.subr.bf16.mxu0 0
    %4103 = vmatpush1.bf16.msra.mxu0 0
    %4104 = vmatprep.subr.bf16.mxu0 0
    %4105 = vmatpush1.bf16.msra.mxu0 0
    %4106 = vmatprep.subr.bf16.mxu0 0
    %4107 = vmatpush1.bf16.msra.mxu0 0
    %4108 = vmatprep.subr.bf16.mxu0 0
    %4109 = vmatpush1.bf16.msra.mxu0 %v4090
    %4110 = vmatprep.subr.bf16.mxu0 0
    %4111 = vmatpush1.bf16.msra.mxu0 %v4089
    %4112 = vmatprep.subr.bf16.mxu0 0
    %4113 = vmatpush2.bf16.msra.mxu0 0
    %4114 = vmatprep.subr.bf16.mxu0 0
    %4115 = vmatpush2.bf16.msra.mxu0 0
    %4116 = vmatprep.subr.bf16.mxu0 0
    %4117 = vmatpush2.bf16.msra.mxu0 0
    %4118 = vmatprep.subr.bf16.mxu0 0
    %4119 = vmatpush2.bf16.msra.mxu0 0
    %4120 = vmatprep.subr.bf16.mxu0 0
    %4121 = vmatpush2.bf16.msra.mxu0 0
    %4122 = vmatprep.subr.bf16.mxu0 0
    %4123 = vmatpush2.bf16.msra.mxu0 0
    %4124 = vmatprep.subr.bf16.mxu0 0
    %4125 = vmatpush2.bf16.msra.mxu0 0
    %4126 = vmatprep.subr.bf16.mxu0 0
    %4127 = vmatpush2.bf16.msra.mxu0 0
    %4128 = vmatprep.mubr.bf16.mxu0 0
    %4129 = vmatmul.mubr.bf16.gmra.mxu0 %v4094
    %v4130 = vpop.f32.mrf.mxu0
    %v4131 = vadd.f32 0.0, %v4130
    %v4132 = vpop.f32.mrf.mxu0
    %v4133 = vpop.f32.mrf.mxu0
    %v4134 = vpop.f32.mrf.mxu0
    %4135 = vdwg.mxu0
    %v4136 = vsel %vm196, %v3966, 0.0
    %v4137 = vsel %vm196, %v4021, 0.0
    %v4138 = vadd.f32 %v4136, %v4137
    %v4139 = vsel %vm196, %v4076, 0.0
    %v4140 = vadd.f32 %v4138, %v4139
    %v4141 = vsel %vm196, %v4131, 0.0
    %v4142 = vadd.f32 %v4140, %v4141
    %v4143 = vadd.f32 %v4142, %v3285
    %v4144 = vpack.c.bf16 %v4143, %v4143
    %4145 = vmatprep.subr.bf16.mxu0 0
    %4146 = vmatpush1.bf16.msra.mxu0 0
    %4147 = vmatprep.subr.bf16.mxu0 0
    %4148 = vmatpush1.bf16.msra.mxu0 0
    %4149 = vmatprep.subr.bf16.mxu0 0
    %4150 = vmatpush1.bf16.msra.mxu0 0
    %4151 = vmatprep.subr.bf16.mxu0 0
    %4152 = vmatpush1.bf16.msra.mxu0 0
    %4153 = vmatprep.subr.bf16.mxu0 0
    %4154 = vmatpush1.bf16.msra.mxu0 0
    %4155 = vmatprep.subr.bf16.mxu0 0
    %4156 = vmatpush1.bf16.msra.mxu0 0
    %4157 = vmatprep.subr.bf16.mxu0 0
    %4158 = vmatpush1.bf16.msra.mxu0 %v3302
    %4159 = vmatprep.subr.bf16.mxu0 0
    %4160 = vmatpush1.bf16.msra.mxu0 %v3301
    %4161 = vmatprep.subr.bf16.mxu0 0
    %4162 = vmatpush2.bf16.msra.mxu0 0
    %4163 = vmatprep.subr.bf16.mxu0 0
    %4164 = vmatpush2.bf16.msra.mxu0 0
    %4165 = vmatprep.subr.bf16.mxu0 0
    %4166 = vmatpush2.bf16.msra.mxu0 0
    %4167 = vmatprep.subr.bf16.mxu0 0
    %4168 = vmatpush2.bf16.msra.mxu0 0
    %4169 = vmatprep.subr.bf16.mxu0 0
    %4170 = vmatpush2.bf16.msra.mxu0 0
    %4171 = vmatprep.subr.bf16.mxu0 0
    %4172 = vmatpush2.bf16.msra.mxu0 0
    %4173 = vmatprep.subr.bf16.mxu0 0
    %4174 = vmatpush2.bf16.msra.mxu0 0
    %4175 = vmatprep.subr.bf16.mxu0 0
    %4176 = vmatpush2.bf16.msra.mxu0 0
    %4177 = vmatprep.mubr.bf16.mxu0 0
    %4178 = vmatmul.mubr.bf16.gmra.mxu0 %v3512
    %v4179 = vpop.f32.mrf.mxu0
    %v4180 = vadd.f32 0.0, %v4179
    %v4181 = vpop.f32.mrf.mxu0
    %v4182 = vpop.f32.mrf.mxu0
    %v4183 = vadd.f32 0.0, %v4182
    %v4184 = vpop.f32.mrf.mxu0
    %4185 = vmatprep.mubr.bf16.mxu0 0
    %4186 = vmatmul.mubr.bf16.gmra.mxu0 %v3515
    %v4187 = vpop.f32.mrf.mxu0
    %v4188 = vadd.f32 0.0, %v4187
    %v4189 = vpop.f32.mrf.mxu0
    %v4190 = vpop.f32.mrf.mxu0
    %v4191 = vadd.f32 0.0, %v4190
    %v4192 = vpop.f32.mrf.mxu0
    %4193 = vmatprep.mubr.bf16.mxu0 0
    %4194 = vmatmul.mubr.bf16.gmra.mxu0 %v3518
    %v4195 = vpop.f32.mrf.mxu0
    %v4196 = vadd.f32 0.0, %v4195
    %v4197 = vpop.f32.mrf.mxu0
    %v4198 = vpop.f32.mrf.mxu0
    %v4199 = vadd.f32 0.0, %v4198
    %v4200 = vpop.f32.mrf.mxu0
    %4201 = vmatprep.mubr.bf16.mxu0 0
    %4202 = vmatmul.mubr.bf16.gmra.mxu0 %v3521
    %v4203 = vpop.f32.mrf.mxu0
    %v4204 = vadd.f32 0.0, %v4203
    %v4205 = vpop.f32.mrf.mxu0
    %v4206 = vpop.f32.mrf.mxu0
    %v4207 = vadd.f32 0.0, %v4206
    %v4208 = vpop.f32.mrf.mxu0
    %4209 = vdwg.mxu0
    %4210 = vmatprep.subr.bf16.mxu0 0
    %4211 = vmatpush1.bf16.msra.mxu0 0
    %4212 = vmatprep.subr.bf16.mxu0 0
    %4213 = vmatpush1.bf16.msra.mxu0 0
    %4214 = vmatprep.subr.bf16.mxu0 0
    %4215 = vmatpush1.bf16.msra.mxu0 0
    %4216 = vmatprep.subr.bf16.mxu0 0
    %4217 = vmatpush1.bf16.msra.mxu0 0
    %4218 = vmatprep.subr.bf16.mxu0 0
    %4219 = vmatpush1.bf16.msra.mxu0 0
    %4220 = vmatprep.subr.bf16.mxu0 0
    %4221 = vmatpush1.bf16.msra.mxu0 0
    %4222 = vmatprep.subr.bf16.mxu0 0
    %4223 = vmatpush1.bf16.msra.mxu0 %v3357
    %4224 = vmatprep.subr.bf16.mxu0 0
    %4225 = vmatpush1.bf16.msra.mxu0 %v3356
    %4226 = vmatprep.subr.bf16.mxu0 0
    %4227 = vmatpush2.bf16.msra.mxu0 0
    %4228 = vmatprep.subr.bf16.mxu0 0
    %4229 = vmatpush2.bf16.msra.mxu0 0
    %4230 = vmatprep.subr.bf16.mxu0 0
    %4231 = vmatpush2.bf16.msra.mxu0 0
    %4232 = vmatprep.subr.bf16.mxu0 0
    %4233 = vmatpush2.bf16.msra.mxu0 0
    %4234 = vmatprep.subr.bf16.mxu0 0
    %4235 = vmatpush2.bf16.msra.mxu0 0
    %4236 = vmatprep.subr.bf16.mxu0 0
    %4237 = vmatpush2.bf16.msra.mxu0 0
    %4238 = vmatprep.subr.bf16.mxu0 0
    %4239 = vmatpush2.bf16.msra.mxu0 0
    %4240 = vmatprep.subr.bf16.mxu0 0
    %4241 = vmatpush2.bf16.msra.mxu0 0
    %4242 = vmatprep.mubr.bf16.mxu0 0
    %4243 = vmatmul.mubr.bf16.gmra.mxu0 %v3512
    %v4244 = vpop.f32.mrf.mxu0
    %v4245 = vadd.f32 0.0, %v4244
    %v4246 = vpop.f32.mrf.mxu0
    %v4247 = vpop.f32.mrf.mxu0
    %v4248 = vadd.f32 0.0, %v4247
    %v4249 = vpop.f32.mrf.mxu0
    %4250 = vmatprep.mubr.bf16.mxu0 0
    %4251 = vmatmul.mubr.bf16.gmra.mxu0 %v3515
    %v4252 = vpop.f32.mrf.mxu0
    %v4253 = vadd.f32 0.0, %v4252
    %v4254 = vpop.f32.mrf.mxu0
    %v4255 = vpop.f32.mrf.mxu0
    %v4256 = vadd.f32 0.0, %v4255
    %v4257 = vpop.f32.mrf.mxu0
    %4258 = vmatprep.mubr.bf16.mxu0 0
    %4259 = vmatmul.mubr.bf16.gmra.mxu0 %v3518
    %v4260 = vpop.f32.mrf.mxu0
    %v4261 = vadd.f32 0.0, %v4260
    %v4262 = vpop.f32.mrf.mxu0
    %v4263 = vpop.f32.mrf.mxu0
    %v4264 = vadd.f32 0.0, %v4263
    %v4265 = vpop.f32.mrf.mxu0
    %4266 = vmatprep.mubr.bf16.mxu0 0
    %4267 = vmatmul.mubr.bf16.gmra.mxu0 %v3521
    %v4268 = vpop.f32.mrf.mxu0
    %v4269 = vadd.f32 0.0, %v4268
    %v4270 = vpop.f32.mrf.mxu0
    %v4271 = vpop.f32.mrf.mxu0
    %v4272 = vadd.f32 0.0, %v4271
    %v4273 = vpop.f32.mrf.mxu0
    %4274 = vdwg.mxu0
    %4275 = vmatprep.subr.bf16.mxu0 0
    %4276 = vmatpush1.bf16.msra.mxu0 0
    %4277 = vmatprep.subr.bf16.mxu0 0
    %4278 = vmatpush1.bf16.msra.mxu0 0
    %4279 = vmatprep.subr.bf16.mxu0 0
    %4280 = vmatpush1.bf16.msra.mxu0 0
    %4281 = vmatprep.subr.bf16.mxu0 0
    %4282 = vmatpush1.bf16.msra.mxu0 0
    %4283 = vmatprep.subr.bf16.mxu0 0
    %4284 = vmatpush1.bf16.msra.mxu0 0
    %4285 = vmatprep.subr.bf16.mxu0 0
    %4286 = vmatpush1.bf16.msra.mxu0 0
    %4287 = vmatprep.subr.bf16.mxu0 0
    %4288 = vmatpush1.bf16.msra.mxu0 %v3409
    %4289 = vmatprep.subr.bf16.mxu0 0
    %4290 = vmatpush1.bf16.msra.mxu0 %v3408
    %4291 = vmatprep.subr.bf16.mxu0 0
    %4292 = vmatpush2.bf16.msra.mxu0 0
    %4293 = vmatprep.subr.bf16.mxu0 0
    %4294 = vmatpush2.bf16.msra.mxu0 0
    %4295 = vmatprep.subr.bf16.mxu0 0
    %4296 = vmatpush2.bf16.msra.mxu0 0
    %4297 = vmatprep.subr.bf16.mxu0 0
    %4298 = vmatpush2.bf16.msra.mxu0 0
    %4299 = vmatprep.subr.bf16.mxu0 0
    %4300 = vmatpush2.bf16.msra.mxu0 0
    %4301 = vmatprep.subr.bf16.mxu0 0
    %4302 = vmatpush2.bf16.msra.mxu0 0
    %4303 = vmatprep.subr.bf16.mxu0 0
    %4304 = vmatpush2.bf16.msra.mxu0 0
    %4305 = vmatprep.subr.bf16.mxu0 0
    %4306 = vmatpush2.bf16.msra.mxu0 0
    %4307 = vmatprep.mubr.bf16.mxu0 0
    %4308 = vmatmul.mubr.bf16.gmra.mxu0 %v3512
    %v4309 = vpop.f32.mrf.mxu0
    %v4310 = vadd.f32 0.0, %v4309
    %v4311 = vpop.f32.mrf.mxu0
    %v4312 = vpop.f32.mrf.mxu0
    %v4313 = vadd.f32 0.0, %v4312
    %v4314 = vpop.f32.mrf.mxu0
    %4315 = vmatprep.mubr.bf16.mxu0 0
    %4316 = vmatmul.mubr.bf16.gmra.mxu0 %v3515
    %v4317 = vpop.f32.mrf.mxu0
    %v4318 = vadd.f32 0.0, %v4317
    %v4319 = vpop.f32.mrf.mxu0
    %v4320 = vpop.f32.mrf.mxu0
    %v4321 = vadd.f32 0.0, %v4320
    %v4322 = vpop.f32.mrf.mxu0
    %4323 = vmatprep.mubr.bf16.mxu0 0
    %4324 = vmatmul.mubr.bf16.gmra.mxu0 %v3518
    %v4325 = vpop.f32.mrf.mxu0
    %v4326 = vadd.f32 0.0, %v4325
    %v4327 = vpop.f32.mrf.mxu0
    %v4328 = vpop.f32.mrf.mxu0
    %v4329 = vadd.f32 0.0, %v4328
    %v4330 = vpop.f32.mrf.mxu0
    %4331 = vmatprep.mubr.bf16.mxu0 0
    %4332 = vmatmul.mubr.bf16.gmra.mxu0 %v3521
    %v4333 = vpop.f32.mrf.mxu0
    %v4334 = vadd.f32 0.0, %v4333
    %v4335 = vpop.f32.mrf.mxu0
    %v4336 = vpop.f32.mrf.mxu0
    %v4337 = vadd.f32 0.0, %v4336
    %v4338 = vpop.f32.mrf.mxu0
    %4339 = vdwg.mxu0
    %4340 = vmatprep.subr.bf16.mxu0 0
    %4341 = vmatpush1.bf16.msra.mxu0 0
    %4342 = vmatprep.subr.bf16.mxu0 0
    %4343 = vmatpush1.bf16.msra.mxu0 0
    %4344 = vmatprep.subr.bf16.mxu0 0
    %4345 = vmatpush1.bf16.msra.mxu0 0
    %4346 = vmatprep.subr.bf16.mxu0 0
    %4347 = vmatpush1.bf16.msra.mxu0 0
    %4348 = vmatprep.subr.bf16.mxu0 0
    %4349 = vmatpush1.bf16.msra.mxu0 0
    %4350 = vmatprep.subr.bf16.mxu0 0
    %4351 = vmatpush1.bf16.msra.mxu0 0
    %4352 = vmatprep.subr.bf16.mxu0 0
    %4353 = vmatpush1.bf16.msra.mxu0 %v3461
    %4354 = vmatprep.subr.bf16.mxu0 0
    %4355 = vmatpush1.bf16.msra.mxu0 %v3460
    %4356 = vmatprep.subr.bf16.mxu0 0
    %4357 = vmatpush2.bf16.msra.mxu0 0
    %4358 = vmatprep.subr.bf16.mxu0 0
    %4359 = vmatpush2.bf16.msra.mxu0 0
    %4360 = vmatprep.subr.bf16.mxu0 0
    %4361 = vmatpush2.bf16.msra.mxu0 0
    %4362 = vmatprep.subr.bf16.mxu0 0
    %4363 = vmatpush2.bf16.msra.mxu0 0
    %4364 = vmatprep.subr.bf16.mxu0 0
    %4365 = vmatpush2.bf16.msra.mxu0 0
    %4366 = vmatprep.subr.bf16.mxu0 0
    %4367 = vmatpush2.bf16.msra.mxu0 0
    %4368 = vmatprep.subr.bf16.mxu0 0
    %4369 = vmatpush2.bf16.msra.mxu0 0
    %4370 = vmatprep.subr.bf16.mxu0 0
    %4371 = vmatpush2.bf16.msra.mxu0 0
    %4372 = vmatprep.mubr.bf16.mxu0 0
    %4373 = vmatmul.mubr.bf16.gmra.mxu0 %v3512
    %v4374 = vpop.f32.mrf.mxu0
    %v4375 = vadd.f32 0.0, %v4374
    %v4376 = vpop.f32.mrf.mxu0
    %v4377 = vpop.f32.mrf.mxu0
    %v4378 = vadd.f32 0.0, %v4377
    %v4379 = vpop.f32.mrf.mxu0
    %4380 = vmatprep.mubr.bf16.mxu0 0
    %4381 = vmatmul.mubr.bf16.gmra.mxu0 %v3515
    %v4382 = vpop.f32.mrf.mxu0
    %v4383 = vadd.f32 0.0, %v4382
    %v4384 = vpop.f32.mrf.mxu0
    %v4385 = vpop.f32.mrf.mxu0
    %v4386 = vadd.f32 0.0, %v4385
    %v4387 = vpop.f32.mrf.mxu0
    %4388 = vmatprep.mubr.bf16.mxu0 0
    %4389 = vmatmul.mubr.bf16.gmra.mxu0 %v3518
    %v4390 = vpop.f32.mrf.mxu0
    %v4391 = vadd.f32 0.0, %v4390
    %v4392 = vpop.f32.mrf.mxu0
    %v4393 = vpop.f32.mrf.mxu0
    %v4394 = vadd.f32 0.0, %v4393
    %v4395 = vpop.f32.mrf.mxu0
    %4396 = vmatprep.mubr.bf16.mxu0 0
    %4397 = vmatmul.mubr.bf16.gmra.mxu0 %v3521
    %v4398 = vpop.f32.mrf.mxu0
    %v4399 = vadd.f32 0.0, %v4398
    %v4400 = vpop.f32.mrf.mxu0
    %v4401 = vpop.f32.mrf.mxu0
    %v4402 = vadd.f32 0.0, %v4401
    %v4403 = vpop.f32.mrf.mxu0
    %4404 = vdwg.mxu0
    %v4405 = vpack.c.bf16 %v4183, %v4180
    %v4406 = vpack.c.bf16 %v4191, %v4188
    %v4407 = vpack.c.bf16 %v4199, %v4196
    %v4408 = vpack.c.bf16 %v4207, %v4204
    %v4409 = vpack.c.bf16 %v4248, %v4245
    %v4410 = vpack.c.bf16 %v4256, %v4253
    %v4411 = vpack.c.bf16 %v4264, %v4261
    %v4412 = vpack.c.bf16 %v4272, %v4269
    %v4413 = vpack.c.bf16 %v4313, %v4310
    %v4414 = vpack.c.bf16 %v4321, %v4318
    %v4415 = vpack.c.bf16 %v4329, %v4326
    %v4416 = vpack.c.bf16 %v4337, %v4334
    %v4417 = vpack.c.bf16 %v4378, %v4375
    %v4418 = vpack.c.bf16 %v4386, %v4383
    %v4419 = vpack.c.bf16 %v4394, %v4391
    %v4420 = vpack.c.bf16 %v4402, %v4399
    %v4422 = vsel %vm196, %v4405, 0
    %v4425 = vsel %vm196, %v4406, 0
    %v4428 = vsel %vm196, %v4407, 0
    %v4431 = vsel %vm196, %v4408, 0
    %v4434 = vsel %vm196, %v4144, 0
    %4436 = vmatprep.subr.bf16.mxu0 0
    %4437 = vmatpush1.bf16.xpose.msra.mxu0 0
    %4438 = vmatprep.subr.bf16.mxu0 0
    %4439 = vmatpush1.bf16.xpose.msra.mxu0 0
    %4440 = vmatprep.subr.bf16.mxu0 0
    %4441 = vmatpush1.bf16.xpose.msra.mxu0 0
    %4442 = vmatprep.subr.bf16.mxu0 0
    %4443 = vmatpush1.bf16.xpose.msra.mxu0 0
    %4444 = vmatprep.subr.bf16.mxu0 0
    %4445 = vmatpush1.bf16.xpose.msra.mxu0 0
    %4446 = vmatprep.subr.bf16.mxu0 0
    %4447 = vmatpush1.bf16.xpose.msra.mxu0 0
    %4448 = vmatprep.subr.bf16.mxu0 0
    %4449 = vmatpush1.bf16.xpose.msra.mxu0 0
    %4450 = vmatprep.subr.bf16.mxu0 0
    %4451 = vmatpush1.bf16.xpose.msra.mxu0 %v4434
    %4452 = vmatprep.subr.bf16.mxu0 0
    %4453 = vmatpush2.bf16.xpose.msra.mxu0 0
    %4454 = vmatprep.subr.bf16.mxu0 0
    %4455 = vmatpush2.bf16.xpose.msra.mxu0 0
    %4456 = vmatprep.subr.bf16.mxu0 0
    %4457 = vmatpush2.bf16.xpose.msra.mxu0 0
    %4458 = vmatprep.subr.bf16.mxu0 0
    %4459 = vmatpush2.bf16.xpose.msra.mxu0 0
    %4460 = vmatprep.subr.bf16.mxu0 0
    %4461 = vmatpush2.bf16.xpose.msra.mxu0 0
    %4462 = vmatprep.subr.bf16.mxu0 0
    %4463 = vmatpush2.bf16.xpose.msra.mxu0 0
    %4464 = vmatprep.subr.bf16.mxu0 0
    %4465 = vmatpush2.bf16.xpose.msra.mxu0 0
    %4466 = vmatprep.subr.bf16.mxu0 0
    %4467 = vmatpush2.bf16.xpose.msra.mxu0 0
    %4468 = vmatprep.mubr.bf16.mxu0 0
    %4469 = vmatmul.mubr.bf16.gmra.mxu0 %v4422
    %v4470 = vpop.f32.mrf.mxu0
    %v4471 = vadd.f32 0.0, %v4470
    %v4472 = vpop.f32.mrf.mxu0
    %v4473 = vpop.f32.mrf.mxu0
    %v4474 = vadd.f32 0.0, %v4473
    %v4475 = vpop.f32.mrf.mxu0
    %4476 = vmatprep.mubr.bf16.mxu0 0
    %4477 = vmatmul.mubr.bf16.gmra.mxu0 %v4425
    %v4478 = vpop.f32.mrf.mxu0
    %v4479 = vadd.f32 0.0, %v4478
    %v4480 = vpop.f32.mrf.mxu0
    %v4481 = vpop.f32.mrf.mxu0
    %v4482 = vadd.f32 0.0, %v4481
    %v4483 = vpop.f32.mrf.mxu0
    %4484 = vmatprep.mubr.bf16.mxu0 0
    %4485 = vmatmul.mubr.bf16.gmra.mxu0 %v4428
    %v4486 = vpop.f32.mrf.mxu0
    %v4487 = vadd.f32 0.0, %v4486
    %v4488 = vpop.f32.mrf.mxu0
    %v4489 = vpop.f32.mrf.mxu0
    %v4490 = vadd.f32 0.0, %v4489
    %v4491 = vpop.f32.mrf.mxu0
    %4492 = vmatprep.mubr.bf16.mxu0 0
    %4493 = vmatmul.mubr.bf16.gmra.mxu0 %v4431
    %v4494 = vpop.f32.mrf.mxu0
    %v4495 = vadd.f32 0.0, %v4494
    %v4496 = vpop.f32.mrf.mxu0
    %v4497 = vpop.f32.mrf.mxu0
    %v4498 = vadd.f32 0.0, %v4497
    %v4499 = vpop.f32.mrf.mxu0
    %4500 = vdwg.mxu0
    %v4502 = vsel %vm196, %v4409, 0
    %v4505 = vsel %vm196, %v4410, 0
    %v4508 = vsel %vm196, %v4411, 0
    %v4511 = vsel %vm196, %v4412, 0
    %4513 = vmatprep.subr.bf16.mxu0 0
    %4514 = vmatpush1.bf16.xpose.msra.mxu0 0
    %4515 = vmatprep.subr.bf16.mxu0 0
    %4516 = vmatpush1.bf16.xpose.msra.mxu0 0
    %4517 = vmatprep.subr.bf16.mxu0 0
    %4518 = vmatpush1.bf16.xpose.msra.mxu0 0
    %4519 = vmatprep.subr.bf16.mxu0 0
    %4520 = vmatpush1.bf16.xpose.msra.mxu0 0
    %4521 = vmatprep.subr.bf16.mxu0 0
    %4522 = vmatpush1.bf16.xpose.msra.mxu0 0
    %4523 = vmatprep.subr.bf16.mxu0 0
    %4524 = vmatpush1.bf16.xpose.msra.mxu0 0
    %4525 = vmatprep.subr.bf16.mxu0 0
    %4526 = vmatpush1.bf16.xpose.msra.mxu0 0
    %4527 = vmatprep.subr.bf16.mxu0 0
    %4528 = vmatpush1.bf16.xpose.msra.mxu0 %v4434
    %4529 = vmatprep.subr.bf16.mxu0 0
    %4530 = vmatpush2.bf16.xpose.msra.mxu0 0
    %4531 = vmatprep.subr.bf16.mxu0 0
    %4532 = vmatpush2.bf16.xpose.msra.mxu0 0
    %4533 = vmatprep.subr.bf16.mxu0 0
    %4534 = vmatpush2.bf16.xpose.msra.mxu0 0
    %4535 = vmatprep.subr.bf16.mxu0 0
    %4536 = vmatpush2.bf16.xpose.msra.mxu0 0
    %4537 = vmatprep.subr.bf16.mxu0 0
    %4538 = vmatpush2.bf16.xpose.msra.mxu0 0
    %4539 = vmatprep.subr.bf16.mxu0 0
    %4540 = vmatpush2.bf16.xpose.msra.mxu0 0
    %4541 = vmatprep.subr.bf16.mxu0 0
    %4542 = vmatpush2.bf16.xpose.msra.mxu0 0
    %4543 = vmatprep.subr.bf16.mxu0 0
    %4544 = vmatpush2.bf16.xpose.msra.mxu0 0
    %4545 = vmatprep.mubr.bf16.mxu0 0
    %4546 = vmatmul.mubr.bf16.gmra.mxu0 %v4502
    %v4547 = vpop.f32.mrf.mxu0
    %v4548 = vadd.f32 0.0, %v4547
    %v4549 = vpop.f32.mrf.mxu0
    %v4550 = vpop.f32.mrf.mxu0
    %v4551 = vadd.f32 0.0, %v4550
    %v4552 = vpop.f32.mrf.mxu0
    %4553 = vmatprep.mubr.bf16.mxu0 0
    %4554 = vmatmul.mubr.bf16.gmra.mxu0 %v4505
    %v4555 = vpop.f32.mrf.mxu0
    %v4556 = vadd.f32 0.0, %v4555
    %v4557 = vpop.f32.mrf.mxu0
    %v4558 = vpop.f32.mrf.mxu0
    %v4559 = vadd.f32 0.0, %v4558
    %v4560 = vpop.f32.mrf.mxu0
    %4561 = vmatprep.mubr.bf16.mxu0 0
    %4562 = vmatmul.mubr.bf16.gmra.mxu0 %v4508
    %v4563 = vpop.f32.mrf.mxu0
    %v4564 = vadd.f32 0.0, %v4563
    %v4565 = vpop.f32.mrf.mxu0
    %v4566 = vpop.f32.mrf.mxu0
    %v4567 = vadd.f32 0.0, %v4566
    %v4568 = vpop.f32.mrf.mxu0
    %4569 = vmatprep.mubr.bf16.mxu0 0
    %4570 = vmatmul.mubr.bf16.gmra.mxu0 %v4511
    %v4571 = vpop.f32.mrf.mxu0
    %v4572 = vadd.f32 0.0, %v4571
    %v4573 = vpop.f32.mrf.mxu0
    %v4574 = vpop.f32.mrf.mxu0
    %v4575 = vadd.f32 0.0, %v4574
    %v4576 = vpop.f32.mrf.mxu0
    %4577 = vdwg.mxu0
    %v4579 = vsel %vm196, %v4413, 0
    %v4582 = vsel %vm196, %v4414, 0
    %v4585 = vsel %vm196, %v4415, 0
    %v4588 = vsel %vm196, %v4416, 0
    %4590 = vmatprep.subr.bf16.mxu0 0
    %4591 = vmatpush1.bf16.xpose.msra.mxu0 0
    %4592 = vmatprep.subr.bf16.mxu0 0
    %4593 = vmatpush1.bf16.xpose.msra.mxu0 0
    %4594 = vmatprep.subr.bf16.mxu0 0
    %4595 = vmatpush1.bf16.xpose.msra.mxu0 0
    %4596 = vmatprep.subr.bf16.mxu0 0
    %4597 = vmatpush1.bf16.xpose.msra.mxu0 0
    %4598 = vmatprep.subr.bf16.mxu0 0
    %4599 = vmatpush1.bf16.xpose.msra.mxu0 0
    %4600 = vmatprep.subr.bf16.mxu0 0
    %4601 = vmatpush1.bf16.xpose.msra.mxu0 0
    %4602 = vmatprep.subr.bf16.mxu0 0
    %4603 = vmatpush1.bf16.xpose.msra.mxu0 0
    %4604 = vmatprep.subr.bf16.mxu0 0
    %4605 = vmatpush1.bf16.xpose.msra.mxu0 %v4434
    %4606 = vmatprep.subr.bf16.mxu0 0
    %4607 = vmatpush2.bf16.xpose.msra.mxu0 0
    %4608 = vmatprep.subr.bf16.mxu0 0
    %4609 = vmatpush2.bf16.xpose.msra.mxu0 0
    %4610 = vmatprep.subr.bf16.mxu0 0
    %4611 = vmatpush2.bf16.xpose.msra.mxu0 0
    %4612 = vmatprep.subr.bf16.mxu0 0
    %4613 = vmatpush2.bf16.xpose.msra.mxu0 0
    %4614 = vmatprep.subr.bf16.mxu0 0
    %4615 = vmatpush2.bf16.xpose.msra.mxu0 0
    %4616 = vmatprep.subr.bf16.mxu0 0
    %4617 = vmatpush2.bf16.xpose.msra.mxu0 0
    %4618 = vmatprep.subr.bf16.mxu0 0
    %4619 = vmatpush2.bf16.xpose.msra.mxu0 0
    %4620 = vmatprep.subr.bf16.mxu0 0
    %4621 = vmatpush2.bf16.xpose.msra.mxu0 0
    %4622 = vmatprep.mubr.bf16.mxu0 0
    %4623 = vmatmul.mubr.bf16.gmra.mxu0 %v4579
    %v4624 = vpop.f32.mrf.mxu0
    %v4625 = vadd.f32 0.0, %v4624
    %v4626 = vpop.f32.mrf.mxu0
    %v4627 = vpop.f32.mrf.mxu0
    %v4628 = vadd.f32 0.0, %v4627
    %v4629 = vpop.f32.mrf.mxu0
    %4630 = vmatprep.mubr.bf16.mxu0 0
    %4631 = vmatmul.mubr.bf16.gmra.mxu0 %v4582
    %v4632 = vpop.f32.mrf.mxu0
    %v4633 = vadd.f32 0.0, %v4632
    %v4634 = vpop.f32.mrf.mxu0
    %v4635 = vpop.f32.mrf.mxu0
    %v4636 = vadd.f32 0.0, %v4635
    %v4637 = vpop.f32.mrf.mxu0
    %4638 = vmatprep.mubr.bf16.mxu0 0
    %4639 = vmatmul.mubr.bf16.gmra.mxu0 %v4585
    %v4640 = vpop.f32.mrf.mxu0
    %v4641 = vadd.f32 0.0, %v4640
    %v4642 = vpop.f32.mrf.mxu0
    %v4643 = vpop.f32.mrf.mxu0
    %v4644 = vadd.f32 0.0, %v4643
    %v4645 = vpop.f32.mrf.mxu0
    %4646 = vmatprep.mubr.bf16.mxu0 0
    %4647 = vmatmul.mubr.bf16.gmra.mxu0 %v4588
    %v4648 = vpop.f32.mrf.mxu0
    %v4649 = vadd.f32 0.0, %v4648
    %v4650 = vpop.f32.mrf.mxu0
    %v4651 = vpop.f32.mrf.mxu0
    %v4652 = vadd.f32 0.0, %v4651
    %v4653 = vpop.f32.mrf.mxu0
    %4654 = vdwg.mxu0
    %v4656 = vsel %vm196, %v4417, 0
    %v4659 = vsel %vm196, %v4418, 0
    %v4662 = vsel %vm196, %v4419, 0
    %v4665 = vsel %vm196, %v4420, 0
    %4667 = vmatprep.subr.bf16.mxu0 0
    %4668 = vmatpush1.bf16.xpose.msra.mxu0 0
    %4669 = vmatprep.subr.bf16.mxu0 0
    %4670 = vmatpush1.bf16.xpose.msra.mxu0 0
    %4671 = vmatprep.subr.bf16.mxu0 0
    %4672 = vmatpush1.bf16.xpose.msra.mxu0 0
    %4673 = vmatprep.subr.bf16.mxu0 0
    %4674 = vmatpush1.bf16.xpose.msra.mxu0 0
    %4675 = vmatprep.subr.bf16.mxu0 0
    %4676 = vmatpush1.bf16.xpose.msra.mxu0 0
    %4677 = vmatprep.subr.bf16.mxu0 0
    %4678 = vmatpush1.bf16.xpose.msra.mxu0 0
    %4679 = vmatprep.subr.bf16.mxu0 0
    %4680 = vmatpush1.bf16.xpose.msra.mxu0 0
    %4681 = vmatprep.subr.bf16.mxu0 0
    %4682 = vmatpush1.bf16.xpose.msra.mxu0 %v4434
    %4683 = vmatprep.subr.bf16.mxu0 0
    %4684 = vmatpush2.bf16.xpose.msra.mxu0 0
    %4685 = vmatprep.subr.bf16.mxu0 0
    %4686 = vmatpush2.bf16.xpose.msra.mxu0 0
    %4687 = vmatprep.subr.bf16.mxu0 0
    %4688 = vmatpush2.bf16.xpose.msra.mxu0 0
    %4689 = vmatprep.subr.bf16.mxu0 0
    %4690 = vmatpush2.bf16.xpose.msra.mxu0 0
    %4691 = vmatprep.subr.bf16.mxu0 0
    %4692 = vmatpush2.bf16.xpose.msra.mxu0 0
    %4693 = vmatprep.subr.bf16.mxu0 0
    %4694 = vmatpush2.bf16.xpose.msra.mxu0 0
    %4695 = vmatprep.subr.bf16.mxu0 0
    %4696 = vmatpush2.bf16.xpose.msra.mxu0 0
    %4697 = vmatprep.subr.bf16.mxu0 0
    %4698 = vmatpush2.bf16.xpose.msra.mxu0 0
    %4699 = vmatprep.mubr.bf16.mxu0 0
    %4700 = vmatmul.mubr.bf16.gmra.mxu0 %v4656
    %v4701 = vpop.f32.mrf.mxu0
    %v4702 = vadd.f32 0.0, %v4701
    %v4703 = vpop.f32.mrf.mxu0
    %v4704 = vpop.f32.mrf.mxu0
    %v4705 = vadd.f32 0.0, %v4704
    %v4706 = vpop.f32.mrf.mxu0
    %4707 = vmatprep.mubr.bf16.mxu0 0
    %4708 = vmatmul.mubr.bf16.gmra.mxu0 %v4659
    %v4709 = vpop.f32.mrf.mxu0
    %v4710 = vadd.f32 0.0, %v4709
    %v4711 = vpop.f32.mrf.mxu0
    %v4712 = vpop.f32.mrf.mxu0
    %v4713 = vadd.f32 0.0, %v4712
    %v4714 = vpop.f32.mrf.mxu0
    %4715 = vmatprep.mubr.bf16.mxu0 0
    %4716 = vmatmul.mubr.bf16.gmra.mxu0 %v4662
    %v4717 = vpop.f32.mrf.mxu0
    %v4718 = vadd.f32 0.0, %v4717
    %v4719 = vpop.f32.mrf.mxu0
    %v4720 = vpop.f32.mrf.mxu0
    %v4721 = vadd.f32 0.0, %v4720
    %v4722 = vpop.f32.mrf.mxu0
    %4723 = vmatprep.mubr.bf16.mxu0 0
    %4724 = vmatmul.mubr.bf16.gmra.mxu0 %v4665
    %v4725 = vpop.f32.mrf.mxu0
    %v4726 = vadd.f32 0.0, %v4725
    %v4727 = vpop.f32.mrf.mxu0
    %v4728 = vpop.f32.mrf.mxu0
    %v4729 = vadd.f32 0.0, %v4728
    %v4730 = vpop.f32.mrf.mxu0
    %4731 = vdwg.mxu0
    %v4732 = vsel %vm1624, %v4471, -inf
    %4733 = vmax.xlane.f32.xlu0 %v4732
    %v4734 = vpop.xlane.xlu0 %4733
    %v4735 = vsel %vm1624, %v4474, -inf
    %4736 = vmax.xlane.f32.xlu0 %v4735
    %v4737 = vpop.xlane.xlu0 %4736
    %v4738 = vsel %vm1624, %v4479, -inf
    %4739 = vmax.xlane.f32.xlu0 %v4738
    %v4740 = vpop.xlane.xlu0 %4739
    %v4741 = vsel %vm1624, %v4482, -inf
    %4742 = vmax.xlane.f32.xlu0 %v4741
    %v4743 = vpop.xlane.xlu0 %4742
    %v4744 = vsel %vm1624, %v4487, -inf
    %4745 = vmax.xlane.f32.xlu0 %v4744
    %v4746 = vpop.xlane.xlu0 %4745
    %v4747 = vsel %vm1624, %v4490, -inf
    %4748 = vmax.xlane.f32.xlu0 %v4747
    %v4749 = vpop.xlane.xlu0 %4748
    %v4750 = vsel %vm1624, %v4495, -inf
    %4751 = vmax.xlane.f32.xlu0 %v4750
    %v4752 = vpop.xlane.xlu0 %4751
    %v4753 = vsel %vm1624, %v4498, -inf
    %4754 = vmax.xlane.f32.xlu0 %v4753
    %v4755 = vpop.xlane.xlu0 %4754
    %v4756 = vsel %vm1624, %v4548, -inf
    %4757 = vmax.xlane.f32.xlu0 %v4756
    %v4758 = vpop.xlane.xlu0 %4757
    %v4759 = vsel %vm1624, %v4551, -inf
    %4760 = vmax.xlane.f32.xlu0 %v4759
    %v4761 = vpop.xlane.xlu0 %4760
    %v4762 = vsel %vm1624, %v4556, -inf
    %4763 = vmax.xlane.f32.xlu0 %v4762
    %v4764 = vpop.xlane.xlu0 %4763
    %v4765 = vsel %vm1624, %v4559, -inf
    %4766 = vmax.xlane.f32.xlu0 %v4765
    %v4767 = vpop.xlane.xlu0 %4766
    %v4768 = vsel %vm1624, %v4564, -inf
    %4769 = vmax.xlane.f32.xlu0 %v4768
    %v4770 = vpop.xlane.xlu0 %4769
    %v4771 = vsel %vm1624, %v4567, -inf
    %4772 = vmax.xlane.f32.xlu0 %v4771
    %v4773 = vpop.xlane.xlu0 %4772
    %v4774 = vsel %vm1624, %v4572, -inf
    %4775 = vmax.xlane.f32.xlu0 %v4774
    %v4776 = vpop.xlane.xlu0 %4775
    %v4777 = vsel %vm1624, %v4575, -inf
    %4778 = vmax.xlane.f32.xlu0 %v4777
    %v4779 = vpop.xlane.xlu0 %4778
    %v4780 = vsel %vm1624, %v4625, -inf
    %4781 = vmax.xlane.f32.xlu0 %v4780
    %v4782 = vpop.xlane.xlu0 %4781
    %v4783 = vsel %vm1624, %v4628, -inf
    %4784 = vmax.xlane.f32.xlu0 %v4783
    %v4785 = vpop.xlane.xlu0 %4784
    %v4786 = vsel %vm1624, %v4633, -inf
    %4787 = vmax.xlane.f32.xlu0 %v4786
    %v4788 = vpop.xlane.xlu0 %4787
    %v4789 = vsel %vm1624, %v4636, -inf
    %4790 = vmax.xlane.f32.xlu0 %v4789
    %v4791 = vpop.xlane.xlu0 %4790
    %v4792 = vsel %vm1624, %v4641, -inf
    %4793 = vmax.xlane.f32.xlu0 %v4792
    %v4794 = vpop.xlane.xlu0 %4793
    %v4795 = vsel %vm1624, %v4644, -inf
    %4796 = vmax.xlane.f32.xlu0 %v4795
    %v4797 = vpop.xlane.xlu0 %4796
    %v4798 = vsel %vm1624, %v4649, -inf
    %4799 = vmax.xlane.f32.xlu0 %v4798
    %v4800 = vpop.xlane.xlu0 %4799
    %v4801 = vsel %vm1624, %v4652, -inf
    %4802 = vmax.xlane.f32.xlu0 %v4801
    %v4803 = vpop.xlane.xlu0 %4802
    %v4804 = vsel %vm1624, %v4702, -inf
    %4805 = vmax.xlane.f32.xlu0 %v4804
    %v4806 = vpop.xlane.xlu0 %4805
    %v4807 = vsel %vm1624, %v4705, -inf
    %4808 = vmax.xlane.f32.xlu0 %v4807
    %v4809 = vpop.xlane.xlu0 %4808
    %v4810 = vsel %vm1624, %v4710, -inf
    %4811 = vmax.xlane.f32.xlu0 %v4810
    %v4812 = vpop.xlane.xlu0 %4811
    %v4813 = vsel %vm1624, %v4713, -inf
    %4814 = vmax.xlane.f32.xlu0 %v4813
    %v4815 = vpop.xlane.xlu0 %4814
    %v4816 = vsel %vm1624, %v4718, -inf
    %4817 = vmax.xlane.f32.xlu0 %v4816
    %v4818 = vpop.xlane.xlu0 %4817
    %v4819 = vsel %vm1624, %v4721, -inf
    %4820 = vmax.xlane.f32.xlu0 %v4819
    %v4821 = vpop.xlane.xlu0 %4820
    %v4822 = vsel %vm1624, %v4726, -inf
    %4823 = vmax.xlane.f32.xlu0 %v4822
    %v4824 = vpop.xlane.xlu0 %4823
    %v4825 = vsel %vm1624, %v4729, -inf
    %4826 = vmax.xlane.f32.xlu0 %v4825
    %v4827 = vpop.xlane.xlu0 %4826
    %v4828 = vsub.f32 %v4471, %v4734
    %v4829 = vsub.f32 %v4474, %v4737
    %v4830 = vsub.f32 %v4479, %v4740
    %v4831 = vsub.f32 %v4482, %v4743
    %v4832 = vsub.f32 %v4487, %v4746
    %v4833 = vsub.f32 %v4490, %v4749
    %v4834 = vsub.f32 %v4495, %v4752
    %v4835 = vsub.f32 %v4498, %v4755
    %v4836 = vsub.f32 %v4548, %v4758
    %v4837 = vsub.f32 %v4551, %v4761
    %v4838 = vsub.f32 %v4556, %v4764
    %v4839 = vsub.f32 %v4559, %v4767
    %v4840 = vsub.f32 %v4564, %v4770
    %v4841 = vsub.f32 %v4567, %v4773
    %v4842 = vsub.f32 %v4572, %v4776
    %v4843 = vsub.f32 %v4575, %v4779
    %v4844 = vsub.f32 %v4625, %v4782
    %v4845 = vsub.f32 %v4628, %v4785
    %v4846 = vsub.f32 %v4633, %v4788
    %v4847 = vsub.f32 %v4636, %v4791
    %v4848 = vsub.f32 %v4641, %v4794
    %v4849 = vsub.f32 %v4644, %v4797
    %v4850 = vsub.f32 %v4649, %v4800
    %v4851 = vsub.f32 %v4652, %v4803
    %v4852 = vsub.f32 %v4702, %v4806
    %v4853 = vsub.f32 %v4705, %v4809
    %v4854 = vsub.f32 %v4710, %v4812
    %v4855 = vsub.f32 %v4713, %v4815
    %v4856 = vsub.f32 %v4718, %v4818
    %v4857 = vsub.f32 %v4721, %v4821
    %v4858 = vsub.f32 %v4726, %v4824
    %v4859 = vsub.f32 %v4729, %v4827
    %v4860 = vmul.f32 %v4828, 1.442695
    %v4861 = vpow.pop %v4860
    %v4862 = vmul.f32 %v4829, 1.442695
    %v4863 = vpow.pop %v4862
    %v4864 = vmul.f32 %v4830, 1.442695
    %v4865 = vpow.pop %v4864
    %v4866 = vmul.f32 %v4831, 1.442695
    %v4867 = vpow.pop %v4866
    %v4868 = vmul.f32 %v4832, 1.442695
    %v4869 = vpow.pop %v4868
    %v4870 = vmul.f32 %v4833, 1.442695
    %v4871 = vpow.pop %v4870
    %v4872 = vmul.f32 %v4834, 1.442695
    %v4873 = vpow.pop %v4872
    %v4874 = vmul.f32 %v4835, 1.442695
    %v4875 = vpow.pop %v4874
    %v4876 = vmul.f32 %v4836, 1.442695
    %v4877 = vpow.pop %v4876
    %v4878 = vmul.f32 %v4837, 1.442695
    %v4879 = vpow.pop %v4878
    %v4880 = vmul.f32 %v4838, 1.442695
    %v4881 = vpow.pop %v4880
    %v4882 = vmul.f32 %v4839, 1.442695
    %v4883 = vpow.pop %v4882
    %v4884 = vmul.f32 %v4840, 1.442695
    %v4885 = vpow.pop %v4884
    %v4886 = vmul.f32 %v4841, 1.442695
    %v4887 = vpow.pop %v4886
    %v4888 = vmul.f32 %v4842, 1.442695
    %v4889 = vpow.pop %v4888
    %v4890 = vmul.f32 %v4843, 1.442695
    %v4891 = vpow.pop %v4890
    %v4892 = vmul.f32 %v4844, 1.442695
    %v4893 = vpow.pop %v4892
    %v4894 = vmul.f32 %v4845, 1.442695
    %v4895 = vpow.pop %v4894
    %v4896 = vmul.f32 %v4846, 1.442695
    %v4897 = vpow.pop %v4896
    %v4898 = vmul.f32 %v4847, 1.442695
    %v4899 = vpow.pop %v4898
    %v4900 = vmul.f32 %v4848, 1.442695
    %v4901 = vpow.pop %v4900
    %v4902 = vmul.f32 %v4849, 1.442695
    %v4903 = vpow.pop %v4902
    %v4904 = vmul.f32 %v4850, 1.442695
    %v4905 = vpow.pop %v4904
    %v4906 = vmul.f32 %v4851, 1.442695
    %v4907 = vpow.pop %v4906
    %v4908 = vmul.f32 %v4852, 1.442695
    %v4909 = vpow.pop %v4908
    %v4910 = vmul.f32 %v4853, 1.442695
    %v4911 = vpow.pop %v4910
    %v4912 = vmul.f32 %v4854, 1.442695
    %v4913 = vpow.pop %v4912
    %v4914 = vmul.f32 %v4855, 1.442695
    %v4915 = vpow.pop %v4914
    %v4916 = vmul.f32 %v4856, 1.442695
    %v4917 = vpow.pop %v4916
    %v4918 = vmul.f32 %v4857, 1.442695
    %v4919 = vpow.pop %v4918
    %v4920 = vmul.f32 %v4858, 1.442695
    %v4921 = vpow.pop %v4920
    %v4922 = vmul.f32 %v4859, 1.442695
    %v4923 = vpow.pop %v4922
    %v4924 = vsel %vm1624, %v4861, 0.0
    %4925 = vadd.xlane.f32.xlu0 %v4924
    %v4926 = vpop.xlane.xlu0 %4925
    %v4927 = vsel %vm1624, %v4863, 0.0
    %4928 = vadd.xlane.f32.xlu0 %v4927
    %v4929 = vpop.xlane.xlu0 %4928
    %v4930 = vsel %vm1624, %v4865, 0.0
    %4931 = vadd.xlane.f32.xlu0 %v4930
    %v4932 = vpop.xlane.xlu0 %4931
    %v4933 = vsel %vm1624, %v4867, 0.0
    %4934 = vadd.xlane.f32.xlu0 %v4933
    %v4935 = vpop.xlane.xlu0 %4934
    %v4936 = vsel %vm1624, %v4869, 0.0
    %4937 = vadd.xlane.f32.xlu0 %v4936
    %v4938 = vpop.xlane.xlu0 %4937
    %v4939 = vsel %vm1624, %v4871, 0.0
    %4940 = vadd.xlane.f32.xlu0 %v4939
    %v4941 = vpop.xlane.xlu0 %4940
    %v4942 = vsel %vm1624, %v4873, 0.0
    %4943 = vadd.xlane.f32.xlu0 %v4942
    %v4944 = vpop.xlane.xlu0 %4943
    %v4945 = vsel %vm1624, %v4875, 0.0
    %4946 = vadd.xlane.f32.xlu0 %v4945
    %v4947 = vpop.xlane.xlu0 %4946
    %v4948 = vsel %vm1624, %v4877, 0.0
    %4949 = vadd.xlane.f32.xlu0 %v4948
    %v4950 = vpop.xlane.xlu0 %4949
    %v4951 = vsel %vm1624, %v4879, 0.0
    %4952 = vadd.xlane.f32.xlu0 %v4951
    %v4953 = vpop.xlane.xlu0 %4952
    %v4954 = vsel %vm1624, %v4881, 0.0
    %4955 = vadd.xlane.f32.xlu0 %v4954
    %v4956 = vpop.xlane.xlu0 %4955
    %v4957 = vsel %vm1624, %v4883, 0.0
    %4958 = vadd.xlane.f32.xlu0 %v4957
    %v4959 = vpop.xlane.xlu0 %4958
    %v4960 = vsel %vm1624, %v4885, 0.0
    %4961 = vadd.xlane.f32.xlu0 %v4960
    %v4962 = vpop.xlane.xlu0 %4961
    %v4963 = vsel %vm1624, %v4887, 0.0
    %4964 = vadd.xlane.f32.xlu0 %v4963
    %v4965 = vpop.xlane.xlu0 %4964
    %v4966 = vsel %vm1624, %v4889, 0.0
    %4967 = vadd.xlane.f32.xlu0 %v4966
    %v4968 = vpop.xlane.xlu0 %4967
    %v4969 = vsel %vm1624, %v4891, 0.0
    %4970 = vadd.xlane.f32.xlu0 %v4969
    %v4971 = vpop.xlane.xlu0 %4970
    %v4972 = vsel %vm1624, %v4893, 0.0
    %4973 = vadd.xlane.f32.xlu0 %v4972
    %v4974 = vpop.xlane.xlu0 %4973
    %v4975 = vsel %vm1624, %v4895, 0.0
    %4976 = vadd.xlane.f32.xlu0 %v4975
    %v4977 = vpop.xlane.xlu0 %4976
    %v4978 = vsel %vm1624, %v4897, 0.0
    %4979 = vadd.xlane.f32.xlu0 %v4978
    %v4980 = vpop.xlane.xlu0 %4979
    %v4981 = vsel %vm1624, %v4899, 0.0
    %4982 = vadd.xlane.f32.xlu0 %v4981
    %v4983 = vpop.xlane.xlu0 %4982
    %v4984 = vsel %vm1624, %v4901, 0.0
    %4985 = vadd.xlane.f32.xlu0 %v4984
    %v4986 = vpop.xlane.xlu0 %4985
    %v4987 = vsel %vm1624, %v4903, 0.0
    %4988 = vadd.xlane.f32.xlu0 %v4987
    %v4989 = vpop.xlane.xlu0 %4988
    %v4990 = vsel %vm1624, %v4905, 0.0
    %4991 = vadd.xlane.f32.xlu0 %v4990
    %v4992 = vpop.xlane.xlu0 %4991
    %v4993 = vsel %vm1624, %v4907, 0.0
    %4994 = vadd.xlane.f32.xlu0 %v4993
    %v4995 = vpop.xlane.xlu0 %4994
    %v4996 = vsel %vm1624, %v4909, 0.0
    %4997 = vadd.xlane.f32.xlu0 %v4996
    %v4998 = vpop.xlane.xlu0 %4997
    %v4999 = vsel %vm1624, %v4911, 0.0
    %5000 = vadd.xlane.f32.xlu0 %v4999
    %v5001 = vpop.xlane.xlu0 %5000
    %v5002 = vsel %vm1624, %v4913, 0.0
    %5003 = vadd.xlane.f32.xlu0 %v5002
    %v5004 = vpop.xlane.xlu0 %5003
    %v5005 = vsel %vm1624, %v4915, 0.0
    %5006 = vadd.xlane.f32.xlu0 %v5005
    %v5007 = vpop.xlane.xlu0 %5006
    %v5008 = vsel %vm1624, %v4917, 0.0
    %5009 = vadd.xlane.f32.xlu0 %v5008
    %v5010 = vpop.xlane.xlu0 %5009
    %v5011 = vsel %vm1624, %v4919, 0.0
    %5012 = vadd.xlane.f32.xlu0 %v5011
    %v5013 = vpop.xlane.xlu0 %5012
    %v5014 = vsel %vm1624, %v4921, 0.0
    %5015 = vadd.xlane.f32.xlu0 %v5014
    %v5016 = vpop.xlane.xlu0 %5015
    %v5017 = vsel %vm1624, %v4923, 0.0
    %5018 = vadd.xlane.f32.xlu0 %v5017
    %v5019 = vpop.xlane.xlu0 %5018
    %v5020 = vrcp.pop %v4926
    %v5021 = vrcp.pop %v4929
    %v5022 = vrcp.pop %v4932
    %v5023 = vrcp.pop %v4935
    %v5024 = vrcp.pop %v4938
    %v5025 = vrcp.pop %v4941
    %v5026 = vrcp.pop %v4944
    %v5027 = vrcp.pop %v4947
    %v5028 = vrcp.pop %v4950
    %v5029 = vrcp.pop %v4953
    %v5030 = vrcp.pop %v4956
    %v5031 = vrcp.pop %v4959
    %v5032 = vrcp.pop %v4962
    %v5033 = vrcp.pop %v4965
    %v5034 = vrcp.pop %v4968
    %v5035 = vrcp.pop %v4971
    %v5036 = vrcp.pop %v4974
    %v5037 = vrcp.pop %v4977
    %v5038 = vrcp.pop %v4980
    %v5039 = vrcp.pop %v4983
    %v5040 = vrcp.pop %v4986
    %v5041 = vrcp.pop %v4989
    %v5042 = vrcp.pop %v4992
    %v5043 = vrcp.pop %v4995
    %v5044 = vrcp.pop %v4998
    %v5045 = vrcp.pop %v5001
    %v5046 = vrcp.pop %v5004
    %v5047 = vrcp.pop %v5007
    %v5048 = vrcp.pop %v5010
    %v5049 = vrcp.pop %v5013
    %v5050 = vrcp.pop %v5016
    %v5051 = vrcp.pop %v5019
    %v5052 = vmul.f32 %v4861, %v5020
    %v5053 = vmul.f32 %v4863, %v5021
    %v5054 = vmul.f32 %v4865, %v5022
    %v5055 = vmul.f32 %v4867, %v5023
    %v5056 = vmul.f32 %v4869, %v5024
    %v5057 = vmul.f32 %v4871, %v5025
    %v5058 = vmul.f32 %v4873, %v5026
    %v5059 = vmul.f32 %v4875, %v5027
    %v5060 = vmul.f32 %v4877, %v5028
    %v5061 = vmul.f32 %v4879, %v5029
    %v5062 = vmul.f32 %v4881, %v5030
    %v5063 = vmul.f32 %v4883, %v5031
    %v5064 = vmul.f32 %v4885, %v5032
    %v5065 = vmul.f32 %v4887, %v5033
    %v5066 = vmul.f32 %v4889, %v5034
    %v5067 = vmul.f32 %v4891, %v5035
    %v5068 = vmul.f32 %v4893, %v5036
    %v5069 = vmul.f32 %v4895, %v5037
    %v5070 = vmul.f32 %v4897, %v5038
    %v5071 = vmul.f32 %v4899, %v5039
    %v5072 = vmul.f32 %v4901, %v5040
    %v5073 = vmul.f32 %v4903, %v5041
    %v5074 = vmul.f32 %v4905, %v5042
    %v5075 = vmul.f32 %v4907, %v5043
    %v5076 = vmul.f32 %v4909, %v5044
    %v5077 = vmul.f32 %v4911, %v5045
    %v5078 = vmul.f32 %v4913, %v5046
    %v5079 = vmul.f32 %v4915, %v5047
    %v5080 = vmul.f32 %v4917, %v5048
    %v5081 = vmul.f32 %v4919, %v5049
    %v5082 = vmul.f32 %v4921, %v5050
    %v5083 = vmul.f32 %v4923, %v5051
    %v5084 = vpack.c.bf16 %v5053, %v5052
    %v5085 = vpack.c.bf16 %v5055, %v5054
    %v5086 = vpack.c.bf16 %v5057, %v5056
    %v5087 = vpack.c.bf16 %v5059, %v5058
    %v5088 = vpack.c.bf16 %v5061, %v5060
    %v5089 = vpack.c.bf16 %v5063, %v5062
    %v5090 = vpack.c.bf16 %v5065, %v5064
    %v5091 = vpack.c.bf16 %v5067, %v5066
    %v5092 = vpack.c.bf16 %v5069, %v5068
    %v5093 = vpack.c.bf16 %v5071, %v5070
    %v5094 = vpack.c.bf16 %v5073, %v5072
    %v5095 = vpack.c.bf16 %v5075, %v5074
    %v5096 = vpack.c.bf16 %v5077, %v5076
    %v5097 = vpack.c.bf16 %v5079, %v5078
    %v5098 = vpack.c.bf16 %v5081, %v5080
    %v5099 = vpack.c.bf16 %v5083, %v5082
    %v5101 = vsel %vm1624, %v5084, 0
    %v5104 = vsel %vm1624, %v5085, 0
    %v5107 = vsel %vm1624, %v5086, 0
    %v5110 = vsel %vm1624, %v5087, 0
    %v5112 = vsel %vm2005, %v4144, 0
    %5114 = vmatprep.subr.bf16.mxu0 0
    %5115 = vmatpush1.bf16.msra.mxu0 0
    %5116 = vmatprep.subr.bf16.mxu0 0
    %5117 = vmatpush1.bf16.msra.mxu0 0
    %5118 = vmatprep.subr.bf16.mxu0 0
    %5119 = vmatpush1.bf16.msra.mxu0 0
    %5120 = vmatprep.subr.bf16.mxu0 0
    %5121 = vmatpush1.bf16.msra.mxu0 0
    %5122 = vmatprep.subr.bf16.mxu0 0
    %5123 = vmatpush1.bf16.msra.mxu0 0
    %5124 = vmatprep.subr.bf16.mxu0 0
    %5125 = vmatpush1.bf16.msra.mxu0 0
    %5126 = vmatprep.subr.bf16.mxu0 0
    %5127 = vmatpush1.bf16.msra.mxu0 0
    %5128 = vmatprep.subr.bf16.mxu0 0
    %5129 = vmatpush1.bf16.msra.mxu0 %v5112
    %5130 = vmatprep.subr.bf16.mxu0 0
    %5131 = vmatpush2.bf16.msra.mxu0 0
    %5132 = vmatprep.subr.bf16.mxu0 0
    %5133 = vmatpush2.bf16.msra.mxu0 0
    %5134 = vmatprep.subr.bf16.mxu0 0
    %5135 = vmatpush2.bf16.msra.mxu0 0
    %5136 = vmatprep.subr.bf16.mxu0 0
    %5137 = vmatpush2.bf16.msra.mxu0 0
    %5138 = vmatprep.subr.bf16.mxu0 0
    %5139 = vmatpush2.bf16.msra.mxu0 0
    %5140 = vmatprep.subr.bf16.mxu0 0
    %5141 = vmatpush2.bf16.msra.mxu0 0
    %5142 = vmatprep.subr.bf16.mxu0 0
    %5143 = vmatpush2.bf16.msra.mxu0 0
    %5144 = vmatprep.subr.bf16.mxu0 0
    %5145 = vmatpush2.bf16.msra.mxu0 0
    %5146 = vmatprep.mubr.bf16.mxu0 0
    %5147 = vmatmul.mubr.bf16.gmra.mxu0 %v5101
    %v5148 = vpop.f32.mrf.mxu0
    %v5149 = vadd.f32 0.0, %v5148
    %v5150 = vpop.f32.mrf.mxu0
    %v5151 = vpop.f32.mrf.mxu0
    %v5152 = vadd.f32 0.0, %v5151
    %v5153 = vpop.f32.mrf.mxu0
    %5154 = vmatprep.mubr.bf16.mxu0 0
    %5155 = vmatmul.mubr.bf16.gmra.mxu0 %v5104
    %v5156 = vpop.f32.mrf.mxu0
    %v5157 = vadd.f32 0.0, %v5156
    %v5158 = vpop.f32.mrf.mxu0
    %v5159 = vpop.f32.mrf.mxu0
    %v5160 = vadd.f32 0.0, %v5159
    %v5161 = vpop.f32.mrf.mxu0
    %5162 = vmatprep.mubr.bf16.mxu0 0
    %5163 = vmatmul.mubr.bf16.gmra.mxu0 %v5107
    %v5164 = vpop.f32.mrf.mxu0
    %v5165 = vadd.f32 0.0, %v5164
    %v5166 = vpop.f32.mrf.mxu0
    %v5167 = vpop.f32.mrf.mxu0
    %v5168 = vadd.f32 0.0, %v5167
    %v5169 = vpop.f32.mrf.mxu0
    %5170 = vmatprep.mubr.bf16.mxu0 0
    %5171 = vmatmul.mubr.bf16.gmra.mxu0 %v5110
    %v5172 = vpop.f32.mrf.mxu0
    %v5173 = vadd.f32 0.0, %v5172
    %v5174 = vpop.f32.mrf.mxu0
    %v5175 = vpop.f32.mrf.mxu0
    %v5176 = vadd.f32 0.0, %v5175
    %v5177 = vpop.f32.mrf.mxu0
    %5178 = vdwg.mxu0
    %v5180 = vsel %vm1624, %v5088, 0
    %v5183 = vsel %vm1624, %v5089, 0
    %v5186 = vsel %vm1624, %v5090, 0
    %v5189 = vsel %vm1624, %v5091, 0
    %5191 = vmatprep.subr.bf16.mxu0 0
    %5192 = vmatpush1.bf16.msra.mxu0 0
    %5193 = vmatprep.subr.bf16.mxu0 0
    %5194 = vmatpush1.bf16.msra.mxu0 0
    %5195 = vmatprep.subr.bf16.mxu0 0
    %5196 = vmatpush1.bf16.msra.mxu0 0
    %5197 = vmatprep.subr.bf16.mxu0 0
    %5198 = vmatpush1.bf16.msra.mxu0 0
    %5199 = vmatprep.subr.bf16.mxu0 0
    %5200 = vmatpush1.bf16.msra.mxu0 0
    %5201 = vmatprep.subr.bf16.mxu0 0
    %5202 = vmatpush1.bf16.msra.mxu0 0
    %5203 = vmatprep.subr.bf16.mxu0 0
    %5204 = vmatpush1.bf16.msra.mxu0 0
    %5205 = vmatprep.subr.bf16.mxu0 0
    %5206 = vmatpush1.bf16.msra.mxu0 %v5112
    %5207 = vmatprep.subr.bf16.mxu0 0
    %5208 = vmatpush2.bf16.msra.mxu0 0
    %5209 = vmatprep.subr.bf16.mxu0 0
    %5210 = vmatpush2.bf16.msra.mxu0 0
    %5211 = vmatprep.subr.bf16.mxu0 0
    %5212 = vmatpush2.bf16.msra.mxu0 0
    %5213 = vmatprep.subr.bf16.mxu0 0
    %5214 = vmatpush2.bf16.msra.mxu0 0
    %5215 = vmatprep.subr.bf16.mxu0 0
    %5216 = vmatpush2.bf16.msra.mxu0 0
    %5217 = vmatprep.subr.bf16.mxu0 0
    %5218 = vmatpush2.bf16.msra.mxu0 0
    %5219 = vmatprep.subr.bf16.mxu0 0
    %5220 = vmatpush2.bf16.msra.mxu0 0
    %5221 = vmatprep.subr.bf16.mxu0 0
    %5222 = vmatpush2.bf16.msra.mxu0 0
    %5223 = vmatprep.mubr.bf16.mxu0 0
    %5224 = vmatmul.mubr.bf16.gmra.mxu0 %v5180
    %v5225 = vpop.f32.mrf.mxu0
    %v5226 = vadd.f32 0.0, %v5225
    %v5227 = vpop.f32.mrf.mxu0
    %v5228 = vpop.f32.mrf.mxu0
    %v5229 = vadd.f32 0.0, %v5228
    %v5230 = vpop.f32.mrf.mxu0
    %5231 = vmatprep.mubr.bf16.mxu0 0
    %5232 = vmatmul.mubr.bf16.gmra.mxu0 %v5183
    %v5233 = vpop.f32.mrf.mxu0
    %v5234 = vadd.f32 0.0, %v5233
    %v5235 = vpop.f32.mrf.mxu0
    %v5236 = vpop.f32.mrf.mxu0
    %v5237 = vadd.f32 0.0, %v5236
    %v5238 = vpop.f32.mrf.mxu0
    %5239 = vmatprep.mubr.bf16.mxu0 0
    %5240 = vmatmul.mubr.bf16.gmra.mxu0 %v5186
    %v5241 = vpop.f32.mrf.mxu0
    %v5242 = vadd.f32 0.0, %v5241
    %v5243 = vpop.f32.mrf.mxu0
    %v5244 = vpop.f32.mrf.mxu0
    %v5245 = vadd.f32 0.0, %v5244
    %v5246 = vpop.f32.mrf.mxu0
    %5247 = vmatprep.mubr.bf16.mxu0 0
    %5248 = vmatmul.mubr.bf16.gmra.mxu0 %v5189
    %v5249 = vpop.f32.mrf.mxu0
    %v5250 = vadd.f32 0.0, %v5249
    %v5251 = vpop.f32.mrf.mxu0
    %v5252 = vpop.f32.mrf.mxu0
    %v5253 = vadd.f32 0.0, %v5252
    %v5254 = vpop.f32.mrf.mxu0
    %5255 = vdwg.mxu0
    %v5257 = vsel %vm1624, %v5092, 0
    %v5260 = vsel %vm1624, %v5093, 0
    %v5263 = vsel %vm1624, %v5094, 0
    %v5266 = vsel %vm1624, %v5095, 0
    %5268 = vmatprep.subr.bf16.mxu0 0
    %5269 = vmatpush1.bf16.msra.mxu0 0
    %5270 = vmatprep.subr.bf16.mxu0 0
    %5271 = vmatpush1.bf16.msra.mxu0 0
    %5272 = vmatprep.subr.bf16.mxu0 0
    %5273 = vmatpush1.bf16.msra.mxu0 0
    %5274 = vmatprep.subr.bf16.mxu0 0
    %5275 = vmatpush1.bf16.msra.mxu0 0
    %5276 = vmatprep.subr.bf16.mxu0 0
    %5277 = vmatpush1.bf16.msra.mxu0 0
    %5278 = vmatprep.subr.bf16.mxu0 0
    %5279 = vmatpush1.bf16.msra.mxu0 0
    %5280 = vmatprep.subr.bf16.mxu0 0
    %5281 = vmatpush1.bf16.msra.mxu0 0
    %5282 = vmatprep.subr.bf16.mxu0 0
    %5283 = vmatpush1.bf16.msra.mxu0 %v5112
    %5284 = vmatprep.subr.bf16.mxu0 0
    %5285 = vmatpush2.bf16.msra.mxu0 0
    %5286 = vmatprep.subr.bf16.mxu0 0
    %5287 = vmatpush2.bf16.msra.mxu0 0
    %5288 = vmatprep.subr.bf16.mxu0 0
    %5289 = vmatpush2.bf16.msra.mxu0 0
    %5290 = vmatprep.subr.bf16.mxu0 0
    %5291 = vmatpush2.bf16.msra.mxu0 0
    %5292 = vmatprep.subr.bf16.mxu0 0
    %5293 = vmatpush2.bf16.msra.mxu0 0
    %5294 = vmatprep.subr.bf16.mxu0 0
    %5295 = vmatpush2.bf16.msra.mxu0 0
    %5296 = vmatprep.subr.bf16.mxu0 0
    %5297 = vmatpush2.bf16.msra.mxu0 0
    %5298 = vmatprep.subr.bf16.mxu0 0
    %5299 = vmatpush2.bf16.msra.mxu0 0
    %5300 = vmatprep.mubr.bf16.mxu0 0
    %5301 = vmatmul.mubr.bf16.gmra.mxu0 %v5257
    %v5302 = vpop.f32.mrf.mxu0
    %v5303 = vadd.f32 0.0, %v5302
    %v5304 = vpop.f32.mrf.mxu0
    %v5305 = vpop.f32.mrf.mxu0
    %v5306 = vadd.f32 0.0, %v5305
    %v5307 = vpop.f32.mrf.mxu0
    %5308 = vmatprep.mubr.bf16.mxu0 0
    %5309 = vmatmul.mubr.bf16.gmra.mxu0 %v5260
    %v5310 = vpop.f32.mrf.mxu0
    %v5311 = vadd.f32 0.0, %v5310
    %v5312 = vpop.f32.mrf.mxu0
    %v5313 = vpop.f32.mrf.mxu0
    %v5314 = vadd.f32 0.0, %v5313
    %v5315 = vpop.f32.mrf.mxu0
    %5316 = vmatprep.mubr.bf16.mxu0 0
    %5317 = vmatmul.mubr.bf16.gmra.mxu0 %v5263
    %v5318 = vpop.f32.mrf.mxu0
    %v5319 = vadd.f32 0.0, %v5318
    %v5320 = vpop.f32.mrf.mxu0
    %v5321 = vpop.f32.mrf.mxu0
    %v5322 = vadd.f32 0.0, %v5321
    %v5323 = vpop.f32.mrf.mxu0
    %5324 = vmatprep.mubr.bf16.mxu0 0
    %5325 = vmatmul.mubr.bf16.gmra.mxu0 %v5266
    %v5326 = vpop.f32.mrf.mxu0
    %v5327 = vadd.f32 0.0, %v5326
    %v5328 = vpop.f32.mrf.mxu0
    %v5329 = vpop.f32.mrf.mxu0
    %v5330 = vadd.f32 0.0, %v5329
    %v5331 = vpop.f32.mrf.mxu0
    %5332 = vdwg.mxu0
    %v5334 = vsel %vm1624, %v5096, 0
    %v5337 = vsel %vm1624, %v5097, 0
    %v5340 = vsel %vm1624, %v5098, 0
    %v5343 = vsel %vm1624, %v5099, 0
    %5345 = vmatprep.subr.bf16.mxu0 0
    %5346 = vmatpush1.bf16.msra.mxu0 0
    %5347 = vmatprep.subr.bf16.mxu0 0
    %5348 = vmatpush1.bf16.msra.mxu0 0
    %5349 = vmatprep.subr.bf16.mxu0 0
    %5350 = vmatpush1.bf16.msra.mxu0 0
    %5351 = vmatprep.subr.bf16.mxu0 0
    %5352 = vmatpush1.bf16.msra.mxu0 0
    %5353 = vmatprep.subr.bf16.mxu0 0
    %5354 = vmatpush1.bf16.msra.mxu0 0
    %5355 = vmatprep.subr.bf16.mxu0 0
    %5356 = vmatpush1.bf16.msra.mxu0 0
    %5357 = vmatprep.subr.bf16.mxu0 0
    %5358 = vmatpush1.bf16.msra.mxu0 0
    %5359 = vmatprep.subr.bf16.mxu0 0
    %5360 = vmatpush1.bf16.msra.mxu0 %v5112
    %5361 = vmatprep.subr.bf16.mxu0 0
    %5362 = vmatpush2.bf16.msra.mxu0 0
    %5363 = vmatprep.subr.bf16.mxu0 0
    %5364 = vmatpush2.bf16.msra.mxu0 0
    %5365 = vmatprep.subr.bf16.mxu0 0
    %5366 = vmatpush2.bf16.msra.mxu0 0
    %5367 = vmatprep.subr.bf16.mxu0 0
    %5368 = vmatpush2.bf16.msra.mxu0 0
    %5369 = vmatprep.subr.bf16.mxu0 0
    %5370 = vmatpush2.bf16.msra.mxu0 0
    %5371 = vmatprep.subr.bf16.mxu0 0
    %5372 = vmatpush2.bf16.msra.mxu0 0
    %5373 = vmatprep.subr.bf16.mxu0 0
    %5374 = vmatpush2.bf16.msra.mxu0 0
    %5375 = vmatprep.subr.bf16.mxu0 0
    %5376 = vmatpush2.bf16.msra.mxu0 0
    %5377 = vmatprep.mubr.bf16.mxu0 0
    %5378 = vmatmul.mubr.bf16.gmra.mxu0 %v5334
    %v5379 = vpop.f32.mrf.mxu0
    %v5380 = vadd.f32 0.0, %v5379
    %v5381 = vpop.f32.mrf.mxu0
    %v5382 = vpop.f32.mrf.mxu0
    %v5383 = vadd.f32 0.0, %v5382
    %v5384 = vpop.f32.mrf.mxu0
    %5385 = vmatprep.mubr.bf16.mxu0 0
    %5386 = vmatmul.mubr.bf16.gmra.mxu0 %v5337
    %v5387 = vpop.f32.mrf.mxu0
    %v5388 = vadd.f32 0.0, %v5387
    %v5389 = vpop.f32.mrf.mxu0
    %v5390 = vpop.f32.mrf.mxu0
    %v5391 = vadd.f32 0.0, %v5390
    %v5392 = vpop.f32.mrf.mxu0
    %5393 = vmatprep.mubr.bf16.mxu0 0
    %5394 = vmatmul.mubr.bf16.gmra.mxu0 %v5340
    %v5395 = vpop.f32.mrf.mxu0
    %v5396 = vadd.f32 0.0, %v5395
    %v5397 = vpop.f32.mrf.mxu0
    %v5398 = vpop.f32.mrf.mxu0
    %v5399 = vadd.f32 0.0, %v5398
    %v5400 = vpop.f32.mrf.mxu0
    %5401 = vmatprep.mubr.bf16.mxu0 0
    %5402 = vmatmul.mubr.bf16.gmra.mxu0 %v5343
    %v5403 = vpop.f32.mrf.mxu0
    %v5404 = vadd.f32 0.0, %v5403
    %v5405 = vpop.f32.mrf.mxu0
    %v5406 = vpop.f32.mrf.mxu0
    %v5407 = vadd.f32 0.0, %v5406
    %v5408 = vpop.f32.mrf.mxu0
    %5409 = vdwg.mxu0
    %v5410 = vpack.c.bf16 %v5152, %v5149
    %v5411 = vpack.c.bf16 %v5160, %v5157
    %v5412 = vpack.c.bf16 %v5168, %v5165
    %v5413 = vpack.c.bf16 %v5176, %v5173
    %v5414 = vpack.c.bf16 %v5229, %v5226
    %v5415 = vpack.c.bf16 %v5237, %v5234
    %v5416 = vpack.c.bf16 %v5245, %v5242
    %v5417 = vpack.c.bf16 %v5253, %v5250
    %v5418 = vpack.c.bf16 %v5306, %v5303
    %v5419 = vpack.c.bf16 %v5314, %v5311
    %v5420 = vpack.c.bf16 %v5322, %v5319
    %v5421 = vpack.c.bf16 %v5330, %v5327
    %v5422 = vpack.c.bf16 %v5383, %v5380
    %v5423 = vpack.c.bf16 %v5391, %v5388
    %v5424 = vpack.c.bf16 %v5399, %v5396
    %v5425 = vpack.c.bf16 %v5407, %v5404
    %v5427 = vsel %vm196, %v5410, 0
    %v5430 = vsel %vm196, %v5411, 0
    %v5433 = vsel %vm196, %v5412, 0
    %v5436 = vsel %vm196, %v5413, 0
    %5438 = vmatprep.subr.bf16.mxu0 0
    %5439 = vmatpush1.bf16.msra.mxu0 0
    %5440 = vmatprep.subr.bf16.mxu0 0
    %5441 = vmatpush1.bf16.msra.mxu0 0
    %5442 = vmatprep.subr.bf16.mxu0 0
    %5443 = vmatpush1.bf16.msra.mxu0 0
    %5444 = vmatprep.subr.bf16.mxu0 0
    %5445 = vmatpush1.bf16.msra.mxu0 0
    %5446 = vmatprep.subr.bf16.mxu0 0
    %5447 = vmatpush1.bf16.msra.mxu0 0
    %5448 = vmatprep.subr.bf16.mxu0 0
    %5449 = vmatpush1.bf16.msra.mxu0 0
    %5450 = vmatprep.subr.bf16.mxu0 0
    %5451 = vmatpush1.bf16.msra.mxu0 %v3925
    %5452 = vmatprep.subr.bf16.mxu0 0
    %5453 = vmatpush1.bf16.msra.mxu0 %v3924
    %5454 = vmatprep.subr.bf16.mxu0 0
    %5455 = vmatpush2.bf16.msra.mxu0 0
    %5456 = vmatprep.subr.bf16.mxu0 0
    %5457 = vmatpush2.bf16.msra.mxu0 0
    %5458 = vmatprep.subr.bf16.mxu0 0
    %5459 = vmatpush2.bf16.msra.mxu0 0
    %5460 = vmatprep.subr.bf16.mxu0 0
    %5461 = vmatpush2.bf16.msra.mxu0 0
    %5462 = vmatprep.subr.bf16.mxu0 0
    %5463 = vmatpush2.bf16.msra.mxu0 0
    %5464 = vmatprep.subr.bf16.mxu0 0
    %5465 = vmatpush2.bf16.msra.mxu0 0
    %5466 = vmatprep.subr.bf16.mxu0 0
    %5467 = vmatpush2.bf16.msra.mxu0 0
    %5468 = vmatprep.subr.bf16.mxu0 0
    %5469 = vmatpush2.bf16.msra.mxu0 0
    %5470 = vmatprep.mubr.bf16.mxu0 0
    %5471 = vmatmul.mubr.bf16.gmra.mxu0 %v5427
    %v5472 = vpop.f32.mrf.mxu0
    %v5473 = vadd.f32 0.0, %v5472
    %v5474 = vpop.f32.mrf.mxu0
    %v5475 = vpop.f32.mrf.mxu0
    %v5476 = vadd.f32 0.0, %v5475
    %v5477 = vpop.f32.mrf.mxu0
    %5478 = vmatprep.mubr.bf16.mxu0 0
    %5479 = vmatmul.mubr.bf16.gmra.mxu0 %v5430
    %v5480 = vpop.f32.mrf.mxu0
    %v5481 = vadd.f32 0.0, %v5480
    %v5482 = vpop.f32.mrf.mxu0
    %v5483 = vpop.f32.mrf.mxu0
    %v5484 = vadd.f32 0.0, %v5483
    %v5485 = vpop.f32.mrf.mxu0
    %5486 = vmatprep.mubr.bf16.mxu0 0
    %5487 = vmatmul.mubr.bf16.gmra.mxu0 %v5433
    %v5488 = vpop.f32.mrf.mxu0
    %v5489 = vadd.f32 0.0, %v5488
    %v5490 = vpop.f32.mrf.mxu0
    %v5491 = vpop.f32.mrf.mxu0
    %v5492 = vadd.f32 0.0, %v5491
    %v5493 = vpop.f32.mrf.mxu0
    %5494 = vmatprep.mubr.bf16.mxu0 0
    %5495 = vmatmul.mubr.bf16.gmra.mxu0 %v5436
    %v5496 = vpop.f32.mrf.mxu0
    %v5497 = vadd.f32 0.0, %v5496
    %v5498 = vpop.f32.mrf.mxu0
    %v5499 = vpop.f32.mrf.mxu0
    %v5500 = vadd.f32 0.0, %v5499
    %v5501 = vpop.f32.mrf.mxu0
    %5502 = vdwg.mxu0
    %v5504 = vsel %vm196, %v5414, 0
    %v5507 = vsel %vm196, %v5415, 0
    %v5510 = vsel %vm196, %v5416, 0
    %v5513 = vsel %vm196, %v5417, 0
    %5515 = vmatprep.subr.bf16.mxu0 0
    %5516 = vmatpush1.bf16.msra.mxu0 0
    %5517 = vmatprep.subr.bf16.mxu0 0
    %5518 = vmatpush1.bf16.msra.mxu0 0
    %5519 = vmatprep.subr.bf16.mxu0 0
    %5520 = vmatpush1.bf16.msra.mxu0 0
    %5521 = vmatprep.subr.bf16.mxu0 0
    %5522 = vmatpush1.bf16.msra.mxu0 0
    %5523 = vmatprep.subr.bf16.mxu0 0
    %5524 = vmatpush1.bf16.msra.mxu0 0
    %5525 = vmatprep.subr.bf16.mxu0 0
    %5526 = vmatpush1.bf16.msra.mxu0 0
    %5527 = vmatprep.subr.bf16.mxu0 0
    %5528 = vmatpush1.bf16.msra.mxu0 %v3980
    %5529 = vmatprep.subr.bf16.mxu0 0
    %5530 = vmatpush1.bf16.msra.mxu0 %v3979
    %5531 = vmatprep.subr.bf16.mxu0 0
    %5532 = vmatpush2.bf16.msra.mxu0 0
    %5533 = vmatprep.subr.bf16.mxu0 0
    %5534 = vmatpush2.bf16.msra.mxu0 0
    %5535 = vmatprep.subr.bf16.mxu0 0
    %5536 = vmatpush2.bf16.msra.mxu0 0
    %5537 = vmatprep.subr.bf16.mxu0 0
    %5538 = vmatpush2.bf16.msra.mxu0 0
    %5539 = vmatprep.subr.bf16.mxu0 0
    %5540 = vmatpush2.bf16.msra.mxu0 0
    %5541 = vmatprep.subr.bf16.mxu0 0
    %5542 = vmatpush2.bf16.msra.mxu0 0
    %5543 = vmatprep.subr.bf16.mxu0 0
    %5544 = vmatpush2.bf16.msra.mxu0 0
    %5545 = vmatprep.subr.bf16.mxu0 0
    %5546 = vmatpush2.bf16.msra.mxu0 0
    %5547 = vmatprep.mubr.bf16.mxu0 0
    %5548 = vmatmul.mubr.bf16.gmra.mxu0 %v5504
    %v5549 = vpop.f32.mrf.mxu0
    %v5550 = vadd.f32 0.0, %v5549
    %v5551 = vpop.f32.mrf.mxu0
    %v5552 = vpop.f32.mrf.mxu0
    %v5553 = vadd.f32 0.0, %v5552
    %v5554 = vpop.f32.mrf.mxu0
    %5555 = vmatprep.mubr.bf16.mxu0 0
    %5556 = vmatmul.mubr.bf16.gmra.mxu0 %v5507
    %v5557 = vpop.f32.mrf.mxu0
    %v5558 = vadd.f32 0.0, %v5557
    %v5559 = vpop.f32.mrf.mxu0
    %v5560 = vpop.f32.mrf.mxu0
    %v5561 = vadd.f32 0.0, %v5560
    %v5562 = vpop.f32.mrf.mxu0
    %5563 = vmatprep.mubr.bf16.mxu0 0
    %5564 = vmatmul.mubr.bf16.gmra.mxu0 %v5510
    %v5565 = vpop.f32.mrf.mxu0
    %v5566 = vadd.f32 0.0, %v5565
    %v5567 = vpop.f32.mrf.mxu0
    %v5568 = vpop.f32.mrf.mxu0
    %v5569 = vadd.f32 0.0, %v5568
    %v5570 = vpop.f32.mrf.mxu0
    %5571 = vmatprep.mubr.bf16.mxu0 0
    %5572 = vmatmul.mubr.bf16.gmra.mxu0 %v5513
    %v5573 = vpop.f32.mrf.mxu0
    %v5574 = vadd.f32 0.0, %v5573
    %v5575 = vpop.f32.mrf.mxu0
    %v5576 = vpop.f32.mrf.mxu0
    %v5577 = vadd.f32 0.0, %v5576
    %v5578 = vpop.f32.mrf.mxu0
    %5579 = vdwg.mxu0
    %v5581 = vsel %vm196, %v5418, 0
    %v5584 = vsel %vm196, %v5419, 0
    %v5587 = vsel %vm196, %v5420, 0
    %v5590 = vsel %vm196, %v5421, 0
    %5592 = vmatprep.subr.bf16.mxu0 0
    %5593 = vmatpush1.bf16.msra.mxu0 0
    %5594 = vmatprep.subr.bf16.mxu0 0
    %5595 = vmatpush1.bf16.msra.mxu0 0
    %5596 = vmatprep.subr.bf16.mxu0 0
    %5597 = vmatpush1.bf16.msra.mxu0 0
    %5598 = vmatprep.subr.bf16.mxu0 0
    %5599 = vmatpush1.bf16.msra.mxu0 0
    %5600 = vmatprep.subr.bf16.mxu0 0
    %5601 = vmatpush1.bf16.msra.mxu0 0
    %5602 = vmatprep.subr.bf16.mxu0 0
    %5603 = vmatpush1.bf16.msra.mxu0 0
    %5604 = vmatprep.subr.bf16.mxu0 0
    %5605 = vmatpush1.bf16.msra.mxu0 %v4035
    %5606 = vmatprep.subr.bf16.mxu0 0
    %5607 = vmatpush1.bf16.msra.mxu0 %v4034
    %5608 = vmatprep.subr.bf16.mxu0 0
    %5609 = vmatpush2.bf16.msra.mxu0 0
    %5610 = vmatprep.subr.bf16.mxu0 0
    %5611 = vmatpush2.bf16.msra.mxu0 0
    %5612 = vmatprep.subr.bf16.mxu0 0
    %5613 = vmatpush2.bf16.msra.mxu0 0
    %5614 = vmatprep.subr.bf16.mxu0 0
    %5615 = vmatpush2.bf16.msra.mxu0 0
    %5616 = vmatprep.subr.bf16.mxu0 0
    %5617 = vmatpush2.bf16.msra.mxu0 0
    %5618 = vmatprep.subr.bf16.mxu0 0
    %5619 = vmatpush2.bf16.msra.mxu0 0
    %5620 = vmatprep.subr.bf16.mxu0 0
    %5621 = vmatpush2.bf16.msra.mxu0 0
    %5622 = vmatprep.subr.bf16.mxu0 0
    %5623 = vmatpush2.bf16.msra.mxu0 0
    %5624 = vmatprep.mubr.bf16.mxu0 0
    %5625 = vmatmul.mubr.bf16.gmra.mxu0 %v5581
    %v5626 = vpop.f32.mrf.mxu0
    %v5627 = vadd.f32 0.0, %v5626
    %v5628 = vpop.f32.mrf.mxu0
    %v5629 = vpop.f32.mrf.mxu0
    %v5630 = vadd.f32 0.0, %v5629
    %v5631 = vpop.f32.mrf.mxu0
    %5632 = vmatprep.mubr.bf16.mxu0 0
    %5633 = vmatmul.mubr.bf16.gmra.mxu0 %v5584
    %v5634 = vpop.f32.mrf.mxu0
    %v5635 = vadd.f32 0.0, %v5634
    %v5636 = vpop.f32.mrf.mxu0
    %v5637 = vpop.f32.mrf.mxu0
    %v5638 = vadd.f32 0.0, %v5637
    %v5639 = vpop.f32.mrf.mxu0
    %5640 = vmatprep.mubr.bf16.mxu0 0
    %5641 = vmatmul.mubr.bf16.gmra.mxu0 %v5587
    %v5642 = vpop.f32.mrf.mxu0
    %v5643 = vadd.f32 0.0, %v5642
    %v5644 = vpop.f32.mrf.mxu0
    %v5645 = vpop.f32.mrf.mxu0
    %v5646 = vadd.f32 0.0, %v5645
    %v5647 = vpop.f32.mrf.mxu0
    %5648 = vmatprep.mubr.bf16.mxu0 0
    %5649 = vmatmul.mubr.bf16.gmra.mxu0 %v5590
    %v5650 = vpop.f32.mrf.mxu0
    %v5651 = vadd.f32 0.0, %v5650
    %v5652 = vpop.f32.mrf.mxu0
    %v5653 = vpop.f32.mrf.mxu0
    %v5654 = vadd.f32 0.0, %v5653
    %v5655 = vpop.f32.mrf.mxu0
    %5656 = vdwg.mxu0
    %v5658 = vsel %vm196, %v5422, 0
    %v5661 = vsel %vm196, %v5423, 0
    %v5664 = vsel %vm196, %v5424, 0
    %v5667 = vsel %vm196, %v5425, 0
    %5669 = vmatprep.subr.bf16.mxu0 0
    %5670 = vmatpush1.bf16.msra.mxu0 0
    %5671 = vmatprep.subr.bf16.mxu0 0
    %5672 = vmatpush1.bf16.msra.mxu0 0
    %5673 = vmatprep.subr.bf16.mxu0 0
    %5674 = vmatpush1.bf16.msra.mxu0 0
    %5675 = vmatprep.subr.bf16.mxu0 0
    %5676 = vmatpush1.bf16.msra.mxu0 0
    %5677 = vmatprep.subr.bf16.mxu0 0
    %5678 = vmatpush1.bf16.msra.mxu0 0
    %5679 = vmatprep.subr.bf16.mxu0 0
    %5680 = vmatpush1.bf16.msra.mxu0 0
    %5681 = vmatprep.subr.bf16.mxu0 0
    %5682 = vmatpush1.bf16.msra.mxu0 %v4090
    %5683 = vmatprep.subr.bf16.mxu0 0
    %5684 = vmatpush1.bf16.msra.mxu0 %v4089
    %5685 = vmatprep.subr.bf16.mxu0 0
    %5686 = vmatpush2.bf16.msra.mxu0 0
    %5687 = vmatprep.subr.bf16.mxu0 0
    %5688 = vmatpush2.bf16.msra.mxu0 0
    %5689 = vmatprep.subr.bf16.mxu0 0
    %5690 = vmatpush2.bf16.msra.mxu0 0
    %5691 = vmatprep.subr.bf16.mxu0 0
    %5692 = vmatpush2.bf16.msra.mxu0 0
    %5693 = vmatprep.subr.bf16.mxu0 0
    %5694 = vmatpush2.bf16.msra.mxu0 0
    %5695 = vmatprep.subr.bf16.mxu0 0
    %5696 = vmatpush2.bf16.msra.mxu0 0
    %5697 = vmatprep.subr.bf16.mxu0 0
    %5698 = vmatpush2.bf16.msra.mxu0 0
    %5699 = vmatprep.subr.bf16.mxu0 0
    %5700 = vmatpush2.bf16.msra.mxu0 0
    %5701 = vmatprep.mubr.bf16.mxu0 0
    %5702 = vmatmul.mubr.bf16.gmra.mxu0 %v5658
    %v5703 = vpop.f32.mrf.mxu0
    %v5704 = vadd.f32 0.0, %v5703
    %v5705 = vpop.f32.mrf.mxu0
    %v5706 = vpop.f32.mrf.mxu0
    %v5707 = vadd.f32 0.0, %v5706
    %v5708 = vpop.f32.mrf.mxu0
    %5709 = vmatprep.mubr.bf16.mxu0 0
    %5710 = vmatmul.mubr.bf16.gmra.mxu0 %v5661
    %v5711 = vpop.f32.mrf.mxu0
    %v5712 = vadd.f32 0.0, %v5711
    %v5713 = vpop.f32.mrf.mxu0
    %v5714 = vpop.f32.mrf.mxu0
    %v5715 = vadd.f32 0.0, %v5714
    %v5716 = vpop.f32.mrf.mxu0
    %5717 = vmatprep.mubr.bf16.mxu0 0
    %5718 = vmatmul.mubr.bf16.gmra.mxu0 %v5664
    %v5719 = vpop.f32.mrf.mxu0
    %v5720 = vadd.f32 0.0, %v5719
    %v5721 = vpop.f32.mrf.mxu0
    %v5722 = vpop.f32.mrf.mxu0
    %v5723 = vadd.f32 0.0, %v5722
    %v5724 = vpop.f32.mrf.mxu0
    %5725 = vmatprep.mubr.bf16.mxu0 0
    %5726 = vmatmul.mubr.bf16.gmra.mxu0 %v5667
    %v5727 = vpop.f32.mrf.mxu0
    %v5728 = vadd.f32 0.0, %v5727
    %v5729 = vpop.f32.mrf.mxu0
    %v5730 = vpop.f32.mrf.mxu0
    %v5731 = vadd.f32 0.0, %v5730
    %v5732 = vpop.f32.mrf.mxu0
    %5733 = vdwg.mxu0
    %v5734 = vsel %vm196, %v5473, 0.0
    %v5735 = vsel %vm196, %v5550, 0.0
    %v5736 = vadd.f32 %v5734, %v5735
    %v5737 = vsel %vm196, %v5627, 0.0
    %v5738 = vadd.f32 %v5736, %v5737
    %v5739 = vsel %vm196, %v5704, 0.0
    %v5740 = vadd.f32 %v5738, %v5739
    %v5741 = vsel %vm196, %v5476, 0.0
    %v5742 = vsel %vm196, %v5553, 0.0
    %v5743 = vadd.f32 %v5741, %v5742
    %v5744 = vsel %vm196, %v5630, 0.0
    %v5745 = vadd.f32 %v5743, %v5744
    %v5746 = vsel %vm196, %v5707, 0.0
    %v5747 = vadd.f32 %v5745, %v5746
    %v5748 = vsel %vm196, %v5481, 0.0
    %v5749 = vsel %vm196, %v5558, 0.0
    %v5750 = vadd.f32 %v5748, %v5749
    %v5751 = vsel %vm196, %v5635, 0.0
    %v5752 = vadd.f32 %v5750, %v5751
    %v5753 = vsel %vm196, %v5712, 0.0
    %v5754 = vadd.f32 %v5752, %v5753
    %v5755 = vsel %vm196, %v5484, 0.0
    %v5756 = vsel %vm196, %v5561, 0.0
    %v5757 = vadd.f32 %v5755, %v5756
    %v5758 = vsel %vm196, %v5638, 0.0
    %v5759 = vadd.f32 %v5757, %v5758
    %v5760 = vsel %vm196, %v5715, 0.0
    %v5761 = vadd.f32 %v5759, %v5760
    %v5762 = vsel %vm196, %v5489, 0.0
    %v5763 = vsel %vm196, %v5566, 0.0
    %v5764 = vadd.f32 %v5762, %v5763
    %v5765 = vsel %vm196, %v5643, 0.0
    %v5766 = vadd.f32 %v5764, %v5765
    %v5767 = vsel %vm196, %v5720, 0.0
    %v5768 = vadd.f32 %v5766, %v5767
    %v5769 = vsel %vm196, %v5492, 0.0
    %v5770 = vsel %vm196, %v5569, 0.0
    %v5771 = vadd.f32 %v5769, %v5770
    %v5772 = vsel %vm196, %v5646, 0.0
    %v5773 = vadd.f32 %v5771, %v5772
    %v5774 = vsel %vm196, %v5723, 0.0
    %v5775 = vadd.f32 %v5773, %v5774
    %v5776 = vsel %vm196, %v5497, 0.0
    %v5777 = vsel %vm196, %v5574, 0.0
    %v5778 = vadd.f32 %v5776, %v5777
    %v5779 = vsel %vm196, %v5651, 0.0
    %v5780 = vadd.f32 %v5778, %v5779
    %v5781 = vsel %vm196, %v5728, 0.0
    %v5782 = vadd.f32 %v5780, %v5781
    %v5783 = vsel %vm196, %v5500, 0.0
    %v5784 = vsel %vm196, %v5577, 0.0
    %v5785 = vadd.f32 %v5783, %v5784
    %v5786 = vsel %vm196, %v5654, 0.0
    %v5787 = vadd.f32 %v5785, %v5786
    %v5788 = vsel %vm196, %v5731, 0.0
    %v5789 = vadd.f32 %v5787, %v5788
    %v5790 = vadd.f32 %v5740, %v3159
    %v5791 = vadd.f32 %v5747, %v3160
    %v5792 = vadd.f32 %v5754, %v3161
    %v5793 = vadd.f32 %v5761, %v3162
    %v5794 = vadd.f32 %v5768, %v3163
    %v5795 = vadd.f32 %v5775, %v3164
    %v5796 = vadd.f32 %v5782, %v3165
    %v5797 = vadd.f32 %v5789, %v3166
    %v5798 = vsel %vm196, %v5790, 0.0
    %5799 = vadd.xlane.f32.xlu0 %v5798
    %v5800 = vpop.xlane.xlu0 %5799
    %v5801 = vsel %vm196, %v5791, 0.0
    %5802 = vadd.xlane.f32.xlu0 %v5801
    %v5803 = vpop.xlane.xlu0 %5802
    %v5804 = vsel %vm196, %v5792, 0.0
    %5805 = vadd.xlane.f32.xlu0 %v5804
    %v5806 = vpop.xlane.xlu0 %5805
    %v5807 = vsel %vm196, %v5793, 0.0
    %5808 = vadd.xlane.f32.xlu0 %v5807
    %v5809 = vpop.xlane.xlu0 %5808
    %v5810 = vsel %vm196, %v5794, 0.0
    %5811 = vadd.xlane.f32.xlu0 %v5810
    %v5812 = vpop.xlane.xlu0 %5811
    %v5813 = vsel %vm196, %v5795, 0.0
    %5814 = vadd.xlane.f32.xlu0 %v5813
    %v5815 = vpop.xlane.xlu0 %5814
    %v5816 = vsel %vm196, %v5796, 0.0
    %5817 = vadd.xlane.f32.xlu0 %v5816
    %v5818 = vpop.xlane.xlu0 %5817
    %v5819 = vsel %vm196, %v5797, 0.0
    %5820 = vadd.xlane.f32.xlu0 %v5819
    %v5821 = vpop.xlane.xlu0 %5820
    %v5822 = vmul.f32 %v5800, %v2716
    %v5823 = vmul.f32 %v5803, %v2716
    %v5824 = vmul.f32 %v5806, %v2716
    %v5825 = vmul.f32 %v5809, %v2716
    %v5826 = vmul.f32 %v5812, %v2716
    %v5827 = vmul.f32 %v5815, %v2716
    %v5828 = vmul.f32 %v5818, %v2716
    %v5829 = vmul.f32 %v5821, %v2716
    %v5830 = vsub.f32 %v5790, %v5822
    %v5831 = vsub.f32 %v5791, %v5823
    %v5832 = vsub.f32 %v5792, %v5824
    %v5833 = vsub.f32 %v5793, %v5825
    %v5834 = vsub.f32 %v5794, %v5826
    %v5835 = vsub.f32 %v5795, %v5827
    %v5836 = vsub.f32 %v5796, %v5828
    %v5837 = vsub.f32 %v5797, %v5829
    %v5838 = vmul.f32 %v5830, %v5830
    %v5839 = vmul.f32 %v5831, %v5831
    %v5840 = vmul.f32 %v5832, %v5832
    %v5841 = vmul.f32 %v5833, %v5833
    %v5842 = vmul.f32 %v5834, %v5834
    %v5843 = vmul.f32 %v5835, %v5835
    %v5844 = vmul.f32 %v5836, %v5836
    %v5845 = vmul.f32 %v5837, %v5837
    %v5846 = vsel %vm196, %v5838, 0.0
    %5847 = vadd.xlane.f32.xlu0 %v5846
    %v5848 = vpop.xlane.xlu0 %5847
    %v5849 = vsel %vm196, %v5839, 0.0
    %5850 = vadd.xlane.f32.xlu0 %v5849
    %v5851 = vpop.xlane.xlu0 %5850
    %v5852 = vsel %vm196, %v5840, 0.0
    %5853 = vadd.xlane.f32.xlu0 %v5852
    %v5854 = vpop.xlane.xlu0 %5853
    %v5855 = vsel %vm196, %v5841, 0.0
    %5856 = vadd.xlane.f32.xlu0 %v5855
    %v5857 = vpop.xlane.xlu0 %5856
    %v5858 = vsel %vm196, %v5842, 0.0
    %5859 = vadd.xlane.f32.xlu0 %v5858
    %v5860 = vpop.xlane.xlu0 %5859
    %v5861 = vsel %vm196, %v5843, 0.0
    %5862 = vadd.xlane.f32.xlu0 %v5861
    %v5863 = vpop.xlane.xlu0 %5862
    %v5864 = vsel %vm196, %v5844, 0.0
    %5865 = vadd.xlane.f32.xlu0 %v5864
    %v5866 = vpop.xlane.xlu0 %5865
    %v5867 = vsel %vm196, %v5845, 0.0
    %5868 = vadd.xlane.f32.xlu0 %v5867
    %v5869 = vpop.xlane.xlu0 %5868
    %v5870 = vmul.f32 %v5848, %v2716
    %v5871 = vmul.f32 %v5851, %v2716
    %v5872 = vmul.f32 %v5854, %v2716
    %v5873 = vmul.f32 %v5857, %v2716
    %v5874 = vmul.f32 %v5860, %v2716
    %v5875 = vmul.f32 %v5863, %v2716
    %v5876 = vmul.f32 %v5866, %v2716
    %v5877 = vmul.f32 %v5869, %v2716
    %v5878 = vadd.f32 %v5870, 1e-05
    %v5879 = vadd.f32 %v5871, 1e-05
    %v5880 = vadd.f32 %v5872, 1e-05
    %v5881 = vadd.f32 %v5873, 1e-05
    %v5882 = vadd.f32 %v5874, 1e-05
    %v5883 = vadd.f32 %v5875, 1e-05
    %v5884 = vadd.f32 %v5876, 1e-05
    %v5885 = vadd.f32 %v5877, 1e-05
    %v5886 = vrsqrt.pop %v5878
    %v5887 = vrsqrt.pop %v5879
    %v5888 = vrsqrt.pop %v5880
    %v5889 = vrsqrt.pop %v5881
    %v5890 = vrsqrt.pop %v5882
    %v5891 = vrsqrt.pop %v5883
    %v5892 = vrsqrt.pop %v5884
    %v5893 = vrsqrt.pop %v5885
    %v5894 = vmul.f32 %v5830, %v5886
    %v5895 = vmul.f32 %v5831, %v5887
    %v5896 = vmul.f32 %v5832, %v5888
    %v5897 = vmul.f32 %v5833, %v5889
    %v5898 = vmul.f32 %v5834, %v5890
    %v5899 = vmul.f32 %v5835, %v5891
    %v5900 = vmul.f32 %v5836, %v5892
    %v5901 = vmul.f32 %v5837, %v5893
    %v5902 = vlaneseq
    %v5903 = vshrl.u32 %v5902, 7
    %v5904 = vsub.s32 2, %v5903
    %v5905 = vrot.slane %v3212, %v5904
    %v5906 = vmul.f32 %v5894, %v5905
    %v5907 = vmul.f32 %v5895, %v5905
    %v5908 = vmul.f32 %v5896, %v5905
    %v5909 = vmul.f32 %v5897, %v5905
    %v5910 = vmul.f32 %v5898, %v5905
    %v5911 = vmul.f32 %v5899, %v5905
    %v5912 = vmul.f32 %v5900, %v5905
    %v5913 = vmul.f32 %v5901, %v5905
    %v5914 = vlaneseq
    %v5915 = vshrl.u32 %v5914, 7
    %v5916 = vsub.s32 3, %v5915
    %v5917 = vrot.slane %v3212, %v5916
    %v5918 = vadd.f32 %v5906, %v5917
    %v5919 = vadd.f32 %v5907, %v5917
    %v5920 = vadd.f32 %v5908, %v5917
    %v5921 = vadd.f32 %v5909, %v5917
    %v5922 = vadd.f32 %v5910, %v5917
    %v5923 = vadd.f32 %v5911, %v5917
    %v5924 = vadd.f32 %v5912, %v5917
    %v5925 = vadd.f32 %v5913, %v5917
    %v5926 = vpack.c.bf16 %v5919, %v5918
    %v5927 = vpack.c.bf16 %v5921, %v5920
    %v5928 = vpack.c.bf16 %v5923, %v5922
    %v5929 = vpack.c.bf16 %v5925, %v5924
    %v5930 = vlaneseq
    %v5931 = vshrl.u32 %v5930, 7
    %v5932 = vsub.s32 0, %v5931
    %v5933 = vrot.slane %v3212, %v5932
    %v5938 = vunpack.c.l.b16 %v3202
    %v5939 = vunpack.c.l.b16 %v3203
    %v5940 = vunpack.c.l.b16 %v3204
    %v5941 = vunpack.c.l.b16 %v3205
    %v5942 = vpack.c.b16 %v5939, %v5938
    %v5943 = vpack.c.b16 %v5941, %v5940
    %v5947 = vsel %vm196, %v5926, 0
    %v5950 = vsel %vm196, %v5927, 0
    %v5953 = vsel %vm196, %v5928, 0
    %v5956 = vsel %vm196, %v5929, 0
    %5958 = vmatprep.subr.bf16.mxu0 0
    %5959 = vmatpush1.bf16.msra.mxu0 0
    %5960 = vmatprep.subr.bf16.mxu0 0
    %5961 = vmatpush1.bf16.msra.mxu0 0
    %5962 = vmatprep.subr.bf16.mxu0 0
    %5963 = vmatpush1.bf16.msra.mxu0 0
    %5964 = vmatprep.subr.bf16.mxu0 0
    %5965 = vmatpush1.bf16.msra.mxu0 0
    %5966 = vmatprep.subr.bf16.mxu0 0
    %5967 = vmatpush1.bf16.msra.mxu0 0
    %5968 = vmatprep.subr.bf16.mxu0 0
    %5969 = vmatpush1.bf16.msra.mxu0 0
    %5970 = vmatprep.subr.bf16.mxu0 0
    %5971 = vmatpush1.bf16.msra.mxu0 %v5943
    %5972 = vmatprep.subr.bf16.mxu0 0
    %5973 = vmatpush1.bf16.msra.mxu0 %v5942
    %5974 = vmatprep.subr.bf16.mxu0 0
    %5975 = vmatpush2.bf16.msra.mxu0 0
    %5976 = vmatprep.subr.bf16.mxu0 0
    %5977 = vmatpush2.bf16.msra.mxu0 0
    %5978 = vmatprep.subr.bf16.mxu0 0
    %5979 = vmatpush2.bf16.msra.mxu0 0
    %5980 = vmatprep.subr.bf16.mxu0 0
    %5981 = vmatpush2.bf16.msra.mxu0 0
    %5982 = vmatprep.subr.bf16.mxu0 0
    %5983 = vmatpush2.bf16.msra.mxu0 0
    %5984 = vmatprep.subr.bf16.mxu0 0
    %5985 = vmatpush2.bf16.msra.mxu0 0
    %5986 = vmatprep.subr.bf16.mxu0 0
    %5987 = vmatpush2.bf16.msra.mxu0 0
    %5988 = vmatprep.subr.bf16.mxu0 0
    %5989 = vmatpush2.bf16.msra.mxu0 0
    %5990 = vmatprep.mubr.bf16.mxu0 0
    %5991 = vmatmul.mubr.bf16.gmra.mxu0 %v5947
    %v5992 = vpop.f32.mrf.mxu0
    %v5993 = vadd.f32 %v5933, %v5992
    %v5994 = vpop.f32.mrf.mxu0
    %v5995 = vpop.f32.mrf.mxu0
    %v5996 = vadd.f32 %v5933, %v5995
    %v5997 = vpop.f32.mrf.mxu0
    %5998 = vmatprep.mubr.bf16.mxu0 0
    %5999 = vmatmul.mubr.bf16.gmra.mxu0 %v5950
    %v6000 = vpop.f32.mrf.mxu0
    %v6001 = vadd.f32 %v5933, %v6000
    %v6002 = vpop.f32.mrf.mxu0
    %v6003 = vpop.f32.mrf.mxu0
    %v6004 = vadd.f32 %v5933, %v6003
    %v6005 = vpop.f32.mrf.mxu0
    %6006 = vmatprep.mubr.bf16.mxu0 0
    %6007 = vmatmul.mubr.bf16.gmra.mxu0 %v5953
    %v6008 = vpop.f32.mrf.mxu0
    %v6009 = vadd.f32 %v5933, %v6008
    %v6010 = vpop.f32.mrf.mxu0
    %v6011 = vpop.f32.mrf.mxu0
    %v6012 = vadd.f32 %v5933, %v6011
    %v6013 = vpop.f32.mrf.mxu0
    %6014 = vmatprep.mubr.bf16.mxu0 0
    %6015 = vmatmul.mubr.bf16.gmra.mxu0 %v5956
    %v6016 = vpop.f32.mrf.mxu0
    %v6017 = vadd.f32 %v5933, %v6016
    %v6018 = vpop.f32.mrf.mxu0
    %v6019 = vpop.f32.mrf.mxu0
    %v6020 = vadd.f32 %v5933, %v6019
    %v6021 = vpop.f32.mrf.mxu0
    %6022 = vdwg.mxu0
    %v6023 = vmax.f32 %v5993, 0.0
    %v6024 = vmax.f32 %v5996, 0.0
    %v6025 = vmax.f32 %v6001, 0.0
    %v6026 = vmax.f32 %v6004, 0.0
    %v6027 = vmax.f32 %v6009, 0.0
    %v6028 = vmax.f32 %v6012, 0.0
    %v6029 = vmax.f32 %v6017, 0.0
    %v6030 = vmax.f32 %v6020, 0.0
    %v6031 = vpack.c.bf16 %v6024, %v6023
    %v6032 = vpack.c.bf16 %v6026, %v6025
    %v6033 = vpack.c.bf16 %v6028, %v6027
    %v6034 = vpack.c.bf16 %v6030, %v6029
    %v6035 = vlaneseq
    %v6036 = vshrl.u32 %v6035, 7
    %v6037 = vsub.s32 1, %v6036
    %v6038 = vrot.slane %v3212, %v6037
    %v6043 = vunpack.c.l.b16 %v3207
    %v6044 = vunpack.c.l.b16 %v3208
    %v6045 = vunpack.c.l.b16 %v3209
    %v6046 = vunpack.c.l.b16 %v3210
    %v6047 = vpack.c.b16 %v6044, %v6043
    %v6048 = vpack.c.b16 %v6046, %v6045
    %v6052 = vsel %vm196, %v6031, 0
    %v6055 = vsel %vm196, %v6032, 0
    %v6058 = vsel %vm196, %v6033, 0
    %v6061 = vsel %vm196, %v6034, 0
    %6063 = vmatprep.subr.bf16.mxu0 0
    %6064 = vmatpush1.bf16.msra.mxu0 0
    %6065 = vmatprep.subr.bf16.mxu0 0
    %6066 = vmatpush1.bf16.msra.mxu0 0
    %6067 = vmatprep.subr.bf16.mxu0 0
    %6068 = vmatpush1.bf16.msra.mxu0 0
    %6069 = vmatprep.subr.bf16.mxu0 0
    %6070 = vmatpush1.bf16.msra.mxu0 0
    %6071 = vmatprep.subr.bf16.mxu0 0
    %6072 = vmatpush1.bf16.msra.mxu0 0
    %6073 = vmatprep.subr.bf16.mxu0 0
    %6074 = vmatpush1.bf16.msra.mxu0 0
    %6075 = vmatprep.subr.bf16.mxu0 0
    %6076 = vmatpush1.bf16.msra.mxu0 %v6048
    %6077 = vmatprep.subr.bf16.mxu0 0
    %6078 = vmatpush1.bf16.msra.mxu0 %v6047
    %6079 = vmatprep.subr.bf16.mxu0 0
    %6080 = vmatpush2.bf16.msra.mxu0 0
    %6081 = vmatprep.subr.bf16.mxu0 0
    %6082 = vmatpush2.bf16.msra.mxu0 0
    %6083 = vmatprep.subr.bf16.mxu0 0
    %6084 = vmatpush2.bf16.msra.mxu0 0
    %6085 = vmatprep.subr.bf16.mxu0 0
    %6086 = vmatpush2.bf16.msra.mxu0 0
    %6087 = vmatprep.subr.bf16.mxu0 0
    %6088 = vmatpush2.bf16.msra.mxu0 0
    %6089 = vmatprep.subr.bf16.mxu0 0
    %6090 = vmatpush2.bf16.msra.mxu0 0
    %6091 = vmatprep.subr.bf16.mxu0 0
    %6092 = vmatpush2.bf16.msra.mxu0 0
    %6093 = vmatprep.subr.bf16.mxu0 0
    %6094 = vmatpush2.bf16.msra.mxu0 0
    %6095 = vmatprep.mubr.bf16.mxu0 0
    %6096 = vmatmul.mubr.bf16.gmra.mxu0 %v6052
    %v6097 = vpop.f32.mrf.mxu0
    %v6098 = vadd.f32 %v6038, %v6097
    %v6099 = vpop.f32.mrf.mxu0
    %v6100 = vpop.f32.mrf.mxu0
    %v6101 = vadd.f32 %v6038, %v6100
    %v6102 = vpop.f32.mrf.mxu0
    %6103 = vmatprep.mubr.bf16.mxu0 0
    %6104 = vmatmul.mubr.bf16.gmra.mxu0 %v6055
    %v6105 = vpop.f32.mrf.mxu0
    %v6106 = vadd.f32 %v6038, %v6105
    %v6107 = vpop.f32.mrf.mxu0
    %v6108 = vpop.f32.mrf.mxu0
    %v6109 = vadd.f32 %v6038, %v6108
    %v6110 = vpop.f32.mrf.mxu0
    %6111 = vmatprep.mubr.bf16.mxu0 0
    %6112 = vmatmul.mubr.bf16.gmra.mxu0 %v6058
    %v6113 = vpop.f32.mrf.mxu0
    %v6114 = vadd.f32 %v6038, %v6113
    %v6115 = vpop.f32.mrf.mxu0
    %v6116 = vpop.f32.mrf.mxu0
    %v6117 = vadd.f32 %v6038, %v6116
    %v6118 = vpop.f32.mrf.mxu0
    %6119 = vmatprep.mubr.bf16.mxu0 0
    %6120 = vmatmul.mubr.bf16.gmra.mxu0 %v6061
    %v6121 = vpop.f32.mrf.mxu0
    %v6122 = vadd.f32 %v6038, %v6121
    %v6123 = vpop.f32.mrf.mxu0
    %v6124 = vpop.f32.mrf.mxu0
    %v6125 = vadd.f32 %v6038, %v6124
    %v6126 = vpop.f32.mrf.mxu0
    %6127 = vdwg.mxu0
    %v6128 = vmax.f32 %v6098, 0.0
    %v6129 = vmax.f32 %v6101, 0.0
    %v6130 = vmax.f32 %v6106, 0.0
    %v6131 = vmax.f32 %v6109, 0.0
    %v6132 = vmax.f32 %v6114, 0.0
    %v6133 = vmax.f32 %v6117, 0.0
    %v6134 = vmax.f32 %v6122, 0.0
    %v6135 = vmax.f32 %v6125, 0.0
    %v6136 = vadd.f32 %v6128, %v5918
    %v6137 = vadd.f32 %v6129, %v5919
    %v6138 = vadd.f32 %v6130, %v5920
    %v6139 = vadd.f32 %v6131, %v5921
    %v6140 = vadd.f32 %v6132, %v5922
    %v6141 = vadd.f32 %v6133, %v5923
    %v6142 = vadd.f32 %v6134, %v5924
    %v6143 = vadd.f32 %v6135, %v5925
    %v6144 = vsel %vm196, %v6136, 0.0
    %6145 = vadd.xlane.f32.xlu0 %v6144
    %v6146 = vpop.xlane.xlu0 %6145
    %v6147 = vsel %vm196, %v6137, 0.0
    %6148 = vadd.xlane.f32.xlu0 %v6147
    %v6149 = vpop.xlane.xlu0 %6148
    %v6150 = vsel %vm196, %v6138, 0.0
    %6151 = vadd.xlane.f32.xlu0 %v6150
    %v6152 = vpop.xlane.xlu0 %6151
    %v6153 = vsel %vm196, %v6139, 0.0
    %6154 = vadd.xlane.f32.xlu0 %v6153
    %v6155 = vpop.xlane.xlu0 %6154
    %v6156 = vsel %vm196, %v6140, 0.0
    %6157 = vadd.xlane.f32.xlu0 %v6156
    %v6158 = vpop.xlane.xlu0 %6157
    %v6159 = vsel %vm196, %v6141, 0.0
    %6160 = vadd.xlane.f32.xlu0 %v6159
    %v6161 = vpop.xlane.xlu0 %6160
    %v6162 = vsel %vm196, %v6142, 0.0
    %6163 = vadd.xlane.f32.xlu0 %v6162
    %v6164 = vpop.xlane.xlu0 %6163
    %v6165 = vsel %vm196, %v6143, 0.0
    %6166 = vadd.xlane.f32.xlu0 %v6165
    %v6167 = vpop.xlane.xlu0 %6166
    %v6168 = vmul.f32 %v6146, %v2716
    %v6169 = vmul.f32 %v6149, %v2716
    %v6170 = vmul.f32 %v6152, %v2716
    %v6171 = vmul.f32 %v6155, %v2716
    %v6172 = vmul.f32 %v6158, %v2716
    %v6173 = vmul.f32 %v6161, %v2716
    %v6174 = vmul.f32 %v6164, %v2716
    %v6175 = vmul.f32 %v6167, %v2716
    %v6176 = vsub.f32 %v6136, %v6168
    %v6177 = vsub.f32 %v6137, %v6169
    %v6178 = vsub.f32 %v6138, %v6170
    %v6179 = vsub.f32 %v6139, %v6171
    %v6180 = vsub.f32 %v6140, %v6172
    %v6181 = vsub.f32 %v6141, %v6173
    %v6182 = vsub.f32 %v6142, %v6174
    %v6183 = vsub.f32 %v6143, %v6175
    %v6184 = vmul.f32 %v6176, %v6176
    %v6185 = vmul.f32 %v6177, %v6177
    %v6186 = vmul.f32 %v6178, %v6178
    %v6187 = vmul.f32 %v6179, %v6179
    %v6188 = vmul.f32 %v6180, %v6180
    %v6189 = vmul.f32 %v6181, %v6181
    %v6190 = vmul.f32 %v6182, %v6182
    %v6191 = vmul.f32 %v6183, %v6183
    %v6192 = vsel %vm196, %v6184, 0.0
    %6193 = vadd.xlane.f32.xlu0 %v6192
    %v6194 = vpop.xlane.xlu0 %6193
    %v6195 = vsel %vm196, %v6185, 0.0
    %6196 = vadd.xlane.f32.xlu0 %v6195
    %v6197 = vpop.xlane.xlu0 %6196
    %v6198 = vsel %vm196, %v6186, 0.0
    %6199 = vadd.xlane.f32.xlu0 %v6198
    %v6200 = vpop.xlane.xlu0 %6199
    %v6201 = vsel %vm196, %v6187, 0.0
    %6202 = vadd.xlane.f32.xlu0 %v6201
    %v6203 = vpop.xlane.xlu0 %6202
    %v6204 = vsel %vm196, %v6188, 0.0
    %6205 = vadd.xlane.f32.xlu0 %v6204
    %v6206 = vpop.xlane.xlu0 %6205
    %v6207 = vsel %vm196, %v6189, 0.0
    %6208 = vadd.xlane.f32.xlu0 %v6207
    %v6209 = vpop.xlane.xlu0 %6208
    %v6210 = vsel %vm196, %v6190, 0.0
    %6211 = vadd.xlane.f32.xlu0 %v6210
    %v6212 = vpop.xlane.xlu0 %6211
    %v6213 = vsel %vm196, %v6191, 0.0
    %6214 = vadd.xlane.f32.xlu0 %v6213
    %v6215 = vpop.xlane.xlu0 %6214
    %v6216 = vmul.f32 %v6194, %v2716
    %v6217 = vmul.f32 %v6197, %v2716
    %v6218 = vmul.f32 %v6200, %v2716
    %v6219 = vmul.f32 %v6203, %v2716
    %v6220 = vmul.f32 %v6206, %v2716
    %v6221 = vmul.f32 %v6209, %v2716
    %v6222 = vmul.f32 %v6212, %v2716
    %v6223 = vmul.f32 %v6215, %v2716
    %v6224 = vadd.f32 %v6216, 1e-05
    %v6225 = vadd.f32 %v6217, 1e-05
    %v6226 = vadd.f32 %v6218, 1e-05
    %v6227 = vadd.f32 %v6219, 1e-05
    %v6228 = vadd.f32 %v6220, 1e-05
    %v6229 = vadd.f32 %v6221, 1e-05
    %v6230 = vadd.f32 %v6222, 1e-05
    %v6231 = vadd.f32 %v6223, 1e-05
    %v6232 = vrsqrt.pop %v6224
    %v6233 = vrsqrt.pop %v6225
    %v6234 = vrsqrt.pop %v6226
    %v6235 = vrsqrt.pop %v6227
    %v6236 = vrsqrt.pop %v6228
    %v6237 = vrsqrt.pop %v6229
    %v6238 = vrsqrt.pop %v6230
    %v6239 = vrsqrt.pop %v6231
    %v6240 = vmul.f32 %v6176, %v6232
    %v6241 = vmul.f32 %v6177, %v6233
    %v6242 = vmul.f32 %v6178, %v6234
    %v6243 = vmul.f32 %v6179, %v6235
    %v6244 = vmul.f32 %v6180, %v6236
    %v6245 = vmul.f32 %v6181, %v6237
    %v6246 = vmul.f32 %v6182, %v6238
    %v6247 = vmul.f32 %v6183, %v6239
    %v6248 = vlaneseq
    %v6249 = vshrl.u32 %v6248, 7
    %v6250 = vsub.s32 4, %v6249
    %v6251 = vrot.slane %v3212, %v6250
    %v6252 = vmul.f32 %v6240, %v6251
    %v6253 = vmul.f32 %v6241, %v6251
    %v6254 = vmul.f32 %v6242, %v6251
    %v6255 = vmul.f32 %v6243, %v6251
    %v6256 = vmul.f32 %v6244, %v6251
    %v6257 = vmul.f32 %v6245, %v6251
    %v6258 = vmul.f32 %v6246, %v6251
    %v6259 = vmul.f32 %v6247, %v6251
    %v6260 = vlaneseq
    %v6261 = vshrl.u32 %v6260, 7
    %v6262 = vsub.s32 5, %v6261
    %v6263 = vrot.slane %v3212, %v6262
    %v6264 = vadd.f32 %v6252, %v6263
    %v6265 = vadd.f32 %v6253, %v6263
    %v6266 = vadd.f32 %v6254, %v6263
    %v6267 = vadd.f32 %v6255, %v6263
    %v6268 = vadd.f32 %v6256, %v6263
    %v6269 = vadd.f32 %v6257, %v6263
    %v6270 = vadd.f32 %v6258, %v6263
    %v6271 = vadd.f32 %v6259, %v6263
    %6272 = vst.msk [vmem:[%s7] sm:$0xff] %vm196, %v6264
    %6273 = vst.msk [vmem:[%s7 + $0x8] sm:$0xff] %vm196, %v6265
    %6274 = vst.msk [vmem:[%s7 + $0x10] sm:$0xff] %vm196, %v6266
    %6275 = vst.msk [vmem:[%s7 + $0x18] sm:$0xff] %vm196, %v6267
    %6276 = vst.msk [vmem:[%s7 + $0x20] sm:$0xff] %vm196, %v6268
    %6277 = vst.msk [vmem:[%s7 + $0x28] sm:$0xff] %vm196, %v6269
    %6278 = vst.msk [vmem:[%s7 + $0x30] sm:$0xff] %vm196, %v6270
    %6279 = vst.msk [vmem:[%s7 + $0x38] sm:$0xff] %vm196, %v6271
    // Predicated region
    $region38: #{tpu_custom_call.1} parent=1 // pred_check
      _
    $region39: #{tpu_custom_call.1} parent=1 // pred_check_branch
      %6281 = sbr.rel (0) target = $region41
    $region40: #{tpu_custom_call.1} parent=1 // pred_region
      _
    $region41: #{tpu_custom_call.1} parent=1 // pred_fallthru
      _
    // Predicated region
    $region42: #{tpu_custom_call.1} parent=1 // pred_check
      _
    $region43: #{tpu_custom_call.1} parent=1 // pred_check_branch
      %6283 = sbr.rel (0) target = $region45
    $region44: #{tpu_custom_call.1} parent=1 // pred_region
      _
    $region45: #{tpu_custom_call.1} parent=1 // pred_fallthru
      _
    %6284 = vsyncpa [#allocation3], 1
    %6285 = vsyncpa [#allocation5], 1

</llo_original>
